<compile_context>
chip_gen: v5e
topology: v5e:2x2
jax: 0.10.0
libtpu: 0.0.40
codegen_flags: <defaults>
</compile_context>

<pallas_src>
import functools

import jax
import jax.numpy as jnp
from jax.experimental import pallas as pl
from jax.experimental.pallas import tpu as pltpu

LANE = 128


def _round_up(n, m):
    return ((n + m - 1) // m) * m


def _pick_tile_h(H, wp, tile_h):
    """Largest divisor of H that is <= tile_h and keeps (th+2)*wp <= 512 rows."""
    cap = max(1, min(tile_h, 512 // wp - 2))
    for d in range(min(cap, H), 0, -1):
        if H % d == 0:
            return d
    return 1


# ----------------------------- Pallas kernel --------------------------------


def _resnet_block_kernel(x_hbm, te_ref, w1_ref, s1_ref, w2_ref, s2_ref,
                         wr_ref, br_ref, o_ref, xbuf, h1p_ref, sem,
                         *, th, wp, H, W, nt):
    """One (batch, row-tile) step of the fused ResNet block.

    x_hbm   : (B, (H+5)*wp, Cinp) bf16 HBM ref (pl.ANY) — overlapping windows
              are fetched manually, double-buffered across row tiles.
    te_ref  : (1, 1, C1p)  f32   precomputed time embedding row (per batch)
    w1_ref  : (9, Cinp, C1p) bf16 conv1 taps (BN1 scale folded in)
    w2_ref  : (9, C1p, C2p)  bf16 conv2 taps (BN2 scale folded in)
    wr_ref  : (C2p, C2p)     bf16 residual 1x1 weight (transposed, not eye-folded)
    o_ref   : (1, 1, th*wp, C2p) f32 output rows (junk columns sliced off in JAX)
    xbuf    : VMEM (2, (th+5)*wp, Cinp) bf16 — double-buffered input windows
    h1p_ref : VMEM ((th+2)*wp + 8, C1p) bf16 — h1 never leaves VMEM
    """
    l_slab = (th + 5) * wp      # input rows fetched per tile (flattened)
    l1 = (th + 2) * wp          # h1 rows per tile (incl. 1-row halo each side)
    l2 = th * wp                # output rows per tile
    c1p = w1_ref.shape[2]
    c2p = w2_ref.shape[2]

    b = pl.program_id(0)
    t = pl.program_id(1)
    slot = t & 1

    def in_dma(tile, buf_slot):
        return pltpu.make_async_copy(
            x_hbm.at[b, pl.ds(tile * (th * wp), l_slab)],
            xbuf.at[buf_slot],
            sem.at[buf_slot])

    # Prime at the start of each batch's row sweep (megacore-safe: only the
    # "parallel" batch axis may be split across cores, the row axis is serial).
    @pl.when(t == 0)
    def _():
        in_dma(t, slot).start()

    # Prefetch the next row tile of this batch while computing the current one.
    @pl.when(t + 1 < nt)
    def _():
        in_dma(t + 1, 1 - slot).start()

    in_dma(t, slot).wait()
    xb = xbuf.at[slot]

    # ---- stage 1: conv1 (BN1 folded) as 9 shifted-slice matmuls + ReLU + temb ----
    acc1 = jnp.zeros((l1, c1p), jnp.float32)
    for dy in range(3):
        for dx in range(3):
            a = xb[pl.ds(dy * wp + dx, l1), :]
            acc1 = acc1 + jnp.dot(a, w1_ref[dy * 3 + dx],
                                  preferred_element_type=jnp.float32)
    h1 = jnp.maximum(acc1 + s1_ref[...], 0.0) + te_ref[0]

    # In-kernel validity mask (replaces the old 1-lane-wide HBM mask input):
    # zero every h1 position that must act as conv2 zero padding.  Row / column
    # indices come from an iota via compares only (no vector integer division).
    i = jax.lax.broadcasted_iota(jnp.int32, (l1, 1), 0)
    row = jnp.zeros_like(i)
    for k in range(1, th + 2):
        row = row + (i >= k * wp).astype(jnp.int32)
    col = i - row * wp                     # position within a wp-wide flat row
    g = t * th - 1 + row                   # global image row of this h1 row
    valid = (g >= 0) & (g < H) & (col >= 1) & (col <= W)
    h1 = jnp.where(valid, h1, 0.0)

    # h1 stays on-chip in bf16; only the small tail (read as padding for junk
    # output columns) is zeroed — the full-scratch memset is gone.
    h1p_ref[pl.ds(0, l1), :] = h1.astype(h1p_ref.dtype)
    tail = h1p_ref.shape[0] - l1
    h1p_ref[pl.ds(l1, tail), :] = jnp.zeros((tail, c1p), h1p_ref.dtype)

    # ---- stage 2: conv2 (BN2 folded) + ReLU, then bf16 1x1 residual ----
    acc2 = jnp.zeros((l2, c2p), jnp.float32)
    for dy in range(3):
        for dx in range(3):
            h = h1p_ref[pl.ds(dy * wp + dx, l2), :]
            acc2 = acc2 + jnp.dot(h, w2_ref[dy * 3 + dx],
                                  preferred_element_type=jnp.float32)
    x2 = jnp.maximum(acc2 + s2_ref[...], 0.0)
    res = jnp.dot(x2.astype(jnp.bfloat16), wr_ref[...],
                  preferred_element_type=jnp.float32)
    o_ref[0, 0] = (x2 + res + br_ref[...]).astype(o_ref.dtype)   # skip add in f32


# -------------------------------- JAX glue -----------------------------------


def _fold_bn(conv_bias, gamma, beta, mean, var, eps=1e-5):
    """Fold conv bias + eval-mode BatchNorm into per-channel scale / shift."""
    scale = gamma / jnp.sqrt(var + eps)
    shift = beta + scale * (conv_bias - mean)
    return scale, shift


def _conv3x3_taps(w, scale):
    """Torch (O, I, 3, 3) -> (9, I, O) taps with the BN scale folded into columns."""
    taps = jnp.transpose(w, (2, 3, 1, 0)).reshape(9, w.shape[1], w.shape[0])
    return taps * scale[None, None, :]


def _pad_to(x, shape):
    return jnp.pad(x, [(0, s - d) for d, s in zip(x.shape, shape)])


@functools.partial(jax.jit, static_argnames=("tile_h",))
def resnet_block_forward(x_nchw, timesteps, params, *, tile_h=8):
    B, cin, H, W = x_nchw.shape
    c1 = params["w1"].shape[0]
    c2 = params["w2"].shape[0]
    cinp, c1p, c2p = (_round_up(c, LANE) for c in (cin, c1, c2))

    wp = _round_up(W + 3, 8)          # left pad 2, right pad >= 1, 8-aligned rows
    th = _pick_tile_h(H, wp, tile_h)  # never falls back to a whole-image tile
    nt = H // th
    l_slab = (th + 5) * wp
    l1 = (th + 2) * wp
    l2 = th * wp
    l1_pad = l1 + 8

    # ---- fold BN into weights/shifts, precompute the time embedding ----
    scale1, shift1 = _fold_bn(params["b1"], params["bn1_gamma"], params["bn1_beta"],
                              params["bn1_mean"], params["bn1_var"])
    scale2, shift2 = _fold_bn(params["b2"], params["bn2_gamma"], params["bn2_beta"],
                              params["bn2_mean"], params["bn2_var"])
    w1t = _pad_to(_conv3x3_taps(params["w1"], scale1), (9, cinp, c1p)).astype(jnp.bfloat16)
    w2t = _pad_to(_conv3x3_taps(params["w2"], scale2), (9, c1p, c2p)).astype(jnp.bfloat16)
    shift1p = _pad_to(shift1.reshape(1, c1), (1, c1p))
    shift2p = _pad_to(shift2.reshape(1, c2), (1, c2p))
    wrp = _pad_to(params["wr"][:, :, 0, 0].T, (c2p, c2p)).astype(jnp.bfloat16)
    brp = _pad_to(params["br"].reshape(1, c2), (1, c2p))
    te = timesteps.astype(jnp.float32) @ params["wte"].T + params["bte"]     # (B, C1)
    te3 = _pad_to(te.reshape(B, 1, c1), (B, 1, c1p))

    # ---- input: NHWC bf16, rows padded (2,3), cols padded (2, wp-W-2), channels
    #      padded to 128 lanes, then (rows, width) flattened to one 8-aligned axis.
    #      No halo duplication in HBM — the kernel fetches overlapping windows. ----
    x_nhwc = jnp.transpose(x_nchw, (0, 2, 3, 1)).astype(jnp.bfloat16)
    xp = jnp.pad(x_nhwc, ((0, 0), (2, 3), (2, wp - W - 2), (0, cinp - cin)))
    xp_flat = xp.reshape(B, (H + 5) * wp, cinp)

    kernel = functools.partial(_resnet_block_kernel, th=th, wp=wp, H=H, W=W, nt=nt)
    out = pl.pallas_call(
        kernel,
        out_shape=jax.ShapeDtypeStruct((B, nt, l2, c2p), jnp.float32),
        grid=(B, nt),
        in_specs=[
            pl.BlockSpec(memory_space=pl.ANY),                     # x (manual DMA)
            pl.BlockSpec((1, 1, c1p), lambda b, t: (b, 0, 0)),     # time embedding
            pl.BlockSpec((9, cinp, c1p), lambda b, t: (0, 0, 0)),  # conv1 taps
            pl.BlockSpec((1, c1p), lambda b, t: (0, 0)),           # shift1
            pl.BlockSpec((9, c1p, c2p), lambda b, t: (0, 0, 0)),   # conv2 taps
            pl.BlockSpec((1, c2p), lambda b, t: (0, 0)),           # shift2
            pl.BlockSpec((c2p, c2p), lambda b, t: (0, 0)),         # residual 1x1 W^T
            pl.BlockSpec((1, c2p), lambda b, t: (0, 0)),           # residual bias
        ],
        out_specs=pl.BlockSpec((1, 1, l2, c2p), lambda b, t: (b, t, 0, 0)),
        scratch_shapes=[
            pltpu.VMEM((2, l_slab, cinp), jnp.bfloat16),   # double-buffered input
            pltpu.VMEM((l1_pad, c1p), jnp.bfloat16),       # h1 (never leaves VMEM)
            pltpu.SemaphoreType.DMA((2,)),
        ],
        compiler_params=pltpu.CompilerParams(
            dimension_semantics=("parallel", "arbitrary"),
            vmem_limit_bytes=64 * 1024 * 1024),
    )(xp_flat, te3, w1t, shift1p, w2t, shift2p, wrp, brp)

    # drop the padded columns / channels and go back to NCHW
    out = out.reshape(B, nt, th, wp, c2p).reshape(B, H, wp, c2p)[:, :, :W, :c2]
    return jnp.transpose(out, (0, 3, 1, 2))


# ----------------------- pure-JAX reference (checking) -----------------------


def _ref_forward(x_nchw, timesteps, params):
    hi = jax.lax.Precision.HIGHEST

    def conv3x3(x, w, b):   # x NHWC, w torch (O,I,3,3)
        wh = jnp.transpose(w, (2, 3, 1, 0))
        y = jax.lax.conv_general_dilated(
            x, wh, (1, 1), "SAME",
            dimension_numbers=("NHWC", "HWIO", "NHWC"), precision=hi)
        return y + b

    def bn(x, g, be, m, v, eps=1e-5):
        return (x - m) / jnp.sqrt(v + eps) * g + be

    x = jnp.transpose(x_nchw, (0, 2, 3, 1))
    h1 = jax.nn.relu(bn(conv3x3(x, params["w1"], params["b1"]),
                        params["bn1_gamma"], params["bn1_beta"],
                        params["bn1_mean"], params["bn1_var"]))
    te = timesteps @ params["wte"].T + params["bte"]
    h1 = h1 + te[:, None, None, :]
    h2 = jax.nn.relu(bn(conv3x3(h1, params["w2"], params["b2"]),
                        params["bn2_gamma"], params["bn2_beta"],
                        params["bn2_mean"], params["bn2_var"]))
    identity = jnp.einsum("bhwc,oc->bhwo", h2, params["wr"][:, :, 0, 0],
                          precision=hi) + params["br"]
    out = h2 + identity
    return jnp.transpose(out, (0, 3, 1, 2))


# --------------------------------- main --------------------------------------


def _init_params(key, cin, c1, c2, temb):
    ks = jax.random.split(key, 8)
    f32 = jnp.float32
    return {
        "w1": 0.1 * jax.random.normal(ks[0], (c1, cin, 3, 3), f32),
        "b1": 0.1 * jax.random.normal(ks[1], (c1,), f32),
        "w2": 0.1 * jax.random.normal(ks[2], (c2, c1, 3, 3), f32),
        "b2": 0.1 * jax.random.normal(ks[3], (c2,), f32),
        "wte": 0.1 * jax.random.normal(ks[4], (c1, temb), f32),     # Linear(temb -> c1)
        "bte": 0.1 * jax.random.normal(ks[5], (c1,), f32),
        "wr": 0.1 * jax.random.normal(ks[6], (c2, c2, 1, 1), f32),  # 1x1 residual conv
        "br": 0.1 * jax.random.normal(ks[7], (c2,), f32),
        # BatchNorm2d (eval-mode, PyTorch default init)
        "bn1_gamma": jnp.ones((c1,), f32), "bn1_beta": jnp.zeros((c1,), f32),
        "bn1_mean": jnp.zeros((c1,), f32), "bn1_var": jnp.ones((c1,), f32),
        "bn2_gamma": jnp.ones((c2,), f32), "bn2_beta": jnp.zeros((c2,), f32),
        "bn2_mean": jnp.zeros((c2,), f32), "bn2_var": jnp.ones((c2,), f32),
    }


if __name__ == "__main__":
    B, Cin, H, W = 2, 8, 16, 16
    C1 = C2 = 8           # out_channels = [8, 8] (== in_channel -> no downsample)
    Temb = 32             # time_embed_channels (small for the example)

    key = jax.random.PRNGKey(0)
    kx, kt, kp = jax.random.split(key, 3)
    x = jax.random.normal(kx, (B, Cin, H, W), jnp.float32)
    timesteps = jax.random.normal(kt, (B, Temb), jnp.float32)
    params = _init_params(kp, Cin, C1, C2, Temb)

    out = resnet_block_forward(x, timesteps, params)
    out = jax.block_until_ready(out)
    assert out.shape == (B, C2, H, W), out.shape

    ref = _ref_forward(x, timesteps, params)
    # bf16 MXU operands (f32 accumulate, f32 skip path) -> bf16-level tolerance.
    assert jnp.allclose(out, ref, atol=3e-2, rtol=3e-2), \
        float(jnp.max(jnp.abs(out - ref)))

    print("KERNEL_OK")
</pallas_src>

<mosaic_0001>
module attributes {stable_mosaic.version = 11 : i64} {
  func.func @_resnet_block_kernel(%arg0: i32, %arg1: i32, %arg2: memref<2x504x128xbf16, #tpu.memory_space<any>>, %arg3: memref<1x1x128xf32, #tpu.memory_space<vmem>>, %arg4: memref<9x128x128xbf16, #tpu.memory_space<vmem>>, %arg5: memref<1x128xf32, #tpu.memory_space<vmem>>, %arg6: memref<9x128x128xbf16, #tpu.memory_space<vmem>>, %arg7: memref<1x128xf32, #tpu.memory_space<vmem>>, %arg8: memref<128x128xbf16, #tpu.memory_space<vmem>>, %arg9: memref<1x128xf32, #tpu.memory_space<vmem>>, %arg10: memref<1x1x192x128xf32, #tpu.memory_space<vmem>>, %arg11: memref<2x312x128xbf16, #tpu.memory_space<vmem>>, %arg12: memref<248x128xbf16, #tpu.memory_space<vmem>>, %arg13: memref<2x!tpu.dma_semaphore, #tpu.memory_space<semaphore_mem>>) attributes {dimension_semantics = [#tpu.dimension_semantics<parallel>, #tpu.dimension_semantics<arbitrary>], iteration_bounds = array<i64: 2, 2>, scalar_prefetch = 0 : i64, scratch_operands = 3 : i64, tpu.core_type = #tpu.core_type<tc>, window_params = [{}, {transform_indices = @transform_1, window_bounds = array<i64: 1, 1, 128>}, {pipeline_mode = #tpu.pipeline_mode<synchronous>, transform_indices = @transform_2, window_bounds = array<i64: 9, 128, 128>}, {pipeline_mode = #tpu.pipeline_mode<synchronous>, transform_indices = @transform_3, window_bounds = array<i64: 1, 128>}, {pipeline_mode = #tpu.pipeline_mode<synchronous>, transform_indices = @transform_4, window_bounds = array<i64: 9, 128, 128>}, {pipeline_mode = #tpu.pipeline_mode<synchronous>, transform_indices = @transform_5, window_bounds = array<i64: 1, 128>}, {pipeline_mode = #tpu.pipeline_mode<synchronous>, transform_indices = @transform_6, window_bounds = array<i64: 128, 128>}, {pipeline_mode = #tpu.pipeline_mode<synchronous>, transform_indices = @transform_7, window_bounds = array<i64: 1, 128>}, {transform_indices = @transform_8, window_bounds = array<i64: 1, 1, 192, 128>}]} {
    %c1_i32 = arith.constant 1 : i32
    %0 = arith.andi %arg1, %c1_i32 : i32
    %c0_i32 = arith.constant 0 : i32
    %1 = arith.cmpi eq, %arg1, %c0_i32 : i32
    %2 = arith.extui %1 : i1 to i32
    %c0_i32_0 = arith.constant 0 : i32
    %3 = arith.cmpi ne, %2, %c0_i32_0 : i32
    scf.if %3 {
      %c192_i32_148 = arith.constant 192 : i32
      %213 = arith.muli %arg1, %c192_i32_148 : i32
      %c0_i32_149 = arith.constant 0 : i32
      %214 = tpu.memref_slice %arg2[%arg0, %213, %c0_i32_149] : memref<2x504x128xbf16, #tpu.memory_space<any>> -> memref<1x312x128xbf16, #tpu.memory_space<any>>
      %215 = tpu.memref_squeeze %214 : memref<1x312x128xbf16, #tpu.memory_space<any>> -> memref<312x128xbf16, #tpu.memory_space<any>>
      %c0_i32_150 = arith.constant 0 : i32
      %c0_i32_151 = arith.constant 0 : i32
      %216 = tpu.memref_slice %arg11[%0, %c0_i32_150, %c0_i32_151] : memref<2x312x128xbf16, #tpu.memory_space<vmem>> -> memref<1x312x128xbf16, #tpu.memory_space<vmem>>
      %217 = tpu.memref_squeeze %216 : memref<1x312x128xbf16, #tpu.memory_space<vmem>> -> memref<312x128xbf16, #tpu.memory_space<vmem>>
      %218 = tpu.memref_slice %arg13[%0] : memref<2x!tpu.dma_semaphore, #tpu.memory_space<semaphore_mem>> -> memref<1x!tpu.dma_semaphore, #tpu.memory_space<semaphore_mem>>
      %219 = tpu.memref_squeeze %218 : memref<1x!tpu.dma_semaphore, #tpu.memory_space<semaphore_mem>> -> memref<!tpu.dma_semaphore, #tpu.memory_space<semaphore_mem>>
      tpu.enqueue_dma source(%215 : memref<312x128xbf16, #tpu.memory_space<any>>) target(%217 : memref<312x128xbf16, #tpu.memory_space<vmem>>) target_semaphore(%219 : memref<!tpu.dma_semaphore, #tpu.memory_space<semaphore_mem>>)
    } else {
    }
    %c1_i32_1 = arith.constant 1 : i32
    %4 = arith.addi %arg1, %c1_i32_1 : i32
    %c2_i32 = arith.constant 2 : i32
    %5 = arith.cmpi slt, %4, %c2_i32 : i32
    %6 = arith.extui %5 : i1 to i32
    %c0_i32_2 = arith.constant 0 : i32
    %7 = arith.cmpi ne, %6, %c0_i32_2 : i32
    scf.if %7 {
      %c1_i32_148 = arith.constant 1 : i32
      %213 = arith.addi %arg1, %c1_i32_148 : i32
      %c1_i32_149 = arith.constant 1 : i32
      %214 = arith.subi %c1_i32_149, %0 : i32
      %c192_i32_150 = arith.constant 192 : i32
      %215 = arith.muli %213, %c192_i32_150 : i32
      %c0_i32_151 = arith.constant 0 : i32
      %216 = tpu.memref_slice %arg2[%arg0, %215, %c0_i32_151] : memref<2x504x128xbf16, #tpu.memory_space<any>> -> memref<1x312x128xbf16, #tpu.memory_space<any>>
      %217 = tpu.memref_squeeze %216 : memref<1x312x128xbf16, #tpu.memory_space<any>> -> memref<312x128xbf16, #tpu.memory_space<any>>
      %c0_i32_152 = arith.constant 0 : i32
      %c0_i32_153 = arith.constant 0 : i32
      %218 = tpu.memref_slice %arg11[%214, %c0_i32_152, %c0_i32_153] : memref<2x312x128xbf16, #tpu.memory_space<vmem>> -> memref<1x312x128xbf16, #tpu.memory_space<vmem>>
      %219 = tpu.memref_squeeze %218 : memref<1x312x128xbf16, #tpu.memory_space<vmem>> -> memref<312x128xbf16, #tpu.memory_space<vmem>>
      %220 = tpu.memref_slice %arg13[%214] : memref<2x!tpu.dma_semaphore, #tpu.memory_space<semaphore_mem>> -> memref<1x!tpu.dma_semaphore, #tpu.memory_space<semaphore_mem>>
      %221 = tpu.memref_squeeze %220 : memref<1x!tpu.dma_semaphore, #tpu.memory_space<semaphore_mem>> -> memref<!tpu.dma_semaphore, #tpu.memory_space<semaphore_mem>>
      tpu.enqueue_dma source(%217 : memref<312x128xbf16, #tpu.memory_space<any>>) target(%219 : memref<312x128xbf16, #tpu.memory_space<vmem>>) target_semaphore(%221 : memref<!tpu.dma_semaphore, #tpu.memory_space<semaphore_mem>>)
    } else {
    }
    %c192_i32 = arith.constant 192 : i32
    %8 = arith.muli %arg1, %c192_i32 : i32
    %c0_i32_3 = arith.constant 0 : i32
    %9 = tpu.memref_slice %arg2[%arg0, %8, %c0_i32_3] : memref<2x504x128xbf16, #tpu.memory_space<any>> -> memref<1x312x128xbf16, #tpu.memory_space<any>>
    %10 = tpu.memref_squeeze %9 : memref<1x312x128xbf16, #tpu.memory_space<any>> -> memref<312x128xbf16, #tpu.memory_space<any>>
    %c0_i32_4 = arith.constant 0 : i32
    %c0_i32_5 = arith.constant 0 : i32
    %11 = tpu.memref_slice %arg11[%0, %c0_i32_4, %c0_i32_5] : memref<2x312x128xbf16, #tpu.memory_space<vmem>> -> memref<1x312x128xbf16, #tpu.memory_space<vmem>>
    %12 = tpu.memref_squeeze %11 : memref<1x312x128xbf16, #tpu.memory_space<vmem>> -> memref<312x128xbf16, #tpu.memory_space<vmem>>
    %13 = tpu.memref_slice %arg13[%0] : memref<2x!tpu.dma_semaphore, #tpu.memory_space<semaphore_mem>> -> memref<1x!tpu.dma_semaphore, #tpu.memory_space<semaphore_mem>>
    %14 = tpu.memref_squeeze %13 : memref<1x!tpu.dma_semaphore, #tpu.memory_space<semaphore_mem>> -> memref<!tpu.dma_semaphore, #tpu.memory_space<semaphore_mem>>
    tpu.wait_dma2 semaphore(%14 : memref<!tpu.dma_semaphore, #tpu.memory_space<semaphore_mem>>) src(%10 : memref<312x128xbf16, #tpu.memory_space<any>>) dst(%12 : memref<312x128xbf16, #tpu.memory_space<vmem>>)
    %cst = arith.constant 0.000000e+00 : f32
    %15 = vector.broadcast %cst : f32 to vector<240x128xf32>
    %c0_i32_6 = arith.constant 0 : i32
    %c0_i32_7 = arith.constant 0 : i32
    %16 = tpu.memref_slice %arg11[%0, %c0_i32_6, %c0_i32_7] : memref<2x312x128xbf16, #tpu.memory_space<vmem>> -> memref<1x312x128xbf16, #tpu.memory_space<vmem>>
    %17 = tpu.memref_squeeze %16 : memref<1x312x128xbf16, #tpu.memory_space<vmem>> -> memref<312x128xbf16, #tpu.memory_space<vmem>>
    %c0 = arith.constant 0 : index
    %c0_8 = arith.constant 0 : index
    %18 = vector.load %17[%c0, %c0_8] : memref<312x128xbf16, #tpu.memory_space<vmem>>, vector<240x128xbf16>
    %c0_9 = arith.constant 0 : index
    %c0_10 = arith.constant 0 : index
    %c0_11 = arith.constant 0 : index
    %19 = vector.load %arg4[%c0_9, %c0_10, %c0_11] : memref<9x128x128xbf16, #tpu.memory_space<vmem>>, vector<1x128x128xbf16>
    %20 = vector.shape_cast %19 : vector<1x128x128xbf16> to vector<128x128xbf16>
    %cst_12 = arith.constant dense<0.000000e+00> : vector<240x128xf32>
    %21 = tpu.matmul %18, %20, %cst_12 {dimension_numbers = #tpu.dot_dimension_numbers<[1], [0], [0], [1], [0, 0, 1, 1], [], []>} : vector<240x128xbf16>, vector<128x128xbf16>, vector<240x128xf32> -> vector<240x128xf32>
    %22 = arith.addf %15, %21 : vector<240x128xf32>
    %c0_i32_13 = arith.constant 0 : i32
    %c0_i32_14 = arith.constant 0 : i32
    %23 = tpu.memref_slice %arg11[%0, %c0_i32_13, %c0_i32_14] : memref<2x312x128xbf16, #tpu.memory_space<vmem>> -> memref<1x312x128xbf16, #tpu.memory_space<vmem>>
    %24 = tpu.memref_squeeze %23 : memref<1x312x128xbf16, #tpu.memory_space<vmem>> -> memref<312x128xbf16, #tpu.memory_space<vmem>>
    %c1 = arith.constant 1 : index
    %c0_15 = arith.constant 0 : index
    %25 = vector.load %24[%c1, %c0_15] : memref<312x128xbf16, #tpu.memory_space<vmem>>, vector<240x128xbf16>
    %c1_16 = arith.constant 1 : index
    %c0_17 = arith.constant 0 : index
    %c0_18 = arith.constant 0 : index
    %26 = vector.load %arg4[%c1_16, %c0_17, %c0_18] : memref<9x128x128xbf16, #tpu.memory_space<vmem>>, vector<1x128x128xbf16>
    %27 = vector.shape_cast %26 : vector<1x128x128xbf16> to vector<128x128xbf16>
    %cst_19 = arith.constant dense<0.000000e+00> : vector<240x128xf32>
    %28 = tpu.matmul %25, %27, %cst_19 {dimension_numbers = #tpu.dot_dimension_numbers<[1], [0], [0], [1], [0, 0, 1, 1], [], []>} : vector<240x128xbf16>, vector<128x128xbf16>, vector<240x128xf32> -> vector<240x128xf32>
    %29 = arith.addf %22, %28 : vector<240x128xf32>
    %c0_i32_20 = arith.constant 0 : i32
    %c0_i32_21 = arith.constant 0 : i32
    %30 = tpu.memref_slice %arg11[%0, %c0_i32_20, %c0_i32_21] : memref<2x312x128xbf16, #tpu.memory_space<vmem>> -> memref<1x312x128xbf16, #tpu.memory_space<vmem>>
    %31 = tpu.memref_squeeze %30 : memref<1x312x128xbf16, #tpu.memory_space<vmem>> -> memref<312x128xbf16, #tpu.memory_space<vmem>>
    %c2 = arith.constant 2 : index
    %c0_22 = arith.constant 0 : index
    %32 = vector.load %31[%c2, %c0_22] : memref<312x128xbf16, #tpu.memory_space<vmem>>, vector<240x128xbf16>
    %c2_23 = arith.constant 2 : index
    %c0_24 = arith.constant 0 : index
    %c0_25 = arith.constant 0 : index
    %33 = vector.load %arg4[%c2_23, %c0_24, %c0_25] : memref<9x128x128xbf16, #tpu.memory_space<vmem>>, vector<1x128x128xbf16>
    %34 = vector.shape_cast %33 : vector<1x128x128xbf16> to vector<128x128xbf16>
    %cst_26 = arith.constant dense<0.000000e+00> : vector<240x128xf32>
    %35 = tpu.matmul %32, %34, %cst_26 {dimension_numbers = #tpu.dot_dimension_numbers<[1], [0], [0], [1], [0, 0, 1, 1], [], []>} : vector<240x128xbf16>, vector<128x128xbf16>, vector<240x128xf32> -> vector<240x128xf32>
    %36 = arith.addf %29, %35 : vector<240x128xf32>
    %c0_i32_27 = arith.constant 0 : i32
    %c0_i32_28 = arith.constant 0 : i32
    %37 = tpu.memref_slice %arg11[%0, %c0_i32_27, %c0_i32_28] : memref<2x312x128xbf16, #tpu.memory_space<vmem>> -> memref<1x312x128xbf16, #tpu.memory_space<vmem>>
    %38 = tpu.memref_squeeze %37 : memref<1x312x128xbf16, #tpu.memory_space<vmem>> -> memref<312x128xbf16, #tpu.memory_space<vmem>>
    %c24 = arith.constant 24 : index
    %c0_29 = arith.constant 0 : index
    %39 = vector.load %38[%c24, %c0_29] : memref<312x128xbf16, #tpu.memory_space<vmem>>, vector<240x128xbf16>
    %c3 = arith.constant 3 : index
    %c0_30 = arith.constant 0 : index
    %c0_31 = arith.constant 0 : index
    %40 = vector.load %arg4[%c3, %c0_30, %c0_31] : memref<9x128x128xbf16, #tpu.memory_space<vmem>>, vector<1x128x128xbf16>
    %41 = vector.shape_cast %40 : vector<1x128x128xbf16> to vector<128x128xbf16>
    %cst_32 = arith.constant dense<0.000000e+00> : vector<240x128xf32>
    %42 = tpu.matmul %39, %41, %cst_32 {dimension_numbers = #tpu.dot_dimension_numbers<[1], [0], [0], [1], [0, 0, 1, 1], [], []>} : vector<240x128xbf16>, vector<128x128xbf16>, vector<240x128xf32> -> vector<240x128xf32>
    %43 = arith.addf %36, %42 : vector<240x128xf32>
    %c0_i32_33 = arith.constant 0 : i32
    %c0_i32_34 = arith.constant 0 : i32
    %44 = tpu.memref_slice %arg11[%0, %c0_i32_33, %c0_i32_34] : memref<2x312x128xbf16, #tpu.memory_space<vmem>> -> memref<1x312x128xbf16, #tpu.memory_space<vmem>>
    %45 = tpu.memref_squeeze %44 : memref<1x312x128xbf16, #tpu.memory_space<vmem>> -> memref<312x128xbf16, #tpu.memory_space<vmem>>
    %c25 = arith.constant 25 : index
    %c0_35 = arith.constant 0 : index
    %46 = vector.load %45[%c25, %c0_35] : memref<312x128xbf16, #tpu.memory_space<vmem>>, vector<240x128xbf16>
    %c4 = arith.constant 4 : index
    %c0_36 = arith.constant 0 : index
    %c0_37 = arith.constant 0 : index
    %47 = vector.load %arg4[%c4, %c0_36, %c0_37] : memref<9x128x128xbf16, #tpu.memory_space<vmem>>, vector<1x128x128xbf16>
    %48 = vector.shape_cast %47 : vector<1x128x128xbf16> to vector<128x128xbf16>
    %cst_38 = arith.constant dense<0.000000e+00> : vector<240x128xf32>
    %49 = tpu.matmul %46, %48, %cst_38 {dimension_numbers = #tpu.dot_dimension_numbers<[1], [0], [0], [1], [0, 0, 1, 1], [], []>} : vector<240x128xbf16>, vector<128x128xbf16>, vector<240x128xf32> -> vector<240x128xf32>
    %50 = arith.addf %43, %49 : vector<240x128xf32>
    %c0_i32_39 = arith.constant 0 : i32
    %c0_i32_40 = arith.constant 0 : i32
    %51 = tpu.memref_slice %arg11[%0, %c0_i32_39, %c0_i32_40] : memref<2x312x128xbf16, #tpu.memory_space<vmem>> -> memref<1x312x128xbf16, #tpu.memory_space<vmem>>
    %52 = tpu.memref_squeeze %51 : memref<1x312x128xbf16, #tpu.memory_space<vmem>> -> memref<312x128xbf16, #tpu.memory_space<vmem>>
    %c26 = arith.constant 26 : index
    %c0_41 = arith.constant 0 : index
    %53 = vector.load %52[%c26, %c0_41] : memref<312x128xbf16, #tpu.memory_space<vmem>>, vector<240x128xbf16>
    %c5 = arith.constant 5 : index
    %c0_42 = arith.constant 0 : index
    %c0_43 = arith.constant 0 : index
    %54 = vector.load %arg4[%c5, %c0_42, %c0_43] : memref<9x128x128xbf16, #tpu.memory_space<vmem>>, vector<1x128x128xbf16>
    %55 = vector.shape_cast %54 : vector<1x128x128xbf16> to vector<128x128xbf16>
    %cst_44 = arith.constant dense<0.000000e+00> : vector<240x128xf32>
    %56 = tpu.matmul %53, %55, %cst_44 {dimension_numbers = #tpu.dot_dimension_numbers<[1], [0], [0], [1], [0, 0, 1, 1], [], []>} : vector<240x128xbf16>, vector<128x128xbf16>, vector<240x128xf32> -> vector<240x128xf32>
    %57 = arith.addf %50, %56 : vector<240x128xf32>
    %c0_i32_45 = arith.constant 0 : i32
    %c0_i32_46 = arith.constant 0 : i32
    %58 = tpu.memref_slice %arg11[%0, %c0_i32_45, %c0_i32_46] : memref<2x312x128xbf16, #tpu.memory_space<vmem>> -> memref<1x312x128xbf16, #tpu.memory_space<vmem>>
    %59 = tpu.memref_squeeze %58 : memref<1x312x128xbf16, #tpu.memory_space<vmem>> -> memref<312x128xbf16, #tpu.memory_space<vmem>>
    %c48 = arith.constant 48 : index
    %c0_47 = arith.constant 0 : index
    %60 = vector.load %59[%c48, %c0_47] : memref<312x128xbf16, #tpu.memory_space<vmem>>, vector<240x128xbf16>
    %c6 = arith.constant 6 : index
    %c0_48 = arith.constant 0 : index
    %c0_49 = arith.constant 0 : index
    %61 = vector.load %arg4[%c6, %c0_48, %c0_49] : memref<9x128x128xbf16, #tpu.memory_space<vmem>>, vector<1x128x128xbf16>
    %62 = vector.shape_cast %61 : vector<1x128x128xbf16> to vector<128x128xbf16>
    %cst_50 = arith.constant dense<0.000000e+00> : vector<240x128xf32>
    %63 = tpu.matmul %60, %62, %cst_50 {dimension_numbers = #tpu.dot_dimension_numbers<[1], [0], [0], [1], [0, 0, 1, 1], [], []>} : vector<240x128xbf16>, vector<128x128xbf16>, vector<240x128xf32> -> vector<240x128xf32>
    %64 = arith.addf %57, %63 : vector<240x128xf32>
    %c0_i32_51 = arith.constant 0 : i32
    %c0_i32_52 = arith.constant 0 : i32
    %65 = tpu.memref_slice %arg11[%0, %c0_i32_51, %c0_i32_52] : memref<2x312x128xbf16, #tpu.memory_space<vmem>> -> memref<1x312x128xbf16, #tpu.memory_space<vmem>>
    %66 = tpu.memref_squeeze %65 : memref<1x312x128xbf16, #tpu.memory_space<vmem>> -> memref<312x128xbf16, #tpu.memory_space<vmem>>
    %c49 = arith.constant 49 : index
    %c0_53 = arith.constant 0 : index
    %67 = vector.load %66[%c49, %c0_53] : memref<312x128xbf16, #tpu.memory_space<vmem>>, vector<240x128xbf16>
    %c7 = arith.constant 7 : index
    %c0_54 = arith.constant 0 : index
    %c0_55 = arith.constant 0 : index
    %68 = vector.load %arg4[%c7, %c0_54, %c0_55] : memref<9x128x128xbf16, #tpu.memory_space<vmem>>, vector<1x128x128xbf16>
    %69 = vector.shape_cast %68 : vector<1x128x128xbf16> to vector<128x128xbf16>
    %cst_56 = arith.constant dense<0.000000e+00> : vector<240x128xf32>
    %70 = tpu.matmul %67, %69, %cst_56 {dimension_numbers = #tpu.dot_dimension_numbers<[1], [0], [0], [1], [0, 0, 1, 1], [], []>} : vector<240x128xbf16>, vector<128x128xbf16>, vector<240x128xf32> -> vector<240x128xf32>
    %71 = arith.addf %64, %70 : vector<240x128xf32>
    %c0_i32_57 = arith.constant 0 : i32
    %c0_i32_58 = arith.constant 0 : i32
    %72 = tpu.memref_slice %arg11[%0, %c0_i32_57, %c0_i32_58] : memref<2x312x128xbf16, #tpu.memory_space<vmem>> -> memref<1x312x128xbf16, #tpu.memory_space<vmem>>
    %73 = tpu.memref_squeeze %72 : memref<1x312x128xbf16, #tpu.memory_space<vmem>> -> memref<312x128xbf16, #tpu.memory_space<vmem>>
    %c50 = arith.constant 50 : index
    %c0_59 = arith.constant 0 : index
    %74 = vector.load %73[%c50, %c0_59] : memref<312x128xbf16, #tpu.memory_space<vmem>>, vector<240x128xbf16>
    %c8 = arith.constant 8 : index
    %c0_60 = arith.constant 0 : index
    %c0_61 = arith.constant 0 : index
    %75 = vector.load %arg4[%c8, %c0_60, %c0_61] : memref<9x128x128xbf16, #tpu.memory_space<vmem>>, vector<1x128x128xbf16>
    %76 = vector.shape_cast %75 : vector<1x128x128xbf16> to vector<128x128xbf16>
    %cst_62 = arith.constant dense<0.000000e+00> : vector<240x128xf32>
    %77 = tpu.matmul %74, %76, %cst_62 {dimension_numbers = #tpu.dot_dimension_numbers<[1], [0], [0], [1], [0, 0, 1, 1], [], []>} : vector<240x128xbf16>, vector<128x128xbf16>, vector<240x128xf32> -> vector<240x128xf32>
    %78 = arith.addf %71, %77 : vector<240x128xf32>
    %c0_63 = arith.constant 0 : index
    %c0_64 = arith.constant 0 : index
    %79 = vector.load %arg5[%c0_63, %c0_64] : memref<1x128xf32, #tpu.memory_space<vmem>>, vector<1x128xf32>
    %80 = vector.broadcast %79 : vector<1x128xf32> to vector<240x128xf32>
    %81 = arith.addf %78, %80 : vector<240x128xf32>
    %cst_65 = arith.constant 0.000000e+00 : f32
    %82 = vector.broadcast %cst_65 : f32 to vector<240x128xf32>
    %83 = arith.maximumf %81, %82 : vector<240x128xf32>
    %c0_66 = arith.constant 0 : index
    %c0_67 = arith.constant 0 : index
    %c0_68 = arith.constant 0 : index
    %84 = vector.load %arg3[%c0_66, %c0_67, %c0_68] : memref<1x1x128xf32, #tpu.memory_space<vmem>>, vector<1x1x128xf32>
    %85 = vector.shape_cast %84 : vector<1x1x128xf32> to vector<1x128xf32>
    %86 = vector.broadcast %85 : vector<1x128xf32> to vector<240x128xf32>
    %87 = arith.addf %83, %86 : vector<240x128xf32>
    %88 = tpu.iota {dimensions = array<i32: 0>} : vector<240x1xi32>
    %c0_i32_69 = arith.constant 0 : i32
    %89 = vector.broadcast %c0_i32_69 : i32 to vector<240x1xi32>
    %c24_i32 = arith.constant 24 : i32
    %90 = vector.broadcast %c24_i32 : i32 to vector<240x1xi32>
    %91 = arith.cmpi sge, %88, %90 : vector<240x1xi32>
    %92 = arith.extui %91 : vector<240x1xi1> to vector<240x1xi32>
    %93 = arith.addi %89, %92 : vector<240x1xi32>
    %c48_i32 = arith.constant 48 : i32
    %94 = vector.broadcast %c48_i32 : i32 to vector<240x1xi32>
    %95 = arith.cmpi sge, %88, %94 : vector<240x1xi32>
    %96 = arith.extui %95 : vector<240x1xi1> to vector<240x1xi32>
    %97 = arith.addi %93, %96 : vector<240x1xi32>
    %c72_i32 = arith.constant 72 : i32
    %98 = vector.broadcast %c72_i32 : i32 to vector<240x1xi32>
    %99 = arith.cmpi sge, %88, %98 : vector<240x1xi32>
    %100 = arith.extui %99 : vector<240x1xi1> to vector<240x1xi32>
    %101 = arith.addi %97, %100 : vector<240x1xi32>
    %c96_i32 = arith.constant 96 : i32
    %102 = vector.broadcast %c96_i32 : i32 to vector<240x1xi32>
    %103 = arith.cmpi sge, %88, %102 : vector<240x1xi32>
    %104 = arith.extui %103 : vector<240x1xi1> to vector<240x1xi32>
    %105 = arith.addi %101, %104 : vector<240x1xi32>
    %c120_i32 = arith.constant 120 : i32
    %106 = vector.broadcast %c120_i32 : i32 to vector<240x1xi32>
    %107 = arith.cmpi sge, %88, %106 : vector<240x1xi32>
    %108 = arith.extui %107 : vector<240x1xi1> to vector<240x1xi32>
    %109 = arith.addi %105, %108 : vector<240x1xi32>
    %c144_i32 = arith.constant 144 : i32
    %110 = vector.broadcast %c144_i32 : i32 to vector<240x1xi32>
    %111 = arith.cmpi sge, %88, %110 : vector<240x1xi32>
    %112 = arith.extui %111 : vector<240x1xi1> to vector<240x1xi32>
    %113 = arith.addi %109, %112 : vector<240x1xi32>
    %c168_i32 = arith.constant 168 : i32
    %114 = vector.broadcast %c168_i32 : i32 to vector<240x1xi32>
    %115 = arith.cmpi sge, %88, %114 : vector<240x1xi32>
    %116 = arith.extui %115 : vector<240x1xi1> to vector<240x1xi32>
    %117 = arith.addi %113, %116 : vector<240x1xi32>
    %c192_i32_70 = arith.constant 192 : i32
    %118 = vector.broadcast %c192_i32_70 : i32 to vector<240x1xi32>
    %119 = arith.cmpi sge, %88, %118 : vector<240x1xi32>
    %120 = arith.extui %119 : vector<240x1xi1> to vector<240x1xi32>
    %121 = arith.addi %117, %120 : vector<240x1xi32>
    %c216_i32 = arith.constant 216 : i32
    %122 = vector.broadcast %c216_i32 : i32 to vector<240x1xi32>
    %123 = arith.cmpi sge, %88, %122 : vector<240x1xi32>
    %124 = arith.extui %123 : vector<240x1xi1> to vector<240x1xi32>
    %125 = arith.addi %121, %124 : vector<240x1xi32>
    %c24_i32_71 = arith.constant 24 : i32
    %126 = vector.broadcast %c24_i32_71 : i32 to vector<240x1xi32>
    %127 = arith.muli %125, %126 : vector<240x1xi32>
    %128 = arith.subi %88, %127 : vector<240x1xi32>
    %c8_i32 = arith.constant 8 : i32
    %129 = arith.muli %arg1, %c8_i32 : i32
    %c1_i32_72 = arith.constant 1 : i32
    %130 = arith.subi %129, %c1_i32_72 : i32
    %131 = vector.broadcast %130 : i32 to vector<240x1xi32>
    %132 = arith.addi %131, %125 : vector<240x1xi32>
    %c0_i32_73 = arith.constant 0 : i32
    %133 = vector.broadcast %c0_i32_73 : i32 to vector<240x1xi32>
    %134 = arith.cmpi sge, %132, %133 : vector<240x1xi32>
    %c16_i32 = arith.constant 16 : i32
    %135 = vector.broadcast %c16_i32 : i32 to vector<240x1xi32>
    %136 = arith.cmpi slt, %132, %135 : vector<240x1xi32>
    %137 = arith.andi %134, %136 : vector<240x1xi1>
    %c1_i32_74 = arith.constant 1 : i32
    %138 = vector.broadcast %c1_i32_74 : i32 to vector<240x1xi32>
    %139 = arith.cmpi sge, %128, %138 : vector<240x1xi32>
    %140 = arith.andi %137, %139 : vector<240x1xi1>
    %c16_i32_75 = arith.constant 16 : i32
    %141 = vector.broadcast %c16_i32_75 : i32 to vector<240x1xi32>
    %142 = arith.cmpi sle, %128, %141 : vector<240x1xi32>
    %143 = arith.andi %140, %142 : vector<240x1xi1>
    %cst_76 = arith.constant 0.000000e+00 : f32
    %144 = vector.shape_cast %143 : vector<240x1xi1> to vector<240x1xi1>
    %145 = vector.broadcast %144 : vector<240x1xi1> to vector<240x128xi1>
    %146 = vector.broadcast %cst_76 : f32 to vector<240x128xf32>
    %147 = arith.select %145, %87, %146 : vector<240x128xi1>, vector<240x128xf32>
    %148 = arith.truncf %147 : vector<240x128xf32> to vector<240x128xbf16>
    %c0_77 = arith.constant 0 : index
    %c0_78 = arith.constant 0 : index
    %149 = vector.load %arg12[%c0_77, %c0_78] : memref<248x128xbf16, #tpu.memory_space<vmem>>, vector<240x128xbf16>
    tpu.vector_store %arg12[%c0_77, %c0_78], %148 {strides = array<i32>} : memref<248x128xbf16, #tpu.memory_space<vmem>>, vector<240x128xbf16>,
    %cst_79 = arith.constant 0.000000e+00 : bf16
    %150 = vector.broadcast %cst_79 : bf16 to vector<8x128xbf16>
    %c240 = arith.constant 240 : index
    %c0_80 = arith.constant 0 : index
    %151 = vector.load %arg12[%c240, %c0_80] : memref<248x128xbf16, #tpu.memory_space<vmem>>, vector<8x128xbf16>
    tpu.vector_store %arg12[%c240, %c0_80], %150 {strides = array<i32>} : memref<248x128xbf16, #tpu.memory_space<vmem>>, vector<8x128xbf16>,
    %cst_81 = arith.constant 0.000000e+00 : f32
    %152 = vector.broadcast %cst_81 : f32 to vector<192x128xf32>
    %c0_82 = arith.constant 0 : index
    %c0_83 = arith.constant 0 : index
    %153 = vector.load %arg12[%c0_82, %c0_83] : memref<248x128xbf16, #tpu.memory_space<vmem>>, vector<192x128xbf16>
    %c0_84 = arith.constant 0 : index
    %c0_85 = arith.constant 0 : index
    %c0_86 = arith.constant 0 : index
    %154 = vector.load %arg6[%c0_84, %c0_85, %c0_86] : memref<9x128x128xbf16, #tpu.memory_space<vmem>>, vector<1x128x128xbf16>
    %155 = vector.shape_cast %154 : vector<1x128x128xbf16> to vector<128x128xbf16>
    %cst_87 = arith.constant dense<0.000000e+00> : vector<192x128xf32>
    %156 = tpu.matmul %153, %155, %cst_87 {dimension_numbers = #tpu.dot_dimension_numbers<[1], [0], [0], [1], [0, 0, 1, 1], [], []>} : vector<192x128xbf16>, vector<128x128xbf16>, vector<192x128xf32> -> vector<192x128xf32>
    %157 = arith.addf %152, %156 : vector<192x128xf32>
    %c1_88 = arith.constant 1 : index
    %c0_89 = arith.constant 0 : index
    %158 = vector.load %arg12[%c1_88, %c0_89] : memref<248x128xbf16, #tpu.memory_space<vmem>>, vector<192x128xbf16>
    %c1_90 = arith.constant 1 : index
    %c0_91 = arith.constant 0 : index
    %c0_92 = arith.constant 0 : index
    %159 = vector.load %arg6[%c1_90, %c0_91, %c0_92] : memref<9x128x128xbf16, #tpu.memory_space<vmem>>, vector<1x128x128xbf16>
    %160 = vector.shape_cast %159 : vector<1x128x128xbf16> to vector<128x128xbf16>
    %cst_93 = arith.constant dense<0.000000e+00> : vector<192x128xf32>
    %161 = tpu.matmul %158, %160, %cst_93 {dimension_numbers = #tpu.dot_dimension_numbers<[1], [0], [0], [1], [0, 0, 1, 1], [], []>} : vector<192x128xbf16>, vector<128x128xbf16>, vector<192x128xf32> -> vector<192x128xf32>
    %162 = arith.addf %157, %161 : vector<192x128xf32>
    %c2_94 = arith.constant 2 : index
    %c0_95 = arith.constant 0 : index
    %163 = vector.load %arg12[%c2_94, %c0_95] : memref<248x128xbf16, #tpu.memory_space<vmem>>, vector<192x128xbf16>
    %c2_96 = arith.constant 2 : index
    %c0_97 = arith.constant 0 : index
    %c0_98 = arith.constant 0 : index
    %164 = vector.load %arg6[%c2_96, %c0_97, %c0_98] : memref<9x128x128xbf16, #tpu.memory_space<vmem>>, vector<1x128x128xbf16>
    %165 = vector.shape_cast %164 : vector<1x128x128xbf16> to vector<128x128xbf16>
    %cst_99 = arith.constant dense<0.000000e+00> : vector<192x128xf32>
    %166 = tpu.matmul %163, %165, %cst_99 {dimension_numbers = #tpu.dot_dimension_numbers<[1], [0], [0], [1], [0, 0, 1, 1], [], []>} : vector<192x128xbf16>, vector<128x128xbf16>, vector<192x128xf32> -> vector<192x128xf32>
    %167 = arith.addf %162, %166 : vector<192x128xf32>
    %c24_100 = arith.constant 24 : index
    %c0_101 = arith.constant 0 : index
    %168 = vector.load %arg12[%c24_100, %c0_101] : memref<248x128xbf16, #tpu.memory_space<vmem>>, vector<192x128xbf16>
    %c3_102 = arith.constant 3 : index
    %c0_103 = arith.constant 0 : index
    %c0_104 = arith.constant 0 : index
    %169 = vector.load %arg6[%c3_102, %c0_103, %c0_104] : memref<9x128x128xbf16, #tpu.memory_space<vmem>>, vector<1x128x128xbf16>
    %170 = vector.shape_cast %169 : vector<1x128x128xbf16> to vector<128x128xbf16>
    %cst_105 = arith.constant dense<0.000000e+00> : vector<192x128xf32>
    %171 = tpu.matmul %168, %170, %cst_105 {dimension_numbers = #tpu.dot_dimension_numbers<[1], [0], [0], [1], [0, 0, 1, 1], [], []>} : vector<192x128xbf16>, vector<128x128xbf16>, vector<192x128xf32> -> vector<192x128xf32>
    %172 = arith.addf %167, %171 : vector<192x128xf32>
    %c25_106 = arith.constant 25 : index
    %c0_107 = arith.constant 0 : index
    %173 = vector.load %arg12[%c25_106, %c0_107] : memref<248x128xbf16, #tpu.memory_space<vmem>>, vector<192x128xbf16>
    %c4_108 = arith.constant 4 : index
    %c0_109 = arith.constant 0 : index
    %c0_110 = arith.constant 0 : index
    %174 = vector.load %arg6[%c4_108, %c0_109, %c0_110] : memref<9x128x128xbf16, #tpu.memory_space<vmem>>, vector<1x128x128xbf16>
    %175 = vector.shape_cast %174 : vector<1x128x128xbf16> to vector<128x128xbf16>
    %cst_111 = arith.constant dense<0.000000e+00> : vector<192x128xf32>
    %176 = tpu.matmul %173, %175, %cst_111 {dimension_numbers = #tpu.dot_dimension_numbers<[1], [0], [0], [1], [0, 0, 1, 1], [], []>} : vector<192x128xbf16>, vector<128x128xbf16>, vector<192x128xf32> -> vector<192x128xf32>
    %177 = arith.addf %172, %176 : vector<192x128xf32>
    %c26_112 = arith.constant 26 : index
    %c0_113 = arith.constant 0 : index
    %178 = vector.load %arg12[%c26_112, %c0_113] : memref<248x128xbf16, #tpu.memory_space<vmem>>, vector<192x128xbf16>
    %c5_114 = arith.constant 5 : index
    %c0_115 = arith.constant 0 : index
    %c0_116 = arith.constant 0 : index
    %179 = vector.load %arg6[%c5_114, %c0_115, %c0_116] : memref<9x128x128xbf16, #tpu.memory_space<vmem>>, vector<1x128x128xbf16>
    %180 = vector.shape_cast %179 : vector<1x128x128xbf16> to vector<128x128xbf16>
    %cst_117 = arith.constant dense<0.000000e+00> : vector<192x128xf32>
    %181 = tpu.matmul %178, %180, %cst_117 {dimension_numbers = #tpu.dot_dimension_numbers<[1], [0], [0], [1], [0, 0, 1, 1], [], []>} : vector<192x128xbf16>, vector<128x128xbf16>, vector<192x128xf32> -> vector<192x128xf32>
    %182 = arith.addf %177, %181 : vector<192x128xf32>
    %c48_118 = arith.constant 48 : index
    %c0_119 = arith.constant 0 : index
    %183 = vector.load %arg12[%c48_118, %c0_119] : memref<248x128xbf16, #tpu.memory_space<vmem>>, vector<192x128xbf16>
    %c6_120 = arith.constant 6 : index
    %c0_121 = arith.constant 0 : index
    %c0_122 = arith.constant 0 : index
    %184 = vector.load %arg6[%c6_120, %c0_121, %c0_122] : memref<9x128x128xbf16, #tpu.memory_space<vmem>>, vector<1x128x128xbf16>
    %185 = vector.shape_cast %184 : vector<1x128x128xbf16> to vector<128x128xbf16>
    %cst_123 = arith.constant dense<0.000000e+00> : vector<192x128xf32>
    %186 = tpu.matmul %183, %185, %cst_123 {dimension_numbers = #tpu.dot_dimension_numbers<[1], [0], [0], [1], [0, 0, 1, 1], [], []>} : vector<192x128xbf16>, vector<128x128xbf16>, vector<192x128xf32> -> vector<192x128xf32>
    %187 = arith.addf %182, %186 : vector<192x128xf32>
    %c49_124 = arith.constant 49 : index
    %c0_125 = arith.constant 0 : index
    %188 = vector.load %arg12[%c49_124, %c0_125] : memref<248x128xbf16, #tpu.memory_space<vmem>>, vector<192x128xbf16>
    %c7_126 = arith.constant 7 : index
    %c0_127 = arith.constant 0 : index
    %c0_128 = arith.constant 0 : index
    %189 = vector.load %arg6[%c7_126, %c0_127, %c0_128] : memref<9x128x128xbf16, #tpu.memory_space<vmem>>, vector<1x128x128xbf16>
    %190 = vector.shape_cast %189 : vector<1x128x128xbf16> to vector<128x128xbf16>
    %cst_129 = arith.constant dense<0.000000e+00> : vector<192x128xf32>
    %191 = tpu.matmul %188, %190, %cst_129 {dimension_numbers = #tpu.dot_dimension_numbers<[1], [0], [0], [1], [0, 0, 1, 1], [], []>} : vector<192x128xbf16>, vector<128x128xbf16>, vector<192x128xf32> -> vector<192x128xf32>
    %192 = arith.addf %187, %191 : vector<192x128xf32>
    %c50_130 = arith.constant 50 : index
    %c0_131 = arith.constant 0 : index
    %193 = vector.load %arg12[%c50_130, %c0_131] : memref<248x128xbf16, #tpu.memory_space<vmem>>, vector<192x128xbf16>
    %c8_132 = arith.constant 8 : index
    %c0_133 = arith.constant 0 : index
    %c0_134 = arith.constant 0 : index
    %194 = vector.load %arg6[%c8_132, %c0_133, %c0_134] : memref<9x128x128xbf16, #tpu.memory_space<vmem>>, vector<1x128x128xbf16>
    %195 = vector.shape_cast %194 : vector<1x128x128xbf16> to vector<128x128xbf16>
    %cst_135 = arith.constant dense<0.000000e+00> : vector<192x128xf32>
    %196 = tpu.matmul %193, %195, %cst_135 {dimension_numbers = #tpu.dot_dimension_numbers<[1], [0], [0], [1], [0, 0, 1, 1], [], []>} : vector<192x128xbf16>, vector<128x128xbf16>, vector<192x128xf32> -> vector<192x128xf32>
    %197 = arith.addf %192, %196 : vector<192x128xf32>
    %c0_136 = arith.constant 0 : index
    %c0_137 = arith.constant 0 : index
    %198 = vector.load %arg7[%c0_136, %c0_137] : memref<1x128xf32, #tpu.memory_space<vmem>>, vector<1x128xf32>
    %199 = vector.broadcast %198 : vector<1x128xf32> to vector<192x128xf32>
    %200 = arith.addf %197, %199 : vector<192x128xf32>
    %cst_138 = arith.constant 0.000000e+00 : f32
    %201 = vector.broadcast %cst_138 : f32 to vector<192x128xf32>
    %202 = arith.maximumf %200, %201 : vector<192x128xf32>
    %203 = arith.truncf %202 : vector<192x128xf32> to vector<192x128xbf16>
    %c0_139 = arith.constant 0 : index
    %c0_140 = arith.constant 0 : index
    %204 = vector.load %arg8[%c0_139, %c0_140] : memref<128x128xbf16, #tpu.memory_space<vmem>>, vector<128x128xbf16>
    %cst_141 = arith.constant dense<0.000000e+00> : vector<192x128xf32>
    %205 = tpu.matmul %203, %204, %cst_141 {dimension_numbers = #tpu.dot_dimension_numbers<[1], [0], [0], [1], [0, 0, 1, 1], [], []>} : vector<192x128xbf16>, vector<128x128xbf16>, vector<192x128xf32> -> vector<192x128xf32>
    %206 = arith.addf %202, %205 : vector<192x128xf32>
    %c0_142 = arith.constant 0 : index
    %c0_143 = arith.constant 0 : index
    %207 = vector.load %arg9[%c0_142, %c0_143] : memref<1x128xf32, #tpu.memory_space<vmem>>, vector<1x128xf32>
    %208 = vector.broadcast %207 : vector<1x128xf32> to vector<192x128xf32>
    %209 = arith.addf %206, %208 : vector<192x128xf32>
    %c0_144 = arith.constant 0 : index
    %c0_145 = arith.constant 0 : index
    %c0_146 = arith.constant 0 : index
    %c0_147 = arith.constant 0 : index
    %210 = vector.load %arg10[%c0_144, %c0_145, %c0_146, %c0_147] : memref<1x1x192x128xf32, #tpu.memory_space<vmem>>, vector<1x1x192x128xf32>
    %211 = vector.shape_cast %210 : vector<1x1x192x128xf32> to vector<192x128xf32>
    %212 = vector.shape_cast %209 : vector<192x128xf32> to vector<1x1x192x128xf32>
    tpu.vector_store %arg10[%c0_144, %c0_145, %c0_146, %c0_147], %212 {strides = array<i32>} : memref<1x1x192x128xf32, #tpu.memory_space<vmem>>, vector<1x1x192x128xf32>,
    return
  }
  func.func @transform_1(%arg0: i32, %arg1: i32) -> (i32, i32, i32) {
    %c0_i32 = arith.constant 0 : i32
    %c0_i32_0 = arith.constant 0 : i32
    %c0_i32_1 = arith.constant 0 : i32
    return %arg0, %c0_i32, %c0_i32_0 : i32, i32, i32
  }
  func.func @transform_2(%arg0: i32, %arg1: i32) -> (i32, i32, i32) {
    %c0_i32 = arith.constant 0 : i32
    %c0_i32_0 = arith.constant 0 : i32
    %c0_i32_1 = arith.constant 0 : i32
    %c0_i32_2 = arith.constant 0 : i32
    return %c0_i32, %c0_i32_0, %c0_i32_1 : i32, i32, i32
  }
  func.func @transform_3(%arg0: i32, %arg1: i32) -> (i32, i32) {
    %c0_i32 = arith.constant 0 : i32
    %c0_i32_0 = arith.constant 0 : i32
    %c0_i32_1 = arith.constant 0 : i32
    return %c0_i32, %c0_i32_0 : i32, i32
  }
  func.func @transform_4(%arg0: i32, %arg1: i32) -> (i32, i32, i32) {
    %c0_i32 = arith.constant 0 : i32
    %c0_i32_0 = arith.constant 0 : i32
    %c0_i32_1 = arith.constant 0 : i32
    %c0_i32_2 = arith.constant 0 : i32
    return %c0_i32, %c0_i32_0, %c0_i32_1 : i32, i32, i32
  }
  func.func @transform_5(%arg0: i32, %arg1: i32) -> (i32, i32) {
    %c0_i32 = arith.constant 0 : i32
    %c0_i32_0 = arith.constant 0 : i32
    %c0_i32_1 = arith.constant 0 : i32
    return %c0_i32, %c0_i32_0 : i32, i32
  }
  func.func @transform_6(%arg0: i32, %arg1: i32) -> (i32, i32) {
    %c0_i32 = arith.constant 0 : i32
    %c0_i32_0 = arith.constant 0 : i32
    %c0_i32_1 = arith.constant 0 : i32
    return %c0_i32, %c0_i32_0 : i32, i32
  }
  func.func @transform_7(%arg0: i32, %arg1: i32) -> (i32, i32) {
    %c0_i32 = arith.constant 0 : i32
    %c0_i32_0 = arith.constant 0 : i32
    %c0_i32_1 = arith.constant 0 : i32
    return %c0_i32, %c0_i32_0 : i32, i32
  }
  func.func @transform_8(%arg0: i32, %arg1: i32) -> (i32, i32, i32, i32) {
    %c0_i32 = arith.constant 0 : i32
    %c0_i32_0 = arith.constant 0 : i32
    %c0_i32_1 = arith.constant 0 : i32
    return %arg0, %arg1, %c0_i32, %c0_i32_0 : i32, i32, i32, i32
  }
}

</mosaic_0001>

<llo_original>
// kernel: resnet_block_forward.1
$region0: #{resnet_block_forward.1}
  #allocation0 [shape = 'u32[]', space=smem, size = 0x4, offset = 0x4, fixed_abs, tag = 'smem constant byte address 0x4 - core index']
  #allocation1 [shape = 'u32[72,128]{1,0:T(1,128)}', space=vmem, size = 0x9000, scoped, tag = 'internal scratch']
  #allocation2 [shape = 'bf16[2,312,128]{2,1,0:T(8,128)(2,1)}', space=vmem, size = 0x27000, scoped, tag = 'scratch operand']
  #allocation3 [shape = 'bf16[248,128]{1,0:T(8,128)(2,1)}', space=vmem, size = 0xf800, scoped, tag = 'scratch operand']
  #allocation4 [shape = 's32[2]{0}', space=sflag, size = 0x8, scoped, tag = 'scratch operand']
  #allocation5 [shape = 's32[]', space=sflag, size = 0x4, offset = 0, fixed_abs, tag = 'sflag constant byte address 0x0 - dummy sync flag']
  #allocation6 [shape = 's32[]', space=sflag, size = 0x4, offset = 0, fixed_abs, tag = 'sflag constant byte address 0x0 - dummy sync flag']
  %s0 = inlined_call_operand.vmem [shape: bf16[2,504,128], index: 0, kind: input, shape index: {}]
  %s1 = inlined_call_operand.vmem [shape: f32[2,1,128], index: 1, kind: input, shape index: {}]
  %s2 = inlined_call_operand.vmem [shape: bf16[9,128,128], index: 2, kind: input, shape index: {}]
  %s3 = inlined_call_operand.vmem [shape: f32[1,128], index: 3, kind: input, shape index: {}]
  %s4 = inlined_call_operand.vmem [shape: bf16[9,128,128], index: 4, kind: input, shape index: {}]
  %s5 = inlined_call_operand.vmem [shape: f32[1,128], index: 5, kind: input, shape index: {}]
  %s6 = inlined_call_operand.vmem [shape: bf16[128,128], index: 6, kind: input, shape index: {}]
  %s7 = inlined_call_operand.vmem [shape: f32[1,128], index: 7, kind: input, shape index: {}]
  %s8 = inlined_call_operand.vmem [shape: f32[2,2,192,128], index: 8, kind: output, shape index: {}]
  %s9 = sld [smem:[#allocation0]]
  $region113: #{resnet_block_forward.1} parent=0
    _
  %s11 = ssub.s32 1, %s9
  %s12 = scalar_select 0, %s11, %s9
  loop: start=0, step=1, limit=6
  $region2: #{resnet_block_forward.1} parent=0 // loop_pre_header
    _
  $region3: #{resnet_block_forward.1} parent=0 // loop_header
    %s14 = sphi 0, %s18
    %p15 = scmp.ge.s32.totalorder %s14, 6
    %s21 = sphi 0, %s33
    %s22 = sphi 0, %s29
    %s23 = sphi 0, %s21
    %s24 = sphi 0, %s22
    %s25 = sphi 0, %s23
    %s26 = sphi 0, %s24
    %s36 = sphi 0, %s38
    %s39 = sphi 0, %s36
    %s40 = sphi 0, %s39
    %s56 = sphi 0, %s40
    %s60 = sphi 0, %s60
    %s62 = sphi 0, %s60
    %s63 = sphi 0, %s62
    %s77 = sphi 0, %s63
    %s81 = sphi 0, %s81
    %s83 = sphi 0, %s81
    %s84 = sphi 0, %s83
    %s98 = sphi 0, %s84
    %s102 = sphi 0, %s102
    %s104 = sphi 0, %s102
    %s105 = sphi 0, %s104
    %s119 = sphi 0, %s105
    %s123 = sphi 0, %s123
    %s125 = sphi 0, %s123
    %s126 = sphi 0, %s125
    %s140 = sphi 0, %s126
    %s144 = sphi 0, %s144
    %s146 = sphi 0, %s144
    %s147 = sphi 0, %s146
    %s161 = sphi 0, %s147
    %s165 = sphi 0, %s165
    %s167 = sphi 0, %s165
    %s168 = sphi 0, %s167
    %s182 = sphi 0, %s168
    %s190 = sphi 0, %s192
    %s193 = sphi 0, %s190
    %s194 = sphi 0, %s193
    %s210 = sphi 0, %s194
  $region4: #{resnet_block_forward.1} parent=0 // loop_header_branch
    %17 = sbr.rel (%p15) target = $region8
  $region5: #{resnet_block_forward.1} parent=0 // loop_body
    %s19 = ssub.s32 %s14, 1
    %s20 = ssub.s32 %s14, 2
    %s27 = sadd.s32 1, %s22
    %p28 = scmp.ge.s32.totalorder %s27, 2
    %s29 = scalar_select %p28, 0, %s27
    %s30 = sadd.s32 1, %s21
    %s31 = scalar_select %p28, %s30, %s21
    %p32 = scmp.ge.s32.totalorder %s31, 2
    %s33 = scalar_select %p32, 0, %s31
    %s34 = ssub.s32 %s21, %s33
    %p35 = scmp.eq.s32.totalorder %s34, 0
    %s37 = sadd.s32 %s36, 1
    %s38 = scalar_select %p35, %s36, %s37
    %p41 = pneg %p35
    %p42 = scmp.eq.s32.totalorder %s14, 3
    %p43 = por %p41, %p42
    %p44 = scmp.ne.s32.totalorder %s36, %s39
    %p45 = scmp.eq.s32.totalorder %s14, 0
    %p46 = por %p44, %p45
    %p47 = scmp.ne.s32.totalorder %s36, %s39
    %p48 = scmp.eq.s32.totalorder %s19, 3
    %p49 = por %p47, %p48
    %p50 = scmp.ne.s32.totalorder %s39, %s40
    %p51 = scmp.eq.s32.totalorder %s19, 0
    %p52 = por %p50, %p51
    %p53 = scmp.ne.s32.totalorder %s39, %s40
    %p54 = scmp.eq.s32.totalorder %s20, 3
    %p55 = por %p53, %p54
    %p57 = scmp.ne.s32.totalorder %s40, %s56
    %p58 = scmp.eq.s32.totalorder %s20, 0
    %p59 = por %p57, %p58
    %s61 = sadd.s32 %s60, 1
    %p64 = scmp.eq.s32.totalorder %s14, 3
    %p65 = scmp.ne.s32.totalorder %s60, %s62
    %p66 = scmp.eq.s32.totalorder %s14, 0
    %p67 = por %p65, %p66
    %p68 = scmp.ne.s32.totalorder %s60, %s62
    %p69 = scmp.eq.s32.totalorder %s19, 3
    %p70 = por %p68, %p69
    %p71 = scmp.ne.s32.totalorder %s62, %s63
    %p72 = scmp.eq.s32.totalorder %s19, 0
    %p73 = por %p71, %p72
    %p74 = scmp.ne.s32.totalorder %s62, %s63
    %p75 = scmp.eq.s32.totalorder %s20, 3
    %p76 = por %p74, %p75
    %p78 = scmp.ne.s32.totalorder %s63, %s77
    %p79 = scmp.eq.s32.totalorder %s20, 0
    %p80 = por %p78, %p79
    %s82 = sadd.s32 %s81, 1
    %p85 = scmp.eq.s32.totalorder %s14, 3
    %p86 = scmp.ne.s32.totalorder %s81, %s83
    %p87 = scmp.eq.s32.totalorder %s14, 0
    %p88 = por %p86, %p87
    %p89 = scmp.ne.s32.totalorder %s81, %s83
    %p90 = scmp.eq.s32.totalorder %s19, 3
    %p91 = por %p89, %p90
    %p92 = scmp.ne.s32.totalorder %s83, %s84
    %p93 = scmp.eq.s32.totalorder %s19, 0
    %p94 = por %p92, %p93
    %p95 = scmp.ne.s32.totalorder %s83, %s84
    %p96 = scmp.eq.s32.totalorder %s20, 3
    %p97 = por %p95, %p96
    %p99 = scmp.ne.s32.totalorder %s84, %s98
    %p100 = scmp.eq.s32.totalorder %s20, 0
    %p101 = por %p99, %p100
    %s103 = sadd.s32 %s102, 1
    %p106 = scmp.eq.s32.totalorder %s14, 3
    %p107 = scmp.ne.s32.totalorder %s102, %s104
    %p108 = scmp.eq.s32.totalorder %s14, 0
    %p109 = por %p107, %p108
    %p110 = scmp.ne.s32.totalorder %s102, %s104
    %p111 = scmp.eq.s32.totalorder %s19, 3
    %p112 = por %p110, %p111
    %p113 = scmp.ne.s32.totalorder %s104, %s105
    %p114 = scmp.eq.s32.totalorder %s19, 0
    %p115 = por %p113, %p114
    %p116 = scmp.ne.s32.totalorder %s104, %s105
    %p117 = scmp.eq.s32.totalorder %s20, 3
    %p118 = por %p116, %p117
    %p120 = scmp.ne.s32.totalorder %s105, %s119
    %p121 = scmp.eq.s32.totalorder %s20, 0
    %p122 = por %p120, %p121
    %s124 = sadd.s32 %s123, 1
    %p127 = scmp.eq.s32.totalorder %s14, 3
    %p128 = scmp.ne.s32.totalorder %s123, %s125
    %p129 = scmp.eq.s32.totalorder %s14, 0
    %p130 = por %p128, %p129
    %p131 = scmp.ne.s32.totalorder %s123, %s125
    %p132 = scmp.eq.s32.totalorder %s19, 3
    %p133 = por %p131, %p132
    %p134 = scmp.ne.s32.totalorder %s125, %s126
    %p135 = scmp.eq.s32.totalorder %s19, 0
    %p136 = por %p134, %p135
    %p137 = scmp.ne.s32.totalorder %s125, %s126
    %p138 = scmp.eq.s32.totalorder %s20, 3
    %p139 = por %p137, %p138
    %p141 = scmp.ne.s32.totalorder %s126, %s140
    %p142 = scmp.eq.s32.totalorder %s20, 0
    %p143 = por %p141, %p142
    %s145 = sadd.s32 %s144, 1
    %p148 = scmp.eq.s32.totalorder %s14, 3
    %p149 = scmp.ne.s32.totalorder %s144, %s146
    %p150 = scmp.eq.s32.totalorder %s14, 0
    %p151 = por %p149, %p150
    %p152 = scmp.ne.s32.totalorder %s144, %s146
    %p153 = scmp.eq.s32.totalorder %s19, 3
    %p154 = por %p152, %p153
    %p155 = scmp.ne.s32.totalorder %s146, %s147
    %p156 = scmp.eq.s32.totalorder %s19, 0
    %p157 = por %p155, %p156
    %p158 = scmp.ne.s32.totalorder %s146, %s147
    %p159 = scmp.eq.s32.totalorder %s20, 3
    %p160 = por %p158, %p159
    %p162 = scmp.ne.s32.totalorder %s147, %s161
    %p163 = scmp.eq.s32.totalorder %s20, 0
    %p164 = por %p162, %p163
    %s166 = sadd.s32 %s165, 1
    %p169 = scmp.eq.s32.totalorder %s14, 3
    %p170 = scmp.ne.s32.totalorder %s165, %s167
    %p171 = scmp.eq.s32.totalorder %s14, 0
    %p172 = por %p170, %p171
    %p173 = scmp.ne.s32.totalorder %s165, %s167
    %p174 = scmp.eq.s32.totalorder %s19, 3
    %p175 = por %p173, %p174
    %p176 = scmp.ne.s32.totalorder %s167, %s168
    %p177 = scmp.eq.s32.totalorder %s19, 0
    %p178 = por %p176, %p177
    %p179 = scmp.ne.s32.totalorder %s167, %s168
    %p180 = scmp.eq.s32.totalorder %s20, 3
    %p181 = por %p179, %p180
    %p183 = scmp.ne.s32.totalorder %s168, %s182
    %p184 = scmp.eq.s32.totalorder %s20, 0
    %p185 = por %p183, %p184
    %s186 = ssub.s32 %s21, %s33
    %s187 = ssub.s32 %s22, %s29
    %s188 = sor.u32 %s186, %s187
    %p189 = scmp.eq.s32.totalorder %s188, 0
    %s191 = sadd.s32 %s190, 1
    %s192 = scalar_select %p189, %s190, %s191
    %p195 = pneg %p189
    %p196 = scmp.eq.s32.totalorder %s14, 3
    %p197 = por %p195, %p196
    %p198 = scmp.ne.s32.totalorder %s190, %s193
    %p199 = scmp.eq.s32.totalorder %s14, 0
    %p200 = por %p198, %p199
    %p201 = scmp.ne.s32.totalorder %s190, %s193
    %p202 = scmp.eq.s32.totalorder %s19, 3
    %p203 = por %p201, %p202
    %p204 = scmp.ne.s32.totalorder %s193, %s194
    %p205 = scmp.eq.s32.totalorder %s19, 0
    %p206 = por %p204, %p205
    %p207 = scmp.ne.s32.totalorder %s193, %s194
    %p208 = scmp.eq.s32.totalorder %s20, 3
    %p209 = por %p207, %p208
    %p211 = scmp.ne.s32.totalorder %s194, %s210
    %p212 = scmp.eq.s32.totalorder %s20, 0
    %p213 = por %p211, %p212
    %p214 = scmp.le.s32.totalorder 1, %s14
    %p215 = scmp.lt.s32.totalorder %s14, 5
    %p216 = pnand %p214, %p215
    %p217 = pneg %p216
    // Predicated region
    $region9: #{resnet_block_forward.1} parent=5 // pred_check
      _
    $region10: #{resnet_block_forward.1} parent=5 // pred_check_branch
      %219 = sbr.rel (%p216) target = $region12
    $region11: #{resnet_block_forward.1} parent=5 // pred_region
      %s220 = ssub.s32 %s14, 1
      // Predicated region
      $region13: #{resnet_block_forward.1} parent=11 // pred_check
        %p221 = pneg %p73
      $region14: #{resnet_block_forward.1} parent=11 // pred_check_branch
        %223 = sbr.rel (%p221) target = $region16
      $region15: #{resnet_block_forward.1} parent=11 // pred_region
        _
      $region16: #{resnet_block_forward.1} parent=11 // pred_fallthru
        _
      // Predicated region
      $region17: #{resnet_block_forward.1} parent=11 // pred_check
        %p224 = pneg %p94
      $region18: #{resnet_block_forward.1} parent=11 // pred_check_branch
        %226 = sbr.rel (%p224) target = $region20
      $region19: #{resnet_block_forward.1} parent=11 // pred_region
        _
      $region20: #{resnet_block_forward.1} parent=11 // pred_fallthru
        _
      // Predicated region
      $region21: #{resnet_block_forward.1} parent=11 // pred_check
        %p227 = pneg %p115
      $region22: #{resnet_block_forward.1} parent=11 // pred_check_branch
        %229 = sbr.rel (%p227) target = $region24
      $region23: #{resnet_block_forward.1} parent=11 // pred_region
        _
      $region24: #{resnet_block_forward.1} parent=11 // pred_fallthru
        _
      // Predicated region
      $region25: #{resnet_block_forward.1} parent=11 // pred_check
        %p230 = pneg %p136
      $region26: #{resnet_block_forward.1} parent=11 // pred_check_branch
        %232 = sbr.rel (%p230) target = $region28
      $region27: #{resnet_block_forward.1} parent=11 // pred_region
        _
      $region28: #{resnet_block_forward.1} parent=11 // pred_fallthru
        _
      // Predicated region
      $region29: #{resnet_block_forward.1} parent=11 // pred_check
        %p233 = pneg %p157
      $region30: #{resnet_block_forward.1} parent=11 // pred_check_branch
        %235 = sbr.rel (%p233) target = $region32
      $region31: #{resnet_block_forward.1} parent=11 // pred_region
        _
      $region32: #{resnet_block_forward.1} parent=11 // pred_fallthru
        _
      // Predicated region
      $region33: #{resnet_block_forward.1} parent=11 // pred_check
        %p236 = pneg %p178
      $region34: #{resnet_block_forward.1} parent=11 // pred_check_branch
        %238 = sbr.rel (%p236) target = $region36
      $region35: #{resnet_block_forward.1} parent=11 // pred_region
        _
      $region36: #{resnet_block_forward.1} parent=11 // pred_fallthru
        _
    $region12: #{resnet_block_forward.1} parent=5 // pred_fallthru
      _
    %p239 = scmp.lt.s32.totalorder %s14, 4
    // Predicated region
    $region37: #{resnet_block_forward.1} parent=5 // pred_check
      %p240 = pneg %p239
    $region38: #{resnet_block_forward.1} parent=5 // pred_check_branch
      %242 = sbr.rel (%p240) target = $region40
    $region39: #{resnet_block_forward.1} parent=5 // pred_region
      // Predicated region
      $region41: #{resnet_block_forward.1} parent=39 // pred_check
        %p243 = pneg %p46
      $region42: #{resnet_block_forward.1} parent=39 // pred_check_branch
        %245 = sbr.rel (%p243) target = $region44
      $region43: #{resnet_block_forward.1} parent=39 // pred_region
        %p246 = scmp.lt.s32.totalorder %s21, 1
        %s247 = scalar_select %p246, %s21, 1
        %s248 = scalar_lea.vmem %s1, %s247
      $region44: #{resnet_block_forward.1} parent=39 // pred_fallthru
        _
    $region40: #{resnet_block_forward.1} parent=5 // pred_fallthru
      _
    %p249 = scmp.le.s32.totalorder 1, %s14
    %p250 = scmp.lt.s32.totalorder %s14, 5
    %p251 = pnand %p249, %p250
    %p252 = pneg %p251
    // Predicated region
    $region45: #{resnet_block_forward.1} parent=5 // pred_check
      _
    $region46: #{resnet_block_forward.1} parent=5 // pred_check_branch
      %254 = sbr.rel (%p251) target = $region48
    $region47: #{resnet_block_forward.1} parent=5 // pred_region
      %s255 = ssub.s32 %s14, 1
      %p256 = scmp.lt.s32.totalorder %s23, 1
      %s257 = scalar_select %p256, %s23, 1
      %s258 = scalar_lea.vmem %s1, %s257
      %p259 = pneg %p52
      %p260 = pneg %p49
      %p261 = pneg %p73
      %p262 = pneg %p70
      %p263 = pneg %p94
      %p264 = pneg %p91
      %p265 = pneg %p115
      %p266 = pneg %p112
      %p267 = pneg %p136
      %p268 = pneg %p133
      %p269 = pneg %p157
      %p270 = pneg %p154
      %p271 = pneg %p178
      %p272 = pneg %p175
      %p273 = pneg %p206
      %p274 = pneg %p203
      %p275 = scmp.lt.s32.totalorder %s23, 1
      %s276 = scalar_select %p275, %s23, 1
      %p277 = scmp.lt.s32.totalorder %s24, 1
      %s278 = scalar_select %p277, %s24, 1
      %s279 = smul.addr %s278, 24
      %s280 = smul.addr %s276, 48
      %s281 = sadd.s32 %s279, %s280
      %s282 = smul.addr %s281, 8
      %s283 = scalar_lea.vmem %s8, %s282
      %p284 = scmp.lt.s32.totalorder %s23, 1
      %s285 = scalar_select %p284, %s23, 1
      %s286 = scalar_lea.vmem %s1, %s285
      %p287 = scmp.lt.s32.totalorder %s23, 1
      %s288 = scalar_select %p287, %s23, 1
      %p289 = scmp.lt.s32.totalorder %s24, 1
      %s290 = scalar_select %p289, %s24, 1
      %s291 = smul.addr %s290, 24
      %s292 = smul.addr %s288, 48
      %s293 = sadd.s32 %s291, %s292
      %s294 = smul.addr %s293, 8
      %s295 = scalar_lea.vmem %s8, %s294
      %s297 = sand.u32 %s24, 1
      %p298 = scmp.eq.s32.totalorder %s24, 0
      // Predicated region
      $region49: #{resnet_block_forward.1} parent=47 // pred_check
        %p299 = pneg %p298
      $region50: #{resnet_block_forward.1} parent=47 // pred_check_branch
        %301 = sbr.rel (%p299) target = $region52
      $region51: #{resnet_block_forward.1} parent=47 // pred_region
        %s302 = smul.u32 %s24, 192
        %s303 = sshra.s32 %s302, 3
        %s304 = sand.u32 %s302, 7
        %s305 = smul.u32 %s23, 63
        %s306 = sadd.s32 %s303, %s305
        %s307 = smul.addr %s306, 4
        %s308 = scalar_lea.vmem %s0, %s307
        %s309 = smul.u32 %s297, 39
        %s310 = smul.addr %s309, 4
        %s311 = scalar_lea.vmem [#allocation2], %s310
        %s312 = scalar_lea.sflag [#allocation4], %s297
        // Predicated region
        $region53: #{resnet_block_forward.1} parent=51 // pred_check
          _
        $region54: #{resnet_block_forward.1} parent=51 // pred_check_branch
          %314 = sbr.rel (0) target = $region56
        $region55: #{resnet_block_forward.1} parent=51 // pred_region
          %s315 = scalar_lea.vmem %s308, 152
          %s316 = scalar_lea.vmem %s311, 152 [#allocation2]
          loop: start=0, step=1, limit=1
          $region57: #{resnet_block_forward.1} parent=55 // loop_pre_header
            _
          $region58: #{resnet_block_forward.1} parent=55 // loop_header
            %s318 = sphi 0, %s322
            %p319 = scmp.ge.s32.totalorder %s318, 1
            %s323 = sphi %s308, %s308
            %s324 = sphi %s311, %s311
          $region59: #{resnet_block_forward.1} parent=55 // loop_header_branch
            %321 = sbr.rel (%p319) target = $region63
          $region60: #{resnet_block_forward.1} parent=55 // loop_body
            %v325 = vld [vmem:[%s323] sm:$0xff]
            %326 = vst [vmem:[%s324] sm:$0xff] %v325
            %v327 = vld [vmem:[%s323 + $0x8] sm:$0xff]
            %328 = vst [vmem:[%s324 + $0x8] sm:$0xff] %v327
            %v329 = vld [vmem:[%s323 + $0x10] sm:$0xff]
            %330 = vst [vmem:[%s324 + $0x10] sm:$0xff] %v329
            %v331 = vld [vmem:[%s323 + $0x18] sm:$0xff]
            %332 = vst [vmem:[%s324 + $0x18] sm:$0xff] %v331
            %v333 = vld [vmem:[%s323 + $0x20] sm:$0xff]
            %334 = vst [vmem:[%s324 + $0x20] sm:$0xff] %v333
            %v335 = vld [vmem:[%s323 + $0x28] sm:$0xff]
            %336 = vst [vmem:[%s324 + $0x28] sm:$0xff] %v335
            %v337 = vld [vmem:[%s323 + $0x30] sm:$0xff]
            %338 = vst [vmem:[%s324 + $0x30] sm:$0xff] %v337
            %v339 = vld [vmem:[%s323 + $0x38] sm:$0xff]
            %340 = vst [vmem:[%s324 + $0x38] sm:$0xff] %v339
            %v341 = vld [vmem:[%s323 + $0x40] sm:$0xff]
            %342 = vst [vmem:[%s324 + $0x40] sm:$0xff] %v341
            %v343 = vld [vmem:[%s323 + $0x48] sm:$0xff]
            %344 = vst [vmem:[%s324 + $0x48] sm:$0xff] %v343
            %v345 = vld [vmem:[%s323 + $0x50] sm:$0xff]
            %346 = vst [vmem:[%s324 + $0x50] sm:$0xff] %v345
            %v347 = vld [vmem:[%s323 + $0x58] sm:$0xff]
            %348 = vst [vmem:[%s324 + $0x58] sm:$0xff] %v347
            %v349 = vld [vmem:[%s323 + $0x60] sm:$0xff]
            %350 = vst [vmem:[%s324 + $0x60] sm:$0xff] %v349
            %v351 = vld [vmem:[%s323 + $0x68] sm:$0xff]
            %352 = vst [vmem:[%s324 + $0x68] sm:$0xff] %v351
            %v353 = vld [vmem:[%s323 + $0x70] sm:$0xff]
            %354 = vst [vmem:[%s324 + $0x70] sm:$0xff] %v353
            %v355 = vld [vmem:[%s323 + $0x78] sm:$0xff]
            %356 = vst [vmem:[%s324 + $0x78] sm:$0xff] %v355
            %v357 = vld [vmem:[%s323 + $0x80] sm:$0xff]
            %358 = vst [vmem:[%s324 + $0x80] sm:$0xff] %v357
            %v359 = vld [vmem:[%s323 + $0x88] sm:$0xff]
            %360 = vst [vmem:[%s324 + $0x88] sm:$0xff] %v359
            %v361 = vld [vmem:[%s323 + $0x90] sm:$0xff]
            %362 = vst [vmem:[%s324 + $0x90] sm:$0xff] %v361
          $region61: #{resnet_block_forward.1} parent=55 // loop_footer
            %s322 = sadd.s32 1, %s318
          $region62: #{resnet_block_forward.1} parent=55 // loop_footer_branch
            %317 = sbr.rel target = $region58
          $region63: #{resnet_block_forward.1} parent=55 // loop_exit
            _
          %s364 = ssub.s32 16, 1
          loop: start=0, step=1, limit=1
          $region64: #{resnet_block_forward.1} parent=55 // loop_pre_header
            _
          $region65: #{resnet_block_forward.1} parent=55 // loop_header
            %s366 = sphi 0, %s370
            %p367 = scmp.ge.s32.totalorder %s366, 1
            %s371 = sphi %s315, %s315
            %s372 = sphi %s316, %s316
          $region66: #{resnet_block_forward.1} parent=55 // loop_header_branch
            %369 = sbr.rel (%p367) target = $region70
          $region67: #{resnet_block_forward.1} parent=55 // loop_body
            %v373 = vld [vmem:[%s371] sm:%s364]
            %374 = vst [vmem:[%s372] sm:%s364] %v373
          $region68: #{resnet_block_forward.1} parent=55 // loop_footer
            %s370 = sadd.s32 1, %s366
          $region69: #{resnet_block_forward.1} parent=55 // loop_footer_branch
            %365 = sbr.rel target = $region65
          $region70: #{resnet_block_forward.1} parent=55 // loop_exit
            _
        $region56: #{resnet_block_forward.1} parent=51 // pred_fallthru
          _
        // Predicated region
        $region71: #{resnet_block_forward.1} parent=51 // pred_check
          _
        $region72: #{resnet_block_forward.1} parent=51 // pred_check_branch
          %377 = sbr.rel (0) target = $region74
        $region73: #{resnet_block_forward.1} parent=51 // pred_region
          %378 = vsyncadd %s312, 2496
        $region74: #{resnet_block_forward.1} parent=51 // pred_fallthru
          _
      $region52: #{resnet_block_forward.1} parent=47 // pred_fallthru
        _
      %s379 = sadd.s32 %s24, 1
      %p380 = scmp.lt.s32.totalorder %s379, 2
      // Predicated region
      $region75: #{resnet_block_forward.1} parent=47 // pred_check
        %p381 = pneg %p380
      $region76: #{resnet_block_forward.1} parent=47 // pred_check_branch
        %383 = sbr.rel (%p381) target = $region78
      $region77: #{resnet_block_forward.1} parent=47 // pred_region
        %s384 = ssub.s32 1, %s297
        %s385 = smul.u32 %s379, 192
        %s386 = sshra.s32 %s385, 3
        %s387 = sand.u32 %s385, 7
        %s388 = smul.u32 %s23, 63
        %s389 = sadd.s32 %s386, %s388
        %s390 = smul.addr %s389, 4
        %s391 = scalar_lea.vmem %s0, %s390
        %s392 = smul.u32 %s384, 39
        %s393 = smul.addr %s392, 4
        %s394 = scalar_lea.vmem [#allocation2], %s393
        %s395 = scalar_lea.sflag [#allocation4], %s384
        // Predicated region
        $region79: #{resnet_block_forward.1} parent=77 // pred_check
          _
        $region80: #{resnet_block_forward.1} parent=77 // pred_check_branch
          %397 = sbr.rel (0) target = $region82
        $region81: #{resnet_block_forward.1} parent=77 // pred_region
          %s398 = scalar_lea.vmem %s391, 152
          %s399 = scalar_lea.vmem %s394, 152 [#allocation2]
          loop: start=0, step=1, limit=1
          $region83: #{resnet_block_forward.1} parent=81 // loop_pre_header
            _
          $region84: #{resnet_block_forward.1} parent=81 // loop_header
            %s401 = sphi 0, %s405
            %p402 = scmp.ge.s32.totalorder %s401, 1
            %s406 = sphi %s391, %s391
            %s407 = sphi %s394, %s394
          $region85: #{resnet_block_forward.1} parent=81 // loop_header_branch
            %404 = sbr.rel (%p402) target = $region89
          $region86: #{resnet_block_forward.1} parent=81 // loop_body
            %v408 = vld [vmem:[%s406] sm:$0xff]
            %409 = vst [vmem:[%s407] sm:$0xff] %v408
            %v410 = vld [vmem:[%s406 + $0x8] sm:$0xff]
            %411 = vst [vmem:[%s407 + $0x8] sm:$0xff] %v410
            %v412 = vld [vmem:[%s406 + $0x10] sm:$0xff]
            %413 = vst [vmem:[%s407 + $0x10] sm:$0xff] %v412
            %v414 = vld [vmem:[%s406 + $0x18] sm:$0xff]
            %415 = vst [vmem:[%s407 + $0x18] sm:$0xff] %v414
            %v416 = vld [vmem:[%s406 + $0x20] sm:$0xff]
            %417 = vst [vmem:[%s407 + $0x20] sm:$0xff] %v416
            %v418 = vld [vmem:[%s406 + $0x28] sm:$0xff]
            %419 = vst [vmem:[%s407 + $0x28] sm:$0xff] %v418
            %v420 = vld [vmem:[%s406 + $0x30] sm:$0xff]
            %421 = vst [vmem:[%s407 + $0x30] sm:$0xff] %v420
            %v422 = vld [vmem:[%s406 + $0x38] sm:$0xff]
            %423 = vst [vmem:[%s407 + $0x38] sm:$0xff] %v422
            %v424 = vld [vmem:[%s406 + $0x40] sm:$0xff]
            %425 = vst [vmem:[%s407 + $0x40] sm:$0xff] %v424
            %v426 = vld [vmem:[%s406 + $0x48] sm:$0xff]
            %427 = vst [vmem:[%s407 + $0x48] sm:$0xff] %v426
            %v428 = vld [vmem:[%s406 + $0x50] sm:$0xff]
            %429 = vst [vmem:[%s407 + $0x50] sm:$0xff] %v428
            %v430 = vld [vmem:[%s406 + $0x58] sm:$0xff]
            %431 = vst [vmem:[%s407 + $0x58] sm:$0xff] %v430
            %v432 = vld [vmem:[%s406 + $0x60] sm:$0xff]
            %433 = vst [vmem:[%s407 + $0x60] sm:$0xff] %v432
            %v434 = vld [vmem:[%s406 + $0x68] sm:$0xff]
            %435 = vst [vmem:[%s407 + $0x68] sm:$0xff] %v434
            %v436 = vld [vmem:[%s406 + $0x70] sm:$0xff]
            %437 = vst [vmem:[%s407 + $0x70] sm:$0xff] %v436
            %v438 = vld [vmem:[%s406 + $0x78] sm:$0xff]
            %439 = vst [vmem:[%s407 + $0x78] sm:$0xff] %v438
            %v440 = vld [vmem:[%s406 + $0x80] sm:$0xff]
            %441 = vst [vmem:[%s407 + $0x80] sm:$0xff] %v440
            %v442 = vld [vmem:[%s406 + $0x88] sm:$0xff]
            %443 = vst [vmem:[%s407 + $0x88] sm:$0xff] %v442
            %v444 = vld [vmem:[%s406 + $0x90] sm:$0xff]
            %445 = vst [vmem:[%s407 + $0x90] sm:$0xff] %v444
          $region87: #{resnet_block_forward.1} parent=81 // loop_footer
            %s405 = sadd.s32 1, %s401
          $region88: #{resnet_block_forward.1} parent=81 // loop_footer_branch
            %400 = sbr.rel target = $region84
          $region89: #{resnet_block_forward.1} parent=81 // loop_exit
            _
          %s447 = ssub.s32 16, 1
          loop: start=0, step=1, limit=1
          $region90: #{resnet_block_forward.1} parent=81 // loop_pre_header
            _
          $region91: #{resnet_block_forward.1} parent=81 // loop_header
            %s449 = sphi 0, %s453
            %p450 = scmp.ge.s32.totalorder %s449, 1
            %s454 = sphi %s398, %s398
            %s455 = sphi %s399, %s399
          $region92: #{resnet_block_forward.1} parent=81 // loop_header_branch
            %452 = sbr.rel (%p450) target = $region96
          $region93: #{resnet_block_forward.1} parent=81 // loop_body
            %v456 = vld [vmem:[%s454] sm:%s447]
            %457 = vst [vmem:[%s455] sm:%s447] %v456
          $region94: #{resnet_block_forward.1} parent=81 // loop_footer
            %s453 = sadd.s32 1, %s449
          $region95: #{resnet_block_forward.1} parent=81 // loop_footer_branch
            %448 = sbr.rel target = $region91
          $region96: #{resnet_block_forward.1} parent=81 // loop_exit
            _
        $region82: #{resnet_block_forward.1} parent=77 // pred_fallthru
          _
        // Predicated region
        $region97: #{resnet_block_forward.1} parent=77 // pred_check
          _
        $region98: #{resnet_block_forward.1} parent=77 // pred_check_branch
          %460 = sbr.rel (0) target = $region100
        $region99: #{resnet_block_forward.1} parent=77 // pred_region
          %461 = vsyncadd %s395, 2496
        $region100: #{resnet_block_forward.1} parent=77 // pred_fallthru
          _
      $region78: #{resnet_block_forward.1} parent=47 // pred_fallthru
        _
      %s462 = smul.u32 %s297, 39
      %s463 = smul.addr %s462, 4
      %s464 = scalar_lea.vmem [#allocation2], %s463
      %s465 = scalar_lea.sflag [#allocation4], %s297
      %s466 = smul.u32 4, 39
      %s467 = smul.u32 %s466, 1
      %s468 = sshll.u32 %s467, 4
      %469 = dma.done %s465, %s468
      %v470 = vld [vmem:[%s464] sm:$0xf]
      %v471 = vld [vmem:[%s464 + $0x4] sm:$0xf]
      %v472 = vld [vmem:[%s464 + $0x8] sm:$0xf]
      %v473 = vld [vmem:[%s464 + $0xc] sm:$0xf]
      %v474 = vld [vmem:[%s464 + $0x10] sm:$0xf]
      %v475 = vld [vmem:[%s464 + $0x14] sm:$0xf]
      %v476 = vld [vmem:[%s464 + $0x18] sm:$0xf]
      %v477 = vld [vmem:[%s464 + $0x1c] sm:$0xf]
      %v478 = vld [vmem:[%s464 + $0x20] sm:$0xf]
      %v479 = vld [vmem:[%s464 + $0x24] sm:$0xf]
      %v480 = vld [vmem:[%s464 + $0x28] sm:$0xf]
      %v481 = vld [vmem:[%s464 + $0x2c] sm:$0xf]
      %v482 = vld [vmem:[%s464 + $0x30] sm:$0xf]
      %v483 = vld [vmem:[%s464 + $0x34] sm:$0xf]
      %v484 = vld [vmem:[%s464 + $0x38] sm:$0xf]
      %v485 = vld [vmem:[%s464 + $0x3c] sm:$0xf]
      %v486 = vld [vmem:[%s464 + $0x40] sm:$0xf]
      %v487 = vld [vmem:[%s464 + $0x44] sm:$0xf]
      %v488 = vld [vmem:[%s464 + $0x48] sm:$0xf]
      %v489 = vld [vmem:[%s464 + $0x4c] sm:$0xf]
      %v490 = vld [vmem:[%s464 + $0x50] sm:$0xf]
      %v491 = vld [vmem:[%s464 + $0x54] sm:$0xf]
      %v492 = vld [vmem:[%s464 + $0x58] sm:$0xf]
      %v493 = vld [vmem:[%s464 + $0x5c] sm:$0xf]
      %v494 = vld [vmem:[%s464 + $0x60] sm:$0xf]
      %v495 = vld [vmem:[%s464 + $0x64] sm:$0xf]
      %v496 = vld [vmem:[%s464 + $0x68] sm:$0xf]
      %v497 = vld [vmem:[%s464 + $0x6c] sm:$0xf]
      %v498 = vld [vmem:[%s464 + $0x70] sm:$0xf]
      %v499 = vld [vmem:[%s464 + $0x74] sm:$0xf]
      %v500 = vld [vmem:[%s2] sm:$0xf]
      %v501 = vld [vmem:[%s2 + $0x4] sm:$0xf]
      %v502 = vld [vmem:[%s2 + $0x8] sm:$0xf]
      %v503 = vld [vmem:[%s2 + $0xc] sm:$0xf]
      %v504 = vld [vmem:[%s2 + $0x10] sm:$0xf]
      %v505 = vld [vmem:[%s2 + $0x14] sm:$0xf]
      %v506 = vld [vmem:[%s2 + $0x18] sm:$0xf]
      %v507 = vld [vmem:[%s2 + $0x1c] sm:$0xf]
      %v508 = vld [vmem:[%s2 + $0x20] sm:$0xf]
      %v509 = vld [vmem:[%s2 + $0x24] sm:$0xf]
      %v510 = vld [vmem:[%s2 + $0x28] sm:$0xf]
      %v511 = vld [vmem:[%s2 + $0x2c] sm:$0xf]
      %v512 = vld [vmem:[%s2 + $0x30] sm:$0xf]
      %v513 = vld [vmem:[%s2 + $0x34] sm:$0xf]
      %v514 = vld [vmem:[%s2 + $0x38] sm:$0xf]
      %v515 = vld [vmem:[%s2 + $0x3c] sm:$0xf]
      %v516 = vld [vmem:[%s464 + $0x78] sm:$0x1]
      %s517 = scalar_lea.vmem %s2, 64
      %v518 = vld [vmem:[%s517] sm:$0xf]
      %v519 = vld [vmem:[%s517 + $0x4] sm:$0xf]
      %v520 = vld [vmem:[%s517 + $0x8] sm:$0xf]
      %v521 = vld [vmem:[%s517 + $0xc] sm:$0xf]
      %v522 = vld [vmem:[%s517 + $0x10] sm:$0xf]
      %v523 = vld [vmem:[%s517 + $0x14] sm:$0xf]
      %v524 = vld [vmem:[%s517 + $0x18] sm:$0xf]
      %v525 = vld [vmem:[%s517 + $0x1c] sm:$0xf]
      %v526 = vld [vmem:[%s517 + $0x20] sm:$0xf]
      %v527 = vld [vmem:[%s517 + $0x24] sm:$0xf]
      %v528 = vld [vmem:[%s517 + $0x28] sm:$0xf]
      %v529 = vld [vmem:[%s517 + $0x2c] sm:$0xf]
      %v530 = vld [vmem:[%s517 + $0x30] sm:$0xf]
      %v531 = vld [vmem:[%s517 + $0x34] sm:$0xf]
      %v532 = vld [vmem:[%s517 + $0x38] sm:$0xf]
      %v533 = vld [vmem:[%s517 + $0x3c] sm:$0xf]
      %v565 = vunpack.c.l.b16 %v470
      %v566 = vunpack.c.l.b16 %v471
      %v567 = vunpack.c.l.b16 %v472
      %v568 = vunpack.c.l.b16 %v473
      %v569 = vunpack.c.l.b16 %v474
      %v570 = vunpack.c.l.b16 %v475
      %v571 = vunpack.c.l.b16 %v476
      %v572 = vunpack.c.l.b16 %v477
      %v573 = vunpack.c.l.b16 %v478
      %v574 = vunpack.c.l.b16 %v479
      %v575 = vunpack.c.l.b16 %v480
      %v576 = vunpack.c.l.b16 %v481
      %v577 = vunpack.c.l.b16 %v482
      %v578 = vunpack.c.l.b16 %v483
      %v579 = vunpack.c.l.b16 %v484
      %v580 = vunpack.c.l.b16 %v485
      %v581 = vunpack.c.l.b16 %v486
      %v582 = vunpack.c.l.b16 %v487
      %v583 = vunpack.c.l.b16 %v488
      %v584 = vunpack.c.l.b16 %v489
      %v585 = vunpack.c.l.b16 %v490
      %v586 = vunpack.c.l.b16 %v491
      %v587 = vunpack.c.l.b16 %v492
      %v588 = vunpack.c.l.b16 %v493
      %v589 = vunpack.c.l.b16 %v494
      %v590 = vunpack.c.l.b16 %v495
      %v591 = vunpack.c.l.b16 %v496
      %v592 = vunpack.c.l.b16 %v497
      %v593 = vunpack.c.l.b16 %v498
      %v594 = vunpack.c.l.b16 %v499
      %v595 = vunpack.c.l.b16 %v516
      %v596 = vpack.c.b16 %v566, %v565
      %v597 = vpack.c.b16 %v568, %v567
      %v598 = vpack.c.b16 %v570, %v569
      %v599 = vpack.c.b16 %v572, %v571
      %v600 = vpack.c.b16 %v574, %v573
      %v601 = vpack.c.b16 %v576, %v575
      %v602 = vpack.c.b16 %v578, %v577
      %v603 = vpack.c.b16 %v580, %v579
      %v604 = vpack.c.b16 %v582, %v581
      %v605 = vpack.c.b16 %v584, %v583
      %v606 = vpack.c.b16 %v586, %v585
      %v607 = vpack.c.b16 %v588, %v587
      %v608 = vpack.c.b16 %v590, %v589
      %v609 = vpack.c.b16 %v592, %v591
      %v610 = vpack.c.b16 %v594, %v593
      %v611 = vpack.c.b16 %v595, %v595
      %vm612 = vsmask.f32 7424
      %v614 = vshrl.u32 %v596, 16
      %v616 = vshll.u32 %v596, 16
      %v618 = vrot.slane %v616, 1
      %v619 = vor.u32 %v614, %v618
      %v621 = vshll.u32 %v597, 16
      %v623 = vrot.slane %v621, 1
      %v624 = vsel %vm612, %v619, %v623
      %v625 = vshrl.u32 %v597, 16
      %v627 = vor.u32 %v625, %v623
      %v629 = vshll.u32 %v598, 16
      %v631 = vrot.slane %v629, 1
      %v632 = vsel %vm612, %v627, %v631
      %v633 = vshrl.u32 %v598, 16
      %v635 = vor.u32 %v633, %v631
      %v637 = vshll.u32 %v599, 16
      %v639 = vrot.slane %v637, 1
      %v640 = vsel %vm612, %v635, %v639
      %v641 = vshrl.u32 %v599, 16
      %v643 = vor.u32 %v641, %v639
      %v645 = vshll.u32 %v600, 16
      %v647 = vrot.slane %v645, 1
      %v648 = vsel %vm612, %v643, %v647
      %v649 = vshrl.u32 %v600, 16
      %v651 = vor.u32 %v649, %v647
      %v653 = vshll.u32 %v601, 16
      %v655 = vrot.slane %v653, 1
      %v656 = vsel %vm612, %v651, %v655
      %v657 = vshrl.u32 %v601, 16
      %v659 = vor.u32 %v657, %v655
      %v661 = vshll.u32 %v602, 16
      %v663 = vrot.slane %v661, 1
      %v664 = vsel %vm612, %v659, %v663
      %v665 = vshrl.u32 %v602, 16
      %v667 = vor.u32 %v665, %v663
      %v669 = vshll.u32 %v603, 16
      %v671 = vrot.slane %v669, 1
      %v672 = vsel %vm612, %v667, %v671
      %v673 = vshrl.u32 %v603, 16
      %v675 = vor.u32 %v673, %v671
      %v677 = vshll.u32 %v604, 16
      %v679 = vrot.slane %v677, 1
      %v680 = vsel %vm612, %v675, %v679
      %v681 = vshrl.u32 %v604, 16
      %v683 = vor.u32 %v681, %v679
      %v685 = vshll.u32 %v605, 16
      %v687 = vrot.slane %v685, 1
      %v688 = vsel %vm612, %v683, %v687
      %v689 = vshrl.u32 %v605, 16
      %v691 = vor.u32 %v689, %v687
      %v693 = vshll.u32 %v606, 16
      %v695 = vrot.slane %v693, 1
      %v696 = vsel %vm612, %v691, %v695
      %v697 = vshrl.u32 %v606, 16
      %v699 = vor.u32 %v697, %v695
      %v701 = vshll.u32 %v607, 16
      %v703 = vrot.slane %v701, 1
      %v704 = vsel %vm612, %v699, %v703
      %v705 = vshrl.u32 %v607, 16
      %v707 = vor.u32 %v705, %v703
      %v709 = vshll.u32 %v608, 16
      %v711 = vrot.slane %v709, 1
      %v712 = vsel %vm612, %v707, %v711
      %v713 = vshrl.u32 %v608, 16
      %v715 = vor.u32 %v713, %v711
      %v717 = vshll.u32 %v609, 16
      %v719 = vrot.slane %v717, 1
      %v720 = vsel %vm612, %v715, %v719
      %v721 = vshrl.u32 %v609, 16
      %v723 = vor.u32 %v721, %v719
      %v725 = vshll.u32 %v610, 16
      %v727 = vrot.slane %v725, 1
      %v728 = vsel %vm612, %v723, %v727
      %v729 = vshrl.u32 %v610, 16
      %v731 = vor.u32 %v729, %v727
      %v733 = vshll.u32 %v611, 16
      %v735 = vrot.slane %v733, 1
      %v736 = vsel %vm612, %v731, %v735
      %v768 = vunpack.c.l.b16 %v518
      %v769 = vunpack.c.l.b16 %v519
      %v770 = vunpack.c.l.b16 %v520
      %v771 = vunpack.c.l.b16 %v521
      %v772 = vunpack.c.l.b16 %v522
      %v773 = vunpack.c.l.b16 %v523
      %v774 = vunpack.c.l.b16 %v524
      %v775 = vunpack.c.l.b16 %v525
      %v776 = vunpack.c.l.b16 %v526
      %v777 = vunpack.c.l.b16 %v527
      %v778 = vunpack.c.l.b16 %v528
      %v779 = vunpack.c.l.b16 %v529
      %v780 = vunpack.c.l.b16 %v530
      %v781 = vunpack.c.l.b16 %v531
      %v782 = vunpack.c.l.b16 %v532
      %v783 = vunpack.c.l.b16 %v533
      %v784 = vpack.c.b16 %v769, %v768
      %v785 = vpack.c.b16 %v771, %v770
      %v786 = vpack.c.b16 %v773, %v772
      %v787 = vpack.c.b16 %v775, %v774
      %v788 = vpack.c.b16 %v777, %v776
      %v789 = vpack.c.b16 %v779, %v778
      %v790 = vpack.c.b16 %v781, %v780
      %v791 = vpack.c.b16 %v783, %v782
      %800 = vmatpush.bf16.msra.mxu0 %v791
      %801 = vmatpush.bf16.msra.mxu0 %v790
      %802 = vmatpush.bf16.msra.mxu0 %v789
      %803 = vmatpush.bf16.msra.mxu0 %v788
      %804 = vmatpush.bf16.msra.mxu0 %v787
      %805 = vmatpush.bf16.msra.mxu0 %v786
      %806 = vmatpush.bf16.msra.mxu0 %v785
      %807 = vmatpush.bf16.msra.mxu0 %v784
      %808 = vmatmul.bf16.gmra.mxu0 %v624
      %v809 = vpop.f32.mrf.mxu0
      %v810 = vadd.f32 0.0, %v809
      %v811 = vpop.f32.mrf.mxu0
      %v812 = vadd.f32 0.0, %v811
      %813 = vmatmul.bf16.gmra.mxu0 %v632
      %v814 = vpop.f32.mrf.mxu0
      %v815 = vadd.f32 0.0, %v814
      %v816 = vpop.f32.mrf.mxu0
      %v817 = vadd.f32 0.0, %v816
      %818 = vmatmul.bf16.gmra.mxu0 %v640
      %v819 = vpop.f32.mrf.mxu0
      %v820 = vadd.f32 0.0, %v819
      %v821 = vpop.f32.mrf.mxu0
      %v822 = vadd.f32 0.0, %v821
      %823 = vmatmul.bf16.gmra.mxu0 %v648
      %v824 = vpop.f32.mrf.mxu0
      %v825 = vadd.f32 0.0, %v824
      %v826 = vpop.f32.mrf.mxu0
      %v827 = vadd.f32 0.0, %v826
      %828 = vmatmul.bf16.gmra.mxu0 %v656
      %v829 = vpop.f32.mrf.mxu0
      %v830 = vadd.f32 0.0, %v829
      %v831 = vpop.f32.mrf.mxu0
      %v832 = vadd.f32 0.0, %v831
      %833 = vmatmul.bf16.gmra.mxu0 %v664
      %v834 = vpop.f32.mrf.mxu0
      %v835 = vadd.f32 0.0, %v834
      %v836 = vpop.f32.mrf.mxu0
      %v837 = vadd.f32 0.0, %v836
      %838 = vmatmul.bf16.gmra.mxu0 %v672
      %v839 = vpop.f32.mrf.mxu0
      %v840 = vadd.f32 0.0, %v839
      %v841 = vpop.f32.mrf.mxu0
      %v842 = vadd.f32 0.0, %v841
      %843 = vmatmul.bf16.gmra.mxu0 %v680
      %v844 = vpop.f32.mrf.mxu0
      %v845 = vadd.f32 0.0, %v844
      %v846 = vpop.f32.mrf.mxu0
      %v847 = vadd.f32 0.0, %v846
      %848 = vmatmul.bf16.gmra.mxu0 %v688
      %v849 = vpop.f32.mrf.mxu0
      %v850 = vadd.f32 0.0, %v849
      %v851 = vpop.f32.mrf.mxu0
      %v852 = vadd.f32 0.0, %v851
      %853 = vmatmul.bf16.gmra.mxu0 %v696
      %v854 = vpop.f32.mrf.mxu0
      %v855 = vadd.f32 0.0, %v854
      %v856 = vpop.f32.mrf.mxu0
      %v857 = vadd.f32 0.0, %v856
      %858 = vmatmul.bf16.gmra.mxu0 %v704
      %v859 = vpop.f32.mrf.mxu0
      %v860 = vadd.f32 0.0, %v859
      %v861 = vpop.f32.mrf.mxu0
      %v862 = vadd.f32 0.0, %v861
      %863 = vmatmul.bf16.gmra.mxu0 %v712
      %v864 = vpop.f32.mrf.mxu0
      %v865 = vadd.f32 0.0, %v864
      %v866 = vpop.f32.mrf.mxu0
      %v867 = vadd.f32 0.0, %v866
      %868 = vmatmul.bf16.gmra.mxu0 %v720
      %v869 = vpop.f32.mrf.mxu0
      %v870 = vadd.f32 0.0, %v869
      %v871 = vpop.f32.mrf.mxu0
      %v872 = vadd.f32 0.0, %v871
      %873 = vmatmul.bf16.gmra.mxu0 %v728
      %v874 = vpop.f32.mrf.mxu0
      %v875 = vadd.f32 0.0, %v874
      %v876 = vpop.f32.mrf.mxu0
      %v877 = vadd.f32 0.0, %v876
      %878 = vmatmul.bf16.gmra.mxu0 %v736
      %v879 = vpop.f32.mrf.mxu0
      %v880 = vadd.f32 0.0, %v879
      %v881 = vpop.f32.mrf.mxu0
      %v882 = vadd.f32 0.0, %v881
      %883 = vdwg.mxu0
      %v915 = vunpack.c.l.b16 %v500
      %v916 = vunpack.c.l.b16 %v501
      %v917 = vunpack.c.l.b16 %v502
      %v918 = vunpack.c.l.b16 %v503
      %v919 = vunpack.c.l.b16 %v504
      %v920 = vunpack.c.l.b16 %v505
      %v921 = vunpack.c.l.b16 %v506
      %v922 = vunpack.c.l.b16 %v507
      %v923 = vunpack.c.l.b16 %v508
      %v924 = vunpack.c.l.b16 %v509
      %v925 = vunpack.c.l.b16 %v510
      %v926 = vunpack.c.l.b16 %v511
      %v927 = vunpack.c.l.b16 %v512
      %v928 = vunpack.c.l.b16 %v513
      %v929 = vunpack.c.l.b16 %v514
      %v930 = vunpack.c.l.b16 %v515
      %v931 = vpack.c.b16 %v916, %v915
      %v932 = vpack.c.b16 %v918, %v917
      %v933 = vpack.c.b16 %v920, %v919
      %v934 = vpack.c.b16 %v922, %v921
      %v935 = vpack.c.b16 %v924, %v923
      %v936 = vpack.c.b16 %v926, %v925
      %v937 = vpack.c.b16 %v928, %v927
      %v938 = vpack.c.b16 %v930, %v929
      %947 = vmatpush.bf16.msra.mxu0 %v938
      %948 = vmatpush.bf16.msra.mxu0 %v937
      %949 = vmatpush.bf16.msra.mxu0 %v936
      %950 = vmatpush.bf16.msra.mxu0 %v935
      %951 = vmatpush.bf16.msra.mxu0 %v934
      %952 = vmatpush.bf16.msra.mxu0 %v933
      %953 = vmatpush.bf16.msra.mxu0 %v932
      %954 = vmatpush.bf16.msra.mxu0 %v931
      %955 = vmatmul.bf16.gmra.mxu0 %v596
      %v956 = vpop.f32.mrf.mxu0
      %v957 = vadd.f32 %v810, %v956
      %v958 = vpop.f32.mrf.mxu0
      %v959 = vadd.f32 %v812, %v958
      %960 = vmatmul.bf16.gmra.mxu0 %v597
      %v961 = vpop.f32.mrf.mxu0
      %v962 = vadd.f32 %v815, %v961
      %v963 = vpop.f32.mrf.mxu0
      %v964 = vadd.f32 %v817, %v963
      %965 = vmatmul.bf16.gmra.mxu0 %v598
      %v966 = vpop.f32.mrf.mxu0
      %v967 = vadd.f32 %v820, %v966
      %v968 = vpop.f32.mrf.mxu0
      %v969 = vadd.f32 %v822, %v968
      %970 = vmatmul.bf16.gmra.mxu0 %v599
      %v971 = vpop.f32.mrf.mxu0
      %v972 = vadd.f32 %v825, %v971
      %v973 = vpop.f32.mrf.mxu0
      %v974 = vadd.f32 %v827, %v973
      %975 = vmatmul.bf16.gmra.mxu0 %v600
      %v976 = vpop.f32.mrf.mxu0
      %v977 = vadd.f32 %v830, %v976
      %v978 = vpop.f32.mrf.mxu0
      %v979 = vadd.f32 %v832, %v978
      %980 = vmatmul.bf16.gmra.mxu0 %v601
      %v981 = vpop.f32.mrf.mxu0
      %v982 = vadd.f32 %v835, %v981
      %v983 = vpop.f32.mrf.mxu0
      %v984 = vadd.f32 %v837, %v983
      %985 = vmatmul.bf16.gmra.mxu0 %v602
      %v986 = vpop.f32.mrf.mxu0
      %v987 = vadd.f32 %v840, %v986
      %v988 = vpop.f32.mrf.mxu0
      %v989 = vadd.f32 %v842, %v988
      %990 = vmatmul.bf16.gmra.mxu0 %v603
      %v991 = vpop.f32.mrf.mxu0
      %v992 = vadd.f32 %v845, %v991
      %v993 = vpop.f32.mrf.mxu0
      %v994 = vadd.f32 %v847, %v993
      %995 = vmatmul.bf16.gmra.mxu0 %v604
      %v996 = vpop.f32.mrf.mxu0
      %v997 = vadd.f32 %v850, %v996
      %v998 = vpop.f32.mrf.mxu0
      %v999 = vadd.f32 %v852, %v998
      %1000 = vmatmul.bf16.gmra.mxu0 %v605
      %v1001 = vpop.f32.mrf.mxu0
      %v1002 = vadd.f32 %v855, %v1001
      %v1003 = vpop.f32.mrf.mxu0
      %v1004 = vadd.f32 %v857, %v1003
      %1005 = vmatmul.bf16.gmra.mxu0 %v606
      %v1006 = vpop.f32.mrf.mxu0
      %v1007 = vadd.f32 %v860, %v1006
      %v1008 = vpop.f32.mrf.mxu0
      %v1009 = vadd.f32 %v862, %v1008
      %1010 = vmatmul.bf16.gmra.mxu0 %v607
      %v1011 = vpop.f32.mrf.mxu0
      %v1012 = vadd.f32 %v865, %v1011
      %v1013 = vpop.f32.mrf.mxu0
      %v1014 = vadd.f32 %v867, %v1013
      %1015 = vmatmul.bf16.gmra.mxu0 %v608
      %v1016 = vpop.f32.mrf.mxu0
      %v1017 = vadd.f32 %v870, %v1016
      %v1018 = vpop.f32.mrf.mxu0
      %v1019 = vadd.f32 %v872, %v1018
      %1020 = vmatmul.bf16.gmra.mxu0 %v609
      %v1021 = vpop.f32.mrf.mxu0
      %v1022 = vadd.f32 %v875, %v1021
      %v1023 = vpop.f32.mrf.mxu0
      %v1024 = vadd.f32 %v877, %v1023
      %1025 = vmatmul.bf16.gmra.mxu0 %v610
      %v1026 = vpop.f32.mrf.mxu0
      %v1027 = vadd.f32 %v880, %v1026
      %v1028 = vpop.f32.mrf.mxu0
      %v1029 = vadd.f32 %v882, %v1028
      %1030 = vdwg.mxu0
      %v1031 = vld [vmem:[%s464] sm:$0xe]
      %s1032 = scalar_lea.vmem %s2, 128
      %v1033 = vld [vmem:[%s1032] sm:$0xf]
      %v1034 = vld [vmem:[%s1032 + $0x4] sm:$0xf]
      %v1035 = vld [vmem:[%s1032 + $0x8] sm:$0xf]
      %v1036 = vld [vmem:[%s1032 + $0xc] sm:$0xf]
      %v1037 = vld [vmem:[%s1032 + $0x10] sm:$0xf]
      %v1038 = vld [vmem:[%s1032 + $0x14] sm:$0xf]
      %v1039 = vld [vmem:[%s1032 + $0x18] sm:$0xf]
      %v1040 = vld [vmem:[%s1032 + $0x1c] sm:$0xf]
      %v1041 = vld [vmem:[%s1032 + $0x20] sm:$0xf]
      %v1042 = vld [vmem:[%s1032 + $0x24] sm:$0xf]
      %v1043 = vld [vmem:[%s1032 + $0x28] sm:$0xf]
      %v1044 = vld [vmem:[%s1032 + $0x2c] sm:$0xf]
      %v1045 = vld [vmem:[%s1032 + $0x30] sm:$0xf]
      %v1046 = vld [vmem:[%s1032 + $0x34] sm:$0xf]
      %v1047 = vld [vmem:[%s1032 + $0x38] sm:$0xf]
      %v1048 = vld [vmem:[%s1032 + $0x3c] sm:$0xf]
      %v1050 = vunpack.c.l.b16 %v1031
      %v1051 = vpack.c.b16 %v566, %v1050
      %vm1052 = vcmask 1046528
      %v1053 = vrot.slane %v1051, 1
      %v1054 = vrot.slane %v597, 1
      %v1055 = vsel %vm1052, %v1053, %v1054
      %v1056 = vrot.slane %v598, 1
      %v1057 = vsel %vm1052, %v1054, %v1056
      %v1058 = vrot.slane %v599, 1
      %v1059 = vsel %vm1052, %v1056, %v1058
      %v1060 = vrot.slane %v600, 1
      %v1061 = vsel %vm1052, %v1058, %v1060
      %v1062 = vrot.slane %v601, 1
      %v1063 = vsel %vm1052, %v1060, %v1062
      %v1064 = vrot.slane %v602, 1
      %v1065 = vsel %vm1052, %v1062, %v1064
      %v1066 = vrot.slane %v603, 1
      %v1067 = vsel %vm1052, %v1064, %v1066
      %v1068 = vrot.slane %v604, 1
      %v1069 = vsel %vm1052, %v1066, %v1068
      %v1070 = vrot.slane %v605, 1
      %v1071 = vsel %vm1052, %v1068, %v1070
      %v1072 = vrot.slane %v606, 1
      %v1073 = vsel %vm1052, %v1070, %v1072
      %v1074 = vrot.slane %v607, 1
      %v1075 = vsel %vm1052, %v1072, %v1074
      %v1076 = vrot.slane %v608, 1
      %v1077 = vsel %vm1052, %v1074, %v1076
      %v1078 = vrot.slane %v609, 1
      %v1079 = vsel %vm1052, %v1076, %v1078
      %v1080 = vrot.slane %v610, 1
      %v1081 = vsel %vm1052, %v1078, %v1080
      %v1082 = vrot.slane %v611, 1
      %v1083 = vsel %vm1052, %v1080, %v1082
      %v1115 = vunpack.c.l.b16 %v1033
      %v1116 = vunpack.c.l.b16 %v1034
      %v1117 = vunpack.c.l.b16 %v1035
      %v1118 = vunpack.c.l.b16 %v1036
      %v1119 = vunpack.c.l.b16 %v1037
      %v1120 = vunpack.c.l.b16 %v1038
      %v1121 = vunpack.c.l.b16 %v1039
      %v1122 = vunpack.c.l.b16 %v1040
      %v1123 = vunpack.c.l.b16 %v1041
      %v1124 = vunpack.c.l.b16 %v1042
      %v1125 = vunpack.c.l.b16 %v1043
      %v1126 = vunpack.c.l.b16 %v1044
      %v1127 = vunpack.c.l.b16 %v1045
      %v1128 = vunpack.c.l.b16 %v1046
      %v1129 = vunpack.c.l.b16 %v1047
      %v1130 = vunpack.c.l.b16 %v1048
      %v1131 = vpack.c.b16 %v1116, %v1115
      %v1132 = vpack.c.b16 %v1118, %v1117
      %v1133 = vpack.c.b16 %v1120, %v1119
      %v1134 = vpack.c.b16 %v1122, %v1121
      %v1135 = vpack.c.b16 %v1124, %v1123
      %v1136 = vpack.c.b16 %v1126, %v1125
      %v1137 = vpack.c.b16 %v1128, %v1127
      %v1138 = vpack.c.b16 %v1130, %v1129
      %1147 = vmatpush.bf16.msra.mxu0 %v1138
      %1148 = vmatpush.bf16.msra.mxu0 %v1137
      %1149 = vmatpush.bf16.msra.mxu0 %v1136
      %1150 = vmatpush.bf16.msra.mxu0 %v1135
      %1151 = vmatpush.bf16.msra.mxu0 %v1134
      %1152 = vmatpush.bf16.msra.mxu0 %v1133
      %1153 = vmatpush.bf16.msra.mxu0 %v1132
      %1154 = vmatpush.bf16.msra.mxu0 %v1131
      %1155 = vmatmul.bf16.gmra.mxu0 %v1055
      %v1156 = vpop.f32.mrf.mxu0
      %v1157 = vadd.f32 0.0, %v1156
      %v1158 = vpop.f32.mrf.mxu0
      %v1159 = vadd.f32 0.0, %v1158
      %1160 = vmatmul.bf16.gmra.mxu0 %v1057
      %v1161 = vpop.f32.mrf.mxu0
      %v1162 = vadd.f32 0.0, %v1161
      %v1163 = vpop.f32.mrf.mxu0
      %v1164 = vadd.f32 0.0, %v1163
      %1165 = vmatmul.bf16.gmra.mxu0 %v1059
      %v1166 = vpop.f32.mrf.mxu0
      %v1167 = vadd.f32 0.0, %v1166
      %v1168 = vpop.f32.mrf.mxu0
      %v1169 = vadd.f32 0.0, %v1168
      %1170 = vmatmul.bf16.gmra.mxu0 %v1061
      %v1171 = vpop.f32.mrf.mxu0
      %v1172 = vadd.f32 0.0, %v1171
      %v1173 = vpop.f32.mrf.mxu0
      %v1174 = vadd.f32 0.0, %v1173
      %1175 = vmatmul.bf16.gmra.mxu0 %v1063
      %v1176 = vpop.f32.mrf.mxu0
      %v1177 = vadd.f32 0.0, %v1176
      %v1178 = vpop.f32.mrf.mxu0
      %v1179 = vadd.f32 0.0, %v1178
      %1180 = vmatmul.bf16.gmra.mxu0 %v1065
      %v1181 = vpop.f32.mrf.mxu0
      %v1182 = vadd.f32 0.0, %v1181
      %v1183 = vpop.f32.mrf.mxu0
      %v1184 = vadd.f32 0.0, %v1183
      %1185 = vmatmul.bf16.gmra.mxu0 %v1067
      %v1186 = vpop.f32.mrf.mxu0
      %v1187 = vadd.f32 0.0, %v1186
      %v1188 = vpop.f32.mrf.mxu0
      %v1189 = vadd.f32 0.0, %v1188
      %1190 = vmatmul.bf16.gmra.mxu0 %v1069
      %v1191 = vpop.f32.mrf.mxu0
      %v1192 = vadd.f32 0.0, %v1191
      %v1193 = vpop.f32.mrf.mxu0
      %v1194 = vadd.f32 0.0, %v1193
      %1195 = vmatmul.bf16.gmra.mxu0 %v1071
      %v1196 = vpop.f32.mrf.mxu0
      %v1197 = vadd.f32 0.0, %v1196
      %v1198 = vpop.f32.mrf.mxu0
      %v1199 = vadd.f32 0.0, %v1198
      %1200 = vmatmul.bf16.gmra.mxu0 %v1073
      %v1201 = vpop.f32.mrf.mxu0
      %v1202 = vadd.f32 0.0, %v1201
      %v1203 = vpop.f32.mrf.mxu0
      %v1204 = vadd.f32 0.0, %v1203
      %1205 = vmatmul.bf16.gmra.mxu0 %v1075
      %v1206 = vpop.f32.mrf.mxu0
      %v1207 = vadd.f32 0.0, %v1206
      %v1208 = vpop.f32.mrf.mxu0
      %v1209 = vadd.f32 0.0, %v1208
      %1210 = vmatmul.bf16.gmra.mxu0 %v1077
      %v1211 = vpop.f32.mrf.mxu0
      %v1212 = vadd.f32 0.0, %v1211
      %v1213 = vpop.f32.mrf.mxu0
      %v1214 = vadd.f32 0.0, %v1213
      %1215 = vmatmul.bf16.gmra.mxu0 %v1079
      %v1216 = vpop.f32.mrf.mxu0
      %v1217 = vadd.f32 0.0, %v1216
      %v1218 = vpop.f32.mrf.mxu0
      %v1219 = vadd.f32 0.0, %v1218
      %1220 = vmatmul.bf16.gmra.mxu0 %v1081
      %v1221 = vpop.f32.mrf.mxu0
      %v1222 = vadd.f32 0.0, %v1221
      %v1223 = vpop.f32.mrf.mxu0
      %v1224 = vadd.f32 0.0, %v1223
      %1225 = vmatmul.bf16.gmra.mxu0 %v1083
      %v1226 = vpop.f32.mrf.mxu0
      %v1227 = vadd.f32 0.0, %v1226
      %v1228 = vpop.f32.mrf.mxu0
      %v1229 = vadd.f32 0.0, %v1228
      %1230 = vdwg.mxu0
      %v1231 = vadd.f32 %v957, %v1157
      %v1232 = vadd.f32 %v959, %v1159
      %v1233 = vadd.f32 %v962, %v1162
      %v1234 = vadd.f32 %v964, %v1164
      %v1235 = vadd.f32 %v967, %v1167
      %v1236 = vadd.f32 %v969, %v1169
      %v1237 = vadd.f32 %v972, %v1172
      %v1238 = vadd.f32 %v974, %v1174
      %v1239 = vadd.f32 %v977, %v1177
      %v1240 = vadd.f32 %v979, %v1179
      %v1241 = vadd.f32 %v982, %v1182
      %v1242 = vadd.f32 %v984, %v1184
      %v1243 = vadd.f32 %v987, %v1187
      %v1244 = vadd.f32 %v989, %v1189
      %v1245 = vadd.f32 %v992, %v1192
      %v1246 = vadd.f32 %v994, %v1194
      %v1247 = vadd.f32 %v997, %v1197
      %v1248 = vadd.f32 %v999, %v1199
      %v1249 = vadd.f32 %v1002, %v1202
      %v1250 = vadd.f32 %v1004, %v1204
      %v1251 = vadd.f32 %v1007, %v1207
      %v1252 = vadd.f32 %v1009, %v1209
      %v1253 = vadd.f32 %v1012, %v1212
      %v1254 = vadd.f32 %v1014, %v1214
      %v1255 = vadd.f32 %v1017, %v1217
      %v1256 = vadd.f32 %v1019, %v1219
      %v1257 = vadd.f32 %v1022, %v1222
      %v1258 = vadd.f32 %v1024, %v1224
      %v1259 = vadd.f32 %v1027, %v1227
      %v1260 = vadd.f32 %v1029, %v1229
      %v1261 = vld [vmem:[%s464 + $0xc] sm:$0xf]
      %v1262 = vld [vmem:[%s464 + $0x10] sm:$0xf]
      %v1263 = vld [vmem:[%s464 + $0x14] sm:$0xf]
      %v1264 = vld [vmem:[%s464 + $0x18] sm:$0xf]
      %v1265 = vld [vmem:[%s464 + $0x1c] sm:$0xf]
      %v1266 = vld [vmem:[%s464 + $0x20] sm:$0xf]
      %v1267 = vld [vmem:[%s464 + $0x24] sm:$0xf]
      %v1268 = vld [vmem:[%s464 + $0x28] sm:$0xf]
      %v1269 = vld [vmem:[%s464 + $0x2c] sm:$0xf]
      %v1270 = vld [vmem:[%s464 + $0x30] sm:$0xf]
      %v1271 = vld [vmem:[%s464 + $0x34] sm:$0xf]
      %v1272 = vld [vmem:[%s464 + $0x38] sm:$0xf]
      %v1273 = vld [vmem:[%s464 + $0x3c] sm:$0xf]
      %v1274 = vld [vmem:[%s464 + $0x40] sm:$0xf]
      %v1275 = vld [vmem:[%s464 + $0x44] sm:$0xf]
      %v1276 = vld [vmem:[%s464 + $0x48] sm:$0xf]
      %v1277 = vld [vmem:[%s464 + $0x4c] sm:$0xf]
      %v1278 = vld [vmem:[%s464 + $0x50] sm:$0xf]
      %v1279 = vld [vmem:[%s464 + $0x54] sm:$0xf]
      %v1280 = vld [vmem:[%s464 + $0x58] sm:$0xf]
      %v1281 = vld [vmem:[%s464 + $0x5c] sm:$0xf]
      %v1282 = vld [vmem:[%s464 + $0x60] sm:$0xf]
      %v1283 = vld [vmem:[%s464 + $0x64] sm:$0xf]
      %v1284 = vld [vmem:[%s464 + $0x68] sm:$0xf]
      %v1285 = vld [vmem:[%s464 + $0x6c] sm:$0xf]
      %v1286 = vld [vmem:[%s464 + $0x70] sm:$0xf]
      %v1287 = vld [vmem:[%s464 + $0x74] sm:$0xf]
      %v1288 = vld [vmem:[%s464 + $0x78] sm:$0xf]
      %v1289 = vld [vmem:[%s464 + $0x7c] sm:$0xf]
      %v1290 = vld [vmem:[%s464 + $0x80] sm:$0xf]
      %s1291 = scalar_lea.vmem %s2, 192
      %v1292 = vld [vmem:[%s1291] sm:$0xf]
      %v1293 = vld [vmem:[%s1291 + $0x4] sm:$0xf]
      %v1294 = vld [vmem:[%s1291 + $0x8] sm:$0xf]
      %v1295 = vld [vmem:[%s1291 + $0xc] sm:$0xf]
      %v1296 = vld [vmem:[%s1291 + $0x10] sm:$0xf]
      %v1297 = vld [vmem:[%s1291 + $0x14] sm:$0xf]
      %v1298 = vld [vmem:[%s1291 + $0x18] sm:$0xf]
      %v1299 = vld [vmem:[%s1291 + $0x1c] sm:$0xf]
      %v1300 = vld [vmem:[%s1291 + $0x20] sm:$0xf]
      %v1301 = vld [vmem:[%s1291 + $0x24] sm:$0xf]
      %v1302 = vld [vmem:[%s1291 + $0x28] sm:$0xf]
      %v1303 = vld [vmem:[%s1291 + $0x2c] sm:$0xf]
      %v1304 = vld [vmem:[%s1291 + $0x30] sm:$0xf]
      %v1305 = vld [vmem:[%s1291 + $0x34] sm:$0xf]
      %v1306 = vld [vmem:[%s1291 + $0x38] sm:$0xf]
      %v1307 = vld [vmem:[%s1291 + $0x3c] sm:$0xf]
      %v1338 = vunpack.c.l.b16 %v1261
      %v1339 = vunpack.c.l.b16 %v1262
      %v1340 = vunpack.c.l.b16 %v1263
      %v1341 = vunpack.c.l.b16 %v1264
      %v1342 = vunpack.c.l.b16 %v1265
      %v1343 = vunpack.c.l.b16 %v1266
      %v1344 = vunpack.c.l.b16 %v1267
      %v1345 = vunpack.c.l.b16 %v1268
      %v1346 = vunpack.c.l.b16 %v1269
      %v1347 = vunpack.c.l.b16 %v1270
      %v1348 = vunpack.c.l.b16 %v1271
      %v1349 = vunpack.c.l.b16 %v1272
      %v1350 = vunpack.c.l.b16 %v1273
      %v1351 = vunpack.c.l.b16 %v1274
      %v1352 = vunpack.c.l.b16 %v1275
      %v1353 = vunpack.c.l.b16 %v1276
      %v1354 = vunpack.c.l.b16 %v1277
      %v1355 = vunpack.c.l.b16 %v1278
      %v1356 = vunpack.c.l.b16 %v1279
      %v1357 = vunpack.c.l.b16 %v1280
      %v1358 = vunpack.c.l.b16 %v1281
      %v1359 = vunpack.c.l.b16 %v1282
      %v1360 = vunpack.c.l.b16 %v1283
      %v1361 = vunpack.c.l.b16 %v1284
      %v1362 = vunpack.c.l.b16 %v1285
      %v1363 = vunpack.c.l.b16 %v1286
      %v1364 = vunpack.c.l.b16 %v1287
      %v1365 = vunpack.c.l.b16 %v1288
      %v1366 = vunpack.c.l.b16 %v1289
      %v1367 = vunpack.c.l.b16 %v1290
      %v1368 = vpack.c.b16 %v1339, %v1338
      %v1369 = vpack.c.b16 %v1341, %v1340
      %v1370 = vpack.c.b16 %v1343, %v1342
      %v1371 = vpack.c.b16 %v1345, %v1344
      %v1372 = vpack.c.b16 %v1347, %v1346
      %v1373 = vpack.c.b16 %v1349, %v1348
      %v1374 = vpack.c.b16 %v1351, %v1350
      %v1375 = vpack.c.b16 %v1353, %v1352
      %v1376 = vpack.c.b16 %v1355, %v1354
      %v1377 = vpack.c.b16 %v1357, %v1356
      %v1378 = vpack.c.b16 %v1359, %v1358
      %v1379 = vpack.c.b16 %v1361, %v1360
      %v1380 = vpack.c.b16 %v1363, %v1362
      %v1381 = vpack.c.b16 %v1365, %v1364
      %v1382 = vpack.c.b16 %v1367, %v1366
      %v1414 = vunpack.c.l.b16 %v1292
      %v1415 = vunpack.c.l.b16 %v1293
      %v1416 = vunpack.c.l.b16 %v1294
      %v1417 = vunpack.c.l.b16 %v1295
      %v1418 = vunpack.c.l.b16 %v1296
      %v1419 = vunpack.c.l.b16 %v1297
      %v1420 = vunpack.c.l.b16 %v1298
      %v1421 = vunpack.c.l.b16 %v1299
      %v1422 = vunpack.c.l.b16 %v1300
      %v1423 = vunpack.c.l.b16 %v1301
      %v1424 = vunpack.c.l.b16 %v1302
      %v1425 = vunpack.c.l.b16 %v1303
      %v1426 = vunpack.c.l.b16 %v1304
      %v1427 = vunpack.c.l.b16 %v1305
      %v1428 = vunpack.c.l.b16 %v1306
      %v1429 = vunpack.c.l.b16 %v1307
      %v1430 = vpack.c.b16 %v1415, %v1414
      %v1431 = vpack.c.b16 %v1417, %v1416
      %v1432 = vpack.c.b16 %v1419, %v1418
      %v1433 = vpack.c.b16 %v1421, %v1420
      %v1434 = vpack.c.b16 %v1423, %v1422
      %v1435 = vpack.c.b16 %v1425, %v1424
      %v1436 = vpack.c.b16 %v1427, %v1426
      %v1437 = vpack.c.b16 %v1429, %v1428
      %1446 = vmatpush.bf16.msra.mxu0 %v1437
      %1447 = vmatpush.bf16.msra.mxu0 %v1436
      %1448 = vmatpush.bf16.msra.mxu0 %v1435
      %1449 = vmatpush.bf16.msra.mxu0 %v1434
      %1450 = vmatpush.bf16.msra.mxu0 %v1433
      %1451 = vmatpush.bf16.msra.mxu0 %v1432
      %1452 = vmatpush.bf16.msra.mxu0 %v1431
      %1453 = vmatpush.bf16.msra.mxu0 %v1430
      %1454 = vmatmul.bf16.gmra.mxu0 %v1368
      %v1455 = vpop.f32.mrf.mxu0
      %v1456 = vadd.f32 0.0, %v1455
      %v1457 = vpop.f32.mrf.mxu0
      %v1458 = vadd.f32 0.0, %v1457
      %1459 = vmatmul.bf16.gmra.mxu0 %v1369
      %v1460 = vpop.f32.mrf.mxu0
      %v1461 = vadd.f32 0.0, %v1460
      %v1462 = vpop.f32.mrf.mxu0
      %v1463 = vadd.f32 0.0, %v1462
      %1464 = vmatmul.bf16.gmra.mxu0 %v1370
      %v1465 = vpop.f32.mrf.mxu0
      %v1466 = vadd.f32 0.0, %v1465
      %v1467 = vpop.f32.mrf.mxu0
      %v1468 = vadd.f32 0.0, %v1467
      %1469 = vmatmul.bf16.gmra.mxu0 %v1371
      %v1470 = vpop.f32.mrf.mxu0
      %v1471 = vadd.f32 0.0, %v1470
      %v1472 = vpop.f32.mrf.mxu0
      %v1473 = vadd.f32 0.0, %v1472
      %1474 = vmatmul.bf16.gmra.mxu0 %v1372
      %v1475 = vpop.f32.mrf.mxu0
      %v1476 = vadd.f32 0.0, %v1475
      %v1477 = vpop.f32.mrf.mxu0
      %v1478 = vadd.f32 0.0, %v1477
      %1479 = vmatmul.bf16.gmra.mxu0 %v1373
      %v1480 = vpop.f32.mrf.mxu0
      %v1481 = vadd.f32 0.0, %v1480
      %v1482 = vpop.f32.mrf.mxu0
      %v1483 = vadd.f32 0.0, %v1482
      %1484 = vmatmul.bf16.gmra.mxu0 %v1374
      %v1485 = vpop.f32.mrf.mxu0
      %v1486 = vadd.f32 0.0, %v1485
      %v1487 = vpop.f32.mrf.mxu0
      %v1488 = vadd.f32 0.0, %v1487
      %1489 = vmatmul.bf16.gmra.mxu0 %v1375
      %v1490 = vpop.f32.mrf.mxu0
      %v1491 = vadd.f32 0.0, %v1490
      %v1492 = vpop.f32.mrf.mxu0
      %v1493 = vadd.f32 0.0, %v1492
      %1494 = vmatmul.bf16.gmra.mxu0 %v1376
      %v1495 = vpop.f32.mrf.mxu0
      %v1496 = vadd.f32 0.0, %v1495
      %v1497 = vpop.f32.mrf.mxu0
      %v1498 = vadd.f32 0.0, %v1497
      %1499 = vmatmul.bf16.gmra.mxu0 %v1377
      %v1500 = vpop.f32.mrf.mxu0
      %v1501 = vadd.f32 0.0, %v1500
      %v1502 = vpop.f32.mrf.mxu0
      %v1503 = vadd.f32 0.0, %v1502
      %1504 = vmatmul.bf16.gmra.mxu0 %v1378
      %v1505 = vpop.f32.mrf.mxu0
      %v1506 = vadd.f32 0.0, %v1505
      %v1507 = vpop.f32.mrf.mxu0
      %v1508 = vadd.f32 0.0, %v1507
      %1509 = vmatmul.bf16.gmra.mxu0 %v1379
      %v1510 = vpop.f32.mrf.mxu0
      %v1511 = vadd.f32 0.0, %v1510
      %v1512 = vpop.f32.mrf.mxu0
      %v1513 = vadd.f32 0.0, %v1512
      %1514 = vmatmul.bf16.gmra.mxu0 %v1380
      %v1515 = vpop.f32.mrf.mxu0
      %v1516 = vadd.f32 0.0, %v1515
      %v1517 = vpop.f32.mrf.mxu0
      %v1518 = vadd.f32 0.0, %v1517
      %1519 = vmatmul.bf16.gmra.mxu0 %v1381
      %v1520 = vpop.f32.mrf.mxu0
      %v1521 = vadd.f32 0.0, %v1520
      %v1522 = vpop.f32.mrf.mxu0
      %v1523 = vadd.f32 0.0, %v1522
      %1524 = vmatmul.bf16.gmra.mxu0 %v1382
      %v1525 = vpop.f32.mrf.mxu0
      %v1526 = vadd.f32 0.0, %v1525
      %v1527 = vpop.f32.mrf.mxu0
      %v1528 = vadd.f32 0.0, %v1527
      %1529 = vdwg.mxu0
      %v1530 = vadd.f32 %v1231, %v1456
      %v1531 = vadd.f32 %v1232, %v1458
      %v1532 = vadd.f32 %v1233, %v1461
      %v1533 = vadd.f32 %v1234, %v1463
      %v1534 = vadd.f32 %v1235, %v1466
      %v1535 = vadd.f32 %v1236, %v1468
      %v1536 = vadd.f32 %v1237, %v1471
      %v1537 = vadd.f32 %v1238, %v1473
      %v1538 = vadd.f32 %v1239, %v1476
      %v1539 = vadd.f32 %v1240, %v1478
      %v1540 = vadd.f32 %v1241, %v1481
      %v1541 = vadd.f32 %v1242, %v1483
      %v1542 = vadd.f32 %v1243, %v1486
      %v1543 = vadd.f32 %v1244, %v1488
      %v1544 = vadd.f32 %v1245, %v1491
      %v1545 = vadd.f32 %v1246, %v1493
      %v1546 = vadd.f32 %v1247, %v1496
      %v1547 = vadd.f32 %v1248, %v1498
      %v1548 = vadd.f32 %v1249, %v1501
      %v1549 = vadd.f32 %v1250, %v1503
      %v1550 = vadd.f32 %v1251, %v1506
      %v1551 = vadd.f32 %v1252, %v1508
      %v1552 = vadd.f32 %v1253, %v1511
      %v1553 = vadd.f32 %v1254, %v1513
      %v1554 = vadd.f32 %v1255, %v1516
      %v1555 = vadd.f32 %v1256, %v1518
      %v1556 = vadd.f32 %v1257, %v1521
      %v1557 = vadd.f32 %v1258, %v1523
      %v1558 = vadd.f32 %v1259, %v1526
      %v1559 = vadd.f32 %v1260, %v1528
      %v1560 = vld [vmem:[%s464 + $0xc] sm:$0xf]
      %v1561 = vld [vmem:[%s464 + $0x10] sm:$0xf]
      %v1562 = vld [vmem:[%s464 + $0x14] sm:$0xf]
      %v1563 = vld [vmem:[%s464 + $0x18] sm:$0xf]
      %v1564 = vld [vmem:[%s464 + $0x1c] sm:$0xf]
      %v1565 = vld [vmem:[%s464 + $0x20] sm:$0xf]
      %v1566 = vld [vmem:[%s464 + $0x24] sm:$0xf]
      %v1567 = vld [vmem:[%s464 + $0x28] sm:$0xf]
      %v1568 = vld [vmem:[%s464 + $0x2c] sm:$0xf]
      %v1569 = vld [vmem:[%s464 + $0x30] sm:$0xf]
      %v1570 = vld [vmem:[%s464 + $0x34] sm:$0xf]
      %v1571 = vld [vmem:[%s464 + $0x38] sm:$0xf]
      %v1572 = vld [vmem:[%s464 + $0x3c] sm:$0xf]
      %v1573 = vld [vmem:[%s464 + $0x40] sm:$0xf]
      %v1574 = vld [vmem:[%s464 + $0x44] sm:$0xf]
      %v1575 = vld [vmem:[%s464 + $0x48] sm:$0xf]
      %v1576 = vld [vmem:[%s464 + $0x4c] sm:$0xf]
      %v1577 = vld [vmem:[%s464 + $0x50] sm:$0xf]
      %v1578 = vld [vmem:[%s464 + $0x54] sm:$0xf]
      %v1579 = vld [vmem:[%s464 + $0x58] sm:$0xf]
      %v1580 = vld [vmem:[%s464 + $0x5c] sm:$0xf]
      %v1581 = vld [vmem:[%s464 + $0x60] sm:$0xf]
      %v1582 = vld [vmem:[%s464 + $0x64] sm:$0xf]
      %v1583 = vld [vmem:[%s464 + $0x68] sm:$0xf]
      %v1584 = vld [vmem:[%s464 + $0x6c] sm:$0xf]
      %v1585 = vld [vmem:[%s464 + $0x70] sm:$0xf]
      %v1586 = vld [vmem:[%s464 + $0x74] sm:$0xf]
      %v1587 = vld [vmem:[%s464 + $0x78] sm:$0xf]
      %v1588 = vld [vmem:[%s464 + $0x7c] sm:$0xf]
      %v1589 = vld [vmem:[%s464 + $0x80] sm:$0xf]
      %v1590 = vld [vmem:[%s464 + $0x84] sm:$0x1]
      %s1591 = scalar_lea.vmem %s2, 256
      %v1592 = vld [vmem:[%s1591] sm:$0xf]
      %v1593 = vld [vmem:[%s1591 + $0x4] sm:$0xf]
      %v1594 = vld [vmem:[%s1591 + $0x8] sm:$0xf]
      %v1595 = vld [vmem:[%s1591 + $0xc] sm:$0xf]
      %v1596 = vld [vmem:[%s1591 + $0x10] sm:$0xf]
      %v1597 = vld [vmem:[%s1591 + $0x14] sm:$0xf]
      %v1598 = vld [vmem:[%s1591 + $0x18] sm:$0xf]
      %v1599 = vld [vmem:[%s1591 + $0x1c] sm:$0xf]
      %v1600 = vld [vmem:[%s1591 + $0x20] sm:$0xf]
      %v1601 = vld [vmem:[%s1591 + $0x24] sm:$0xf]
      %v1602 = vld [vmem:[%s1591 + $0x28] sm:$0xf]
      %v1603 = vld [vmem:[%s1591 + $0x2c] sm:$0xf]
      %v1604 = vld [vmem:[%s1591 + $0x30] sm:$0xf]
      %v1605 = vld [vmem:[%s1591 + $0x34] sm:$0xf]
      %v1606 = vld [vmem:[%s1591 + $0x38] sm:$0xf]
      %v1607 = vld [vmem:[%s1591 + $0x3c] sm:$0xf]
      %v1639 = vunpack.c.l.b16 %v1560
      %v1640 = vunpack.c.l.b16 %v1561
      %v1641 = vunpack.c.l.b16 %v1562
      %v1642 = vunpack.c.l.b16 %v1563
      %v1643 = vunpack.c.l.b16 %v1564
      %v1644 = vunpack.c.l.b16 %v1565
      %v1645 = vunpack.c.l.b16 %v1566
      %v1646 = vunpack.c.l.b16 %v1567
      %v1647 = vunpack.c.l.b16 %v1568
      %v1648 = vunpack.c.l.b16 %v1569
      %v1649 = vunpack.c.l.b16 %v1570
      %v1650 = vunpack.c.l.b16 %v1571
      %v1651 = vunpack.c.l.b16 %v1572
      %v1652 = vunpack.c.l.b16 %v1573
      %v1653 = vunpack.c.l.b16 %v1574
      %v1654 = vunpack.c.l.b16 %v1575
      %v1655 = vunpack.c.l.b16 %v1576
      %v1656 = vunpack.c.l.b16 %v1577
      %v1657 = vunpack.c.l.b16 %v1578
      %v1658 = vunpack.c.l.b16 %v1579
      %v1659 = vunpack.c.l.b16 %v1580
      %v1660 = vunpack.c.l.b16 %v1581
      %v1661 = vunpack.c.l.b16 %v1582
      %v1662 = vunpack.c.l.b16 %v1583
      %v1663 = vunpack.c.l.b16 %v1584
      %v1664 = vunpack.c.l.b16 %v1585
      %v1665 = vunpack.c.l.b16 %v1586
      %v1666 = vunpack.c.l.b16 %v1587
      %v1667 = vunpack.c.l.b16 %v1588
      %v1668 = vunpack.c.l.b16 %v1589
      %v1669 = vunpack.c.l.b16 %v1590
      %v1670 = vpack.c.b16 %v1640, %v1639
      %v1671 = vpack.c.b16 %v1642, %v1641
      %v1672 = vpack.c.b16 %v1644, %v1643
      %v1673 = vpack.c.b16 %v1646, %v1645
      %v1674 = vpack.c.b16 %v1648, %v1647
      %v1675 = vpack.c.b16 %v1650, %v1649
      %v1676 = vpack.c.b16 %v1652, %v1651
      %v1677 = vpack.c.b16 %v1654, %v1653
      %v1678 = vpack.c.b16 %v1656, %v1655
      %v1679 = vpack.c.b16 %v1658, %v1657
      %v1680 = vpack.c.b16 %v1660, %v1659
      %v1681 = vpack.c.b16 %v1662, %v1661
      %v1682 = vpack.c.b16 %v1664, %v1663
      %v1683 = vpack.c.b16 %v1666, %v1665
      %v1684 = vpack.c.b16 %v1668, %v1667
      %v1685 = vpack.c.b16 %v1669, %v1669
      %v1687 = vshrl.u32 %v1670, 16
      %v1689 = vshll.u32 %v1670, 16
      %v1691 = vrot.slane %v1689, 1
      %v1692 = vor.u32 %v1687, %v1691
      %v1694 = vshll.u32 %v1671, 16
      %v1696 = vrot.slane %v1694, 1
      %v1697 = vsel %vm612, %v1692, %v1696
      %v1698 = vshrl.u32 %v1671, 16
      %v1700 = vor.u32 %v1698, %v1696
      %v1702 = vshll.u32 %v1672, 16
      %v1704 = vrot.slane %v1702, 1
      %v1705 = vsel %vm612, %v1700, %v1704
      %v1706 = vshrl.u32 %v1672, 16
      %v1708 = vor.u32 %v1706, %v1704
      %v1710 = vshll.u32 %v1673, 16
      %v1712 = vrot.slane %v1710, 1
      %v1713 = vsel %vm612, %v1708, %v1712
      %v1714 = vshrl.u32 %v1673, 16
      %v1716 = vor.u32 %v1714, %v1712
      %v1718 = vshll.u32 %v1674, 16
      %v1720 = vrot.slane %v1718, 1
      %v1721 = vsel %vm612, %v1716, %v1720
      %v1722 = vshrl.u32 %v1674, 16
      %v1724 = vor.u32 %v1722, %v1720
      %v1726 = vshll.u32 %v1675, 16
      %v1728 = vrot.slane %v1726, 1
      %v1729 = vsel %vm612, %v1724, %v1728
      %v1730 = vshrl.u32 %v1675, 16
      %v1732 = vor.u32 %v1730, %v1728
      %v1734 = vshll.u32 %v1676, 16
      %v1736 = vrot.slane %v1734, 1
      %v1737 = vsel %vm612, %v1732, %v1736
      %v1738 = vshrl.u32 %v1676, 16
      %v1740 = vor.u32 %v1738, %v1736
      %v1742 = vshll.u32 %v1677, 16
      %v1744 = vrot.slane %v1742, 1
      %v1745 = vsel %vm612, %v1740, %v1744
      %v1746 = vshrl.u32 %v1677, 16
      %v1748 = vor.u32 %v1746, %v1744
      %v1750 = vshll.u32 %v1678, 16
      %v1752 = vrot.slane %v1750, 1
      %v1753 = vsel %vm612, %v1748, %v1752
      %v1754 = vshrl.u32 %v1678, 16
      %v1756 = vor.u32 %v1754, %v1752
      %v1758 = vshll.u32 %v1679, 16
      %v1760 = vrot.slane %v1758, 1
      %v1761 = vsel %vm612, %v1756, %v1760
      %v1762 = vshrl.u32 %v1679, 16
      %v1764 = vor.u32 %v1762, %v1760
      %v1766 = vshll.u32 %v1680, 16
      %v1768 = vrot.slane %v1766, 1
      %v1769 = vsel %vm612, %v1764, %v1768
      %v1770 = vshrl.u32 %v1680, 16
      %v1772 = vor.u32 %v1770, %v1768
      %v1774 = vshll.u32 %v1681, 16
      %v1776 = vrot.slane %v1774, 1
      %v1777 = vsel %vm612, %v1772, %v1776
      %v1778 = vshrl.u32 %v1681, 16
      %v1780 = vor.u32 %v1778, %v1776
      %v1782 = vshll.u32 %v1682, 16
      %v1784 = vrot.slane %v1782, 1
      %v1785 = vsel %vm612, %v1780, %v1784
      %v1786 = vshrl.u32 %v1682, 16
      %v1788 = vor.u32 %v1786, %v1784
      %v1790 = vshll.u32 %v1683, 16
      %v1792 = vrot.slane %v1790, 1
      %v1793 = vsel %vm612, %v1788, %v1792
      %v1794 = vshrl.u32 %v1683, 16
      %v1796 = vor.u32 %v1794, %v1792
      %v1798 = vshll.u32 %v1684, 16
      %v1800 = vrot.slane %v1798, 1
      %v1801 = vsel %vm612, %v1796, %v1800
      %v1802 = vshrl.u32 %v1684, 16
      %v1804 = vor.u32 %v1802, %v1800
      %v1806 = vshll.u32 %v1685, 16
      %v1808 = vrot.slane %v1806, 1
      %v1809 = vsel %vm612, %v1804, %v1808
      %v1841 = vunpack.c.l.b16 %v1592
      %v1842 = vunpack.c.l.b16 %v1593
      %v1843 = vunpack.c.l.b16 %v1594
      %v1844 = vunpack.c.l.b16 %v1595
      %v1845 = vunpack.c.l.b16 %v1596
      %v1846 = vunpack.c.l.b16 %v1597
      %v1847 = vunpack.c.l.b16 %v1598
      %v1848 = vunpack.c.l.b16 %v1599
      %v1849 = vunpack.c.l.b16 %v1600
      %v1850 = vunpack.c.l.b16 %v1601
      %v1851 = vunpack.c.l.b16 %v1602
      %v1852 = vunpack.c.l.b16 %v1603
      %v1853 = vunpack.c.l.b16 %v1604
      %v1854 = vunpack.c.l.b16 %v1605
      %v1855 = vunpack.c.l.b16 %v1606
      %v1856 = vunpack.c.l.b16 %v1607
      %v1857 = vpack.c.b16 %v1842, %v1841
      %v1858 = vpack.c.b16 %v1844, %v1843
      %v1859 = vpack.c.b16 %v1846, %v1845
      %v1860 = vpack.c.b16 %v1848, %v1847
      %v1861 = vpack.c.b16 %v1850, %v1849
      %v1862 = vpack.c.b16 %v1852, %v1851
      %v1863 = vpack.c.b16 %v1854, %v1853
      %v1864 = vpack.c.b16 %v1856, %v1855
      %1873 = vmatpush.bf16.msra.mxu0 %v1864
      %1874 = vmatpush.bf16.msra.mxu0 %v1863
      %1875 = vmatpush.bf16.msra.mxu0 %v1862
      %1876 = vmatpush.bf16.msra.mxu0 %v1861
      %1877 = vmatpush.bf16.msra.mxu0 %v1860
      %1878 = vmatpush.bf16.msra.mxu0 %v1859
      %1879 = vmatpush.bf16.msra.mxu0 %v1858
      %1880 = vmatpush.bf16.msra.mxu0 %v1857
      %1881 = vmatmul.bf16.gmra.mxu0 %v1697
      %v1882 = vpop.f32.mrf.mxu0
      %v1883 = vadd.f32 0.0, %v1882
      %v1884 = vpop.f32.mrf.mxu0
      %v1885 = vadd.f32 0.0, %v1884
      %1886 = vmatmul.bf16.gmra.mxu0 %v1705
      %v1887 = vpop.f32.mrf.mxu0
      %v1888 = vadd.f32 0.0, %v1887
      %v1889 = vpop.f32.mrf.mxu0
      %v1890 = vadd.f32 0.0, %v1889
      %1891 = vmatmul.bf16.gmra.mxu0 %v1713
      %v1892 = vpop.f32.mrf.mxu0
      %v1893 = vadd.f32 0.0, %v1892
      %v1894 = vpop.f32.mrf.mxu0
      %v1895 = vadd.f32 0.0, %v1894
      %1896 = vmatmul.bf16.gmra.mxu0 %v1721
      %v1897 = vpop.f32.mrf.mxu0
      %v1898 = vadd.f32 0.0, %v1897
      %v1899 = vpop.f32.mrf.mxu0
      %v1900 = vadd.f32 0.0, %v1899
      %1901 = vmatmul.bf16.gmra.mxu0 %v1729
      %v1902 = vpop.f32.mrf.mxu0
      %v1903 = vadd.f32 0.0, %v1902
      %v1904 = vpop.f32.mrf.mxu0
      %v1905 = vadd.f32 0.0, %v1904
      %1906 = vmatmul.bf16.gmra.mxu0 %v1737
      %v1907 = vpop.f32.mrf.mxu0
      %v1908 = vadd.f32 0.0, %v1907
      %v1909 = vpop.f32.mrf.mxu0
      %v1910 = vadd.f32 0.0, %v1909
      %1911 = vmatmul.bf16.gmra.mxu0 %v1745
      %v1912 = vpop.f32.mrf.mxu0
      %v1913 = vadd.f32 0.0, %v1912
      %v1914 = vpop.f32.mrf.mxu0
      %v1915 = vadd.f32 0.0, %v1914
      %1916 = vmatmul.bf16.gmra.mxu0 %v1753
      %v1917 = vpop.f32.mrf.mxu0
      %v1918 = vadd.f32 0.0, %v1917
      %v1919 = vpop.f32.mrf.mxu0
      %v1920 = vadd.f32 0.0, %v1919
      %1921 = vmatmul.bf16.gmra.mxu0 %v1761
      %v1922 = vpop.f32.mrf.mxu0
      %v1923 = vadd.f32 0.0, %v1922
      %v1924 = vpop.f32.mrf.mxu0
      %v1925 = vadd.f32 0.0, %v1924
      %1926 = vmatmul.bf16.gmra.mxu0 %v1769
      %v1927 = vpop.f32.mrf.mxu0
      %v1928 = vadd.f32 0.0, %v1927
      %v1929 = vpop.f32.mrf.mxu0
      %v1930 = vadd.f32 0.0, %v1929
      %1931 = vmatmul.bf16.gmra.mxu0 %v1777
      %v1932 = vpop.f32.mrf.mxu0
      %v1933 = vadd.f32 0.0, %v1932
      %v1934 = vpop.f32.mrf.mxu0
      %v1935 = vadd.f32 0.0, %v1934
      %1936 = vmatmul.bf16.gmra.mxu0 %v1785
      %v1937 = vpop.f32.mrf.mxu0
      %v1938 = vadd.f32 0.0, %v1937
      %v1939 = vpop.f32.mrf.mxu0
      %v1940 = vadd.f32 0.0, %v1939
      %1941 = vmatmul.bf16.gmra.mxu0 %v1793
      %v1942 = vpop.f32.mrf.mxu0
      %v1943 = vadd.f32 0.0, %v1942
      %v1944 = vpop.f32.mrf.mxu0
      %v1945 = vadd.f32 0.0, %v1944
      %1946 = vmatmul.bf16.gmra.mxu0 %v1801
      %v1947 = vpop.f32.mrf.mxu0
      %v1948 = vadd.f32 0.0, %v1947
      %v1949 = vpop.f32.mrf.mxu0
      %v1950 = vadd.f32 0.0, %v1949
      %1951 = vmatmul.bf16.gmra.mxu0 %v1809
      %v1952 = vpop.f32.mrf.mxu0
      %v1953 = vadd.f32 0.0, %v1952
      %v1954 = vpop.f32.mrf.mxu0
      %v1955 = vadd.f32 0.0, %v1954
      %1956 = vdwg.mxu0
      %v1957 = vadd.f32 %v1530, %v1883
      %v1958 = vadd.f32 %v1531, %v1885
      %v1959 = vadd.f32 %v1532, %v1888
      %v1960 = vadd.f32 %v1533, %v1890
      %v1961 = vadd.f32 %v1534, %v1893
      %v1962 = vadd.f32 %v1535, %v1895
      %v1963 = vadd.f32 %v1536, %v1898
      %v1964 = vadd.f32 %v1537, %v1900
      %v1965 = vadd.f32 %v1538, %v1903
      %v1966 = vadd.f32 %v1539, %v1905
      %v1967 = vadd.f32 %v1540, %v1908
      %v1968 = vadd.f32 %v1541, %v1910
      %v1969 = vadd.f32 %v1542, %v1913
      %v1970 = vadd.f32 %v1543, %v1915
      %v1971 = vadd.f32 %v1544, %v1918
      %v1972 = vadd.f32 %v1545, %v1920
      %v1973 = vadd.f32 %v1546, %v1923
      %v1974 = vadd.f32 %v1547, %v1925
      %v1975 = vadd.f32 %v1548, %v1928
      %v1976 = vadd.f32 %v1549, %v1930
      %v1977 = vadd.f32 %v1550, %v1933
      %v1978 = vadd.f32 %v1551, %v1935
      %v1979 = vadd.f32 %v1552, %v1938
      %v1980 = vadd.f32 %v1553, %v1940
      %v1981 = vadd.f32 %v1554, %v1943
      %v1982 = vadd.f32 %v1555, %v1945
      %v1983 = vadd.f32 %v1556, %v1948
      %v1984 = vadd.f32 %v1557, %v1950
      %v1985 = vadd.f32 %v1558, %v1953
      %v1986 = vadd.f32 %v1559, %v1955
      %v1987 = vld [vmem:[%s464 + $0xc] sm:$0xe]
      %s1988 = scalar_lea.vmem %s2, 320
      %v1989 = vld [vmem:[%s1988] sm:$0xf]
      %v1990 = vld [vmem:[%s1988 + $0x4] sm:$0xf]
      %v1991 = vld [vmem:[%s1988 + $0x8] sm:$0xf]
      %v1992 = vld [vmem:[%s1988 + $0xc] sm:$0xf]
      %v1993 = vld [vmem:[%s1988 + $0x10] sm:$0xf]
      %v1994 = vld [vmem:[%s1988 + $0x14] sm:$0xf]
      %v1995 = vld [vmem:[%s1988 + $0x18] sm:$0xf]
      %v1996 = vld [vmem:[%s1988 + $0x1c] sm:$0xf]
      %v1997 = vld [vmem:[%s1988 + $0x20] sm:$0xf]
      %v1998 = vld [vmem:[%s1988 + $0x24] sm:$0xf]
      %v1999 = vld [vmem:[%s1988 + $0x28] sm:$0xf]
      %v2000 = vld [vmem:[%s1988 + $0x2c] sm:$0xf]
      %v2001 = vld [vmem:[%s1988 + $0x30] sm:$0xf]
      %v2002 = vld [vmem:[%s1988 + $0x34] sm:$0xf]
      %v2003 = vld [vmem:[%s1988 + $0x38] sm:$0xf]
      %v2004 = vld [vmem:[%s1988 + $0x3c] sm:$0xf]
      %v2006 = vunpack.c.l.b16 %v1987
      %v2007 = vpack.c.b16 %v1640, %v2006
      %v2008 = vrot.slane %v2007, 1
      %v2009 = vrot.slane %v1671, 1
      %v2010 = vsel %vm1052, %v2008, %v2009
      %v2011 = vrot.slane %v1672, 1
      %v2012 = vsel %vm1052, %v2009, %v2011
      %v2013 = vrot.slane %v1673, 1
      %v2014 = vsel %vm1052, %v2011, %v2013
      %v2015 = vrot.slane %v1674, 1
      %v2016 = vsel %vm1052, %v2013, %v2015
      %v2017 = vrot.slane %v1675, 1
      %v2018 = vsel %vm1052, %v2015, %v2017
      %v2019 = vrot.slane %v1676, 1
      %v2020 = vsel %vm1052, %v2017, %v2019
      %v2021 = vrot.slane %v1677, 1
      %v2022 = vsel %vm1052, %v2019, %v2021
      %v2023 = vrot.slane %v1678, 1
      %v2024 = vsel %vm1052, %v2021, %v2023
      %v2025 = vrot.slane %v1679, 1
      %v2026 = vsel %vm1052, %v2023, %v2025
      %v2027 = vrot.slane %v1680, 1
      %v2028 = vsel %vm1052, %v2025, %v2027
      %v2029 = vrot.slane %v1681, 1
      %v2030 = vsel %vm1052, %v2027, %v2029
      %v2031 = vrot.slane %v1682, 1
      %v2032 = vsel %vm1052, %v2029, %v2031
      %v2033 = vrot.slane %v1683, 1
      %v2034 = vsel %vm1052, %v2031, %v2033
      %v2035 = vrot.slane %v1684, 1
      %v2036 = vsel %vm1052, %v2033, %v2035
      %v2037 = vrot.slane %v1685, 1
      %v2038 = vsel %vm1052, %v2035, %v2037
      %v2070 = vunpack.c.l.b16 %v1989
      %v2071 = vunpack.c.l.b16 %v1990
      %v2072 = vunpack.c.l.b16 %v1991
      %v2073 = vunpack.c.l.b16 %v1992
      %v2074 = vunpack.c.l.b16 %v1993
      %v2075 = vunpack.c.l.b16 %v1994
      %v2076 = vunpack.c.l.b16 %v1995
      %v2077 = vunpack.c.l.b16 %v1996
      %v2078 = vunpack.c.l.b16 %v1997
      %v2079 = vunpack.c.l.b16 %v1998
      %v2080 = vunpack.c.l.b16 %v1999
      %v2081 = vunpack.c.l.b16 %v2000
      %v2082 = vunpack.c.l.b16 %v2001
      %v2083 = vunpack.c.l.b16 %v2002
      %v2084 = vunpack.c.l.b16 %v2003
      %v2085 = vunpack.c.l.b16 %v2004
      %v2086 = vpack.c.b16 %v2071, %v2070
      %v2087 = vpack.c.b16 %v2073, %v2072
      %v2088 = vpack.c.b16 %v2075, %v2074
      %v2089 = vpack.c.b16 %v2077, %v2076
      %v2090 = vpack.c.b16 %v2079, %v2078
      %v2091 = vpack.c.b16 %v2081, %v2080
      %v2092 = vpack.c.b16 %v2083, %v2082
      %v2093 = vpack.c.b16 %v2085, %v2084
      %2102 = vmatpush.bf16.msra.mxu0 %v2093
      %2103 = vmatpush.bf16.msra.mxu0 %v2092
      %2104 = vmatpush.bf16.msra.mxu0 %v2091
      %2105 = vmatpush.bf16.msra.mxu0 %v2090
      %2106 = vmatpush.bf16.msra.mxu0 %v2089
      %2107 = vmatpush.bf16.msra.mxu0 %v2088
      %2108 = vmatpush.bf16.msra.mxu0 %v2087
      %2109 = vmatpush.bf16.msra.mxu0 %v2086
      %2110 = vmatmul.bf16.gmra.mxu0 %v2010
      %v2111 = vpop.f32.mrf.mxu0
      %v2112 = vadd.f32 0.0, %v2111
      %v2113 = vpop.f32.mrf.mxu0
      %v2114 = vadd.f32 0.0, %v2113
      %2115 = vmatmul.bf16.gmra.mxu0 %v2012
      %v2116 = vpop.f32.mrf.mxu0
      %v2117 = vadd.f32 0.0, %v2116
      %v2118 = vpop.f32.mrf.mxu0
      %v2119 = vadd.f32 0.0, %v2118
      %2120 = vmatmul.bf16.gmra.mxu0 %v2014
      %v2121 = vpop.f32.mrf.mxu0
      %v2122 = vadd.f32 0.0, %v2121
      %v2123 = vpop.f32.mrf.mxu0
      %v2124 = vadd.f32 0.0, %v2123
      %2125 = vmatmul.bf16.gmra.mxu0 %v2016
      %v2126 = vpop.f32.mrf.mxu0
      %v2127 = vadd.f32 0.0, %v2126
      %v2128 = vpop.f32.mrf.mxu0
      %v2129 = vadd.f32 0.0, %v2128
      %2130 = vmatmul.bf16.gmra.mxu0 %v2018
      %v2131 = vpop.f32.mrf.mxu0
      %v2132 = vadd.f32 0.0, %v2131
      %v2133 = vpop.f32.mrf.mxu0
      %v2134 = vadd.f32 0.0, %v2133
      %2135 = vmatmul.bf16.gmra.mxu0 %v2020
      %v2136 = vpop.f32.mrf.mxu0
      %v2137 = vadd.f32 0.0, %v2136
      %v2138 = vpop.f32.mrf.mxu0
      %v2139 = vadd.f32 0.0, %v2138
      %2140 = vmatmul.bf16.gmra.mxu0 %v2022
      %v2141 = vpop.f32.mrf.mxu0
      %v2142 = vadd.f32 0.0, %v2141
      %v2143 = vpop.f32.mrf.mxu0
      %v2144 = vadd.f32 0.0, %v2143
      %2145 = vmatmul.bf16.gmra.mxu0 %v2024
      %v2146 = vpop.f32.mrf.mxu0
      %v2147 = vadd.f32 0.0, %v2146
      %v2148 = vpop.f32.mrf.mxu0
      %v2149 = vadd.f32 0.0, %v2148
      %2150 = vmatmul.bf16.gmra.mxu0 %v2026
      %v2151 = vpop.f32.mrf.mxu0
      %v2152 = vadd.f32 0.0, %v2151
      %v2153 = vpop.f32.mrf.mxu0
      %v2154 = vadd.f32 0.0, %v2153
      %2155 = vmatmul.bf16.gmra.mxu0 %v2028
      %v2156 = vpop.f32.mrf.mxu0
      %v2157 = vadd.f32 0.0, %v2156
      %v2158 = vpop.f32.mrf.mxu0
      %v2159 = vadd.f32 0.0, %v2158
      %2160 = vmatmul.bf16.gmra.mxu0 %v2030
      %v2161 = vpop.f32.mrf.mxu0
      %v2162 = vadd.f32 0.0, %v2161
      %v2163 = vpop.f32.mrf.mxu0
      %v2164 = vadd.f32 0.0, %v2163
      %2165 = vmatmul.bf16.gmra.mxu0 %v2032
      %v2166 = vpop.f32.mrf.mxu0
      %v2167 = vadd.f32 0.0, %v2166
      %v2168 = vpop.f32.mrf.mxu0
      %v2169 = vadd.f32 0.0, %v2168
      %2170 = vmatmul.bf16.gmra.mxu0 %v2034
      %v2171 = vpop.f32.mrf.mxu0
      %v2172 = vadd.f32 0.0, %v2171
      %v2173 = vpop.f32.mrf.mxu0
      %v2174 = vadd.f32 0.0, %v2173
      %2175 = vmatmul.bf16.gmra.mxu0 %v2036
      %v2176 = vpop.f32.mrf.mxu0
      %v2177 = vadd.f32 0.0, %v2176
      %v2178 = vpop.f32.mrf.mxu0
      %v2179 = vadd.f32 0.0, %v2178
      %2180 = vmatmul.bf16.gmra.mxu0 %v2038
      %v2181 = vpop.f32.mrf.mxu0
      %v2182 = vadd.f32 0.0, %v2181
      %v2183 = vpop.f32.mrf.mxu0
      %v2184 = vadd.f32 0.0, %v2183
      %2185 = vdwg.mxu0
      %v2186 = vadd.f32 %v1957, %v2112
      %v2187 = vadd.f32 %v1958, %v2114
      %v2188 = vadd.f32 %v1959, %v2117
      %v2189 = vadd.f32 %v1960, %v2119
      %v2190 = vadd.f32 %v1961, %v2122
      %v2191 = vadd.f32 %v1962, %v2124
      %v2192 = vadd.f32 %v1963, %v2127
      %v2193 = vadd.f32 %v1964, %v2129
      %v2194 = vadd.f32 %v1965, %v2132
      %v2195 = vadd.f32 %v1966, %v2134
      %v2196 = vadd.f32 %v1967, %v2137
      %v2197 = vadd.f32 %v1968, %v2139
      %v2198 = vadd.f32 %v1969, %v2142
      %v2199 = vadd.f32 %v1970, %v2144
      %v2200 = vadd.f32 %v1971, %v2147
      %v2201 = vadd.f32 %v1972, %v2149
      %v2202 = vadd.f32 %v1973, %v2152
      %v2203 = vadd.f32 %v1974, %v2154
      %v2204 = vadd.f32 %v1975, %v2157
      %v2205 = vadd.f32 %v1976, %v2159
      %v2206 = vadd.f32 %v1977, %v2162
      %v2207 = vadd.f32 %v1978, %v2164
      %v2208 = vadd.f32 %v1979, %v2167
      %v2209 = vadd.f32 %v1980, %v2169
      %v2210 = vadd.f32 %v1981, %v2172
      %v2211 = vadd.f32 %v1982, %v2174
      %v2212 = vadd.f32 %v1983, %v2177
      %v2213 = vadd.f32 %v1984, %v2179
      %v2214 = vadd.f32 %v1985, %v2182
      %v2215 = vadd.f32 %v1986, %v2184
      %v2216 = vld [vmem:[%s464 + $0x18] sm:$0xf]
      %v2217 = vld [vmem:[%s464 + $0x1c] sm:$0xf]
      %v2218 = vld [vmem:[%s464 + $0x20] sm:$0xf]
      %v2219 = vld [vmem:[%s464 + $0x24] sm:$0xf]
      %v2220 = vld [vmem:[%s464 + $0x28] sm:$0xf]
      %v2221 = vld [vmem:[%s464 + $0x2c] sm:$0xf]
      %v2222 = vld [vmem:[%s464 + $0x30] sm:$0xf]
      %v2223 = vld [vmem:[%s464 + $0x34] sm:$0xf]
      %v2224 = vld [vmem:[%s464 + $0x38] sm:$0xf]
      %v2225 = vld [vmem:[%s464 + $0x3c] sm:$0xf]
      %v2226 = vld [vmem:[%s464 + $0x40] sm:$0xf]
      %v2227 = vld [vmem:[%s464 + $0x44] sm:$0xf]
      %v2228 = vld [vmem:[%s464 + $0x48] sm:$0xf]
      %v2229 = vld [vmem:[%s464 + $0x4c] sm:$0xf]
      %v2230 = vld [vmem:[%s464 + $0x50] sm:$0xf]
      %v2231 = vld [vmem:[%s464 + $0x54] sm:$0xf]
      %v2232 = vld [vmem:[%s464 + $0x58] sm:$0xf]
      %v2233 = vld [vmem:[%s464 + $0x5c] sm:$0xf]
      %v2234 = vld [vmem:[%s464 + $0x60] sm:$0xf]
      %v2235 = vld [vmem:[%s464 + $0x64] sm:$0xf]
      %v2236 = vld [vmem:[%s464 + $0x68] sm:$0xf]
      %v2237 = vld [vmem:[%s464 + $0x6c] sm:$0xf]
      %v2238 = vld [vmem:[%s464 + $0x70] sm:$0xf]
      %v2239 = vld [vmem:[%s464 + $0x74] sm:$0xf]
      %v2240 = vld [vmem:[%s464 + $0x78] sm:$0xf]
      %v2241 = vld [vmem:[%s464 + $0x7c] sm:$0xf]
      %v2242 = vld [vmem:[%s464 + $0x80] sm:$0xf]
      %v2243 = vld [vmem:[%s464 + $0x84] sm:$0xf]
      %v2244 = vld [vmem:[%s464 + $0x88] sm:$0xf]
      %v2245 = vld [vmem:[%s464 + $0x8c] sm:$0xf]
      %s2246 = scalar_lea.vmem %s2, 384
      %v2247 = vld [vmem:[%s2246] sm:$0xf]
      %v2248 = vld [vmem:[%s2246 + $0x4] sm:$0xf]
      %v2249 = vld [vmem:[%s2246 + $0x8] sm:$0xf]
      %v2250 = vld [vmem:[%s2246 + $0xc] sm:$0xf]
      %v2251 = vld [vmem:[%s2246 + $0x10] sm:$0xf]
      %v2252 = vld [vmem:[%s2246 + $0x14] sm:$0xf]
      %v2253 = vld [vmem:[%s2246 + $0x18] sm:$0xf]
      %v2254 = vld [vmem:[%s2246 + $0x1c] sm:$0xf]
      %v2255 = vld [vmem:[%s2246 + $0x20] sm:$0xf]
      %v2256 = vld [vmem:[%s2246 + $0x24] sm:$0xf]
      %v2257 = vld [vmem:[%s2246 + $0x28] sm:$0xf]
      %v2258 = vld [vmem:[%s2246 + $0x2c] sm:$0xf]
      %v2259 = vld [vmem:[%s2246 + $0x30] sm:$0xf]
      %v2260 = vld [vmem:[%s2246 + $0x34] sm:$0xf]
      %v2261 = vld [vmem:[%s2246 + $0x38] sm:$0xf]
      %v2262 = vld [vmem:[%s2246 + $0x3c] sm:$0xf]
      %v2293 = vunpack.c.l.b16 %v2216
      %v2294 = vunpack.c.l.b16 %v2217
      %v2295 = vunpack.c.l.b16 %v2218
      %v2296 = vunpack.c.l.b16 %v2219
      %v2297 = vunpack.c.l.b16 %v2220
      %v2298 = vunpack.c.l.b16 %v2221
      %v2299 = vunpack.c.l.b16 %v2222
      %v2300 = vunpack.c.l.b16 %v2223
      %v2301 = vunpack.c.l.b16 %v2224
      %v2302 = vunpack.c.l.b16 %v2225
      %v2303 = vunpack.c.l.b16 %v2226
      %v2304 = vunpack.c.l.b16 %v2227
      %v2305 = vunpack.c.l.b16 %v2228
      %v2306 = vunpack.c.l.b16 %v2229
      %v2307 = vunpack.c.l.b16 %v2230
      %v2308 = vunpack.c.l.b16 %v2231
      %v2309 = vunpack.c.l.b16 %v2232
      %v2310 = vunpack.c.l.b16 %v2233
      %v2311 = vunpack.c.l.b16 %v2234
      %v2312 = vunpack.c.l.b16 %v2235
      %v2313 = vunpack.c.l.b16 %v2236
      %v2314 = vunpack.c.l.b16 %v2237
      %v2315 = vunpack.c.l.b16 %v2238
      %v2316 = vunpack.c.l.b16 %v2239
      %v2317 = vunpack.c.l.b16 %v2240
      %v2318 = vunpack.c.l.b16 %v2241
      %v2319 = vunpack.c.l.b16 %v2242
      %v2320 = vunpack.c.l.b16 %v2243
      %v2321 = vunpack.c.l.b16 %v2244
      %v2322 = vunpack.c.l.b16 %v2245
      %v2323 = vpack.c.b16 %v2294, %v2293
      %v2324 = vpack.c.b16 %v2296, %v2295
      %v2325 = vpack.c.b16 %v2298, %v2297
      %v2326 = vpack.c.b16 %v2300, %v2299
      %v2327 = vpack.c.b16 %v2302, %v2301
      %v2328 = vpack.c.b16 %v2304, %v2303
      %v2329 = vpack.c.b16 %v2306, %v2305
      %v2330 = vpack.c.b16 %v2308, %v2307
      %v2331 = vpack.c.b16 %v2310, %v2309
      %v2332 = vpack.c.b16 %v2312, %v2311
      %v2333 = vpack.c.b16 %v2314, %v2313
      %v2334 = vpack.c.b16 %v2316, %v2315
      %v2335 = vpack.c.b16 %v2318, %v2317
      %v2336 = vpack.c.b16 %v2320, %v2319
      %v2337 = vpack.c.b16 %v2322, %v2321
      %v2369 = vunpack.c.l.b16 %v2247
      %v2370 = vunpack.c.l.b16 %v2248
      %v2371 = vunpack.c.l.b16 %v2249
      %v2372 = vunpack.c.l.b16 %v2250
      %v2373 = vunpack.c.l.b16 %v2251
      %v2374 = vunpack.c.l.b16 %v2252
      %v2375 = vunpack.c.l.b16 %v2253
      %v2376 = vunpack.c.l.b16 %v2254
      %v2377 = vunpack.c.l.b16 %v2255
      %v2378 = vunpack.c.l.b16 %v2256
      %v2379 = vunpack.c.l.b16 %v2257
      %v2380 = vunpack.c.l.b16 %v2258
      %v2381 = vunpack.c.l.b16 %v2259
      %v2382 = vunpack.c.l.b16 %v2260
      %v2383 = vunpack.c.l.b16 %v2261
      %v2384 = vunpack.c.l.b16 %v2262
      %v2385 = vpack.c.b16 %v2370, %v2369
      %v2386 = vpack.c.b16 %v2372, %v2371
      %v2387 = vpack.c.b16 %v2374, %v2373
      %v2388 = vpack.c.b16 %v2376, %v2375
      %v2389 = vpack.c.b16 %v2378, %v2377
      %v2390 = vpack.c.b16 %v2380, %v2379
      %v2391 = vpack.c.b16 %v2382, %v2381
      %v2392 = vpack.c.b16 %v2384, %v2383
      %2401 = vmatpush.bf16.msra.mxu0 %v2392
      %2402 = vmatpush.bf16.msra.mxu0 %v2391
      %2403 = vmatpush.bf16.msra.mxu0 %v2390
      %2404 = vmatpush.bf16.msra.mxu0 %v2389
      %2405 = vmatpush.bf16.msra.mxu0 %v2388
      %2406 = vmatpush.bf16.msra.mxu0 %v2387
      %2407 = vmatpush.bf16.msra.mxu0 %v2386
      %2408 = vmatpush.bf16.msra.mxu0 %v2385
      %2409 = vmatmul.bf16.gmra.mxu0 %v2323
      %v2410 = vpop.f32.mrf.mxu0
      %v2411 = vadd.f32 0.0, %v2410
      %v2412 = vpop.f32.mrf.mxu0
      %v2413 = vadd.f32 0.0, %v2412
      %2414 = vmatmul.bf16.gmra.mxu0 %v2324
      %v2415 = vpop.f32.mrf.mxu0
      %v2416 = vadd.f32 0.0, %v2415
      %v2417 = vpop.f32.mrf.mxu0
      %v2418 = vadd.f32 0.0, %v2417
      %2419 = vmatmul.bf16.gmra.mxu0 %v2325
      %v2420 = vpop.f32.mrf.mxu0
      %v2421 = vadd.f32 0.0, %v2420
      %v2422 = vpop.f32.mrf.mxu0
      %v2423 = vadd.f32 0.0, %v2422
      %2424 = vmatmul.bf16.gmra.mxu0 %v2326
      %v2425 = vpop.f32.mrf.mxu0
      %v2426 = vadd.f32 0.0, %v2425
      %v2427 = vpop.f32.mrf.mxu0
      %v2428 = vadd.f32 0.0, %v2427
      %2429 = vmatmul.bf16.gmra.mxu0 %v2327
      %v2430 = vpop.f32.mrf.mxu0
      %v2431 = vadd.f32 0.0, %v2430
      %v2432 = vpop.f32.mrf.mxu0
      %v2433 = vadd.f32 0.0, %v2432
      %2434 = vmatmul.bf16.gmra.mxu0 %v2328
      %v2435 = vpop.f32.mrf.mxu0
      %v2436 = vadd.f32 0.0, %v2435
      %v2437 = vpop.f32.mrf.mxu0
      %v2438 = vadd.f32 0.0, %v2437
      %2439 = vmatmul.bf16.gmra.mxu0 %v2329
      %v2440 = vpop.f32.mrf.mxu0
      %v2441 = vadd.f32 0.0, %v2440
      %v2442 = vpop.f32.mrf.mxu0
      %v2443 = vadd.f32 0.0, %v2442
      %2444 = vmatmul.bf16.gmra.mxu0 %v2330
      %v2445 = vpop.f32.mrf.mxu0
      %v2446 = vadd.f32 0.0, %v2445
      %v2447 = vpop.f32.mrf.mxu0
      %v2448 = vadd.f32 0.0, %v2447
      %2449 = vmatmul.bf16.gmra.mxu0 %v2331
      %v2450 = vpop.f32.mrf.mxu0
      %v2451 = vadd.f32 0.0, %v2450
      %v2452 = vpop.f32.mrf.mxu0
      %v2453 = vadd.f32 0.0, %v2452
      %2454 = vmatmul.bf16.gmra.mxu0 %v2332
      %v2455 = vpop.f32.mrf.mxu0
      %v2456 = vadd.f32 0.0, %v2455
      %v2457 = vpop.f32.mrf.mxu0
      %v2458 = vadd.f32 0.0, %v2457
      %2459 = vmatmul.bf16.gmra.mxu0 %v2333
      %v2460 = vpop.f32.mrf.mxu0
      %v2461 = vadd.f32 0.0, %v2460
      %v2462 = vpop.f32.mrf.mxu0
      %v2463 = vadd.f32 0.0, %v2462
      %2464 = vmatmul.bf16.gmra.mxu0 %v2334
      %v2465 = vpop.f32.mrf.mxu0
      %v2466 = vadd.f32 0.0, %v2465
      %v2467 = vpop.f32.mrf.mxu0
      %v2468 = vadd.f32 0.0, %v2467
      %2469 = vmatmul.bf16.gmra.mxu0 %v2335
      %v2470 = vpop.f32.mrf.mxu0
      %v2471 = vadd.f32 0.0, %v2470
      %v2472 = vpop.f32.mrf.mxu0
      %v2473 = vadd.f32 0.0, %v2472
      %2474 = vmatmul.bf16.gmra.mxu0 %v2336
      %v2475 = vpop.f32.mrf.mxu0
      %v2476 = vadd.f32 0.0, %v2475
      %v2477 = vpop.f32.mrf.mxu0
      %v2478 = vadd.f32 0.0, %v2477
      %2479 = vmatmul.bf16.gmra.mxu0 %v2337
      %v2480 = vpop.f32.mrf.mxu0
      %v2481 = vadd.f32 0.0, %v2480
      %v2482 = vpop.f32.mrf.mxu0
      %v2483 = vadd.f32 0.0, %v2482
      %2484 = vdwg.mxu0
      %v2485 = vadd.f32 %v2186, %v2411
      %v2486 = vadd.f32 %v2187, %v2413
      %v2487 = vadd.f32 %v2188, %v2416
      %v2488 = vadd.f32 %v2189, %v2418
      %v2489 = vadd.f32 %v2190, %v2421
      %v2490 = vadd.f32 %v2191, %v2423
      %v2491 = vadd.f32 %v2192, %v2426
      %v2492 = vadd.f32 %v2193, %v2428
      %v2493 = vadd.f32 %v2194, %v2431
      %v2494 = vadd.f32 %v2195, %v2433
      %v2495 = vadd.f32 %v2196, %v2436
      %v2496 = vadd.f32 %v2197, %v2438
      %v2497 = vadd.f32 %v2198, %v2441
      %v2498 = vadd.f32 %v2199, %v2443
      %v2499 = vadd.f32 %v2200, %v2446
      %v2500 = vadd.f32 %v2201, %v2448
      %v2501 = vadd.f32 %v2202, %v2451
      %v2502 = vadd.f32 %v2203, %v2453
      %v2503 = vadd.f32 %v2204, %v2456
      %v2504 = vadd.f32 %v2205, %v2458
      %v2505 = vadd.f32 %v2206, %v2461
      %v2506 = vadd.f32 %v2207, %v2463
      %v2507 = vadd.f32 %v2208, %v2466
      %v2508 = vadd.f32 %v2209, %v2468
      %v2509 = vadd.f32 %v2210, %v2471
      %v2510 = vadd.f32 %v2211, %v2473
      %v2511 = vadd.f32 %v2212, %v2476
      %v2512 = vadd.f32 %v2213, %v2478
      %v2513 = vadd.f32 %v2214, %v2481
      %v2514 = vadd.f32 %v2215, %v2483
      %v2515 = vld [vmem:[%s464 + $0x18] sm:$0xf]
      %v2516 = vld [vmem:[%s464 + $0x1c] sm:$0xf]
      %v2517 = vld [vmem:[%s464 + $0x20] sm:$0xf]
      %v2518 = vld [vmem:[%s464 + $0x24] sm:$0xf]
      %v2519 = vld [vmem:[%s464 + $0x28] sm:$0xf]
      %v2520 = vld [vmem:[%s464 + $0x2c] sm:$0xf]
      %v2521 = vld [vmem:[%s464 + $0x30] sm:$0xf]
      %v2522 = vld [vmem:[%s464 + $0x34] sm:$0xf]
      %v2523 = vld [vmem:[%s464 + $0x38] sm:$0xf]
      %v2524 = vld [vmem:[%s464 + $0x3c] sm:$0xf]
      %v2525 = vld [vmem:[%s464 + $0x40] sm:$0xf]
      %v2526 = vld [vmem:[%s464 + $0x44] sm:$0xf]
      %v2527 = vld [vmem:[%s464 + $0x48] sm:$0xf]
      %v2528 = vld [vmem:[%s464 + $0x4c] sm:$0xf]
      %v2529 = vld [vmem:[%s464 + $0x50] sm:$0xf]
      %v2530 = vld [vmem:[%s464 + $0x54] sm:$0xf]
      %v2531 = vld [vmem:[%s464 + $0x58] sm:$0xf]
      %v2532 = vld [vmem:[%s464 + $0x5c] sm:$0xf]
      %v2533 = vld [vmem:[%s464 + $0x60] sm:$0xf]
      %v2534 = vld [vmem:[%s464 + $0x64] sm:$0xf]
      %v2535 = vld [vmem:[%s464 + $0x68] sm:$0xf]
      %v2536 = vld [vmem:[%s464 + $0x6c] sm:$0xf]
      %v2537 = vld [vmem:[%s464 + $0x70] sm:$0xf]
      %v2538 = vld [vmem:[%s464 + $0x74] sm:$0xf]
      %v2539 = vld [vmem:[%s464 + $0x78] sm:$0xf]
      %v2540 = vld [vmem:[%s464 + $0x7c] sm:$0xf]
      %v2541 = vld [vmem:[%s464 + $0x80] sm:$0xf]
      %v2542 = vld [vmem:[%s464 + $0x84] sm:$0xf]
      %v2543 = vld [vmem:[%s464 + $0x88] sm:$0xf]
      %v2544 = vld [vmem:[%s464 + $0x8c] sm:$0xf]
      %v2545 = vld [vmem:[%s464 + $0x90] sm:$0x1]
      %s2546 = scalar_lea.vmem %s2, 448
      %v2547 = vld [vmem:[%s2546] sm:$0xf]
      %v2548 = vld [vmem:[%s2546 + $0x4] sm:$0xf]
      %v2549 = vld [vmem:[%s2546 + $0x8] sm:$0xf]
      %v2550 = vld [vmem:[%s2546 + $0xc] sm:$0xf]
      %v2551 = vld [vmem:[%s2546 + $0x10] sm:$0xf]
      %v2552 = vld [vmem:[%s2546 + $0x14] sm:$0xf]
      %v2553 = vld [vmem:[%s2546 + $0x18] sm:$0xf]
      %v2554 = vld [vmem:[%s2546 + $0x1c] sm:$0xf]
      %v2555 = vld [vmem:[%s2546 + $0x20] sm:$0xf]
      %v2556 = vld [vmem:[%s2546 + $0x24] sm:$0xf]
      %v2557 = vld [vmem:[%s2546 + $0x28] sm:$0xf]
      %v2558 = vld [vmem:[%s2546 + $0x2c] sm:$0xf]
      %v2559 = vld [vmem:[%s2546 + $0x30] sm:$0xf]
      %v2560 = vld [vmem:[%s2546 + $0x34] sm:$0xf]
      %v2561 = vld [vmem:[%s2546 + $0x38] sm:$0xf]
      %v2562 = vld [vmem:[%s2546 + $0x3c] sm:$0xf]
      %v2594 = vunpack.c.l.b16 %v2515
      %v2595 = vunpack.c.l.b16 %v2516
      %v2596 = vunpack.c.l.b16 %v2517
      %v2597 = vunpack.c.l.b16 %v2518
      %v2598 = vunpack.c.l.b16 %v2519
      %v2599 = vunpack.c.l.b16 %v2520
      %v2600 = vunpack.c.l.b16 %v2521
      %v2601 = vunpack.c.l.b16 %v2522
      %v2602 = vunpack.c.l.b16 %v2523
      %v2603 = vunpack.c.l.b16 %v2524
      %v2604 = vunpack.c.l.b16 %v2525
      %v2605 = vunpack.c.l.b16 %v2526
      %v2606 = vunpack.c.l.b16 %v2527
      %v2607 = vunpack.c.l.b16 %v2528
      %v2608 = vunpack.c.l.b16 %v2529
      %v2609 = vunpack.c.l.b16 %v2530
      %v2610 = vunpack.c.l.b16 %v2531
      %v2611 = vunpack.c.l.b16 %v2532
      %v2612 = vunpack.c.l.b16 %v2533
      %v2613 = vunpack.c.l.b16 %v2534
      %v2614 = vunpack.c.l.b16 %v2535
      %v2615 = vunpack.c.l.b16 %v2536
      %v2616 = vunpack.c.l.b16 %v2537
      %v2617 = vunpack.c.l.b16 %v2538
      %v2618 = vunpack.c.l.b16 %v2539
      %v2619 = vunpack.c.l.b16 %v2540
      %v2620 = vunpack.c.l.b16 %v2541
      %v2621 = vunpack.c.l.b16 %v2542
      %v2622 = vunpack.c.l.b16 %v2543
      %v2623 = vunpack.c.l.b16 %v2544
      %v2624 = vunpack.c.l.b16 %v2545
      %v2625 = vpack.c.b16 %v2595, %v2594
      %v2626 = vpack.c.b16 %v2597, %v2596
      %v2627 = vpack.c.b16 %v2599, %v2598
      %v2628 = vpack.c.b16 %v2601, %v2600
      %v2629 = vpack.c.b16 %v2603, %v2602
      %v2630 = vpack.c.b16 %v2605, %v2604
      %v2631 = vpack.c.b16 %v2607, %v2606
      %v2632 = vpack.c.b16 %v2609, %v2608
      %v2633 = vpack.c.b16 %v2611, %v2610
      %v2634 = vpack.c.b16 %v2613, %v2612
      %v2635 = vpack.c.b16 %v2615, %v2614
      %v2636 = vpack.c.b16 %v2617, %v2616
      %v2637 = vpack.c.b16 %v2619, %v2618
      %v2638 = vpack.c.b16 %v2621, %v2620
      %v2639 = vpack.c.b16 %v2623, %v2622
      %v2640 = vpack.c.b16 %v2624, %v2624
      %v2642 = vshrl.u32 %v2625, 16
      %v2644 = vshll.u32 %v2625, 16
      %v2646 = vrot.slane %v2644, 1
      %v2647 = vor.u32 %v2642, %v2646
      %v2649 = vshll.u32 %v2626, 16
      %v2651 = vrot.slane %v2649, 1
      %v2652 = vsel %vm612, %v2647, %v2651
      %v2653 = vshrl.u32 %v2626, 16
      %v2655 = vor.u32 %v2653, %v2651
      %v2657 = vshll.u32 %v2627, 16
      %v2659 = vrot.slane %v2657, 1
      %v2660 = vsel %vm612, %v2655, %v2659
      %v2661 = vshrl.u32 %v2627, 16
      %v2663 = vor.u32 %v2661, %v2659
      %v2665 = vshll.u32 %v2628, 16
      %v2667 = vrot.slane %v2665, 1
      %v2668 = vsel %vm612, %v2663, %v2667
      %v2669 = vshrl.u32 %v2628, 16
      %v2671 = vor.u32 %v2669, %v2667
      %v2673 = vshll.u32 %v2629, 16
      %v2675 = vrot.slane %v2673, 1
      %v2676 = vsel %vm612, %v2671, %v2675
      %v2677 = vshrl.u32 %v2629, 16
      %v2679 = vor.u32 %v2677, %v2675
      %v2681 = vshll.u32 %v2630, 16
      %v2683 = vrot.slane %v2681, 1
      %v2684 = vsel %vm612, %v2679, %v2683
      %v2685 = vshrl.u32 %v2630, 16
      %v2687 = vor.u32 %v2685, %v2683
      %v2689 = vshll.u32 %v2631, 16
      %v2691 = vrot.slane %v2689, 1
      %v2692 = vsel %vm612, %v2687, %v2691
      %v2693 = vshrl.u32 %v2631, 16
      %v2695 = vor.u32 %v2693, %v2691
      %v2697 = vshll.u32 %v2632, 16
      %v2699 = vrot.slane %v2697, 1
      %v2700 = vsel %vm612, %v2695, %v2699
      %v2701 = vshrl.u32 %v2632, 16
      %v2703 = vor.u32 %v2701, %v2699
      %v2705 = vshll.u32 %v2633, 16
      %v2707 = vrot.slane %v2705, 1
      %v2708 = vsel %vm612, %v2703, %v2707
      %v2709 = vshrl.u32 %v2633, 16
      %v2711 = vor.u32 %v2709, %v2707
      %v2713 = vshll.u32 %v2634, 16
      %v2715 = vrot.slane %v2713, 1
      %v2716 = vsel %vm612, %v2711, %v2715
      %v2717 = vshrl.u32 %v2634, 16
      %v2719 = vor.u32 %v2717, %v2715
      %v2721 = vshll.u32 %v2635, 16
      %v2723 = vrot.slane %v2721, 1
      %v2724 = vsel %vm612, %v2719, %v2723
      %v2725 = vshrl.u32 %v2635, 16
      %v2727 = vor.u32 %v2725, %v2723
      %v2729 = vshll.u32 %v2636, 16
      %v2731 = vrot.slane %v2729, 1
      %v2732 = vsel %vm612, %v2727, %v2731
      %v2733 = vshrl.u32 %v2636, 16
      %v2735 = vor.u32 %v2733, %v2731
      %v2737 = vshll.u32 %v2637, 16
      %v2739 = vrot.slane %v2737, 1
      %v2740 = vsel %vm612, %v2735, %v2739
      %v2741 = vshrl.u32 %v2637, 16
      %v2743 = vor.u32 %v2741, %v2739
      %v2745 = vshll.u32 %v2638, 16
      %v2747 = vrot.slane %v2745, 1
      %v2748 = vsel %vm612, %v2743, %v2747
      %v2749 = vshrl.u32 %v2638, 16
      %v2751 = vor.u32 %v2749, %v2747
      %v2753 = vshll.u32 %v2639, 16
      %v2755 = vrot.slane %v2753, 1
      %v2756 = vsel %vm612, %v2751, %v2755
      %v2757 = vshrl.u32 %v2639, 16
      %v2759 = vor.u32 %v2757, %v2755
      %v2761 = vshll.u32 %v2640, 16
      %v2763 = vrot.slane %v2761, 1
      %v2764 = vsel %vm612, %v2759, %v2763
      %v2796 = vunpack.c.l.b16 %v2547
      %v2797 = vunpack.c.l.b16 %v2548
      %v2798 = vunpack.c.l.b16 %v2549
      %v2799 = vunpack.c.l.b16 %v2550
      %v2800 = vunpack.c.l.b16 %v2551
      %v2801 = vunpack.c.l.b16 %v2552
      %v2802 = vunpack.c.l.b16 %v2553
      %v2803 = vunpack.c.l.b16 %v2554
      %v2804 = vunpack.c.l.b16 %v2555
      %v2805 = vunpack.c.l.b16 %v2556
      %v2806 = vunpack.c.l.b16 %v2557
      %v2807 = vunpack.c.l.b16 %v2558
      %v2808 = vunpack.c.l.b16 %v2559
      %v2809 = vunpack.c.l.b16 %v2560
      %v2810 = vunpack.c.l.b16 %v2561
      %v2811 = vunpack.c.l.b16 %v2562
      %v2812 = vpack.c.b16 %v2797, %v2796
      %v2813 = vpack.c.b16 %v2799, %v2798
      %v2814 = vpack.c.b16 %v2801, %v2800
      %v2815 = vpack.c.b16 %v2803, %v2802
      %v2816 = vpack.c.b16 %v2805, %v2804
      %v2817 = vpack.c.b16 %v2807, %v2806
      %v2818 = vpack.c.b16 %v2809, %v2808
      %v2819 = vpack.c.b16 %v2811, %v2810
      %2828 = vmatpush.bf16.msra.mxu0 %v2819
      %2829 = vmatpush.bf16.msra.mxu0 %v2818
      %2830 = vmatpush.bf16.msra.mxu0 %v2817
      %2831 = vmatpush.bf16.msra.mxu0 %v2816
      %2832 = vmatpush.bf16.msra.mxu0 %v2815
      %2833 = vmatpush.bf16.msra.mxu0 %v2814
      %2834 = vmatpush.bf16.msra.mxu0 %v2813
      %2835 = vmatpush.bf16.msra.mxu0 %v2812
      %2836 = vmatmul.bf16.gmra.mxu0 %v2652
      %v2837 = vpop.f32.mrf.mxu0
      %v2838 = vadd.f32 0.0, %v2837
      %v2839 = vpop.f32.mrf.mxu0
      %v2840 = vadd.f32 0.0, %v2839
      %2841 = vmatmul.bf16.gmra.mxu0 %v2660
      %v2842 = vpop.f32.mrf.mxu0
      %v2843 = vadd.f32 0.0, %v2842
      %v2844 = vpop.f32.mrf.mxu0
      %v2845 = vadd.f32 0.0, %v2844
      %2846 = vmatmul.bf16.gmra.mxu0 %v2668
      %v2847 = vpop.f32.mrf.mxu0
      %v2848 = vadd.f32 0.0, %v2847
      %v2849 = vpop.f32.mrf.mxu0
      %v2850 = vadd.f32 0.0, %v2849
      %2851 = vmatmul.bf16.gmra.mxu0 %v2676
      %v2852 = vpop.f32.mrf.mxu0
      %v2853 = vadd.f32 0.0, %v2852
      %v2854 = vpop.f32.mrf.mxu0
      %v2855 = vadd.f32 0.0, %v2854
      %2856 = vmatmul.bf16.gmra.mxu0 %v2684
      %v2857 = vpop.f32.mrf.mxu0
      %v2858 = vadd.f32 0.0, %v2857
      %v2859 = vpop.f32.mrf.mxu0
      %v2860 = vadd.f32 0.0, %v2859
      %2861 = vmatmul.bf16.gmra.mxu0 %v2692
      %v2862 = vpop.f32.mrf.mxu0
      %v2863 = vadd.f32 0.0, %v2862
      %v2864 = vpop.f32.mrf.mxu0
      %v2865 = vadd.f32 0.0, %v2864
      %2866 = vmatmul.bf16.gmra.mxu0 %v2700
      %v2867 = vpop.f32.mrf.mxu0
      %v2868 = vadd.f32 0.0, %v2867
      %v2869 = vpop.f32.mrf.mxu0
      %v2870 = vadd.f32 0.0, %v2869
      %2871 = vmatmul.bf16.gmra.mxu0 %v2708
      %v2872 = vpop.f32.mrf.mxu0
      %v2873 = vadd.f32 0.0, %v2872
      %v2874 = vpop.f32.mrf.mxu0
      %v2875 = vadd.f32 0.0, %v2874
      %2876 = vmatmul.bf16.gmra.mxu0 %v2716
      %v2877 = vpop.f32.mrf.mxu0
      %v2878 = vadd.f32 0.0, %v2877
      %v2879 = vpop.f32.mrf.mxu0
      %v2880 = vadd.f32 0.0, %v2879
      %2881 = vmatmul.bf16.gmra.mxu0 %v2724
      %v2882 = vpop.f32.mrf.mxu0
      %v2883 = vadd.f32 0.0, %v2882
      %v2884 = vpop.f32.mrf.mxu0
      %v2885 = vadd.f32 0.0, %v2884
      %2886 = vmatmul.bf16.gmra.mxu0 %v2732
      %v2887 = vpop.f32.mrf.mxu0
      %v2888 = vadd.f32 0.0, %v2887
      %v2889 = vpop.f32.mrf.mxu0
      %v2890 = vadd.f32 0.0, %v2889
      %2891 = vmatmul.bf16.gmra.mxu0 %v2740
      %v2892 = vpop.f32.mrf.mxu0
      %v2893 = vadd.f32 0.0, %v2892
      %v2894 = vpop.f32.mrf.mxu0
      %v2895 = vadd.f32 0.0, %v2894
      %2896 = vmatmul.bf16.gmra.mxu0 %v2748
      %v2897 = vpop.f32.mrf.mxu0
      %v2898 = vadd.f32 0.0, %v2897
      %v2899 = vpop.f32.mrf.mxu0
      %v2900 = vadd.f32 0.0, %v2899
      %2901 = vmatmul.bf16.gmra.mxu0 %v2756
      %v2902 = vpop.f32.mrf.mxu0
      %v2903 = vadd.f32 0.0, %v2902
      %v2904 = vpop.f32.mrf.mxu0
      %v2905 = vadd.f32 0.0, %v2904
      %2906 = vmatmul.bf16.gmra.mxu0 %v2764
      %v2907 = vpop.f32.mrf.mxu0
      %v2908 = vadd.f32 0.0, %v2907
      %v2909 = vpop.f32.mrf.mxu0
      %v2910 = vadd.f32 0.0, %v2909
      %2911 = vdwg.mxu0
      %v2912 = vadd.f32 %v2485, %v2838
      %v2913 = vadd.f32 %v2486, %v2840
      %v2914 = vadd.f32 %v2487, %v2843
      %v2915 = vadd.f32 %v2488, %v2845
      %v2916 = vadd.f32 %v2489, %v2848
      %v2917 = vadd.f32 %v2490, %v2850
      %v2918 = vadd.f32 %v2491, %v2853
      %v2919 = vadd.f32 %v2492, %v2855
      %v2920 = vadd.f32 %v2493, %v2858
      %v2921 = vadd.f32 %v2494, %v2860
      %v2922 = vadd.f32 %v2495, %v2863
      %v2923 = vadd.f32 %v2496, %v2865
      %v2924 = vadd.f32 %v2497, %v2868
      %v2925 = vadd.f32 %v2498, %v2870
      %v2926 = vadd.f32 %v2499, %v2873
      %v2927 = vadd.f32 %v2500, %v2875
      %v2928 = vadd.f32 %v2501, %v2878
      %v2929 = vadd.f32 %v2502, %v2880
      %v2930 = vadd.f32 %v2503, %v2883
      %v2931 = vadd.f32 %v2504, %v2885
      %v2932 = vadd.f32 %v2505, %v2888
      %v2933 = vadd.f32 %v2506, %v2890
      %v2934 = vadd.f32 %v2507, %v2893
      %v2935 = vadd.f32 %v2508, %v2895
      %v2936 = vadd.f32 %v2509, %v2898
      %v2937 = vadd.f32 %v2510, %v2900
      %v2938 = vadd.f32 %v2511, %v2903
      %v2939 = vadd.f32 %v2512, %v2905
      %v2940 = vadd.f32 %v2513, %v2908
      %v2941 = vadd.f32 %v2514, %v2910
      %v2942 = vld [vmem:[%s464 + $0x18] sm:$0xe]
      %s2943 = scalar_lea.vmem %s2, 512
      %v2944 = vld [vmem:[%s2943] sm:$0xf]
      %v2945 = vld [vmem:[%s2943 + $0x4] sm:$0xf]
      %v2946 = vld [vmem:[%s2943 + $0x8] sm:$0xf]
      %v2947 = vld [vmem:[%s2943 + $0xc] sm:$0xf]
      %v2948 = vld [vmem:[%s2943 + $0x10] sm:$0xf]
      %v2949 = vld [vmem:[%s2943 + $0x14] sm:$0xf]
      %v2950 = vld [vmem:[%s2943 + $0x18] sm:$0xf]
      %v2951 = vld [vmem:[%s2943 + $0x1c] sm:$0xf]
      %v2952 = vld [vmem:[%s2943 + $0x20] sm:$0xf]
      %v2953 = vld [vmem:[%s2943 + $0x24] sm:$0xf]
      %v2954 = vld [vmem:[%s2943 + $0x28] sm:$0xf]
      %v2955 = vld [vmem:[%s2943 + $0x2c] sm:$0xf]
      %v2956 = vld [vmem:[%s2943 + $0x30] sm:$0xf]
      %v2957 = vld [vmem:[%s2943 + $0x34] sm:$0xf]
      %v2958 = vld [vmem:[%s2943 + $0x38] sm:$0xf]
      %v2959 = vld [vmem:[%s2943 + $0x3c] sm:$0xf]
      %v2961 = vunpack.c.l.b16 %v2942
      %v2962 = vpack.c.b16 %v2595, %v2961
      %v2963 = vrot.slane %v2962, 1
      %v2964 = vrot.slane %v2626, 1
      %v2965 = vsel %vm1052, %v2963, %v2964
      %v2966 = vrot.slane %v2627, 1
      %v2967 = vsel %vm1052, %v2964, %v2966
      %v2968 = vrot.slane %v2628, 1
      %v2969 = vsel %vm1052, %v2966, %v2968
      %v2970 = vrot.slane %v2629, 1
      %v2971 = vsel %vm1052, %v2968, %v2970
      %v2972 = vrot.slane %v2630, 1
      %v2973 = vsel %vm1052, %v2970, %v2972
      %v2974 = vrot.slane %v2631, 1
      %v2975 = vsel %vm1052, %v2972, %v2974
      %v2976 = vrot.slane %v2632, 1
      %v2977 = vsel %vm1052, %v2974, %v2976
      %v2978 = vrot.slane %v2633, 1
      %v2979 = vsel %vm1052, %v2976, %v2978
      %v2980 = vrot.slane %v2634, 1
      %v2981 = vsel %vm1052, %v2978, %v2980
      %v2982 = vrot.slane %v2635, 1
      %v2983 = vsel %vm1052, %v2980, %v2982
      %v2984 = vrot.slane %v2636, 1
      %v2985 = vsel %vm1052, %v2982, %v2984
      %v2986 = vrot.slane %v2637, 1
      %v2987 = vsel %vm1052, %v2984, %v2986
      %v2988 = vrot.slane %v2638, 1
      %v2989 = vsel %vm1052, %v2986, %v2988
      %v2990 = vrot.slane %v2639, 1
      %v2991 = vsel %vm1052, %v2988, %v2990
      %v2992 = vrot.slane %v2640, 1
      %v2993 = vsel %vm1052, %v2990, %v2992
      %v3025 = vunpack.c.l.b16 %v2944
      %v3026 = vunpack.c.l.b16 %v2945
      %v3027 = vunpack.c.l.b16 %v2946
      %v3028 = vunpack.c.l.b16 %v2947
      %v3029 = vunpack.c.l.b16 %v2948
      %v3030 = vunpack.c.l.b16 %v2949
      %v3031 = vunpack.c.l.b16 %v2950
      %v3032 = vunpack.c.l.b16 %v2951
      %v3033 = vunpack.c.l.b16 %v2952
      %v3034 = vunpack.c.l.b16 %v2953
      %v3035 = vunpack.c.l.b16 %v2954
      %v3036 = vunpack.c.l.b16 %v2955
      %v3037 = vunpack.c.l.b16 %v2956
      %v3038 = vunpack.c.l.b16 %v2957
      %v3039 = vunpack.c.l.b16 %v2958
      %v3040 = vunpack.c.l.b16 %v2959
      %v3041 = vpack.c.b16 %v3026, %v3025
      %v3042 = vpack.c.b16 %v3028, %v3027
      %v3043 = vpack.c.b16 %v3030, %v3029
      %v3044 = vpack.c.b16 %v3032, %v3031
      %v3045 = vpack.c.b16 %v3034, %v3033
      %v3046 = vpack.c.b16 %v3036, %v3035
      %v3047 = vpack.c.b16 %v3038, %v3037
      %v3048 = vpack.c.b16 %v3040, %v3039
      %3057 = vmatpush.bf16.msra.mxu0 %v3048
      %3058 = vmatpush.bf16.msra.mxu0 %v3047
      %3059 = vmatpush.bf16.msra.mxu0 %v3046
      %3060 = vmatpush.bf16.msra.mxu0 %v3045
      %3061 = vmatpush.bf16.msra.mxu0 %v3044
      %3062 = vmatpush.bf16.msra.mxu0 %v3043
      %3063 = vmatpush.bf16.msra.mxu0 %v3042
      %3064 = vmatpush.bf16.msra.mxu0 %v3041
      %3065 = vmatmul.bf16.gmra.mxu0 %v2965
      %v3066 = vpop.f32.mrf.mxu0
      %v3067 = vadd.f32 0.0, %v3066
      %v3068 = vpop.f32.mrf.mxu0
      %v3069 = vadd.f32 0.0, %v3068
      %3070 = vmatmul.bf16.gmra.mxu0 %v2967
      %v3071 = vpop.f32.mrf.mxu0
      %v3072 = vadd.f32 0.0, %v3071
      %v3073 = vpop.f32.mrf.mxu0
      %v3074 = vadd.f32 0.0, %v3073
      %3075 = vmatmul.bf16.gmra.mxu0 %v2969
      %v3076 = vpop.f32.mrf.mxu0
      %v3077 = vadd.f32 0.0, %v3076
      %v3078 = vpop.f32.mrf.mxu0
      %v3079 = vadd.f32 0.0, %v3078
      %3080 = vmatmul.bf16.gmra.mxu0 %v2971
      %v3081 = vpop.f32.mrf.mxu0
      %v3082 = vadd.f32 0.0, %v3081
      %v3083 = vpop.f32.mrf.mxu0
      %v3084 = vadd.f32 0.0, %v3083
      %3085 = vmatmul.bf16.gmra.mxu0 %v2973
      %v3086 = vpop.f32.mrf.mxu0
      %v3087 = vadd.f32 0.0, %v3086
      %v3088 = vpop.f32.mrf.mxu0
      %v3089 = vadd.f32 0.0, %v3088
      %3090 = vmatmul.bf16.gmra.mxu0 %v2975
      %v3091 = vpop.f32.mrf.mxu0
      %v3092 = vadd.f32 0.0, %v3091
      %v3093 = vpop.f32.mrf.mxu0
      %v3094 = vadd.f32 0.0, %v3093
      %3095 = vmatmul.bf16.gmra.mxu0 %v2977
      %v3096 = vpop.f32.mrf.mxu0
      %v3097 = vadd.f32 0.0, %v3096
      %v3098 = vpop.f32.mrf.mxu0
      %v3099 = vadd.f32 0.0, %v3098
      %3100 = vmatmul.bf16.gmra.mxu0 %v2979
      %v3101 = vpop.f32.mrf.mxu0
      %v3102 = vadd.f32 0.0, %v3101
      %v3103 = vpop.f32.mrf.mxu0
      %v3104 = vadd.f32 0.0, %v3103
      %3105 = vmatmul.bf16.gmra.mxu0 %v2981
      %v3106 = vpop.f32.mrf.mxu0
      %v3107 = vadd.f32 0.0, %v3106
      %v3108 = vpop.f32.mrf.mxu0
      %v3109 = vadd.f32 0.0, %v3108
      %3110 = vmatmul.bf16.gmra.mxu0 %v2983
      %v3111 = vpop.f32.mrf.mxu0
      %v3112 = vadd.f32 0.0, %v3111
      %v3113 = vpop.f32.mrf.mxu0
      %v3114 = vadd.f32 0.0, %v3113
      %3115 = vmatmul.bf16.gmra.mxu0 %v2985
      %v3116 = vpop.f32.mrf.mxu0
      %v3117 = vadd.f32 0.0, %v3116
      %v3118 = vpop.f32.mrf.mxu0
      %v3119 = vadd.f32 0.0, %v3118
      %3120 = vmatmul.bf16.gmra.mxu0 %v2987
      %v3121 = vpop.f32.mrf.mxu0
      %v3122 = vadd.f32 0.0, %v3121
      %v3123 = vpop.f32.mrf.mxu0
      %v3124 = vadd.f32 0.0, %v3123
      %3125 = vmatmul.bf16.gmra.mxu0 %v2989
      %v3126 = vpop.f32.mrf.mxu0
      %v3127 = vadd.f32 0.0, %v3126
      %v3128 = vpop.f32.mrf.mxu0
      %v3129 = vadd.f32 0.0, %v3128
      %3130 = vmatmul.bf16.gmra.mxu0 %v2991
      %v3131 = vpop.f32.mrf.mxu0
      %v3132 = vadd.f32 0.0, %v3131
      %v3133 = vpop.f32.mrf.mxu0
      %v3134 = vadd.f32 0.0, %v3133
      %3135 = vmatmul.bf16.gmra.mxu0 %v2993
      %v3136 = vpop.f32.mrf.mxu0
      %v3137 = vadd.f32 0.0, %v3136
      %v3138 = vpop.f32.mrf.mxu0
      %v3139 = vadd.f32 0.0, %v3138
      %3140 = vdwg.mxu0
      %v3141 = vadd.f32 %v2912, %v3067
      %v3142 = vadd.f32 %v2913, %v3069
      %v3143 = vadd.f32 %v2914, %v3072
      %v3144 = vadd.f32 %v2915, %v3074
      %v3145 = vadd.f32 %v2916, %v3077
      %v3146 = vadd.f32 %v2917, %v3079
      %v3147 = vadd.f32 %v2918, %v3082
      %v3148 = vadd.f32 %v2919, %v3084
      %v3149 = vadd.f32 %v2920, %v3087
      %v3150 = vadd.f32 %v2921, %v3089
      %v3151 = vadd.f32 %v2922, %v3092
      %v3152 = vadd.f32 %v2923, %v3094
      %v3153 = vadd.f32 %v2924, %v3097
      %v3154 = vadd.f32 %v2925, %v3099
      %v3155 = vadd.f32 %v2926, %v3102
      %v3156 = vadd.f32 %v2927, %v3104
      %v3157 = vadd.f32 %v2928, %v3107
      %v3158 = vadd.f32 %v2929, %v3109
      %v3159 = vadd.f32 %v2930, %v3112
      %v3160 = vadd.f32 %v2931, %v3114
      %v3161 = vadd.f32 %v2932, %v3117
      %v3162 = vadd.f32 %v2933, %v3119
      %v3163 = vadd.f32 %v2934, %v3122
      %v3164 = vadd.f32 %v2935, %v3124
      %v3165 = vadd.f32 %v2936, %v3127
      %v3166 = vadd.f32 %v2937, %v3129
      %v3167 = vadd.f32 %v2938, %v3132
      %v3168 = vadd.f32 %v2939, %v3134
      %v3169 = vadd.f32 %v2940, %v3137
      %v3170 = vadd.f32 %v2941, %v3139
      %v3171 = vld [vmem:[%s3] sm:$0x1]
      %v3173 = vperm.slane %v3171, 0
      %v3175 = vadd.f32 %v3141, %v3173
      %v3176 = vadd.f32 %v3142, %v3173
      %v3177 = vadd.f32 %v3143, %v3173
      %v3178 = vadd.f32 %v3144, %v3173
      %v3179 = vadd.f32 %v3145, %v3173
      %v3180 = vadd.f32 %v3146, %v3173
      %v3181 = vadd.f32 %v3147, %v3173
      %v3182 = vadd.f32 %v3148, %v3173
      %v3183 = vadd.f32 %v3149, %v3173
      %v3184 = vadd.f32 %v3150, %v3173
      %v3185 = vadd.f32 %v3151, %v3173
      %v3186 = vadd.f32 %v3152, %v3173
      %v3187 = vadd.f32 %v3153, %v3173
      %v3188 = vadd.f32 %v3154, %v3173
      %v3189 = vadd.f32 %v3155, %v3173
      %v3190 = vadd.f32 %v3156, %v3173
      %v3191 = vadd.f32 %v3157, %v3173
      %v3192 = vadd.f32 %v3158, %v3173
      %v3193 = vadd.f32 %v3159, %v3173
      %v3194 = vadd.f32 %v3160, %v3173
      %v3195 = vadd.f32 %v3161, %v3173
      %v3196 = vadd.f32 %v3162, %v3173
      %v3197 = vadd.f32 %v3163, %v3173
      %v3198 = vadd.f32 %v3164, %v3173
      %v3199 = vadd.f32 %v3165, %v3173
      %v3200 = vadd.f32 %v3166, %v3173
      %v3201 = vadd.f32 %v3167, %v3173
      %v3202 = vadd.f32 %v3168, %v3173
      %v3203 = vadd.f32 %v3169, %v3173
      %v3204 = vadd.f32 %v3170, %v3173
      %v3205 = vmax.f32 %v3175, 0.0
      %v3206 = vmax.f32 %v3176, 0.0
      %v3207 = vmax.f32 %v3177, 0.0
      %v3208 = vmax.f32 %v3178, 0.0
      %v3209 = vmax.f32 %v3179, 0.0
      %v3210 = vmax.f32 %v3180, 0.0
      %v3211 = vmax.f32 %v3181, 0.0
      %v3212 = vmax.f32 %v3182, 0.0
      %v3213 = vmax.f32 %v3183, 0.0
      %v3214 = vmax.f32 %v3184, 0.0
      %v3215 = vmax.f32 %v3185, 0.0
      %v3216 = vmax.f32 %v3186, 0.0
      %v3217 = vmax.f32 %v3187, 0.0
      %v3218 = vmax.f32 %v3188, 0.0
      %v3219 = vmax.f32 %v3189, 0.0
      %v3220 = vmax.f32 %v3190, 0.0
      %v3221 = vmax.f32 %v3191, 0.0
      %v3222 = vmax.f32 %v3192, 0.0
      %v3223 = vmax.f32 %v3193, 0.0
      %v3224 = vmax.f32 %v3194, 0.0
      %v3225 = vmax.f32 %v3195, 0.0
      %v3226 = vmax.f32 %v3196, 0.0
      %v3227 = vmax.f32 %v3197, 0.0
      %v3228 = vmax.f32 %v3198, 0.0
      %v3229 = vmax.f32 %v3199, 0.0
      %v3230 = vmax.f32 %v3200, 0.0
      %v3231 = vmax.f32 %v3201, 0.0
      %v3232 = vmax.f32 %v3202, 0.0
      %v3233 = vmax.f32 %v3203, 0.0
      %v3234 = vmax.f32 %v3204, 0.0
      %v3235 = vld [vmem:[%s286] sm:$0x1]
      %v3237 = vperm.slane %v3235, 0
      %v3239 = vadd.f32 %v3205, %v3237
      %v3240 = vadd.f32 %v3206, %v3237
      %v3241 = vadd.f32 %v3207, %v3237
      %v3242 = vadd.f32 %v3208, %v3237
      %v3243 = vadd.f32 %v3209, %v3237
      %v3244 = vadd.f32 %v3210, %v3237
      %v3245 = vadd.f32 %v3211, %v3237
      %v3246 = vadd.f32 %v3212, %v3237
      %v3247 = vadd.f32 %v3213, %v3237
      %v3248 = vadd.f32 %v3214, %v3237
      %v3249 = vadd.f32 %v3215, %v3237
      %v3250 = vadd.f32 %v3216, %v3237
      %v3251 = vadd.f32 %v3217, %v3237
      %v3252 = vadd.f32 %v3218, %v3237
      %v3253 = vadd.f32 %v3219, %v3237
      %v3254 = vadd.f32 %v3220, %v3237
      %v3255 = vadd.f32 %v3221, %v3237
      %v3256 = vadd.f32 %v3222, %v3237
      %v3257 = vadd.f32 %v3223, %v3237
      %v3258 = vadd.f32 %v3224, %v3237
      %v3259 = vadd.f32 %v3225, %v3237
      %v3260 = vadd.f32 %v3226, %v3237
      %v3261 = vadd.f32 %v3227, %v3237
      %v3262 = vadd.f32 %v3228, %v3237
      %v3263 = vadd.f32 %v3229, %v3237
      %v3264 = vadd.f32 %v3230, %v3237
      %v3265 = vadd.f32 %v3231, %v3237
      %v3266 = vadd.f32 %v3232, %v3237
      %v3267 = vadd.f32 %v3233, %v3237
      %v3268 = vadd.f32 %v3234, %v3237
      %v3269 = vlaneseq
      %v3270 = vshrl.u32 %v3269, 7
      %v3271 = vadd.s32 %v3270, 8
      %v3272 = vadd.s32 %v3270, 16
      %v3273 = vadd.s32 %v3270, 24
      %v3274 = vadd.s32 %v3270, 32
      %v3275 = vadd.s32 %v3270, 40
      %v3276 = vadd.s32 %v3270, 48
      %v3277 = vadd.s32 %v3270, 56
      %v3278 = vadd.s32 %v3270, 64
      %v3279 = vadd.s32 %v3270, 72
      %v3280 = vadd.s32 %v3270, 80
      %v3281 = vadd.s32 %v3270, 88
      %v3282 = vadd.s32 %v3270, 96
      %v3283 = vadd.s32 %v3270, 104
      %v3284 = vadd.s32 %v3270, 112
      %v3285 = vadd.s32 %v3270, 120
      %v3286 = vadd.s32 %v3270, 128
      %v3287 = vadd.s32 %v3270, 136
      %v3288 = vadd.s32 %v3270, 144
      %v3289 = vadd.s32 %v3270, 152
      %v3290 = vadd.s32 %v3270, 160
      %v3291 = vadd.s32 %v3270, 168
      %v3292 = vadd.s32 %v3270, 176
      %v3293 = vadd.s32 %v3270, 184
      %v3294 = vadd.s32 %v3270, 192
      %v3295 = vadd.s32 %v3270, 200
      %v3296 = vadd.s32 %v3270, 208
      %v3297 = vadd.s32 %v3270, 216
      %v3298 = vadd.s32 %v3270, 224
      %v3299 = vadd.s32 %v3270, 232
      %vm3300 = vcmp.ge.s32.totalorder %v3270, 24
      %vm3301 = vcmp.ge.s32.totalorder %v3271, 24
      %vm3302 = vcmp.ge.s32.totalorder %v3272, 24
      %vm3303 = vcmp.ge.s32.totalorder %v3273, 24
      %vm3304 = vcmp.ge.s32.totalorder %v3274, 24
      %vm3305 = vcmp.ge.s32.totalorder %v3275, 24
      %vm3306 = vcmp.ge.s32.totalorder %v3276, 24
      %vm3307 = vcmp.ge.s32.totalorder %v3277, 24
      %vm3308 = vcmp.ge.s32.totalorder %v3278, 24
      %vm3309 = vcmp.ge.s32.totalorder %v3279, 24
      %vm3310 = vcmp.ge.s32.totalorder %v3280, 24
      %vm3311 = vcmp.ge.s32.totalorder %v3281, 24
      %vm3312 = vcmp.ge.s32.totalorder %v3282, 24
      %vm3313 = vcmp.ge.s32.totalorder %v3283, 24
      %vm3314 = vcmp.ge.s32.totalorder %v3284, 24
      %vm3315 = vcmp.ge.s32.totalorder %v3285, 24
      %vm3316 = vcmp.ge.s32.totalorder %v3286, 24
      %vm3317 = vcmp.ge.s32.totalorder %v3287, 24
      %vm3318 = vcmp.ge.s32.totalorder %v3288, 24
      %vm3319 = vcmp.ge.s32.totalorder %v3289, 24
      %vm3320 = vcmp.ge.s32.totalorder %v3290, 24
      %vm3321 = vcmp.ge.s32.totalorder %v3291, 24
      %vm3322 = vcmp.ge.s32.totalorder %v3292, 24
      %vm3323 = vcmp.ge.s32.totalorder %v3293, 24
      %vm3324 = vcmp.ge.s32.totalorder %v3294, 24
      %vm3325 = vcmp.ge.s32.totalorder %v3295, 24
      %vm3326 = vcmp.ge.s32.totalorder %v3296, 24
      %vm3327 = vcmp.ge.s32.totalorder %v3297, 24
      %vm3328 = vcmp.ge.s32.totalorder %v3298, 24
      %vm3329 = vcmp.ge.s32.totalorder %v3299, 24
      %v3330 = vsel %vm3300, 1, 0
      %v3331 = vsel %vm3301, 1, 0
      %v3332 = vsel %vm3302, 1, 0
      %v3333 = vsel %vm3303, 1, 0
      %v3334 = vsel %vm3304, 1, 0
      %v3335 = vsel %vm3305, 1, 0
      %v3336 = vsel %vm3306, 1, 0
      %v3337 = vsel %vm3307, 1, 0
      %v3338 = vsel %vm3308, 1, 0
      %v3339 = vsel %vm3309, 1, 0
      %v3340 = vsel %vm3310, 1, 0
      %v3341 = vsel %vm3311, 1, 0
      %v3342 = vsel %vm3312, 1, 0
      %v3343 = vsel %vm3313, 1, 0
      %v3344 = vsel %vm3314, 1, 0
      %v3345 = vsel %vm3315, 1, 0
      %v3346 = vsel %vm3316, 1, 0
      %v3347 = vsel %vm3317, 1, 0
      %v3348 = vsel %vm3318, 1, 0
      %v3349 = vsel %vm3319, 1, 0
      %v3350 = vsel %vm3320, 1, 0
      %v3351 = vsel %vm3321, 1, 0
      %v3352 = vsel %vm3322, 1, 0
      %v3353 = vsel %vm3323, 1, 0
      %v3354 = vsel %vm3324, 1, 0
      %v3355 = vsel %vm3325, 1, 0
      %v3356 = vsel %vm3326, 1, 0
      %v3357 = vsel %vm3327, 1, 0
      %v3358 = vsel %vm3328, 1, 0
      %v3359 = vsel %vm3329, 1, 0
      %vm3360 = vcmp.ge.s32.totalorder %v3270, 48
      %vm3361 = vcmp.ge.s32.totalorder %v3271, 48
      %vm3362 = vcmp.ge.s32.totalorder %v3272, 48
      %vm3363 = vcmp.ge.s32.totalorder %v3273, 48
      %vm3364 = vcmp.ge.s32.totalorder %v3274, 48
      %vm3365 = vcmp.ge.s32.totalorder %v3275, 48
      %vm3366 = vcmp.ge.s32.totalorder %v3276, 48
      %vm3367 = vcmp.ge.s32.totalorder %v3277, 48
      %vm3368 = vcmp.ge.s32.totalorder %v3278, 48
      %vm3369 = vcmp.ge.s32.totalorder %v3279, 48
      %vm3370 = vcmp.ge.s32.totalorder %v3280, 48
      %vm3371 = vcmp.ge.s32.totalorder %v3281, 48
      %vm3372 = vcmp.ge.s32.totalorder %v3282, 48
      %vm3373 = vcmp.ge.s32.totalorder %v3283, 48
      %vm3374 = vcmp.ge.s32.totalorder %v3284, 48
      %vm3375 = vcmp.ge.s32.totalorder %v3285, 48
      %vm3376 = vcmp.ge.s32.totalorder %v3286, 48
      %vm3377 = vcmp.ge.s32.totalorder %v3287, 48
      %vm3378 = vcmp.ge.s32.totalorder %v3288, 48
      %vm3379 = vcmp.ge.s32.totalorder %v3289, 48
      %vm3380 = vcmp.ge.s32.totalorder %v3290, 48
      %vm3381 = vcmp.ge.s32.totalorder %v3291, 48
      %vm3382 = vcmp.ge.s32.totalorder %v3292, 48
      %vm3383 = vcmp.ge.s32.totalorder %v3293, 48
      %vm3384 = vcmp.ge.s32.totalorder %v3294, 48
      %vm3385 = vcmp.ge.s32.totalorder %v3295, 48
      %vm3386 = vcmp.ge.s32.totalorder %v3296, 48
      %vm3387 = vcmp.ge.s32.totalorder %v3297, 48
      %vm3388 = vcmp.ge.s32.totalorder %v3298, 48
      %vm3389 = vcmp.ge.s32.totalorder %v3299, 48
      %v3390 = vsel %vm3360, 1, 0
      %v3391 = vsel %vm3361, 1, 0
      %v3392 = vsel %vm3362, 1, 0
      %v3393 = vsel %vm3363, 1, 0
      %v3394 = vsel %vm3364, 1, 0
      %v3395 = vsel %vm3365, 1, 0
      %v3396 = vsel %vm3366, 1, 0
      %v3397 = vsel %vm3367, 1, 0
      %v3398 = vsel %vm3368, 1, 0
      %v3399 = vsel %vm3369, 1, 0
      %v3400 = vsel %vm3370, 1, 0
      %v3401 = vsel %vm3371, 1, 0
      %v3402 = vsel %vm3372, 1, 0
      %v3403 = vsel %vm3373, 1, 0
      %v3404 = vsel %vm3374, 1, 0
      %v3405 = vsel %vm3375, 1, 0
      %v3406 = vsel %vm3376, 1, 0
      %v3407 = vsel %vm3377, 1, 0
      %v3408 = vsel %vm3378, 1, 0
      %v3409 = vsel %vm3379, 1, 0
      %v3410 = vsel %vm3380, 1, 0
      %v3411 = vsel %vm3381, 1, 0
      %v3412 = vsel %vm3382, 1, 0
      %v3413 = vsel %vm3383, 1, 0
      %v3414 = vsel %vm3384, 1, 0
      %v3415 = vsel %vm3385, 1, 0
      %v3416 = vsel %vm3386, 1, 0
      %v3417 = vsel %vm3387, 1, 0
      %v3418 = vsel %vm3388, 1, 0
      %v3419 = vsel %vm3389, 1, 0
      %v3420 = vadd.s32 %v3330, %v3390
      %v3421 = vadd.s32 %v3331, %v3391
      %v3422 = vadd.s32 %v3332, %v3392
      %v3423 = vadd.s32 %v3333, %v3393
      %v3424 = vadd.s32 %v3334, %v3394
      %v3425 = vadd.s32 %v3335, %v3395
      %v3426 = vadd.s32 %v3336, %v3396
      %v3427 = vadd.s32 %v3337, %v3397
      %v3428 = vadd.s32 %v3338, %v3398
      %v3429 = vadd.s32 %v3339, %v3399
      %v3430 = vadd.s32 %v3340, %v3400
      %v3431 = vadd.s32 %v3341, %v3401
      %v3432 = vadd.s32 %v3342, %v3402
      %v3433 = vadd.s32 %v3343, %v3403
      %v3434 = vadd.s32 %v3344, %v3404
      %v3435 = vadd.s32 %v3345, %v3405
      %v3436 = vadd.s32 %v3346, %v3406
      %v3437 = vadd.s32 %v3347, %v3407
      %v3438 = vadd.s32 %v3348, %v3408
      %v3439 = vadd.s32 %v3349, %v3409
      %v3440 = vadd.s32 %v3350, %v3410
      %v3441 = vadd.s32 %v3351, %v3411
      %v3442 = vadd.s32 %v3352, %v3412
      %v3443 = vadd.s32 %v3353, %v3413
      %v3444 = vadd.s32 %v3354, %v3414
      %v3445 = vadd.s32 %v3355, %v3415
      %v3446 = vadd.s32 %v3356, %v3416
      %v3447 = vadd.s32 %v3357, %v3417
      %v3448 = vadd.s32 %v3358, %v3418
      %v3449 = vadd.s32 %v3359, %v3419
      %vm3450 = vcmp.ge.s32.totalorder %v3270, 72
      %vm3451 = vcmp.ge.s32.totalorder %v3271, 72
      %vm3452 = vcmp.ge.s32.totalorder %v3272, 72
      %vm3453 = vcmp.ge.s32.totalorder %v3273, 72
      %vm3454 = vcmp.ge.s32.totalorder %v3274, 72
      %vm3455 = vcmp.ge.s32.totalorder %v3275, 72
      %vm3456 = vcmp.ge.s32.totalorder %v3276, 72
      %vm3457 = vcmp.ge.s32.totalorder %v3277, 72
      %vm3458 = vcmp.ge.s32.totalorder %v3278, 72
      %vm3459 = vcmp.ge.s32.totalorder %v3279, 72
      %vm3460 = vcmp.ge.s32.totalorder %v3280, 72
      %vm3461 = vcmp.ge.s32.totalorder %v3281, 72
      %vm3462 = vcmp.ge.s32.totalorder %v3282, 72
      %vm3463 = vcmp.ge.s32.totalorder %v3283, 72
      %vm3464 = vcmp.ge.s32.totalorder %v3284, 72
      %vm3465 = vcmp.ge.s32.totalorder %v3285, 72
      %vm3466 = vcmp.ge.s32.totalorder %v3286, 72
      %vm3467 = vcmp.ge.s32.totalorder %v3287, 72
      %vm3468 = vcmp.ge.s32.totalorder %v3288, 72
      %vm3469 = vcmp.ge.s32.totalorder %v3289, 72
      %vm3470 = vcmp.ge.s32.totalorder %v3290, 72
      %vm3471 = vcmp.ge.s32.totalorder %v3291, 72
      %vm3472 = vcmp.ge.s32.totalorder %v3292, 72
      %vm3473 = vcmp.ge.s32.totalorder %v3293, 72
      %vm3474 = vcmp.ge.s32.totalorder %v3294, 72
      %vm3475 = vcmp.ge.s32.totalorder %v3295, 72
      %vm3476 = vcmp.ge.s32.totalorder %v3296, 72
      %vm3477 = vcmp.ge.s32.totalorder %v3297, 72
      %vm3478 = vcmp.ge.s32.totalorder %v3298, 72
      %vm3479 = vcmp.ge.s32.totalorder %v3299, 72
      %v3480 = vsel %vm3450, 1, 0
      %v3481 = vsel %vm3451, 1, 0
      %v3482 = vsel %vm3452, 1, 0
      %v3483 = vsel %vm3453, 1, 0
      %v3484 = vsel %vm3454, 1, 0
      %v3485 = vsel %vm3455, 1, 0
      %v3486 = vsel %vm3456, 1, 0
      %v3487 = vsel %vm3457, 1, 0
      %v3488 = vsel %vm3458, 1, 0
      %v3489 = vsel %vm3459, 1, 0
      %v3490 = vsel %vm3460, 1, 0
      %v3491 = vsel %vm3461, 1, 0
      %v3492 = vsel %vm3462, 1, 0
      %v3493 = vsel %vm3463, 1, 0
      %v3494 = vsel %vm3464, 1, 0
      %v3495 = vsel %vm3465, 1, 0
      %v3496 = vsel %vm3466, 1, 0
      %v3497 = vsel %vm3467, 1, 0
      %v3498 = vsel %vm3468, 1, 0
      %v3499 = vsel %vm3469, 1, 0
      %v3500 = vsel %vm3470, 1, 0
      %v3501 = vsel %vm3471, 1, 0
      %v3502 = vsel %vm3472, 1, 0
      %v3503 = vsel %vm3473, 1, 0
      %v3504 = vsel %vm3474, 1, 0
      %v3505 = vsel %vm3475, 1, 0
      %v3506 = vsel %vm3476, 1, 0
      %v3507 = vsel %vm3477, 1, 0
      %v3508 = vsel %vm3478, 1, 0
      %v3509 = vsel %vm3479, 1, 0
      %v3510 = vadd.s32 %v3420, %v3480
      %v3511 = vadd.s32 %v3421, %v3481
      %v3512 = vadd.s32 %v3422, %v3482
      %v3513 = vadd.s32 %v3423, %v3483
      %v3514 = vadd.s32 %v3424, %v3484
      %v3515 = vadd.s32 %v3425, %v3485
      %v3516 = vadd.s32 %v3426, %v3486
      %v3517 = vadd.s32 %v3427, %v3487
      %v3518 = vadd.s32 %v3428, %v3488
      %v3519 = vadd.s32 %v3429, %v3489
      %v3520 = vadd.s32 %v3430, %v3490
      %v3521 = vadd.s32 %v3431, %v3491
      %v3522 = vadd.s32 %v3432, %v3492
      %v3523 = vadd.s32 %v3433, %v3493
      %v3524 = vadd.s32 %v3434, %v3494
      %v3525 = vadd.s32 %v3435, %v3495
      %v3526 = vadd.s32 %v3436, %v3496
      %v3527 = vadd.s32 %v3437, %v3497
      %v3528 = vadd.s32 %v3438, %v3498
      %v3529 = vadd.s32 %v3439, %v3499
      %v3530 = vadd.s32 %v3440, %v3500
      %v3531 = vadd.s32 %v3441, %v3501
      %v3532 = vadd.s32 %v3442, %v3502
      %v3533 = vadd.s32 %v3443, %v3503
      %v3534 = vadd.s32 %v3444, %v3504
      %v3535 = vadd.s32 %v3445, %v3505
      %v3536 = vadd.s32 %v3446, %v3506
      %v3537 = vadd.s32 %v3447, %v3507
      %v3538 = vadd.s32 %v3448, %v3508
      %v3539 = vadd.s32 %v3449, %v3509
      %vm3540 = vcmp.ge.s32.totalorder %v3270, 96
      %vm3541 = vcmp.ge.s32.totalorder %v3271, 96
      %vm3542 = vcmp.ge.s32.totalorder %v3272, 96
      %vm3543 = vcmp.ge.s32.totalorder %v3273, 96
      %vm3544 = vcmp.ge.s32.totalorder %v3274, 96
      %vm3545 = vcmp.ge.s32.totalorder %v3275, 96
      %vm3546 = vcmp.ge.s32.totalorder %v3276, 96
      %vm3547 = vcmp.ge.s32.totalorder %v3277, 96
      %vm3548 = vcmp.ge.s32.totalorder %v3278, 96
      %vm3549 = vcmp.ge.s32.totalorder %v3279, 96
      %vm3550 = vcmp.ge.s32.totalorder %v3280, 96
      %vm3551 = vcmp.ge.s32.totalorder %v3281, 96
      %vm3552 = vcmp.ge.s32.totalorder %v3282, 96
      %vm3553 = vcmp.ge.s32.totalorder %v3283, 96
      %vm3554 = vcmp.ge.s32.totalorder %v3284, 96
      %vm3555 = vcmp.ge.s32.totalorder %v3285, 96
      %vm3556 = vcmp.ge.s32.totalorder %v3286, 96
      %vm3557 = vcmp.ge.s32.totalorder %v3287, 96
      %vm3558 = vcmp.ge.s32.totalorder %v3288, 96
      %vm3559 = vcmp.ge.s32.totalorder %v3289, 96
      %vm3560 = vcmp.ge.s32.totalorder %v3290, 96
      %vm3561 = vcmp.ge.s32.totalorder %v3291, 96
      %vm3562 = vcmp.ge.s32.totalorder %v3292, 96
      %vm3563 = vcmp.ge.s32.totalorder %v3293, 96
      %vm3564 = vcmp.ge.s32.totalorder %v3294, 96
      %vm3565 = vcmp.ge.s32.totalorder %v3295, 96
      %vm3566 = vcmp.ge.s32.totalorder %v3296, 96
      %vm3567 = vcmp.ge.s32.totalorder %v3297, 96
      %vm3568 = vcmp.ge.s32.totalorder %v3298, 96
      %vm3569 = vcmp.ge.s32.totalorder %v3299, 96
      %v3570 = vsel %vm3540, 1, 0
      %v3571 = vsel %vm3541, 1, 0
      %v3572 = vsel %vm3542, 1, 0
      %v3573 = vsel %vm3543, 1, 0
      %v3574 = vsel %vm3544, 1, 0
      %v3575 = vsel %vm3545, 1, 0
      %v3576 = vsel %vm3546, 1, 0
      %v3577 = vsel %vm3547, 1, 0
      %v3578 = vsel %vm3548, 1, 0
      %v3579 = vsel %vm3549, 1, 0
      %v3580 = vsel %vm3550, 1, 0
      %v3581 = vsel %vm3551, 1, 0
      %v3582 = vsel %vm3552, 1, 0
      %v3583 = vsel %vm3553, 1, 0
      %v3584 = vsel %vm3554, 1, 0
      %v3585 = vsel %vm3555, 1, 0
      %v3586 = vsel %vm3556, 1, 0
      %v3587 = vsel %vm3557, 1, 0
      %v3588 = vsel %vm3558, 1, 0
      %v3589 = vsel %vm3559, 1, 0
      %v3590 = vsel %vm3560, 1, 0
      %v3591 = vsel %vm3561, 1, 0
      %v3592 = vsel %vm3562, 1, 0
      %v3593 = vsel %vm3563, 1, 0
      %v3594 = vsel %vm3564, 1, 0
      %v3595 = vsel %vm3565, 1, 0
      %v3596 = vsel %vm3566, 1, 0
      %v3597 = vsel %vm3567, 1, 0
      %v3598 = vsel %vm3568, 1, 0
      %v3599 = vsel %vm3569, 1, 0
      %v3600 = vadd.s32 %v3510, %v3570
      %v3601 = vadd.s32 %v3511, %v3571
      %v3602 = vadd.s32 %v3512, %v3572
      %v3603 = vadd.s32 %v3513, %v3573
      %v3604 = vadd.s32 %v3514, %v3574
      %v3605 = vadd.s32 %v3515, %v3575
      %v3606 = vadd.s32 %v3516, %v3576
      %v3607 = vadd.s32 %v3517, %v3577
      %v3608 = vadd.s32 %v3518, %v3578
      %v3609 = vadd.s32 %v3519, %v3579
      %v3610 = vadd.s32 %v3520, %v3580
      %v3611 = vadd.s32 %v3521, %v3581
      %v3612 = vadd.s32 %v3522, %v3582
      %v3613 = vadd.s32 %v3523, %v3583
      %v3614 = vadd.s32 %v3524, %v3584
      %v3615 = vadd.s32 %v3525, %v3585
      %v3616 = vadd.s32 %v3526, %v3586
      %v3617 = vadd.s32 %v3527, %v3587
      %v3618 = vadd.s32 %v3528, %v3588
      %v3619 = vadd.s32 %v3529, %v3589
      %v3620 = vadd.s32 %v3530, %v3590
      %v3621 = vadd.s32 %v3531, %v3591
      %v3622 = vadd.s32 %v3532, %v3592
      %v3623 = vadd.s32 %v3533, %v3593
      %v3624 = vadd.s32 %v3534, %v3594
      %v3625 = vadd.s32 %v3535, %v3595
      %v3626 = vadd.s32 %v3536, %v3596
      %v3627 = vadd.s32 %v3537, %v3597
      %v3628 = vadd.s32 %v3538, %v3598
      %v3629 = vadd.s32 %v3539, %v3599
      %vm3630 = vcmp.ge.s32.totalorder %v3270, 120
      %vm3631 = vcmp.ge.s32.totalorder %v3271, 120
      %vm3632 = vcmp.ge.s32.totalorder %v3272, 120
      %vm3633 = vcmp.ge.s32.totalorder %v3273, 120
      %vm3634 = vcmp.ge.s32.totalorder %v3274, 120
      %vm3635 = vcmp.ge.s32.totalorder %v3275, 120
      %vm3636 = vcmp.ge.s32.totalorder %v3276, 120
      %vm3637 = vcmp.ge.s32.totalorder %v3277, 120
      %vm3638 = vcmp.ge.s32.totalorder %v3278, 120
      %vm3639 = vcmp.ge.s32.totalorder %v3279, 120
      %vm3640 = vcmp.ge.s32.totalorder %v3280, 120
      %vm3641 = vcmp.ge.s32.totalorder %v3281, 120
      %vm3642 = vcmp.ge.s32.totalorder %v3282, 120
      %vm3643 = vcmp.ge.s32.totalorder %v3283, 120
      %vm3644 = vcmp.ge.s32.totalorder %v3284, 120
      %vm3645 = vcmp.ge.s32.totalorder %v3285, 120
      %vm3646 = vcmp.ge.s32.totalorder %v3286, 120
      %vm3647 = vcmp.ge.s32.totalorder %v3287, 120
      %vm3648 = vcmp.ge.s32.totalorder %v3288, 120
      %vm3649 = vcmp.ge.s32.totalorder %v3289, 120
      %vm3650 = vcmp.ge.s32.totalorder %v3290, 120
      %vm3651 = vcmp.ge.s32.totalorder %v3291, 120
      %vm3652 = vcmp.ge.s32.totalorder %v3292, 120
      %vm3653 = vcmp.ge.s32.totalorder %v3293, 120
      %vm3654 = vcmp.ge.s32.totalorder %v3294, 120
      %vm3655 = vcmp.ge.s32.totalorder %v3295, 120
      %vm3656 = vcmp.ge.s32.totalorder %v3296, 120
      %vm3657 = vcmp.ge.s32.totalorder %v3297, 120
      %vm3658 = vcmp.ge.s32.totalorder %v3298, 120
      %vm3659 = vcmp.ge.s32.totalorder %v3299, 120
      %v3660 = vsel %vm3630, 1, 0
      %v3661 = vsel %vm3631, 1, 0
      %v3662 = vsel %vm3632, 1, 0
      %v3663 = vsel %vm3633, 1, 0
      %v3664 = vsel %vm3634, 1, 0
      %v3665 = vsel %vm3635, 1, 0
      %v3666 = vsel %vm3636, 1, 0
      %v3667 = vsel %vm3637, 1, 0
      %v3668 = vsel %vm3638, 1, 0
      %v3669 = vsel %vm3639, 1, 0
      %v3670 = vsel %vm3640, 1, 0
      %v3671 = vsel %vm3641, 1, 0
      %v3672 = vsel %vm3642, 1, 0
      %v3673 = vsel %vm3643, 1, 0
      %v3674 = vsel %vm3644, 1, 0
      %v3675 = vsel %vm3645, 1, 0
      %v3676 = vsel %vm3646, 1, 0
      %v3677 = vsel %vm3647, 1, 0
      %v3678 = vsel %vm3648, 1, 0
      %v3679 = vsel %vm3649, 1, 0
      %v3680 = vsel %vm3650, 1, 0
      %v3681 = vsel %vm3651, 1, 0
      %v3682 = vsel %vm3652, 1, 0
      %v3683 = vsel %vm3653, 1, 0
      %v3684 = vsel %vm3654, 1, 0
      %v3685 = vsel %vm3655, 1, 0
      %v3686 = vsel %vm3656, 1, 0
      %v3687 = vsel %vm3657, 1, 0
      %v3688 = vsel %vm3658, 1, 0
      %v3689 = vsel %vm3659, 1, 0
      %v3690 = vadd.s32 %v3600, %v3660
      %v3691 = vadd.s32 %v3601, %v3661
      %v3692 = vadd.s32 %v3602, %v3662
      %v3693 = vadd.s32 %v3603, %v3663
      %v3694 = vadd.s32 %v3604, %v3664
      %v3695 = vadd.s32 %v3605, %v3665
      %v3696 = vadd.s32 %v3606, %v3666
      %v3697 = vadd.s32 %v3607, %v3667
      %v3698 = vadd.s32 %v3608, %v3668
      %v3699 = vadd.s32 %v3609, %v3669
      %v3700 = vadd.s32 %v3610, %v3670
      %v3701 = vadd.s32 %v3611, %v3671
      %v3702 = vadd.s32 %v3612, %v3672
      %v3703 = vadd.s32 %v3613, %v3673
      %v3704 = vadd.s32 %v3614, %v3674
      %v3705 = vadd.s32 %v3615, %v3675
      %v3706 = vadd.s32 %v3616, %v3676
      %v3707 = vadd.s32 %v3617, %v3677
      %v3708 = vadd.s32 %v3618, %v3678
      %v3709 = vadd.s32 %v3619, %v3679
      %v3710 = vadd.s32 %v3620, %v3680
      %v3711 = vadd.s32 %v3621, %v3681
      %v3712 = vadd.s32 %v3622, %v3682
      %v3713 = vadd.s32 %v3623, %v3683
      %v3714 = vadd.s32 %v3624, %v3684
      %v3715 = vadd.s32 %v3625, %v3685
      %v3716 = vadd.s32 %v3626, %v3686
      %v3717 = vadd.s32 %v3627, %v3687
      %v3718 = vadd.s32 %v3628, %v3688
      %v3719 = vadd.s32 %v3629, %v3689
      %vm3720 = vcmp.ge.s32.totalorder %v3270, 144
      %vm3721 = vcmp.ge.s32.totalorder %v3271, 144
      %vm3722 = vcmp.ge.s32.totalorder %v3272, 144
      %vm3723 = vcmp.ge.s32.totalorder %v3273, 144
      %vm3724 = vcmp.ge.s32.totalorder %v3274, 144
      %vm3725 = vcmp.ge.s32.totalorder %v3275, 144
      %vm3726 = vcmp.ge.s32.totalorder %v3276, 144
      %vm3727 = vcmp.ge.s32.totalorder %v3277, 144
      %vm3728 = vcmp.ge.s32.totalorder %v3278, 144
      %vm3729 = vcmp.ge.s32.totalorder %v3279, 144
      %vm3730 = vcmp.ge.s32.totalorder %v3280, 144
      %vm3731 = vcmp.ge.s32.totalorder %v3281, 144
      %vm3732 = vcmp.ge.s32.totalorder %v3282, 144
      %vm3733 = vcmp.ge.s32.totalorder %v3283, 144
      %vm3734 = vcmp.ge.s32.totalorder %v3284, 144
      %vm3735 = vcmp.ge.s32.totalorder %v3285, 144
      %vm3736 = vcmp.ge.s32.totalorder %v3286, 144
      %vm3737 = vcmp.ge.s32.totalorder %v3287, 144
      %vm3738 = vcmp.ge.s32.totalorder %v3288, 144
      %vm3739 = vcmp.ge.s32.totalorder %v3289, 144
      %vm3740 = vcmp.ge.s32.totalorder %v3290, 144
      %vm3741 = vcmp.ge.s32.totalorder %v3291, 144
      %vm3742 = vcmp.ge.s32.totalorder %v3292, 144
      %vm3743 = vcmp.ge.s32.totalorder %v3293, 144
      %vm3744 = vcmp.ge.s32.totalorder %v3294, 144
      %vm3745 = vcmp.ge.s32.totalorder %v3295, 144
      %vm3746 = vcmp.ge.s32.totalorder %v3296, 144
      %vm3747 = vcmp.ge.s32.totalorder %v3297, 144
      %vm3748 = vcmp.ge.s32.totalorder %v3298, 144
      %vm3749 = vcmp.ge.s32.totalorder %v3299, 144
      %v3750 = vsel %vm3720, 1, 0
      %v3751 = vsel %vm3721, 1, 0
      %v3752 = vsel %vm3722, 1, 0
      %v3753 = vsel %vm3723, 1, 0
      %v3754 = vsel %vm3724, 1, 0
      %v3755 = vsel %vm3725, 1, 0
      %v3756 = vsel %vm3726, 1, 0
      %v3757 = vsel %vm3727, 1, 0
      %v3758 = vsel %vm3728, 1, 0
      %v3759 = vsel %vm3729, 1, 0
      %v3760 = vsel %vm3730, 1, 0
      %v3761 = vsel %vm3731, 1, 0
      %v3762 = vsel %vm3732, 1, 0
      %v3763 = vsel %vm3733, 1, 0
      %v3764 = vsel %vm3734, 1, 0
      %v3765 = vsel %vm3735, 1, 0
      %v3766 = vsel %vm3736, 1, 0
      %v3767 = vsel %vm3737, 1, 0
      %v3768 = vsel %vm3738, 1, 0
      %v3769 = vsel %vm3739, 1, 0
      %v3770 = vsel %vm3740, 1, 0
      %v3771 = vsel %vm3741, 1, 0
      %v3772 = vsel %vm3742, 1, 0
      %v3773 = vsel %vm3743, 1, 0
      %v3774 = vsel %vm3744, 1, 0
      %v3775 = vsel %vm3745, 1, 0
      %v3776 = vsel %vm3746, 1, 0
      %v3777 = vsel %vm3747, 1, 0
      %v3778 = vsel %vm3748, 1, 0
      %v3779 = vsel %vm3749, 1, 0
      %v3780 = vadd.s32 %v3690, %v3750
      %v3781 = vadd.s32 %v3691, %v3751
      %v3782 = vadd.s32 %v3692, %v3752
      %v3783 = vadd.s32 %v3693, %v3753
      %v3784 = vadd.s32 %v3694, %v3754
      %v3785 = vadd.s32 %v3695, %v3755
      %v3786 = vadd.s32 %v3696, %v3756
      %v3787 = vadd.s32 %v3697, %v3757
      %v3788 = vadd.s32 %v3698, %v3758
      %v3789 = vadd.s32 %v3699, %v3759
      %v3790 = vadd.s32 %v3700, %v3760
      %v3791 = vadd.s32 %v3701, %v3761
      %v3792 = vadd.s32 %v3702, %v3762
      %v3793 = vadd.s32 %v3703, %v3763
      %v3794 = vadd.s32 %v3704, %v3764
      %v3795 = vadd.s32 %v3705, %v3765
      %v3796 = vadd.s32 %v3706, %v3766
      %v3797 = vadd.s32 %v3707, %v3767
      %v3798 = vadd.s32 %v3708, %v3768
      %v3799 = vadd.s32 %v3709, %v3769
      %v3800 = vadd.s32 %v3710, %v3770
      %v3801 = vadd.s32 %v3711, %v3771
      %v3802 = vadd.s32 %v3712, %v3772
      %v3803 = vadd.s32 %v3713, %v3773
      %v3804 = vadd.s32 %v3714, %v3774
      %v3805 = vadd.s32 %v3715, %v3775
      %v3806 = vadd.s32 %v3716, %v3776
      %v3807 = vadd.s32 %v3717, %v3777
      %v3808 = vadd.s32 %v3718, %v3778
      %v3809 = vadd.s32 %v3719, %v3779
      %vm3810 = vcmp.ge.s32.totalorder %v3270, 168
      %vm3811 = vcmp.ge.s32.totalorder %v3271, 168
      %vm3812 = vcmp.ge.s32.totalorder %v3272, 168
      %vm3813 = vcmp.ge.s32.totalorder %v3273, 168
      %vm3814 = vcmp.ge.s32.totalorder %v3274, 168
      %vm3815 = vcmp.ge.s32.totalorder %v3275, 168
      %vm3816 = vcmp.ge.s32.totalorder %v3276, 168
      %vm3817 = vcmp.ge.s32.totalorder %v3277, 168
      %vm3818 = vcmp.ge.s32.totalorder %v3278, 168
      %vm3819 = vcmp.ge.s32.totalorder %v3279, 168
      %vm3820 = vcmp.ge.s32.totalorder %v3280, 168
      %vm3821 = vcmp.ge.s32.totalorder %v3281, 168
      %vm3822 = vcmp.ge.s32.totalorder %v3282, 168
      %vm3823 = vcmp.ge.s32.totalorder %v3283, 168
      %vm3824 = vcmp.ge.s32.totalorder %v3284, 168
      %vm3825 = vcmp.ge.s32.totalorder %v3285, 168
      %vm3826 = vcmp.ge.s32.totalorder %v3286, 168
      %vm3827 = vcmp.ge.s32.totalorder %v3287, 168
      %vm3828 = vcmp.ge.s32.totalorder %v3288, 168
      %vm3829 = vcmp.ge.s32.totalorder %v3289, 168
      %vm3830 = vcmp.ge.s32.totalorder %v3290, 168
      %vm3831 = vcmp.ge.s32.totalorder %v3291, 168
      %vm3832 = vcmp.ge.s32.totalorder %v3292, 168
      %vm3833 = vcmp.ge.s32.totalorder %v3293, 168
      %vm3834 = vcmp.ge.s32.totalorder %v3294, 168
      %vm3835 = vcmp.ge.s32.totalorder %v3295, 168
      %vm3836 = vcmp.ge.s32.totalorder %v3296, 168
      %vm3837 = vcmp.ge.s32.totalorder %v3297, 168
      %vm3838 = vcmp.ge.s32.totalorder %v3298, 168
      %vm3839 = vcmp.ge.s32.totalorder %v3299, 168
      %v3840 = vsel %vm3810, 1, 0
      %v3841 = vsel %vm3811, 1, 0
      %v3842 = vsel %vm3812, 1, 0
      %v3843 = vsel %vm3813, 1, 0
      %v3844 = vsel %vm3814, 1, 0
      %v3845 = vsel %vm3815, 1, 0
      %v3846 = vsel %vm3816, 1, 0
      %v3847 = vsel %vm3817, 1, 0
      %v3848 = vsel %vm3818, 1, 0
      %v3849 = vsel %vm3819, 1, 0
      %v3850 = vsel %vm3820, 1, 0
      %v3851 = vsel %vm3821, 1, 0
      %v3852 = vsel %vm3822, 1, 0
      %v3853 = vsel %vm3823, 1, 0
      %v3854 = vsel %vm3824, 1, 0
      %v3855 = vsel %vm3825, 1, 0
      %v3856 = vsel %vm3826, 1, 0
      %v3857 = vsel %vm3827, 1, 0
      %v3858 = vsel %vm3828, 1, 0
      %v3859 = vsel %vm3829, 1, 0
      %v3860 = vsel %vm3830, 1, 0
      %v3861 = vsel %vm3831, 1, 0
      %v3862 = vsel %vm3832, 1, 0
      %v3863 = vsel %vm3833, 1, 0
      %v3864 = vsel %vm3834, 1, 0
      %v3865 = vsel %vm3835, 1, 0
      %v3866 = vsel %vm3836, 1, 0
      %v3867 = vsel %vm3837, 1, 0
      %v3868 = vsel %vm3838, 1, 0
      %v3869 = vsel %vm3839, 1, 0
      %v3870 = vadd.s32 %v3780, %v3840
      %v3871 = vadd.s32 %v3781, %v3841
      %v3872 = vadd.s32 %v3782, %v3842
      %v3873 = vadd.s32 %v3783, %v3843
      %v3874 = vadd.s32 %v3784, %v3844
      %v3875 = vadd.s32 %v3785, %v3845
      %v3876 = vadd.s32 %v3786, %v3846
      %v3877 = vadd.s32 %v3787, %v3847
      %v3878 = vadd.s32 %v3788, %v3848
      %v3879 = vadd.s32 %v3789, %v3849
      %v3880 = vadd.s32 %v3790, %v3850
      %v3881 = vadd.s32 %v3791, %v3851
      %v3882 = vadd.s32 %v3792, %v3852
      %v3883 = vadd.s32 %v3793, %v3853
      %v3884 = vadd.s32 %v3794, %v3854
      %v3885 = vadd.s32 %v3795, %v3855
      %v3886 = vadd.s32 %v3796, %v3856
      %v3887 = vadd.s32 %v3797, %v3857
      %v3888 = vadd.s32 %v3798, %v3858
      %v3889 = vadd.s32 %v3799, %v3859
      %v3890 = vadd.s32 %v3800, %v3860
      %v3891 = vadd.s32 %v3801, %v3861
      %v3892 = vadd.s32 %v3802, %v3862
      %v3893 = vadd.s32 %v3803, %v3863
      %v3894 = vadd.s32 %v3804, %v3864
      %v3895 = vadd.s32 %v3805, %v3865
      %v3896 = vadd.s32 %v3806, %v3866
      %v3897 = vadd.s32 %v3807, %v3867
      %v3898 = vadd.s32 %v3808, %v3868
      %v3899 = vadd.s32 %v3809, %v3869
      %vm3900 = vcmp.ge.s32.totalorder %v3270, 192
      %vm3901 = vcmp.ge.s32.totalorder %v3271, 192
      %vm3902 = vcmp.ge.s32.totalorder %v3272, 192
      %vm3903 = vcmp.ge.s32.totalorder %v3273, 192
      %vm3904 = vcmp.ge.s32.totalorder %v3274, 192
      %vm3905 = vcmp.ge.s32.totalorder %v3275, 192
      %vm3906 = vcmp.ge.s32.totalorder %v3276, 192
      %vm3907 = vcmp.ge.s32.totalorder %v3277, 192
      %vm3908 = vcmp.ge.s32.totalorder %v3278, 192
      %vm3909 = vcmp.ge.s32.totalorder %v3279, 192
      %vm3910 = vcmp.ge.s32.totalorder %v3280, 192
      %vm3911 = vcmp.ge.s32.totalorder %v3281, 192
      %vm3912 = vcmp.ge.s32.totalorder %v3282, 192
      %vm3913 = vcmp.ge.s32.totalorder %v3283, 192
      %vm3914 = vcmp.ge.s32.totalorder %v3284, 192
      %vm3915 = vcmp.ge.s32.totalorder %v3285, 192
      %vm3916 = vcmp.ge.s32.totalorder %v3286, 192
      %vm3917 = vcmp.ge.s32.totalorder %v3287, 192
      %vm3918 = vcmp.ge.s32.totalorder %v3288, 192
      %vm3919 = vcmp.ge.s32.totalorder %v3289, 192
      %vm3920 = vcmp.ge.s32.totalorder %v3290, 192
      %vm3921 = vcmp.ge.s32.totalorder %v3291, 192
      %vm3922 = vcmp.ge.s32.totalorder %v3292, 192
      %vm3923 = vcmp.ge.s32.totalorder %v3293, 192
      %vm3924 = vcmp.ge.s32.totalorder %v3294, 192
      %vm3925 = vcmp.ge.s32.totalorder %v3295, 192
      %vm3926 = vcmp.ge.s32.totalorder %v3296, 192
      %vm3927 = vcmp.ge.s32.totalorder %v3297, 192
      %vm3928 = vcmp.ge.s32.totalorder %v3298, 192
      %vm3929 = vcmp.ge.s32.totalorder %v3299, 192
      %v3930 = vsel %vm3900, 1, 0
      %v3931 = vsel %vm3901, 1, 0
      %v3932 = vsel %vm3902, 1, 0
      %v3933 = vsel %vm3903, 1, 0
      %v3934 = vsel %vm3904, 1, 0
      %v3935 = vsel %vm3905, 1, 0
      %v3936 = vsel %vm3906, 1, 0
      %v3937 = vsel %vm3907, 1, 0
      %v3938 = vsel %vm3908, 1, 0
      %v3939 = vsel %vm3909, 1, 0
      %v3940 = vsel %vm3910, 1, 0
      %v3941 = vsel %vm3911, 1, 0
      %v3942 = vsel %vm3912, 1, 0
      %v3943 = vsel %vm3913, 1, 0
      %v3944 = vsel %vm3914, 1, 0
      %v3945 = vsel %vm3915, 1, 0
      %v3946 = vsel %vm3916, 1, 0
      %v3947 = vsel %vm3917, 1, 0
      %v3948 = vsel %vm3918, 1, 0
      %v3949 = vsel %vm3919, 1, 0
      %v3950 = vsel %vm3920, 1, 0
      %v3951 = vsel %vm3921, 1, 0
      %v3952 = vsel %vm3922, 1, 0
      %v3953 = vsel %vm3923, 1, 0
      %v3954 = vsel %vm3924, 1, 0
      %v3955 = vsel %vm3925, 1, 0
      %v3956 = vsel %vm3926, 1, 0
      %v3957 = vsel %vm3927, 1, 0
      %v3958 = vsel %vm3928, 1, 0
      %v3959 = vsel %vm3929, 1, 0
      %v3960 = vadd.s32 %v3870, %v3930
      %v3961 = vadd.s32 %v3871, %v3931
      %v3962 = vadd.s32 %v3872, %v3932
      %v3963 = vadd.s32 %v3873, %v3933
      %v3964 = vadd.s32 %v3874, %v3934
      %v3965 = vadd.s32 %v3875, %v3935
      %v3966 = vadd.s32 %v3876, %v3936
      %v3967 = vadd.s32 %v3877, %v3937
      %v3968 = vadd.s32 %v3878, %v3938
      %v3969 = vadd.s32 %v3879, %v3939
      %v3970 = vadd.s32 %v3880, %v3940
      %v3971 = vadd.s32 %v3881, %v3941
      %v3972 = vadd.s32 %v3882, %v3942
      %v3973 = vadd.s32 %v3883, %v3943
      %v3974 = vadd.s32 %v3884, %v3944
      %v3975 = vadd.s32 %v3885, %v3945
      %v3976 = vadd.s32 %v3886, %v3946
      %v3977 = vadd.s32 %v3887, %v3947
      %v3978 = vadd.s32 %v3888, %v3948
      %v3979 = vadd.s32 %v3889, %v3949
      %v3980 = vadd.s32 %v3890, %v3950
      %v3981 = vadd.s32 %v3891, %v3951
      %v3982 = vadd.s32 %v3892, %v3952
      %v3983 = vadd.s32 %v3893, %v3953
      %v3984 = vadd.s32 %v3894, %v3954
      %v3985 = vadd.s32 %v3895, %v3955
      %v3986 = vadd.s32 %v3896, %v3956
      %v3987 = vadd.s32 %v3897, %v3957
      %v3988 = vadd.s32 %v3898, %v3958
      %v3989 = vadd.s32 %v3899, %v3959
      %vm3990 = vcmp.ge.s32.totalorder %v3270, 216
      %vm3991 = vcmp.ge.s32.totalorder %v3271, 216
      %vm3992 = vcmp.ge.s32.totalorder %v3272, 216
      %vm3993 = vcmp.ge.s32.totalorder %v3273, 216
      %vm3994 = vcmp.ge.s32.totalorder %v3274, 216
      %vm3995 = vcmp.ge.s32.totalorder %v3275, 216
      %vm3996 = vcmp.ge.s32.totalorder %v3276, 216
      %vm3997 = vcmp.ge.s32.totalorder %v3277, 216
      %vm3998 = vcmp.ge.s32.totalorder %v3278, 216
      %vm3999 = vcmp.ge.s32.totalorder %v3279, 216
      %vm4000 = vcmp.ge.s32.totalorder %v3280, 216
      %vm4001 = vcmp.ge.s32.totalorder %v3281, 216
      %vm4002 = vcmp.ge.s32.totalorder %v3282, 216
      %vm4003 = vcmp.ge.s32.totalorder %v3283, 216
      %vm4004 = vcmp.ge.s32.totalorder %v3284, 216
      %vm4005 = vcmp.ge.s32.totalorder %v3285, 216
      %vm4006 = vcmp.ge.s32.totalorder %v3286, 216
      %vm4007 = vcmp.ge.s32.totalorder %v3287, 216
      %vm4008 = vcmp.ge.s32.totalorder %v3288, 216
      %vm4009 = vcmp.ge.s32.totalorder %v3289, 216
      %vm4010 = vcmp.ge.s32.totalorder %v3290, 216
      %vm4011 = vcmp.ge.s32.totalorder %v3291, 216
      %vm4012 = vcmp.ge.s32.totalorder %v3292, 216
      %vm4013 = vcmp.ge.s32.totalorder %v3293, 216
      %vm4014 = vcmp.ge.s32.totalorder %v3294, 216
      %vm4015 = vcmp.ge.s32.totalorder %v3295, 216
      %vm4016 = vcmp.ge.s32.totalorder %v3296, 216
      %vm4017 = vcmp.ge.s32.totalorder %v3297, 216
      %vm4018 = vcmp.ge.s32.totalorder %v3298, 216
      %vm4019 = vcmp.ge.s32.totalorder %v3299, 216
      %v4020 = vsel %vm3990, 1, 0
      %v4021 = vsel %vm3991, 1, 0
      %v4022 = vsel %vm3992, 1, 0
      %v4023 = vsel %vm3993, 1, 0
      %v4024 = vsel %vm3994, 1, 0
      %v4025 = vsel %vm3995, 1, 0
      %v4026 = vsel %vm3996, 1, 0
      %v4027 = vsel %vm3997, 1, 0
      %v4028 = vsel %vm3998, 1, 0
      %v4029 = vsel %vm3999, 1, 0
      %v4030 = vsel %vm4000, 1, 0
      %v4031 = vsel %vm4001, 1, 0
      %v4032 = vsel %vm4002, 1, 0
      %v4033 = vsel %vm4003, 1, 0
      %v4034 = vsel %vm4004, 1, 0
      %v4035 = vsel %vm4005, 1, 0
      %v4036 = vsel %vm4006, 1, 0
      %v4037 = vsel %vm4007, 1, 0
      %v4038 = vsel %vm4008, 1, 0
      %v4039 = vsel %vm4009, 1, 0
      %v4040 = vsel %vm4010, 1, 0
      %v4041 = vsel %vm4011, 1, 0
      %v4042 = vsel %vm4012, 1, 0
      %v4043 = vsel %vm4013, 1, 0
      %v4044 = vsel %vm4014, 1, 0
      %v4045 = vsel %vm4015, 1, 0
      %v4046 = vsel %vm4016, 1, 0
      %v4047 = vsel %vm4017, 1, 0
      %v4048 = vsel %vm4018, 1, 0
      %v4049 = vsel %vm4019, 1, 0
      %v4050 = vadd.s32 %v3960, %v4020
      %v4051 = vadd.s32 %v3961, %v4021
      %v4052 = vadd.s32 %v3962, %v4022
      %v4053 = vadd.s32 %v3963, %v4023
      %v4054 = vadd.s32 %v3964, %v4024
      %v4055 = vadd.s32 %v3965, %v4025
      %v4056 = vadd.s32 %v3966, %v4026
      %v4057 = vadd.s32 %v3967, %v4027
      %v4058 = vadd.s32 %v3968, %v4028
      %v4059 = vadd.s32 %v3969, %v4029
      %v4060 = vadd.s32 %v3970, %v4030
      %v4061 = vadd.s32 %v3971, %v4031
      %v4062 = vadd.s32 %v3972, %v4032
      %v4063 = vadd.s32 %v3973, %v4033
      %v4064 = vadd.s32 %v3974, %v4034
      %v4065 = vadd.s32 %v3975, %v4035
      %v4066 = vadd.s32 %v3976, %v4036
      %v4067 = vadd.s32 %v3977, %v4037
      %v4068 = vadd.s32 %v3978, %v4038
      %v4069 = vadd.s32 %v3979, %v4039
      %v4070 = vadd.s32 %v3980, %v4040
      %v4071 = vadd.s32 %v3981, %v4041
      %v4072 = vadd.s32 %v3982, %v4042
      %v4073 = vadd.s32 %v3983, %v4043
      %v4074 = vadd.s32 %v3984, %v4044
      %v4075 = vadd.s32 %v3985, %v4045
      %v4076 = vadd.s32 %v3986, %v4046
      %v4077 = vadd.s32 %v3987, %v4047
      %v4078 = vadd.s32 %v3988, %v4048
      %v4079 = vadd.s32 %v3989, %v4049
      %v4080 = vmul.u32 %v4050, 24
      %v4081 = vmul.u32 %v4051, 24
      %v4082 = vmul.u32 %v4052, 24
      %v4083 = vmul.u32 %v4053, 24
      %v4084 = vmul.u32 %v4054, 24
      %v4085 = vmul.u32 %v4055, 24
      %v4086 = vmul.u32 %v4056, 24
      %v4087 = vmul.u32 %v4057, 24
      %v4088 = vmul.u32 %v4058, 24
      %v4089 = vmul.u32 %v4059, 24
      %v4090 = vmul.u32 %v4060, 24
      %v4091 = vmul.u32 %v4061, 24
      %v4092 = vmul.u32 %v4062, 24
      %v4093 = vmul.u32 %v4063, 24
      %v4094 = vmul.u32 %v4064, 24
      %v4095 = vmul.u32 %v4065, 24
      %v4096 = vmul.u32 %v4066, 24
      %v4097 = vmul.u32 %v4067, 24
      %v4098 = vmul.u32 %v4068, 24
      %v4099 = vmul.u32 %v4069, 24
      %v4100 = vmul.u32 %v4070, 24
      %v4101 = vmul.u32 %v4071, 24
      %v4102 = vmul.u32 %v4072, 24
      %v4103 = vmul.u32 %v4073, 24
      %v4104 = vmul.u32 %v4074, 24
      %v4105 = vmul.u32 %v4075, 24
      %v4106 = vmul.u32 %v4076, 24
      %v4107 = vmul.u32 %v4077, 24
      %v4108 = vmul.u32 %v4078, 24
      %v4109 = vmul.u32 %v4079, 24
      %v4110 = vsub.s32 %v3270, %v4080
      %v4111 = vsub.s32 %v3271, %v4081
      %v4112 = vsub.s32 %v3272, %v4082
      %v4113 = vsub.s32 %v3273, %v4083
      %v4114 = vsub.s32 %v3274, %v4084
      %v4115 = vsub.s32 %v3275, %v4085
      %v4116 = vsub.s32 %v3276, %v4086
      %v4117 = vsub.s32 %v3277, %v4087
      %v4118 = vsub.s32 %v3278, %v4088
      %v4119 = vsub.s32 %v3279, %v4089
      %v4120 = vsub.s32 %v3280, %v4090
      %v4121 = vsub.s32 %v3281, %v4091
      %v4122 = vsub.s32 %v3282, %v4092
      %v4123 = vsub.s32 %v3283, %v4093
      %v4124 = vsub.s32 %v3284, %v4094
      %v4125 = vsub.s32 %v3285, %v4095
      %v4126 = vsub.s32 %v3286, %v4096
      %v4127 = vsub.s32 %v3287, %v4097
      %v4128 = vsub.s32 %v3288, %v4098
      %v4129 = vsub.s32 %v3289, %v4099
      %v4130 = vsub.s32 %v3290, %v4100
      %v4131 = vsub.s32 %v3291, %v4101
      %v4132 = vsub.s32 %v3292, %v4102
      %v4133 = vsub.s32 %v3293, %v4103
      %v4134 = vsub.s32 %v3294, %v4104
      %v4135 = vsub.s32 %v3295, %v4105
      %v4136 = vsub.s32 %v3296, %v4106
      %v4137 = vsub.s32 %v3297, %v4107
      %v4138 = vsub.s32 %v3298, %v4108
      %v4139 = vsub.s32 %v3299, %v4109
      %s4140 = smul.u32 %s24, 8
      %s4141 = ssub.s32 %s4140, 1
      %v4142 = vstv %s4141
      %v4143 = vadd.s32 %v4142, %v4050
      %v4144 = vadd.s32 %v4142, %v4051
      %v4145 = vadd.s32 %v4142, %v4052
      %v4146 = vadd.s32 %v4142, %v4053
      %v4147 = vadd.s32 %v4142, %v4054
      %v4148 = vadd.s32 %v4142, %v4055
      %v4149 = vadd.s32 %v4142, %v4056
      %v4150 = vadd.s32 %v4142, %v4057
      %v4151 = vadd.s32 %v4142, %v4058
      %v4152 = vadd.s32 %v4142, %v4059
      %v4153 = vadd.s32 %v4142, %v4060
      %v4154 = vadd.s32 %v4142, %v4061
      %v4155 = vadd.s32 %v4142, %v4062
      %v4156 = vadd.s32 %v4142, %v4063
      %v4157 = vadd.s32 %v4142, %v4064
      %v4158 = vadd.s32 %v4142, %v4065
      %v4159 = vadd.s32 %v4142, %v4066
      %v4160 = vadd.s32 %v4142, %v4067
      %v4161 = vadd.s32 %v4142, %v4068
      %v4162 = vadd.s32 %v4142, %v4069
      %v4163 = vadd.s32 %v4142, %v4070
      %v4164 = vadd.s32 %v4142, %v4071
      %v4165 = vadd.s32 %v4142, %v4072
      %v4166 = vadd.s32 %v4142, %v4073
      %v4167 = vadd.s32 %v4142, %v4074
      %v4168 = vadd.s32 %v4142, %v4075
      %v4169 = vadd.s32 %v4142, %v4076
      %v4170 = vadd.s32 %v4142, %v4077
      %v4171 = vadd.s32 %v4142, %v4078
      %v4172 = vadd.s32 %v4142, %v4079
      %vm4173 = vcmp.ge.s32.totalorder %v4143, 0
      %vm4174 = vcmp.ge.s32.totalorder %v4144, 0
      %vm4175 = vcmp.ge.s32.totalorder %v4145, 0
      %vm4176 = vcmp.ge.s32.totalorder %v4146, 0
      %vm4177 = vcmp.ge.s32.totalorder %v4147, 0
      %vm4178 = vcmp.ge.s32.totalorder %v4148, 0
      %vm4179 = vcmp.ge.s32.totalorder %v4149, 0
      %vm4180 = vcmp.ge.s32.totalorder %v4150, 0
      %vm4181 = vcmp.ge.s32.totalorder %v4151, 0
      %vm4182 = vcmp.ge.s32.totalorder %v4152, 0
      %vm4183 = vcmp.ge.s32.totalorder %v4153, 0
      %vm4184 = vcmp.ge.s32.totalorder %v4154, 0
      %vm4185 = vcmp.ge.s32.totalorder %v4155, 0
      %vm4186 = vcmp.ge.s32.totalorder %v4156, 0
      %vm4187 = vcmp.ge.s32.totalorder %v4157, 0
      %vm4188 = vcmp.ge.s32.totalorder %v4158, 0
      %vm4189 = vcmp.ge.s32.totalorder %v4159, 0
      %vm4190 = vcmp.ge.s32.totalorder %v4160, 0
      %vm4191 = vcmp.ge.s32.totalorder %v4161, 0
      %vm4192 = vcmp.ge.s32.totalorder %v4162, 0
      %vm4193 = vcmp.ge.s32.totalorder %v4163, 0
      %vm4194 = vcmp.ge.s32.totalorder %v4164, 0
      %vm4195 = vcmp.ge.s32.totalorder %v4165, 0
      %vm4196 = vcmp.ge.s32.totalorder %v4166, 0
      %vm4197 = vcmp.ge.s32.totalorder %v4167, 0
      %vm4198 = vcmp.ge.s32.totalorder %v4168, 0
      %vm4199 = vcmp.ge.s32.totalorder %v4169, 0
      %vm4200 = vcmp.ge.s32.totalorder %v4170, 0
      %vm4201 = vcmp.ge.s32.totalorder %v4171, 0
      %vm4202 = vcmp.ge.s32.totalorder %v4172, 0
      %vm4203 = vcmp.lt.s32.totalorder %v4143, 16
      %vm4204 = vcmp.lt.s32.totalorder %v4144, 16
      %vm4205 = vcmp.lt.s32.totalorder %v4145, 16
      %vm4206 = vcmp.lt.s32.totalorder %v4146, 16
      %vm4207 = vcmp.lt.s32.totalorder %v4147, 16
      %vm4208 = vcmp.lt.s32.totalorder %v4148, 16
      %vm4209 = vcmp.lt.s32.totalorder %v4149, 16
      %vm4210 = vcmp.lt.s32.totalorder %v4150, 16
      %vm4211 = vcmp.lt.s32.totalorder %v4151, 16
      %vm4212 = vcmp.lt.s32.totalorder %v4152, 16
      %vm4213 = vcmp.lt.s32.totalorder %v4153, 16
      %vm4214 = vcmp.lt.s32.totalorder %v4154, 16
      %vm4215 = vcmp.lt.s32.totalorder %v4155, 16
      %vm4216 = vcmp.lt.s32.totalorder %v4156, 16
      %vm4217 = vcmp.lt.s32.totalorder %v4157, 16
      %vm4218 = vcmp.lt.s32.totalorder %v4158, 16
      %vm4219 = vcmp.lt.s32.totalorder %v4159, 16
      %vm4220 = vcmp.lt.s32.totalorder %v4160, 16
      %vm4221 = vcmp.lt.s32.totalorder %v4161, 16
      %vm4222 = vcmp.lt.s32.totalorder %v4162, 16
      %vm4223 = vcmp.lt.s32.totalorder %v4163, 16
      %vm4224 = vcmp.lt.s32.totalorder %v4164, 16
      %vm4225 = vcmp.lt.s32.totalorder %v4165, 16
      %vm4226 = vcmp.lt.s32.totalorder %v4166, 16
      %vm4227 = vcmp.lt.s32.totalorder %v4167, 16
      %vm4228 = vcmp.lt.s32.totalorder %v4168, 16
      %vm4229 = vcmp.lt.s32.totalorder %v4169, 16
      %vm4230 = vcmp.lt.s32.totalorder %v4170, 16
      %vm4231 = vcmp.lt.s32.totalorder %v4171, 16
      %vm4232 = vcmp.lt.s32.totalorder %v4172, 16
      %vm4233 = vmand %vm4173, %vm4203
      %vm4234 = vmand %vm4174, %vm4204
      %vm4235 = vmand %vm4175, %vm4205
      %vm4236 = vmand %vm4176, %vm4206
      %vm4237 = vmand %vm4177, %vm4207
      %vm4238 = vmand %vm4178, %vm4208
      %vm4239 = vmand %vm4179, %vm4209
      %vm4240 = vmand %vm4180, %vm4210
      %vm4241 = vmand %vm4181, %vm4211
      %vm4242 = vmand %vm4182, %vm4212
      %vm4243 = vmand %vm4183, %vm4213
      %vm4244 = vmand %vm4184, %vm4214
      %vm4245 = vmand %vm4185, %vm4215
      %vm4246 = vmand %vm4186, %vm4216
      %vm4247 = vmand %vm4187, %vm4217
      %vm4248 = vmand %vm4188, %vm4218
      %vm4249 = vmand %vm4189, %vm4219
      %vm4250 = vmand %vm4190, %vm4220
      %vm4251 = vmand %vm4191, %vm4221
      %vm4252 = vmand %vm4192, %vm4222
      %vm4253 = vmand %vm4193, %vm4223
      %vm4254 = vmand %vm4194, %vm4224
      %vm4255 = vmand %vm4195, %vm4225
      %vm4256 = vmand %vm4196, %vm4226
      %vm4257 = vmand %vm4197, %vm4227
      %vm4258 = vmand %vm4198, %vm4228
      %vm4259 = vmand %vm4199, %vm4229
      %vm4260 = vmand %vm4200, %vm4230
      %vm4261 = vmand %vm4201, %vm4231
      %vm4262 = vmand %vm4202, %vm4232
      %vm4263 = vcmp.ge.s32.totalorder %v4110, 1
      %vm4264 = vcmp.ge.s32.totalorder %v4111, 1
      %vm4265 = vcmp.ge.s32.totalorder %v4112, 1
      %vm4266 = vcmp.ge.s32.totalorder %v4113, 1
      %vm4267 = vcmp.ge.s32.totalorder %v4114, 1
      %vm4268 = vcmp.ge.s32.totalorder %v4115, 1
      %vm4269 = vcmp.ge.s32.totalorder %v4116, 1
      %vm4270 = vcmp.ge.s32.totalorder %v4117, 1
      %vm4271 = vcmp.ge.s32.totalorder %v4118, 1
      %vm4272 = vcmp.ge.s32.totalorder %v4119, 1
      %vm4273 = vcmp.ge.s32.totalorder %v4120, 1
      %vm4274 = vcmp.ge.s32.totalorder %v4121, 1
      %vm4275 = vcmp.ge.s32.totalorder %v4122, 1
      %vm4276 = vcmp.ge.s32.totalorder %v4123, 1
      %vm4277 = vcmp.ge.s32.totalorder %v4124, 1
      %vm4278 = vcmp.ge.s32.totalorder %v4125, 1
      %vm4279 = vcmp.ge.s32.totalorder %v4126, 1
      %vm4280 = vcmp.ge.s32.totalorder %v4127, 1
      %vm4281 = vcmp.ge.s32.totalorder %v4128, 1
      %vm4282 = vcmp.ge.s32.totalorder %v4129, 1
      %vm4283 = vcmp.ge.s32.totalorder %v4130, 1
      %vm4284 = vcmp.ge.s32.totalorder %v4131, 1
      %vm4285 = vcmp.ge.s32.totalorder %v4132, 1
      %vm4286 = vcmp.ge.s32.totalorder %v4133, 1
      %vm4287 = vcmp.ge.s32.totalorder %v4134, 1
      %vm4288 = vcmp.ge.s32.totalorder %v4135, 1
      %vm4289 = vcmp.ge.s32.totalorder %v4136, 1
      %vm4290 = vcmp.ge.s32.totalorder %v4137, 1
      %vm4291 = vcmp.ge.s32.totalorder %v4138, 1
      %vm4292 = vcmp.ge.s32.totalorder %v4139, 1
      %vm4293 = vmand %vm4233, %vm4263
      %vm4294 = vmand %vm4234, %vm4264
      %vm4295 = vmand %vm4235, %vm4265
      %vm4296 = vmand %vm4236, %vm4266
      %vm4297 = vmand %vm4237, %vm4267
      %vm4298 = vmand %vm4238, %vm4268
      %vm4299 = vmand %vm4239, %vm4269
      %vm4300 = vmand %vm4240, %vm4270
      %vm4301 = vmand %vm4241, %vm4271
      %vm4302 = vmand %vm4242, %vm4272
      %vm4303 = vmand %vm4243, %vm4273
      %vm4304 = vmand %vm4244, %vm4274
      %vm4305 = vmand %vm4245, %vm4275
      %vm4306 = vmand %vm4246, %vm4276
      %vm4307 = vmand %vm4247, %vm4277
      %vm4308 = vmand %vm4248, %vm4278
      %vm4309 = vmand %vm4249, %vm4279
      %vm4310 = vmand %vm4250, %vm4280
      %vm4311 = vmand %vm4251, %vm4281
      %vm4312 = vmand %vm4252, %vm4282
      %vm4313 = vmand %vm4253, %vm4283
      %vm4314 = vmand %vm4254, %vm4284
      %vm4315 = vmand %vm4255, %vm4285
      %vm4316 = vmand %vm4256, %vm4286
      %vm4317 = vmand %vm4257, %vm4287
      %vm4318 = vmand %vm4258, %vm4288
      %vm4319 = vmand %vm4259, %vm4289
      %vm4320 = vmand %vm4260, %vm4290
      %vm4321 = vmand %vm4261, %vm4291
      %vm4322 = vmand %vm4262, %vm4292
      %vm4323 = vcmp.le.s32.totalorder %v4110, 16
      %vm4324 = vcmp.le.s32.totalorder %v4111, 16
      %vm4325 = vcmp.le.s32.totalorder %v4112, 16
      %vm4326 = vcmp.le.s32.totalorder %v4113, 16
      %vm4327 = vcmp.le.s32.totalorder %v4114, 16
      %vm4328 = vcmp.le.s32.totalorder %v4115, 16
      %vm4329 = vcmp.le.s32.totalorder %v4116, 16
      %vm4330 = vcmp.le.s32.totalorder %v4117, 16
      %vm4331 = vcmp.le.s32.totalorder %v4118, 16
      %vm4332 = vcmp.le.s32.totalorder %v4119, 16
      %vm4333 = vcmp.le.s32.totalorder %v4120, 16
      %vm4334 = vcmp.le.s32.totalorder %v4121, 16
      %vm4335 = vcmp.le.s32.totalorder %v4122, 16
      %vm4336 = vcmp.le.s32.totalorder %v4123, 16
      %vm4337 = vcmp.le.s32.totalorder %v4124, 16
      %vm4338 = vcmp.le.s32.totalorder %v4125, 16
      %vm4339 = vcmp.le.s32.totalorder %v4126, 16
      %vm4340 = vcmp.le.s32.totalorder %v4127, 16
      %vm4341 = vcmp.le.s32.totalorder %v4128, 16
      %vm4342 = vcmp.le.s32.totalorder %v4129, 16
      %vm4343 = vcmp.le.s32.totalorder %v4130, 16
      %vm4344 = vcmp.le.s32.totalorder %v4131, 16
      %vm4345 = vcmp.le.s32.totalorder %v4132, 16
      %vm4346 = vcmp.le.s32.totalorder %v4133, 16
      %vm4347 = vcmp.le.s32.totalorder %v4134, 16
      %vm4348 = vcmp.le.s32.totalorder %v4135, 16
      %vm4349 = vcmp.le.s32.totalorder %v4136, 16
      %vm4350 = vcmp.le.s32.totalorder %v4137, 16
      %vm4351 = vcmp.le.s32.totalorder %v4138, 16
      %vm4352 = vcmp.le.s32.totalorder %v4139, 16
      %vm4353 = vmand %vm4293, %vm4323
      %vm4354 = vmand %vm4294, %vm4324
      %vm4355 = vmand %vm4295, %vm4325
      %vm4356 = vmand %vm4296, %vm4326
      %vm4357 = vmand %vm4297, %vm4327
      %vm4358 = vmand %vm4298, %vm4328
      %vm4359 = vmand %vm4299, %vm4329
      %vm4360 = vmand %vm4300, %vm4330
      %vm4361 = vmand %vm4301, %vm4331
      %vm4362 = vmand %vm4302, %vm4332
      %vm4363 = vmand %vm4303, %vm4333
      %vm4364 = vmand %vm4304, %vm4334
      %vm4365 = vmand %vm4305, %vm4335
      %vm4366 = vmand %vm4306, %vm4336
      %vm4367 = vmand %vm4307, %vm4337
      %vm4368 = vmand %vm4308, %vm4338
      %vm4369 = vmand %vm4309, %vm4339
      %vm4370 = vmand %vm4310, %vm4340
      %vm4371 = vmand %vm4311, %vm4341
      %vm4372 = vmand %vm4312, %vm4342
      %vm4373 = vmand %vm4313, %vm4343
      %vm4374 = vmand %vm4314, %vm4344
      %vm4375 = vmand %vm4315, %vm4345
      %vm4376 = vmand %vm4316, %vm4346
      %vm4377 = vmand %vm4317, %vm4347
      %vm4378 = vmand %vm4318, %vm4348
      %vm4379 = vmand %vm4319, %vm4349
      %vm4380 = vmand %vm4320, %vm4350
      %vm4381 = vmand %vm4321, %vm4351
      %vm4382 = vmand %vm4322, %vm4352
      %v4383 = vsel %vm4353, 1, 0
      %v4384 = vsel %vm4354, 1, 0
      %v4385 = vsel %vm4355, 1, 0
      %v4386 = vsel %vm4356, 1, 0
      %v4387 = vsel %vm4357, 1, 0
      %v4388 = vsel %vm4358, 1, 0
      %v4389 = vsel %vm4359, 1, 0
      %v4390 = vsel %vm4360, 1, 0
      %v4391 = vsel %vm4361, 1, 0
      %v4392 = vsel %vm4362, 1, 0
      %v4393 = vsel %vm4363, 1, 0
      %v4394 = vsel %vm4364, 1, 0
      %v4395 = vsel %vm4365, 1, 0
      %v4396 = vsel %vm4366, 1, 0
      %v4397 = vsel %vm4367, 1, 0
      %v4398 = vsel %vm4368, 1, 0
      %v4399 = vsel %vm4369, 1, 0
      %v4400 = vsel %vm4370, 1, 0
      %v4401 = vsel %vm4371, 1, 0
      %v4402 = vsel %vm4372, 1, 0
      %v4403 = vsel %vm4373, 1, 0
      %v4404 = vsel %vm4374, 1, 0
      %v4405 = vsel %vm4375, 1, 0
      %v4406 = vsel %vm4376, 1, 0
      %v4407 = vsel %vm4377, 1, 0
      %v4408 = vsel %vm4378, 1, 0
      %v4409 = vsel %vm4379, 1, 0
      %v4410 = vsel %vm4380, 1, 0
      %v4411 = vsel %vm4381, 1, 0
      %v4412 = vsel %vm4382, 1, 0
      %vm4413 = vcmp.eq.s32.totalorder %v4383, 1
      %vm4414 = vcmp.eq.s32.totalorder %v4384, 1
      %vm4415 = vcmp.eq.s32.totalorder %v4385, 1
      %vm4416 = vcmp.eq.s32.totalorder %v4386, 1
      %vm4417 = vcmp.eq.s32.totalorder %v4387, 1
      %vm4418 = vcmp.eq.s32.totalorder %v4388, 1
      %vm4419 = vcmp.eq.s32.totalorder %v4389, 1
      %vm4420 = vcmp.eq.s32.totalorder %v4390, 1
      %vm4421 = vcmp.eq.s32.totalorder %v4391, 1
      %vm4422 = vcmp.eq.s32.totalorder %v4392, 1
      %vm4423 = vcmp.eq.s32.totalorder %v4393, 1
      %vm4424 = vcmp.eq.s32.totalorder %v4394, 1
      %vm4425 = vcmp.eq.s32.totalorder %v4395, 1
      %vm4426 = vcmp.eq.s32.totalorder %v4396, 1
      %vm4427 = vcmp.eq.s32.totalorder %v4397, 1
      %vm4428 = vcmp.eq.s32.totalorder %v4398, 1
      %vm4429 = vcmp.eq.s32.totalorder %v4399, 1
      %vm4430 = vcmp.eq.s32.totalorder %v4400, 1
      %vm4431 = vcmp.eq.s32.totalorder %v4401, 1
      %vm4432 = vcmp.eq.s32.totalorder %v4402, 1
      %vm4433 = vcmp.eq.s32.totalorder %v4403, 1
      %vm4434 = vcmp.eq.s32.totalorder %v4404, 1
      %vm4435 = vcmp.eq.s32.totalorder %v4405, 1
      %vm4436 = vcmp.eq.s32.totalorder %v4406, 1
      %vm4437 = vcmp.eq.s32.totalorder %v4407, 1
      %vm4438 = vcmp.eq.s32.totalorder %v4408, 1
      %vm4439 = vcmp.eq.s32.totalorder %v4409, 1
      %vm4440 = vcmp.eq.s32.totalorder %v4410, 1
      %vm4441 = vcmp.eq.s32.totalorder %v4411, 1
      %vm4442 = vcmp.eq.s32.totalorder %v4412, 1
      %v4443 = vsel %vm4413, %v3239, 0.0
      %v4444 = vsel %vm4414, %v3240, 0.0
      %v4445 = vsel %vm4415, %v3241, 0.0
      %v4446 = vsel %vm4416, %v3242, 0.0
      %v4447 = vsel %vm4417, %v3243, 0.0
      %v4448 = vsel %vm4418, %v3244, 0.0
      %v4449 = vsel %vm4419, %v3245, 0.0
      %v4450 = vsel %vm4420, %v3246, 0.0
      %v4451 = vsel %vm4421, %v3247, 0.0
      %v4452 = vsel %vm4422, %v3248, 0.0
      %v4453 = vsel %vm4423, %v3249, 0.0
      %v4454 = vsel %vm4424, %v3250, 0.0
      %v4455 = vsel %vm4425, %v3251, 0.0
      %v4456 = vsel %vm4426, %v3252, 0.0
      %v4457 = vsel %vm4427, %v3253, 0.0
      %v4458 = vsel %vm4428, %v3254, 0.0
      %v4459 = vsel %vm4429, %v3255, 0.0
      %v4460 = vsel %vm4430, %v3256, 0.0
      %v4461 = vsel %vm4431, %v3257, 0.0
      %v4462 = vsel %vm4432, %v3258, 0.0
      %v4463 = vsel %vm4433, %v3259, 0.0
      %v4464 = vsel %vm4434, %v3260, 0.0
      %v4465 = vsel %vm4435, %v3261, 0.0
      %v4466 = vsel %vm4436, %v3262, 0.0
      %v4467 = vsel %vm4437, %v3263, 0.0
      %v4468 = vsel %vm4438, %v3264, 0.0
      %v4469 = vsel %vm4439, %v3265, 0.0
      %v4470 = vsel %vm4440, %v3266, 0.0
      %v4471 = vsel %vm4441, %v3267, 0.0
      %v4472 = vsel %vm4442, %v3268, 0.0
      %v4473 = vpack.c.bf16 %v4443, %v4443
      %v4474 = vpack.c.bf16 %v4444, %v4444
      %v4475 = vpack.c.bf16 %v4445, %v4445
      %v4476 = vpack.c.bf16 %v4446, %v4446
      %v4477 = vpack.c.bf16 %v4447, %v4447
      %v4478 = vpack.c.bf16 %v4448, %v4448
      %v4479 = vpack.c.bf16 %v4449, %v4449
      %v4480 = vpack.c.bf16 %v4450, %v4450
      %v4481 = vpack.c.bf16 %v4451, %v4451
      %v4482 = vpack.c.bf16 %v4452, %v4452
      %v4483 = vpack.c.bf16 %v4453, %v4453
      %v4484 = vpack.c.bf16 %v4454, %v4454
      %v4485 = vpack.c.bf16 %v4455, %v4455
      %v4486 = vpack.c.bf16 %v4456, %v4456
      %v4487 = vpack.c.bf16 %v4457, %v4457
      %v4488 = vpack.c.bf16 %v4458, %v4458
      %v4489 = vpack.c.bf16 %v4459, %v4459
      %v4490 = vpack.c.bf16 %v4460, %v4460
      %v4491 = vpack.c.bf16 %v4461, %v4461
      %v4492 = vpack.c.bf16 %v4462, %v4462
      %v4493 = vpack.c.bf16 %v4463, %v4463
      %v4494 = vpack.c.bf16 %v4464, %v4464
      %v4495 = vpack.c.bf16 %v4465, %v4465
      %v4496 = vpack.c.bf16 %v4466, %v4466
      %v4497 = vpack.c.bf16 %v4467, %v4467
      %v4498 = vpack.c.bf16 %v4468, %v4468
      %v4499 = vpack.c.bf16 %v4469, %v4469
      %v4500 = vpack.c.bf16 %v4470, %v4470
      %v4501 = vpack.c.bf16 %v4471, %v4471
      %v4502 = vpack.c.bf16 %v4472, %v4472
      %4503 = vst [vmem:[#allocation3] sm:$0xf] %v4473
      %4504 = vst [vmem:[#allocation3 + $0x4] sm:$0xf] %v4474
      %4505 = vst [vmem:[#allocation3 + $0x8] sm:$0xf] %v4475
      %4506 = vst [vmem:[#allocation3 + $0xc] sm:$0xf] %v4476
      %4507 = vst [vmem:[#allocation3 + $0x10] sm:$0xf] %v4477
      %4508 = vst [vmem:[#allocation3 + $0x14] sm:$0xf] %v4478
      %4509 = vst [vmem:[#allocation3 + $0x18] sm:$0xf] %v4479
      %4510 = vst [vmem:[#allocation3 + $0x1c] sm:$0xf] %v4480
      %4511 = vst [vmem:[#allocation3 + $0x20] sm:$0xf] %v4481
      %4512 = vst [vmem:[#allocation3 + $0x24] sm:$0xf] %v4482
      %4513 = vst [vmem:[#allocation3 + $0x28] sm:$0xf] %v4483
      %4514 = vst [vmem:[#allocation3 + $0x2c] sm:$0xf] %v4484
      %4515 = vst [vmem:[#allocation3 + $0x30] sm:$0xf] %v4485
      %4516 = vst [vmem:[#allocation3 + $0x34] sm:$0xf] %v4486
      %4517 = vst [vmem:[#allocation3 + $0x38] sm:$0xf] %v4487
      %4518 = vst [vmem:[#allocation3 + $0x3c] sm:$0xf] %v4488
      %4519 = vst [vmem:[#allocation3 + $0x40] sm:$0xf] %v4489
      %4520 = vst [vmem:[#allocation3 + $0x44] sm:$0xf] %v4490
      %4521 = vst [vmem:[#allocation3 + $0x48] sm:$0xf] %v4491
      %4522 = vst [vmem:[#allocation3 + $0x4c] sm:$0xf] %v4492
      %4523 = vst [vmem:[#allocation3 + $0x50] sm:$0xf] %v4493
      %4524 = vst [vmem:[#allocation3 + $0x54] sm:$0xf] %v4494
      %4525 = vst [vmem:[#allocation3 + $0x58] sm:$0xf] %v4495
      %4526 = vst [vmem:[#allocation3 + $0x5c] sm:$0xf] %v4496
      %4527 = vst [vmem:[#allocation3 + $0x60] sm:$0xf] %v4497
      %4528 = vst [vmem:[#allocation3 + $0x64] sm:$0xf] %v4498
      %4529 = vst [vmem:[#allocation3 + $0x68] sm:$0xf] %v4499
      %4530 = vst [vmem:[#allocation3 + $0x6c] sm:$0xf] %v4500
      %4531 = vst [vmem:[#allocation3 + $0x70] sm:$0xf] %v4501
      %4532 = vst [vmem:[#allocation3 + $0x74] sm:$0xf] %v4502
      %4533 = vst [vmem:[#allocation3 + $0x78] sm:$0xf] 0
      %v4534 = vld [vmem:[#allocation3] sm:$0xf]
      %v4535 = vld [vmem:[#allocation3 + $0x4] sm:$0xf]
      %v4536 = vld [vmem:[#allocation3 + $0x8] sm:$0xf]
      %v4537 = vld [vmem:[#allocation3 + $0xc] sm:$0xf]
      %v4538 = vld [vmem:[#allocation3 + $0x10] sm:$0xf]
      %v4539 = vld [vmem:[#allocation3 + $0x14] sm:$0xf]
      %v4540 = vld [vmem:[#allocation3 + $0x18] sm:$0xf]
      %v4541 = vld [vmem:[#allocation3 + $0x1c] sm:$0xf]
      %v4542 = vld [vmem:[#allocation3 + $0x20] sm:$0xf]
      %v4543 = vld [vmem:[#allocation3 + $0x24] sm:$0xf]
      %v4544 = vld [vmem:[#allocation3 + $0x28] sm:$0xf]
      %v4545 = vld [vmem:[#allocation3 + $0x2c] sm:$0xf]
      %v4546 = vld [vmem:[#allocation3 + $0x30] sm:$0xf]
      %v4547 = vld [vmem:[#allocation3 + $0x34] sm:$0xf]
      %v4548 = vld [vmem:[#allocation3 + $0x38] sm:$0xf]
      %v4549 = vld [vmem:[#allocation3 + $0x3c] sm:$0xf]
      %v4550 = vld [vmem:[#allocation3 + $0x40] sm:$0xf]
      %v4551 = vld [vmem:[#allocation3 + $0x44] sm:$0xf]
      %v4552 = vld [vmem:[#allocation3 + $0x48] sm:$0xf]
      %v4553 = vld [vmem:[#allocation3 + $0x4c] sm:$0xf]
      %v4554 = vld [vmem:[#allocation3 + $0x50] sm:$0xf]
      %v4555 = vld [vmem:[#allocation3 + $0x54] sm:$0xf]
      %v4556 = vld [vmem:[#allocation3 + $0x58] sm:$0xf]
      %v4557 = vld [vmem:[#allocation3 + $0x5c] sm:$0xf]
      %v4558 = vld [vmem:[%s4] sm:$0xf]
      %v4559 = vld [vmem:[%s4 + $0x4] sm:$0xf]
      %v4560 = vld [vmem:[%s4 + $0x8] sm:$0xf]
      %v4561 = vld [vmem:[%s4 + $0xc] sm:$0xf]
      %v4562 = vld [vmem:[%s4 + $0x10] sm:$0xf]
      %v4563 = vld [vmem:[%s4 + $0x14] sm:$0xf]
      %v4564 = vld [vmem:[%s4 + $0x18] sm:$0xf]
      %v4565 = vld [vmem:[%s4 + $0x1c] sm:$0xf]
      %v4566 = vld [vmem:[%s4 + $0x20] sm:$0xf]
      %v4567 = vld [vmem:[%s4 + $0x24] sm:$0xf]
      %v4568 = vld [vmem:[%s4 + $0x28] sm:$0xf]
      %v4569 = vld [vmem:[%s4 + $0x2c] sm:$0xf]
      %v4570 = vld [vmem:[%s4 + $0x30] sm:$0xf]
      %v4571 = vld [vmem:[%s4 + $0x34] sm:$0xf]
      %v4572 = vld [vmem:[%s4 + $0x38] sm:$0xf]
      %v4573 = vld [vmem:[%s4 + $0x3c] sm:$0xf]
      %v4574 = vld [vmem:[#allocation3 + $0x60] sm:$0x1]
      %s4575 = scalar_lea.vmem %s4, 64
      %v4576 = vld [vmem:[%s4575] sm:$0xf]
      %v4577 = vld [vmem:[%s4575 + $0x4] sm:$0xf]
      %v4578 = vld [vmem:[%s4575 + $0x8] sm:$0xf]
      %v4579 = vld [vmem:[%s4575 + $0xc] sm:$0xf]
      %v4580 = vld [vmem:[%s4575 + $0x10] sm:$0xf]
      %v4581 = vld [vmem:[%s4575 + $0x14] sm:$0xf]
      %v4582 = vld [vmem:[%s4575 + $0x18] sm:$0xf]
      %v4583 = vld [vmem:[%s4575 + $0x1c] sm:$0xf]
      %v4584 = vld [vmem:[%s4575 + $0x20] sm:$0xf]
      %v4585 = vld [vmem:[%s4575 + $0x24] sm:$0xf]
      %v4586 = vld [vmem:[%s4575 + $0x28] sm:$0xf]
      %v4587 = vld [vmem:[%s4575 + $0x2c] sm:$0xf]
      %v4588 = vld [vmem:[%s4575 + $0x30] sm:$0xf]
      %v4589 = vld [vmem:[%s4575 + $0x34] sm:$0xf]
      %v4590 = vld [vmem:[%s4575 + $0x38] sm:$0xf]
      %v4591 = vld [vmem:[%s4575 + $0x3c] sm:$0xf]
      %v4617 = vunpack.c.l.b16 %v4534
      %v4618 = vunpack.c.l.b16 %v4535
      %v4619 = vunpack.c.l.b16 %v4536
      %v4620 = vunpack.c.l.b16 %v4537
      %v4621 = vunpack.c.l.b16 %v4538
      %v4622 = vunpack.c.l.b16 %v4539
      %v4623 = vunpack.c.l.b16 %v4540
      %v4624 = vunpack.c.l.b16 %v4541
      %v4625 = vunpack.c.l.b16 %v4542
      %v4626 = vunpack.c.l.b16 %v4543
      %v4627 = vunpack.c.l.b16 %v4544
      %v4628 = vunpack.c.l.b16 %v4545
      %v4629 = vunpack.c.l.b16 %v4546
      %v4630 = vunpack.c.l.b16 %v4547
      %v4631 = vunpack.c.l.b16 %v4548
      %v4632 = vunpack.c.l.b16 %v4549
      %v4633 = vunpack.c.l.b16 %v4550
      %v4634 = vunpack.c.l.b16 %v4551
      %v4635 = vunpack.c.l.b16 %v4552
      %v4636 = vunpack.c.l.b16 %v4553
      %v4637 = vunpack.c.l.b16 %v4554
      %v4638 = vunpack.c.l.b16 %v4555
      %v4639 = vunpack.c.l.b16 %v4556
      %v4640 = vunpack.c.l.b16 %v4557
      %v4641 = vunpack.c.l.b16 %v4574
      %v4642 = vpack.c.b16 %v4618, %v4617
      %v4643 = vpack.c.b16 %v4620, %v4619
      %v4644 = vpack.c.b16 %v4622, %v4621
      %v4645 = vpack.c.b16 %v4624, %v4623
      %v4646 = vpack.c.b16 %v4626, %v4625
      %v4647 = vpack.c.b16 %v4628, %v4627
      %v4648 = vpack.c.b16 %v4630, %v4629
      %v4649 = vpack.c.b16 %v4632, %v4631
      %v4650 = vpack.c.b16 %v4634, %v4633
      %v4651 = vpack.c.b16 %v4636, %v4635
      %v4652 = vpack.c.b16 %v4638, %v4637
      %v4653 = vpack.c.b16 %v4640, %v4639
      %v4654 = vpack.c.b16 %v4641, %v4641
      %v4656 = vshrl.u32 %v4642, 16
      %v4658 = vshll.u32 %v4642, 16
      %v4660 = vrot.slane %v4658, 1
      %v4661 = vor.u32 %v4656, %v4660
      %v4663 = vshll.u32 %v4643, 16
      %v4665 = vrot.slane %v4663, 1
      %v4666 = vsel %vm612, %v4661, %v4665
      %v4667 = vshrl.u32 %v4643, 16
      %v4669 = vor.u32 %v4667, %v4665
      %v4671 = vshll.u32 %v4644, 16
      %v4673 = vrot.slane %v4671, 1
      %v4674 = vsel %vm612, %v4669, %v4673
      %v4675 = vshrl.u32 %v4644, 16
      %v4677 = vor.u32 %v4675, %v4673
      %v4679 = vshll.u32 %v4645, 16
      %v4681 = vrot.slane %v4679, 1
      %v4682 = vsel %vm612, %v4677, %v4681
      %v4683 = vshrl.u32 %v4645, 16
      %v4685 = vor.u32 %v4683, %v4681
      %v4687 = vshll.u32 %v4646, 16
      %v4689 = vrot.slane %v4687, 1
      %v4690 = vsel %vm612, %v4685, %v4689
      %v4691 = vshrl.u32 %v4646, 16
      %v4693 = vor.u32 %v4691, %v4689
      %v4695 = vshll.u32 %v4647, 16
      %v4697 = vrot.slane %v4695, 1
      %v4698 = vsel %vm612, %v4693, %v4697
      %v4699 = vshrl.u32 %v4647, 16
      %v4701 = vor.u32 %v4699, %v4697
      %v4703 = vshll.u32 %v4648, 16
      %v4705 = vrot.slane %v4703, 1
      %v4706 = vsel %vm612, %v4701, %v4705
      %v4707 = vshrl.u32 %v4648, 16
      %v4709 = vor.u32 %v4707, %v4705
      %v4711 = vshll.u32 %v4649, 16
      %v4713 = vrot.slane %v4711, 1
      %v4714 = vsel %vm612, %v4709, %v4713
      %v4715 = vshrl.u32 %v4649, 16
      %v4717 = vor.u32 %v4715, %v4713
      %v4719 = vshll.u32 %v4650, 16
      %v4721 = vrot.slane %v4719, 1
      %v4722 = vsel %vm612, %v4717, %v4721
      %v4723 = vshrl.u32 %v4650, 16
      %v4725 = vor.u32 %v4723, %v4721
      %v4727 = vshll.u32 %v4651, 16
      %v4729 = vrot.slane %v4727, 1
      %v4730 = vsel %vm612, %v4725, %v4729
      %v4731 = vshrl.u32 %v4651, 16
      %v4733 = vor.u32 %v4731, %v4729
      %v4735 = vshll.u32 %v4652, 16
      %v4737 = vrot.slane %v4735, 1
      %v4738 = vsel %vm612, %v4733, %v4737
      %v4739 = vshrl.u32 %v4652, 16
      %v4741 = vor.u32 %v4739, %v4737
      %v4743 = vshll.u32 %v4653, 16
      %v4745 = vrot.slane %v4743, 1
      %v4746 = vsel %vm612, %v4741, %v4745
      %v4747 = vshrl.u32 %v4653, 16
      %v4749 = vor.u32 %v4747, %v4745
      %v4751 = vshll.u32 %v4654, 16
      %v4753 = vrot.slane %v4751, 1
      %v4754 = vsel %vm612, %v4749, %v4753
      %v4783 = vunpack.c.l.b16 %v4576
      %v4784 = vunpack.c.l.b16 %v4577
      %v4785 = vunpack.c.l.b16 %v4578
      %v4786 = vunpack.c.l.b16 %v4579
      %v4787 = vunpack.c.l.b16 %v4580
      %v4788 = vunpack.c.l.b16 %v4581
      %v4789 = vunpack.c.l.b16 %v4582
      %v4790 = vunpack.c.l.b16 %v4583
      %v4791 = vunpack.c.l.b16 %v4584
      %v4792 = vunpack.c.l.b16 %v4585
      %v4793 = vunpack.c.l.b16 %v4586
      %v4794 = vunpack.c.l.b16 %v4587
      %v4795 = vunpack.c.l.b16 %v4588
      %v4796 = vunpack.c.l.b16 %v4589
      %v4797 = vunpack.c.l.b16 %v4590
      %v4798 = vunpack.c.l.b16 %v4591
      %v4799 = vpack.c.b16 %v4784, %v4783
      %v4800 = vpack.c.b16 %v4786, %v4785
      %v4801 = vpack.c.b16 %v4788, %v4787
      %v4802 = vpack.c.b16 %v4790, %v4789
      %v4803 = vpack.c.b16 %v4792, %v4791
      %v4804 = vpack.c.b16 %v4794, %v4793
      %v4805 = vpack.c.b16 %v4796, %v4795
      %v4806 = vpack.c.b16 %v4798, %v4797
      %4815 = vmatpush.bf16.msra.mxu0 %v4806
      %4816 = vmatpush.bf16.msra.mxu0 %v4805
      %4817 = vmatpush.bf16.msra.mxu0 %v4804
      %4818 = vmatpush.bf16.msra.mxu0 %v4803
      %4819 = vmatpush.bf16.msra.mxu0 %v4802
      %4820 = vmatpush.bf16.msra.mxu0 %v4801
      %4821 = vmatpush.bf16.msra.mxu0 %v4800
      %4822 = vmatpush.bf16.msra.mxu0 %v4799
      %4823 = vmatmul.bf16.gmra.mxu0 %v4666
      %v4824 = vpop.f32.mrf.mxu0
      %v4825 = vadd.f32 0.0, %v4824
      %v4826 = vpop.f32.mrf.mxu0
      %v4827 = vadd.f32 0.0, %v4826
      %4828 = vmatmul.bf16.gmra.mxu0 %v4674
      %v4829 = vpop.f32.mrf.mxu0
      %v4830 = vadd.f32 0.0, %v4829
      %v4831 = vpop.f32.mrf.mxu0
      %v4832 = vadd.f32 0.0, %v4831
      %4833 = vmatmul.bf16.gmra.mxu0 %v4682
      %v4834 = vpop.f32.mrf.mxu0
      %v4835 = vadd.f32 0.0, %v4834
      %v4836 = vpop.f32.mrf.mxu0
      %v4837 = vadd.f32 0.0, %v4836
      %4838 = vmatmul.bf16.gmra.mxu0 %v4690
      %v4839 = vpop.f32.mrf.mxu0
      %v4840 = vadd.f32 0.0, %v4839
      %v4841 = vpop.f32.mrf.mxu0
      %v4842 = vadd.f32 0.0, %v4841
      %4843 = vmatmul.bf16.gmra.mxu0 %v4698
      %v4844 = vpop.f32.mrf.mxu0
      %v4845 = vadd.f32 0.0, %v4844
      %v4846 = vpop.f32.mrf.mxu0
      %v4847 = vadd.f32 0.0, %v4846
      %4848 = vmatmul.bf16.gmra.mxu0 %v4706
      %v4849 = vpop.f32.mrf.mxu0
      %v4850 = vadd.f32 0.0, %v4849
      %v4851 = vpop.f32.mrf.mxu0
      %v4852 = vadd.f32 0.0, %v4851
      %4853 = vmatmul.bf16.gmra.mxu0 %v4714
      %v4854 = vpop.f32.mrf.mxu0
      %v4855 = vadd.f32 0.0, %v4854
      %v4856 = vpop.f32.mrf.mxu0
      %v4857 = vadd.f32 0.0, %v4856
      %4858 = vmatmul.bf16.gmra.mxu0 %v4722
      %v4859 = vpop.f32.mrf.mxu0
      %v4860 = vadd.f32 0.0, %v4859
      %v4861 = vpop.f32.mrf.mxu0
      %v4862 = vadd.f32 0.0, %v4861
      %4863 = vmatmul.bf16.gmra.mxu0 %v4730
      %v4864 = vpop.f32.mrf.mxu0
      %v4865 = vadd.f32 0.0, %v4864
      %v4866 = vpop.f32.mrf.mxu0
      %v4867 = vadd.f32 0.0, %v4866
      %4868 = vmatmul.bf16.gmra.mxu0 %v4738
      %v4869 = vpop.f32.mrf.mxu0
      %v4870 = vadd.f32 0.0, %v4869
      %v4871 = vpop.f32.mrf.mxu0
      %v4872 = vadd.f32 0.0, %v4871
      %4873 = vmatmul.bf16.gmra.mxu0 %v4746
      %v4874 = vpop.f32.mrf.mxu0
      %v4875 = vadd.f32 0.0, %v4874
      %v4876 = vpop.f32.mrf.mxu0
      %v4877 = vadd.f32 0.0, %v4876
      %4878 = vmatmul.bf16.gmra.mxu0 %v4754
      %v4879 = vpop.f32.mrf.mxu0
      %v4880 = vadd.f32 0.0, %v4879
      %v4881 = vpop.f32.mrf.mxu0
      %v4882 = vadd.f32 0.0, %v4881
      %4883 = vdwg.mxu0
      %v4912 = vunpack.c.l.b16 %v4558
      %v4913 = vunpack.c.l.b16 %v4559
      %v4914 = vunpack.c.l.b16 %v4560
      %v4915 = vunpack.c.l.b16 %v4561
      %v4916 = vunpack.c.l.b16 %v4562
      %v4917 = vunpack.c.l.b16 %v4563
      %v4918 = vunpack.c.l.b16 %v4564
      %v4919 = vunpack.c.l.b16 %v4565
      %v4920 = vunpack.c.l.b16 %v4566
      %v4921 = vunpack.c.l.b16 %v4567
      %v4922 = vunpack.c.l.b16 %v4568
      %v4923 = vunpack.c.l.b16 %v4569
      %v4924 = vunpack.c.l.b16 %v4570
      %v4925 = vunpack.c.l.b16 %v4571
      %v4926 = vunpack.c.l.b16 %v4572
      %v4927 = vunpack.c.l.b16 %v4573
      %v4928 = vpack.c.b16 %v4913, %v4912
      %v4929 = vpack.c.b16 %v4915, %v4914
      %v4930 = vpack.c.b16 %v4917, %v4916
      %v4931 = vpack.c.b16 %v4919, %v4918
      %v4932 = vpack.c.b16 %v4921, %v4920
      %v4933 = vpack.c.b16 %v4923, %v4922
      %v4934 = vpack.c.b16 %v4925, %v4924
      %v4935 = vpack.c.b16 %v4927, %v4926
      %4944 = vmatpush.bf16.msra.mxu0 %v4935
      %4945 = vmatpush.bf16.msra.mxu0 %v4934
      %4946 = vmatpush.bf16.msra.mxu0 %v4933
      %4947 = vmatpush.bf16.msra.mxu0 %v4932
      %4948 = vmatpush.bf16.msra.mxu0 %v4931
      %4949 = vmatpush.bf16.msra.mxu0 %v4930
      %4950 = vmatpush.bf16.msra.mxu0 %v4929
      %4951 = vmatpush.bf16.msra.mxu0 %v4928
      %4952 = vmatmul.bf16.gmra.mxu0 %v4642
      %v4953 = vpop.f32.mrf.mxu0
      %v4954 = vadd.f32 %v4825, %v4953
      %v4955 = vpop.f32.mrf.mxu0
      %v4956 = vadd.f32 %v4827, %v4955
      %4957 = vmatmul.bf16.gmra.mxu0 %v4643
      %v4958 = vpop.f32.mrf.mxu0
      %v4959 = vadd.f32 %v4830, %v4958
      %v4960 = vpop.f32.mrf.mxu0
      %v4961 = vadd.f32 %v4832, %v4960
      %4962 = vmatmul.bf16.gmra.mxu0 %v4644
      %v4963 = vpop.f32.mrf.mxu0
      %v4964 = vadd.f32 %v4835, %v4963
      %v4965 = vpop.f32.mrf.mxu0
      %v4966 = vadd.f32 %v4837, %v4965
      %4967 = vmatmul.bf16.gmra.mxu0 %v4645
      %v4968 = vpop.f32.mrf.mxu0
      %v4969 = vadd.f32 %v4840, %v4968
      %v4970 = vpop.f32.mrf.mxu0
      %v4971 = vadd.f32 %v4842, %v4970
      %4972 = vmatmul.bf16.gmra.mxu0 %v4646
      %v4973 = vpop.f32.mrf.mxu0
      %v4974 = vadd.f32 %v4845, %v4973
      %v4975 = vpop.f32.mrf.mxu0
      %v4976 = vadd.f32 %v4847, %v4975
      %4977 = vmatmul.bf16.gmra.mxu0 %v4647
      %v4978 = vpop.f32.mrf.mxu0
      %v4979 = vadd.f32 %v4850, %v4978
      %v4980 = vpop.f32.mrf.mxu0
      %v4981 = vadd.f32 %v4852, %v4980
      %4982 = vmatmul.bf16.gmra.mxu0 %v4648
      %v4983 = vpop.f32.mrf.mxu0
      %v4984 = vadd.f32 %v4855, %v4983
      %v4985 = vpop.f32.mrf.mxu0
      %v4986 = vadd.f32 %v4857, %v4985
      %4987 = vmatmul.bf16.gmra.mxu0 %v4649
      %v4988 = vpop.f32.mrf.mxu0
      %v4989 = vadd.f32 %v4860, %v4988
      %v4990 = vpop.f32.mrf.mxu0
      %v4991 = vadd.f32 %v4862, %v4990
      %4992 = vmatmul.bf16.gmra.mxu0 %v4650
      %v4993 = vpop.f32.mrf.mxu0
      %v4994 = vadd.f32 %v4865, %v4993
      %v4995 = vpop.f32.mrf.mxu0
      %v4996 = vadd.f32 %v4867, %v4995
      %4997 = vmatmul.bf16.gmra.mxu0 %v4651
      %v4998 = vpop.f32.mrf.mxu0
      %v4999 = vadd.f32 %v4870, %v4998
      %v5000 = vpop.f32.mrf.mxu0
      %v5001 = vadd.f32 %v4872, %v5000
      %5002 = vmatmul.bf16.gmra.mxu0 %v4652
      %v5003 = vpop.f32.mrf.mxu0
      %v5004 = vadd.f32 %v4875, %v5003
      %v5005 = vpop.f32.mrf.mxu0
      %v5006 = vadd.f32 %v4877, %v5005
      %5007 = vmatmul.bf16.gmra.mxu0 %v4653
      %v5008 = vpop.f32.mrf.mxu0
      %v5009 = vadd.f32 %v4880, %v5008
      %v5010 = vpop.f32.mrf.mxu0
      %v5011 = vadd.f32 %v4882, %v5010
      %5012 = vdwg.mxu0
      %v5013 = vld [vmem:[#allocation3] sm:$0xe]
      %s5014 = scalar_lea.vmem %s4, 128
      %v5015 = vld [vmem:[%s5014] sm:$0xf]
      %v5016 = vld [vmem:[%s5014 + $0x4] sm:$0xf]
      %v5017 = vld [vmem:[%s5014 + $0x8] sm:$0xf]
      %v5018 = vld [vmem:[%s5014 + $0xc] sm:$0xf]
      %v5019 = vld [vmem:[%s5014 + $0x10] sm:$0xf]
      %v5020 = vld [vmem:[%s5014 + $0x14] sm:$0xf]
      %v5021 = vld [vmem:[%s5014 + $0x18] sm:$0xf]
      %v5022 = vld [vmem:[%s5014 + $0x1c] sm:$0xf]
      %v5023 = vld [vmem:[%s5014 + $0x20] sm:$0xf]
      %v5024 = vld [vmem:[%s5014 + $0x24] sm:$0xf]
      %v5025 = vld [vmem:[%s5014 + $0x28] sm:$0xf]
      %v5026 = vld [vmem:[%s5014 + $0x2c] sm:$0xf]
      %v5027 = vld [vmem:[%s5014 + $0x30] sm:$0xf]
      %v5028 = vld [vmem:[%s5014 + $0x34] sm:$0xf]
      %v5029 = vld [vmem:[%s5014 + $0x38] sm:$0xf]
      %v5030 = vld [vmem:[%s5014 + $0x3c] sm:$0xf]
      %v5032 = vunpack.c.l.b16 %v5013
      %v5033 = vpack.c.b16 %v4618, %v5032
      %v5034 = vrot.slane %v5033, 1
      %v5035 = vrot.slane %v4643, 1
      %v5036 = vsel %vm1052, %v5034, %v5035
      %v5037 = vrot.slane %v4644, 1
      %v5038 = vsel %vm1052, %v5035, %v5037
      %v5039 = vrot.slane %v4645, 1
      %v5040 = vsel %vm1052, %v5037, %v5039
      %v5041 = vrot.slane %v4646, 1
      %v5042 = vsel %vm1052, %v5039, %v5041
      %v5043 = vrot.slane %v4647, 1
      %v5044 = vsel %vm1052, %v5041, %v5043
      %v5045 = vrot.slane %v4648, 1
      %v5046 = vsel %vm1052, %v5043, %v5045
      %v5047 = vrot.slane %v4649, 1
      %v5048 = vsel %vm1052, %v5045, %v5047
      %v5049 = vrot.slane %v4650, 1
      %v5050 = vsel %vm1052, %v5047, %v5049
      %v5051 = vrot.slane %v4651, 1
      %v5052 = vsel %vm1052, %v5049, %v5051
      %v5053 = vrot.slane %v4652, 1
      %v5054 = vsel %vm1052, %v5051, %v5053
      %v5055 = vrot.slane %v4653, 1
      %v5056 = vsel %vm1052, %v5053, %v5055
      %v5057 = vrot.slane %v4654, 1
      %v5058 = vsel %vm1052, %v5055, %v5057
      %v5087 = vunpack.c.l.b16 %v5015
      %v5088 = vunpack.c.l.b16 %v5016
      %v5089 = vunpack.c.l.b16 %v5017
      %v5090 = vunpack.c.l.b16 %v5018
      %v5091 = vunpack.c.l.b16 %v5019
      %v5092 = vunpack.c.l.b16 %v5020
      %v5093 = vunpack.c.l.b16 %v5021
      %v5094 = vunpack.c.l.b16 %v5022
      %v5095 = vunpack.c.l.b16 %v5023
      %v5096 = vunpack.c.l.b16 %v5024
      %v5097 = vunpack.c.l.b16 %v5025
      %v5098 = vunpack.c.l.b16 %v5026
      %v5099 = vunpack.c.l.b16 %v5027
      %v5100 = vunpack.c.l.b16 %v5028
      %v5101 = vunpack.c.l.b16 %v5029
      %v5102 = vunpack.c.l.b16 %v5030
      %v5103 = vpack.c.b16 %v5088, %v5087
      %v5104 = vpack.c.b16 %v5090, %v5089
      %v5105 = vpack.c.b16 %v5092, %v5091
      %v5106 = vpack.c.b16 %v5094, %v5093
      %v5107 = vpack.c.b16 %v5096, %v5095
      %v5108 = vpack.c.b16 %v5098, %v5097
      %v5109 = vpack.c.b16 %v5100, %v5099
      %v5110 = vpack.c.b16 %v5102, %v5101
      %5119 = vmatpush.bf16.msra.mxu0 %v5110
      %5120 = vmatpush.bf16.msra.mxu0 %v5109
      %5121 = vmatpush.bf16.msra.mxu0 %v5108
      %5122 = vmatpush.bf16.msra.mxu0 %v5107
      %5123 = vmatpush.bf16.msra.mxu0 %v5106
      %5124 = vmatpush.bf16.msra.mxu0 %v5105
      %5125 = vmatpush.bf16.msra.mxu0 %v5104
      %5126 = vmatpush.bf16.msra.mxu0 %v5103
      %5127 = vmatmul.bf16.gmra.mxu0 %v5036
      %v5128 = vpop.f32.mrf.mxu0
      %v5129 = vadd.f32 0.0, %v5128
      %v5130 = vpop.f32.mrf.mxu0
      %v5131 = vadd.f32 0.0, %v5130
      %5132 = vmatmul.bf16.gmra.mxu0 %v5038
      %v5133 = vpop.f32.mrf.mxu0
      %v5134 = vadd.f32 0.0, %v5133
      %v5135 = vpop.f32.mrf.mxu0
      %v5136 = vadd.f32 0.0, %v5135
      %5137 = vmatmul.bf16.gmra.mxu0 %v5040
      %v5138 = vpop.f32.mrf.mxu0
      %v5139 = vadd.f32 0.0, %v5138
      %v5140 = vpop.f32.mrf.mxu0
      %v5141 = vadd.f32 0.0, %v5140
      %5142 = vmatmul.bf16.gmra.mxu0 %v5042
      %v5143 = vpop.f32.mrf.mxu0
      %v5144 = vadd.f32 0.0, %v5143
      %v5145 = vpop.f32.mrf.mxu0
      %v5146 = vadd.f32 0.0, %v5145
      %5147 = vmatmul.bf16.gmra.mxu0 %v5044
      %v5148 = vpop.f32.mrf.mxu0
      %v5149 = vadd.f32 0.0, %v5148
      %v5150 = vpop.f32.mrf.mxu0
      %v5151 = vadd.f32 0.0, %v5150
      %5152 = vmatmul.bf16.gmra.mxu0 %v5046
      %v5153 = vpop.f32.mrf.mxu0
      %v5154 = vadd.f32 0.0, %v5153
      %v5155 = vpop.f32.mrf.mxu0
      %v5156 = vadd.f32 0.0, %v5155
      %5157 = vmatmul.bf16.gmra.mxu0 %v5048
      %v5158 = vpop.f32.mrf.mxu0
      %v5159 = vadd.f32 0.0, %v5158
      %v5160 = vpop.f32.mrf.mxu0
      %v5161 = vadd.f32 0.0, %v5160
      %5162 = vmatmul.bf16.gmra.mxu0 %v5050
      %v5163 = vpop.f32.mrf.mxu0
      %v5164 = vadd.f32 0.0, %v5163
      %v5165 = vpop.f32.mrf.mxu0
      %v5166 = vadd.f32 0.0, %v5165
      %5167 = vmatmul.bf16.gmra.mxu0 %v5052
      %v5168 = vpop.f32.mrf.mxu0
      %v5169 = vadd.f32 0.0, %v5168
      %v5170 = vpop.f32.mrf.mxu0
      %v5171 = vadd.f32 0.0, %v5170
      %5172 = vmatmul.bf16.gmra.mxu0 %v5054
      %v5173 = vpop.f32.mrf.mxu0
      %v5174 = vadd.f32 0.0, %v5173
      %v5175 = vpop.f32.mrf.mxu0
      %v5176 = vadd.f32 0.0, %v5175
      %5177 = vmatmul.bf16.gmra.mxu0 %v5056
      %v5178 = vpop.f32.mrf.mxu0
      %v5179 = vadd.f32 0.0, %v5178
      %v5180 = vpop.f32.mrf.mxu0
      %v5181 = vadd.f32 0.0, %v5180
      %5182 = vmatmul.bf16.gmra.mxu0 %v5058
      %v5183 = vpop.f32.mrf.mxu0
      %v5184 = vadd.f32 0.0, %v5183
      %v5185 = vpop.f32.mrf.mxu0
      %v5186 = vadd.f32 0.0, %v5185
      %5187 = vdwg.mxu0
      %v5188 = vadd.f32 %v4954, %v5129
      %v5189 = vadd.f32 %v4956, %v5131
      %v5190 = vadd.f32 %v4959, %v5134
      %v5191 = vadd.f32 %v4961, %v5136
      %v5192 = vadd.f32 %v4964, %v5139
      %v5193 = vadd.f32 %v4966, %v5141
      %v5194 = vadd.f32 %v4969, %v5144
      %v5195 = vadd.f32 %v4971, %v5146
      %v5196 = vadd.f32 %v4974, %v5149
      %v5197 = vadd.f32 %v4976, %v5151
      %v5198 = vadd.f32 %v4979, %v5154
      %v5199 = vadd.f32 %v4981, %v5156
      %v5200 = vadd.f32 %v4984, %v5159
      %v5201 = vadd.f32 %v4986, %v5161
      %v5202 = vadd.f32 %v4989, %v5164
      %v5203 = vadd.f32 %v4991, %v5166
      %v5204 = vadd.f32 %v4994, %v5169
      %v5205 = vadd.f32 %v4996, %v5171
      %v5206 = vadd.f32 %v4999, %v5174
      %v5207 = vadd.f32 %v5001, %v5176
      %v5208 = vadd.f32 %v5004, %v5179
      %v5209 = vadd.f32 %v5006, %v5181
      %v5210 = vadd.f32 %v5009, %v5184
      %v5211 = vadd.f32 %v5011, %v5186
      %v5212 = vld [vmem:[#allocation3 + $0xc] sm:$0xf]
      %v5213 = vld [vmem:[#allocation3 + $0x10] sm:$0xf]
      %v5214 = vld [vmem:[#allocation3 + $0x14] sm:$0xf]
      %v5215 = vld [vmem:[#allocation3 + $0x18] sm:$0xf]
      %v5216 = vld [vmem:[#allocation3 + $0x1c] sm:$0xf]
      %v5217 = vld [vmem:[#allocation3 + $0x20] sm:$0xf]
      %v5218 = vld [vmem:[#allocation3 + $0x24] sm:$0xf]
      %v5219 = vld [vmem:[#allocation3 + $0x28] sm:$0xf]
      %v5220 = vld [vmem:[#allocation3 + $0x2c] sm:$0xf]
      %v5221 = vld [vmem:[#allocation3 + $0x30] sm:$0xf]
      %v5222 = vld [vmem:[#allocation3 + $0x34] sm:$0xf]
      %v5223 = vld [vmem:[#allocation3 + $0x38] sm:$0xf]
      %v5224 = vld [vmem:[#allocation3 + $0x3c] sm:$0xf]
      %v5225 = vld [vmem:[#allocation3 + $0x40] sm:$0xf]
      %v5226 = vld [vmem:[#allocation3 + $0x44] sm:$0xf]
      %v5227 = vld [vmem:[#allocation3 + $0x48] sm:$0xf]
      %v5228 = vld [vmem:[#allocation3 + $0x4c] sm:$0xf]
      %v5229 = vld [vmem:[#allocation3 + $0x50] sm:$0xf]
      %v5230 = vld [vmem:[#allocation3 + $0x54] sm:$0xf]
      %v5231 = vld [vmem:[#allocation3 + $0x58] sm:$0xf]
      %v5232 = vld [vmem:[#allocation3 + $0x5c] sm:$0xf]
      %v5233 = vld [vmem:[#allocation3 + $0x60] sm:$0xf]
      %v5234 = vld [vmem:[#allocation3 + $0x64] sm:$0xf]
      %v5235 = vld [vmem:[#allocation3 + $0x68] sm:$0xf]
      %s5236 = scalar_lea.vmem %s4, 192
      %v5237 = vld [vmem:[%s5236] sm:$0xf]
      %v5238 = vld [vmem:[%s5236 + $0x4] sm:$0xf]
      %v5239 = vld [vmem:[%s5236 + $0x8] sm:$0xf]
      %v5240 = vld [vmem:[%s5236 + $0xc] sm:$0xf]
      %v5241 = vld [vmem:[%s5236 + $0x10] sm:$0xf]
      %v5242 = vld [vmem:[%s5236 + $0x14] sm:$0xf]
      %v5243 = vld [vmem:[%s5236 + $0x18] sm:$0xf]
      %v5244 = vld [vmem:[%s5236 + $0x1c] sm:$0xf]
      %v5245 = vld [vmem:[%s5236 + $0x20] sm:$0xf]
      %v5246 = vld [vmem:[%s5236 + $0x24] sm:$0xf]
      %v5247 = vld [vmem:[%s5236 + $0x28] sm:$0xf]
      %v5248 = vld [vmem:[%s5236 + $0x2c] sm:$0xf]
      %v5249 = vld [vmem:[%s5236 + $0x30] sm:$0xf]
      %v5250 = vld [vmem:[%s5236 + $0x34] sm:$0xf]
      %v5251 = vld [vmem:[%s5236 + $0x38] sm:$0xf]
      %v5252 = vld [vmem:[%s5236 + $0x3c] sm:$0xf]
      %v5277 = vunpack.c.l.b16 %v5212
      %v5278 = vunpack.c.l.b16 %v5213
      %v5279 = vunpack.c.l.b16 %v5214
      %v5280 = vunpack.c.l.b16 %v5215
      %v5281 = vunpack.c.l.b16 %v5216
      %v5282 = vunpack.c.l.b16 %v5217
      %v5283 = vunpack.c.l.b16 %v5218
      %v5284 = vunpack.c.l.b16 %v5219
      %v5285 = vunpack.c.l.b16 %v5220
      %v5286 = vunpack.c.l.b16 %v5221
      %v5287 = vunpack.c.l.b16 %v5222
      %v5288 = vunpack.c.l.b16 %v5223
      %v5289 = vunpack.c.l.b16 %v5224
      %v5290 = vunpack.c.l.b16 %v5225
      %v5291 = vunpack.c.l.b16 %v5226
      %v5292 = vunpack.c.l.b16 %v5227
      %v5293 = vunpack.c.l.b16 %v5228
      %v5294 = vunpack.c.l.b16 %v5229
      %v5295 = vunpack.c.l.b16 %v5230
      %v5296 = vunpack.c.l.b16 %v5231
      %v5297 = vunpack.c.l.b16 %v5232
      %v5298 = vunpack.c.l.b16 %v5233
      %v5299 = vunpack.c.l.b16 %v5234
      %v5300 = vunpack.c.l.b16 %v5235
      %v5301 = vpack.c.b16 %v5278, %v5277
      %v5302 = vpack.c.b16 %v5280, %v5279
      %v5303 = vpack.c.b16 %v5282, %v5281
      %v5304 = vpack.c.b16 %v5284, %v5283
      %v5305 = vpack.c.b16 %v5286, %v5285
      %v5306 = vpack.c.b16 %v5288, %v5287
      %v5307 = vpack.c.b16 %v5290, %v5289
      %v5308 = vpack.c.b16 %v5292, %v5291
      %v5309 = vpack.c.b16 %v5294, %v5293
      %v5310 = vpack.c.b16 %v5296, %v5295
      %v5311 = vpack.c.b16 %v5298, %v5297
      %v5312 = vpack.c.b16 %v5300, %v5299
      %v5341 = vunpack.c.l.b16 %v5237
      %v5342 = vunpack.c.l.b16 %v5238
      %v5343 = vunpack.c.l.b16 %v5239
      %v5344 = vunpack.c.l.b16 %v5240
      %v5345 = vunpack.c.l.b16 %v5241
      %v5346 = vunpack.c.l.b16 %v5242
      %v5347 = vunpack.c.l.b16 %v5243
      %v5348 = vunpack.c.l.b16 %v5244
      %v5349 = vunpack.c.l.b16 %v5245
      %v5350 = vunpack.c.l.b16 %v5246
      %v5351 = vunpack.c.l.b16 %v5247
      %v5352 = vunpack.c.l.b16 %v5248
      %v5353 = vunpack.c.l.b16 %v5249
      %v5354 = vunpack.c.l.b16 %v5250
      %v5355 = vunpack.c.l.b16 %v5251
      %v5356 = vunpack.c.l.b16 %v5252
      %v5357 = vpack.c.b16 %v5342, %v5341
      %v5358 = vpack.c.b16 %v5344, %v5343
      %v5359 = vpack.c.b16 %v5346, %v5345
      %v5360 = vpack.c.b16 %v5348, %v5347
      %v5361 = vpack.c.b16 %v5350, %v5349
      %v5362 = vpack.c.b16 %v5352, %v5351
      %v5363 = vpack.c.b16 %v5354, %v5353
      %v5364 = vpack.c.b16 %v5356, %v5355
      %5373 = vmatpush.bf16.msra.mxu0 %v5364
      %5374 = vmatpush.bf16.msra.mxu0 %v5363
      %5375 = vmatpush.bf16.msra.mxu0 %v5362
      %5376 = vmatpush.bf16.msra.mxu0 %v5361
      %5377 = vmatpush.bf16.msra.mxu0 %v5360
      %5378 = vmatpush.bf16.msra.mxu0 %v5359
      %5379 = vmatpush.bf16.msra.mxu0 %v5358
      %5380 = vmatpush.bf16.msra.mxu0 %v5357
      %5381 = vmatmul.bf16.gmra.mxu0 %v5301
      %v5382 = vpop.f32.mrf.mxu0
      %v5383 = vadd.f32 0.0, %v5382
      %v5384 = vpop.f32.mrf.mxu0
      %v5385 = vadd.f32 0.0, %v5384
      %5386 = vmatmul.bf16.gmra.mxu0 %v5302
      %v5387 = vpop.f32.mrf.mxu0
      %v5388 = vadd.f32 0.0, %v5387
      %v5389 = vpop.f32.mrf.mxu0
      %v5390 = vadd.f32 0.0, %v5389
      %5391 = vmatmul.bf16.gmra.mxu0 %v5303
      %v5392 = vpop.f32.mrf.mxu0
      %v5393 = vadd.f32 0.0, %v5392
      %v5394 = vpop.f32.mrf.mxu0
      %v5395 = vadd.f32 0.0, %v5394
      %5396 = vmatmul.bf16.gmra.mxu0 %v5304
      %v5397 = vpop.f32.mrf.mxu0
      %v5398 = vadd.f32 0.0, %v5397
      %v5399 = vpop.f32.mrf.mxu0
      %v5400 = vadd.f32 0.0, %v5399
      %5401 = vmatmul.bf16.gmra.mxu0 %v5305
      %v5402 = vpop.f32.mrf.mxu0
      %v5403 = vadd.f32 0.0, %v5402
      %v5404 = vpop.f32.mrf.mxu0
      %v5405 = vadd.f32 0.0, %v5404
      %5406 = vmatmul.bf16.gmra.mxu0 %v5306
      %v5407 = vpop.f32.mrf.mxu0
      %v5408 = vadd.f32 0.0, %v5407
      %v5409 = vpop.f32.mrf.mxu0
      %v5410 = vadd.f32 0.0, %v5409
      %5411 = vmatmul.bf16.gmra.mxu0 %v5307
      %v5412 = vpop.f32.mrf.mxu0
      %v5413 = vadd.f32 0.0, %v5412
      %v5414 = vpop.f32.mrf.mxu0
      %v5415 = vadd.f32 0.0, %v5414
      %5416 = vmatmul.bf16.gmra.mxu0 %v5308
      %v5417 = vpop.f32.mrf.mxu0
      %v5418 = vadd.f32 0.0, %v5417
      %v5419 = vpop.f32.mrf.mxu0
      %v5420 = vadd.f32 0.0, %v5419
      %5421 = vmatmul.bf16.gmra.mxu0 %v5309
      %v5422 = vpop.f32.mrf.mxu0
      %v5423 = vadd.f32 0.0, %v5422
      %v5424 = vpop.f32.mrf.mxu0
      %v5425 = vadd.f32 0.0, %v5424
      %5426 = vmatmul.bf16.gmra.mxu0 %v5310
      %v5427 = vpop.f32.mrf.mxu0
      %v5428 = vadd.f32 0.0, %v5427
      %v5429 = vpop.f32.mrf.mxu0
      %v5430 = vadd.f32 0.0, %v5429
      %5431 = vmatmul.bf16.gmra.mxu0 %v5311
      %v5432 = vpop.f32.mrf.mxu0
      %v5433 = vadd.f32 0.0, %v5432
      %v5434 = vpop.f32.mrf.mxu0
      %v5435 = vadd.f32 0.0, %v5434
      %5436 = vmatmul.bf16.gmra.mxu0 %v5312
      %v5437 = vpop.f32.mrf.mxu0
      %v5438 = vadd.f32 0.0, %v5437
      %v5439 = vpop.f32.mrf.mxu0
      %v5440 = vadd.f32 0.0, %v5439
      %5441 = vdwg.mxu0
      %v5442 = vadd.f32 %v5188, %v5383
      %v5443 = vadd.f32 %v5189, %v5385
      %v5444 = vadd.f32 %v5190, %v5388
      %v5445 = vadd.f32 %v5191, %v5390
      %v5446 = vadd.f32 %v5192, %v5393
      %v5447 = vadd.f32 %v5193, %v5395
      %v5448 = vadd.f32 %v5194, %v5398
      %v5449 = vadd.f32 %v5195, %v5400
      %v5450 = vadd.f32 %v5196, %v5403
      %v5451 = vadd.f32 %v5197, %v5405
      %v5452 = vadd.f32 %v5198, %v5408
      %v5453 = vadd.f32 %v5199, %v5410
      %v5454 = vadd.f32 %v5200, %v5413
      %v5455 = vadd.f32 %v5201, %v5415
      %v5456 = vadd.f32 %v5202, %v5418
      %v5457 = vadd.f32 %v5203, %v5420
      %v5458 = vadd.f32 %v5204, %v5423
      %v5459 = vadd.f32 %v5205, %v5425
      %v5460 = vadd.f32 %v5206, %v5428
      %v5461 = vadd.f32 %v5207, %v5430
      %v5462 = vadd.f32 %v5208, %v5433
      %v5463 = vadd.f32 %v5209, %v5435
      %v5464 = vadd.f32 %v5210, %v5438
      %v5465 = vadd.f32 %v5211, %v5440
      %v5466 = vld [vmem:[#allocation3 + $0xc] sm:$0xf]
      %v5467 = vld [vmem:[#allocation3 + $0x10] sm:$0xf]
      %v5468 = vld [vmem:[#allocation3 + $0x14] sm:$0xf]
      %v5469 = vld [vmem:[#allocation3 + $0x18] sm:$0xf]
      %v5470 = vld [vmem:[#allocation3 + $0x1c] sm:$0xf]
      %v5471 = vld [vmem:[#allocation3 + $0x20] sm:$0xf]
      %v5472 = vld [vmem:[#allocation3 + $0x24] sm:$0xf]
      %v5473 = vld [vmem:[#allocation3 + $0x28] sm:$0xf]
      %v5474 = vld [vmem:[#allocation3 + $0x2c] sm:$0xf]
      %v5475 = vld [vmem:[#allocation3 + $0x30] sm:$0xf]
      %v5476 = vld [vmem:[#allocation3 + $0x34] sm:$0xf]
      %v5477 = vld [vmem:[#allocation3 + $0x38] sm:$0xf]
      %v5478 = vld [vmem:[#allocation3 + $0x3c] sm:$0xf]
      %v5479 = vld [vmem:[#allocation3 + $0x40] sm:$0xf]
      %v5480 = vld [vmem:[#allocation3 + $0x44] sm:$0xf]
      %v5481 = vld [vmem:[#allocation3 + $0x48] sm:$0xf]
      %v5482 = vld [vmem:[#allocation3 + $0x4c] sm:$0xf]
      %v5483 = vld [vmem:[#allocation3 + $0x50] sm:$0xf]
      %v5484 = vld [vmem:[#allocation3 + $0x54] sm:$0xf]
      %v5485 = vld [vmem:[#allocation3 + $0x58] sm:$0xf]
      %v5486 = vld [vmem:[#allocation3 + $0x5c] sm:$0xf]
      %v5487 = vld [vmem:[#allocation3 + $0x60] sm:$0xf]
      %v5488 = vld [vmem:[#allocation3 + $0x64] sm:$0xf]
      %v5489 = vld [vmem:[#allocation3 + $0x68] sm:$0xf]
      %v5490 = vld [vmem:[#allocation3 + $0x6c] sm:$0x1]
      %s5491 = scalar_lea.vmem %s4, 256
      %v5492 = vld [vmem:[%s5491] sm:$0xf]
      %v5493 = vld [vmem:[%s5491 + $0x4] sm:$0xf]
      %v5494 = vld [vmem:[%s5491 + $0x8] sm:$0xf]
      %v5495 = vld [vmem:[%s5491 + $0xc] sm:$0xf]
      %v5496 = vld [vmem:[%s5491 + $0x10] sm:$0xf]
      %v5497 = vld [vmem:[%s5491 + $0x14] sm:$0xf]
      %v5498 = vld [vmem:[%s5491 + $0x18] sm:$0xf]
      %v5499 = vld [vmem:[%s5491 + $0x1c] sm:$0xf]
      %v5500 = vld [vmem:[%s5491 + $0x20] sm:$0xf]
      %v5501 = vld [vmem:[%s5491 + $0x24] sm:$0xf]
      %v5502 = vld [vmem:[%s5491 + $0x28] sm:$0xf]
      %v5503 = vld [vmem:[%s5491 + $0x2c] sm:$0xf]
      %v5504 = vld [vmem:[%s5491 + $0x30] sm:$0xf]
      %v5505 = vld [vmem:[%s5491 + $0x34] sm:$0xf]
      %v5506 = vld [vmem:[%s5491 + $0x38] sm:$0xf]
      %v5507 = vld [vmem:[%s5491 + $0x3c] sm:$0xf]
      %v5533 = vunpack.c.l.b16 %v5466
      %v5534 = vunpack.c.l.b16 %v5467
      %v5535 = vunpack.c.l.b16 %v5468
      %v5536 = vunpack.c.l.b16 %v5469
      %v5537 = vunpack.c.l.b16 %v5470
      %v5538 = vunpack.c.l.b16 %v5471
      %v5539 = vunpack.c.l.b16 %v5472
      %v5540 = vunpack.c.l.b16 %v5473
      %v5541 = vunpack.c.l.b16 %v5474
      %v5542 = vunpack.c.l.b16 %v5475
      %v5543 = vunpack.c.l.b16 %v5476
      %v5544 = vunpack.c.l.b16 %v5477
      %v5545 = vunpack.c.l.b16 %v5478
      %v5546 = vunpack.c.l.b16 %v5479
      %v5547 = vunpack.c.l.b16 %v5480
      %v5548 = vunpack.c.l.b16 %v5481
      %v5549 = vunpack.c.l.b16 %v5482
      %v5550 = vunpack.c.l.b16 %v5483
      %v5551 = vunpack.c.l.b16 %v5484
      %v5552 = vunpack.c.l.b16 %v5485
      %v5553 = vunpack.c.l.b16 %v5486
      %v5554 = vunpack.c.l.b16 %v5487
      %v5555 = vunpack.c.l.b16 %v5488
      %v5556 = vunpack.c.l.b16 %v5489
      %v5557 = vunpack.c.l.b16 %v5490
      %v5558 = vpack.c.b16 %v5534, %v5533
      %v5559 = vpack.c.b16 %v5536, %v5535
      %v5560 = vpack.c.b16 %v5538, %v5537
      %v5561 = vpack.c.b16 %v5540, %v5539
      %v5562 = vpack.c.b16 %v5542, %v5541
      %v5563 = vpack.c.b16 %v5544, %v5543
      %v5564 = vpack.c.b16 %v5546, %v5545
      %v5565 = vpack.c.b16 %v5548, %v5547
      %v5566 = vpack.c.b16 %v5550, %v5549
      %v5567 = vpack.c.b16 %v5552, %v5551
      %v5568 = vpack.c.b16 %v5554, %v5553
      %v5569 = vpack.c.b16 %v5556, %v5555
      %v5570 = vpack.c.b16 %v5557, %v5557
      %v5572 = vshrl.u32 %v5558, 16
      %v5574 = vshll.u32 %v5558, 16
      %v5576 = vrot.slane %v5574, 1
      %v5577 = vor.u32 %v5572, %v5576
      %v5579 = vshll.u32 %v5559, 16
      %v5581 = vrot.slane %v5579, 1
      %v5582 = vsel %vm612, %v5577, %v5581
      %v5583 = vshrl.u32 %v5559, 16
      %v5585 = vor.u32 %v5583, %v5581
      %v5587 = vshll.u32 %v5560, 16
      %v5589 = vrot.slane %v5587, 1
      %v5590 = vsel %vm612, %v5585, %v5589
      %v5591 = vshrl.u32 %v5560, 16
      %v5593 = vor.u32 %v5591, %v5589
      %v5595 = vshll.u32 %v5561, 16
      %v5597 = vrot.slane %v5595, 1
      %v5598 = vsel %vm612, %v5593, %v5597
      %v5599 = vshrl.u32 %v5561, 16
      %v5601 = vor.u32 %v5599, %v5597
      %v5603 = vshll.u32 %v5562, 16
      %v5605 = vrot.slane %v5603, 1
      %v5606 = vsel %vm612, %v5601, %v5605
      %v5607 = vshrl.u32 %v5562, 16
      %v5609 = vor.u32 %v5607, %v5605
      %v5611 = vshll.u32 %v5563, 16
      %v5613 = vrot.slane %v5611, 1
      %v5614 = vsel %vm612, %v5609, %v5613
      %v5615 = vshrl.u32 %v5563, 16
      %v5617 = vor.u32 %v5615, %v5613
      %v5619 = vshll.u32 %v5564, 16
      %v5621 = vrot.slane %v5619, 1
      %v5622 = vsel %vm612, %v5617, %v5621
      %v5623 = vshrl.u32 %v5564, 16
      %v5625 = vor.u32 %v5623, %v5621
      %v5627 = vshll.u32 %v5565, 16
      %v5629 = vrot.slane %v5627, 1
      %v5630 = vsel %vm612, %v5625, %v5629
      %v5631 = vshrl.u32 %v5565, 16
      %v5633 = vor.u32 %v5631, %v5629
      %v5635 = vshll.u32 %v5566, 16
      %v5637 = vrot.slane %v5635, 1
      %v5638 = vsel %vm612, %v5633, %v5637
      %v5639 = vshrl.u32 %v5566, 16
      %v5641 = vor.u32 %v5639, %v5637
      %v5643 = vshll.u32 %v5567, 16
      %v5645 = vrot.slane %v5643, 1
      %v5646 = vsel %vm612, %v5641, %v5645
      %v5647 = vshrl.u32 %v5567, 16
      %v5649 = vor.u32 %v5647, %v5645
      %v5651 = vshll.u32 %v5568, 16
      %v5653 = vrot.slane %v5651, 1
      %v5654 = vsel %vm612, %v5649, %v5653
      %v5655 = vshrl.u32 %v5568, 16
      %v5657 = vor.u32 %v5655, %v5653
      %v5659 = vshll.u32 %v5569, 16
      %v5661 = vrot.slane %v5659, 1
      %v5662 = vsel %vm612, %v5657, %v5661
      %v5663 = vshrl.u32 %v5569, 16
      %v5665 = vor.u32 %v5663, %v5661
      %v5667 = vshll.u32 %v5570, 16
      %v5669 = vrot.slane %v5667, 1
      %v5670 = vsel %vm612, %v5665, %v5669
      %v5699 = vunpack.c.l.b16 %v5492
      %v5700 = vunpack.c.l.b16 %v5493
      %v5701 = vunpack.c.l.b16 %v5494
      %v5702 = vunpack.c.l.b16 %v5495
      %v5703 = vunpack.c.l.b16 %v5496
      %v5704 = vunpack.c.l.b16 %v5497
      %v5705 = vunpack.c.l.b16 %v5498
      %v5706 = vunpack.c.l.b16 %v5499
      %v5707 = vunpack.c.l.b16 %v5500
      %v5708 = vunpack.c.l.b16 %v5501
      %v5709 = vunpack.c.l.b16 %v5502
      %v5710 = vunpack.c.l.b16 %v5503
      %v5711 = vunpack.c.l.b16 %v5504
      %v5712 = vunpack.c.l.b16 %v5505
      %v5713 = vunpack.c.l.b16 %v5506
      %v5714 = vunpack.c.l.b16 %v5507
      %v5715 = vpack.c.b16 %v5700, %v5699
      %v5716 = vpack.c.b16 %v5702, %v5701
      %v5717 = vpack.c.b16 %v5704, %v5703
      %v5718 = vpack.c.b16 %v5706, %v5705
      %v5719 = vpack.c.b16 %v5708, %v5707
      %v5720 = vpack.c.b16 %v5710, %v5709
      %v5721 = vpack.c.b16 %v5712, %v5711
      %v5722 = vpack.c.b16 %v5714, %v5713
      %5731 = vmatpush.bf16.msra.mxu0 %v5722
      %5732 = vmatpush.bf16.msra.mxu0 %v5721
      %5733 = vmatpush.bf16.msra.mxu0 %v5720
      %5734 = vmatpush.bf16.msra.mxu0 %v5719
      %5735 = vmatpush.bf16.msra.mxu0 %v5718
      %5736 = vmatpush.bf16.msra.mxu0 %v5717
      %5737 = vmatpush.bf16.msra.mxu0 %v5716
      %5738 = vmatpush.bf16.msra.mxu0 %v5715
      %5739 = vmatmul.bf16.gmra.mxu0 %v5582
      %v5740 = vpop.f32.mrf.mxu0
      %v5741 = vadd.f32 0.0, %v5740
      %v5742 = vpop.f32.mrf.mxu0
      %v5743 = vadd.f32 0.0, %v5742
      %5744 = vmatmul.bf16.gmra.mxu0 %v5590
      %v5745 = vpop.f32.mrf.mxu0
      %v5746 = vadd.f32 0.0, %v5745
      %v5747 = vpop.f32.mrf.mxu0
      %v5748 = vadd.f32 0.0, %v5747
      %5749 = vmatmul.bf16.gmra.mxu0 %v5598
      %v5750 = vpop.f32.mrf.mxu0
      %v5751 = vadd.f32 0.0, %v5750
      %v5752 = vpop.f32.mrf.mxu0
      %v5753 = vadd.f32 0.0, %v5752
      %5754 = vmatmul.bf16.gmra.mxu0 %v5606
      %v5755 = vpop.f32.mrf.mxu0
      %v5756 = vadd.f32 0.0, %v5755
      %v5757 = vpop.f32.mrf.mxu0
      %v5758 = vadd.f32 0.0, %v5757
      %5759 = vmatmul.bf16.gmra.mxu0 %v5614
      %v5760 = vpop.f32.mrf.mxu0
      %v5761 = vadd.f32 0.0, %v5760
      %v5762 = vpop.f32.mrf.mxu0
      %v5763 = vadd.f32 0.0, %v5762
      %5764 = vmatmul.bf16.gmra.mxu0 %v5622
      %v5765 = vpop.f32.mrf.mxu0
      %v5766 = vadd.f32 0.0, %v5765
      %v5767 = vpop.f32.mrf.mxu0
      %v5768 = vadd.f32 0.0, %v5767
      %5769 = vmatmul.bf16.gmra.mxu0 %v5630
      %v5770 = vpop.f32.mrf.mxu0
      %v5771 = vadd.f32 0.0, %v5770
      %v5772 = vpop.f32.mrf.mxu0
      %v5773 = vadd.f32 0.0, %v5772
      %5774 = vmatmul.bf16.gmra.mxu0 %v5638
      %v5775 = vpop.f32.mrf.mxu0
      %v5776 = vadd.f32 0.0, %v5775
      %v5777 = vpop.f32.mrf.mxu0
      %v5778 = vadd.f32 0.0, %v5777
      %5779 = vmatmul.bf16.gmra.mxu0 %v5646
      %v5780 = vpop.f32.mrf.mxu0
      %v5781 = vadd.f32 0.0, %v5780
      %v5782 = vpop.f32.mrf.mxu0
      %v5783 = vadd.f32 0.0, %v5782
      %5784 = vmatmul.bf16.gmra.mxu0 %v5654
      %v5785 = vpop.f32.mrf.mxu0
      %v5786 = vadd.f32 0.0, %v5785
      %v5787 = vpop.f32.mrf.mxu0
      %v5788 = vadd.f32 0.0, %v5787
      %5789 = vmatmul.bf16.gmra.mxu0 %v5662
      %v5790 = vpop.f32.mrf.mxu0
      %v5791 = vadd.f32 0.0, %v5790
      %v5792 = vpop.f32.mrf.mxu0
      %v5793 = vadd.f32 0.0, %v5792
      %5794 = vmatmul.bf16.gmra.mxu0 %v5670
      %v5795 = vpop.f32.mrf.mxu0
      %v5796 = vadd.f32 0.0, %v5795
      %v5797 = vpop.f32.mrf.mxu0
      %v5798 = vadd.f32 0.0, %v5797
      %5799 = vdwg.mxu0
      %v5800 = vadd.f32 %v5442, %v5741
      %v5801 = vadd.f32 %v5443, %v5743
      %v5802 = vadd.f32 %v5444, %v5746
      %v5803 = vadd.f32 %v5445, %v5748
      %v5804 = vadd.f32 %v5446, %v5751
      %v5805 = vadd.f32 %v5447, %v5753
      %v5806 = vadd.f32 %v5448, %v5756
      %v5807 = vadd.f32 %v5449, %v5758
      %v5808 = vadd.f32 %v5450, %v5761
      %v5809 = vadd.f32 %v5451, %v5763
      %v5810 = vadd.f32 %v5452, %v5766
      %v5811 = vadd.f32 %v5453, %v5768
      %v5812 = vadd.f32 %v5454, %v5771
      %v5813 = vadd.f32 %v5455, %v5773
      %v5814 = vadd.f32 %v5456, %v5776
      %v5815 = vadd.f32 %v5457, %v5778
      %v5816 = vadd.f32 %v5458, %v5781
      %v5817 = vadd.f32 %v5459, %v5783
      %v5818 = vadd.f32 %v5460, %v5786
      %v5819 = vadd.f32 %v5461, %v5788
      %v5820 = vadd.f32 %v5462, %v5791
      %v5821 = vadd.f32 %v5463, %v5793
      %v5822 = vadd.f32 %v5464, %v5796
      %v5823 = vadd.f32 %v5465, %v5798
      %v5824 = vld [vmem:[#allocation3 + $0xc] sm:$0xe]
      %s5825 = scalar_lea.vmem %s4, 320
      %v5826 = vld [vmem:[%s5825] sm:$0xf]
      %v5827 = vld [vmem:[%s5825 + $0x4] sm:$0xf]
      %v5828 = vld [vmem:[%s5825 + $0x8] sm:$0xf]
      %v5829 = vld [vmem:[%s5825 + $0xc] sm:$0xf]
      %v5830 = vld [vmem:[%s5825 + $0x10] sm:$0xf]
      %v5831 = vld [vmem:[%s5825 + $0x14] sm:$0xf]
      %v5832 = vld [vmem:[%s5825 + $0x18] sm:$0xf]
      %v5833 = vld [vmem:[%s5825 + $0x1c] sm:$0xf]
      %v5834 = vld [vmem:[%s5825 + $0x20] sm:$0xf]
      %v5835 = vld [vmem:[%s5825 + $0x24] sm:$0xf]
      %v5836 = vld [vmem:[%s5825 + $0x28] sm:$0xf]
      %v5837 = vld [vmem:[%s5825 + $0x2c] sm:$0xf]
      %v5838 = vld [vmem:[%s5825 + $0x30] sm:$0xf]
      %v5839 = vld [vmem:[%s5825 + $0x34] sm:$0xf]
      %v5840 = vld [vmem:[%s5825 + $0x38] sm:$0xf]
      %v5841 = vld [vmem:[%s5825 + $0x3c] sm:$0xf]
      %v5843 = vunpack.c.l.b16 %v5824
      %v5844 = vpack.c.b16 %v5534, %v5843
      %v5845 = vrot.slane %v5844, 1
      %v5846 = vrot.slane %v5559, 1
      %v5847 = vsel %vm1052, %v5845, %v5846
      %v5848 = vrot.slane %v5560, 1
      %v5849 = vsel %vm1052, %v5846, %v5848
      %v5850 = vrot.slane %v5561, 1
      %v5851 = vsel %vm1052, %v5848, %v5850
      %v5852 = vrot.slane %v5562, 1
      %v5853 = vsel %vm1052, %v5850, %v5852
      %v5854 = vrot.slane %v5563, 1
      %v5855 = vsel %vm1052, %v5852, %v5854
      %v5856 = vrot.slane %v5564, 1
      %v5857 = vsel %vm1052, %v5854, %v5856
      %v5858 = vrot.slane %v5565, 1
      %v5859 = vsel %vm1052, %v5856, %v5858
      %v5860 = vrot.slane %v5566, 1
      %v5861 = vsel %vm1052, %v5858, %v5860
      %v5862 = vrot.slane %v5567, 1
      %v5863 = vsel %vm1052, %v5860, %v5862
      %v5864 = vrot.slane %v5568, 1
      %v5865 = vsel %vm1052, %v5862, %v5864
      %v5866 = vrot.slane %v5569, 1
      %v5867 = vsel %vm1052, %v5864, %v5866
      %v5868 = vrot.slane %v5570, 1
      %v5869 = vsel %vm1052, %v5866, %v5868
      %v5898 = vunpack.c.l.b16 %v5826
      %v5899 = vunpack.c.l.b16 %v5827
      %v5900 = vunpack.c.l.b16 %v5828
      %v5901 = vunpack.c.l.b16 %v5829
      %v5902 = vunpack.c.l.b16 %v5830
      %v5903 = vunpack.c.l.b16 %v5831
      %v5904 = vunpack.c.l.b16 %v5832
      %v5905 = vunpack.c.l.b16 %v5833
      %v5906 = vunpack.c.l.b16 %v5834
      %v5907 = vunpack.c.l.b16 %v5835
      %v5908 = vunpack.c.l.b16 %v5836
      %v5909 = vunpack.c.l.b16 %v5837
      %v5910 = vunpack.c.l.b16 %v5838
      %v5911 = vunpack.c.l.b16 %v5839
      %v5912 = vunpack.c.l.b16 %v5840
      %v5913 = vunpack.c.l.b16 %v5841
      %v5914 = vpack.c.b16 %v5899, %v5898
      %v5915 = vpack.c.b16 %v5901, %v5900
      %v5916 = vpack.c.b16 %v5903, %v5902
      %v5917 = vpack.c.b16 %v5905, %v5904
      %v5918 = vpack.c.b16 %v5907, %v5906
      %v5919 = vpack.c.b16 %v5909, %v5908
      %v5920 = vpack.c.b16 %v5911, %v5910
      %v5921 = vpack.c.b16 %v5913, %v5912
      %5930 = vmatpush.bf16.msra.mxu0 %v5921
      %5931 = vmatpush.bf16.msra.mxu0 %v5920
      %5932 = vmatpush.bf16.msra.mxu0 %v5919
      %5933 = vmatpush.bf16.msra.mxu0 %v5918
      %5934 = vmatpush.bf16.msra.mxu0 %v5917
      %5935 = vmatpush.bf16.msra.mxu0 %v5916
      %5936 = vmatpush.bf16.msra.mxu0 %v5915
      %5937 = vmatpush.bf16.msra.mxu0 %v5914
      %5938 = vmatmul.bf16.gmra.mxu0 %v5847
      %v5939 = vpop.f32.mrf.mxu0
      %v5940 = vadd.f32 0.0, %v5939
      %v5941 = vpop.f32.mrf.mxu0
      %v5942 = vadd.f32 0.0, %v5941
      %5943 = vmatmul.bf16.gmra.mxu0 %v5849
      %v5944 = vpop.f32.mrf.mxu0
      %v5945 = vadd.f32 0.0, %v5944
      %v5946 = vpop.f32.mrf.mxu0
      %v5947 = vadd.f32 0.0, %v5946
      %5948 = vmatmul.bf16.gmra.mxu0 %v5851
      %v5949 = vpop.f32.mrf.mxu0
      %v5950 = vadd.f32 0.0, %v5949
      %v5951 = vpop.f32.mrf.mxu0
      %v5952 = vadd.f32 0.0, %v5951
      %5953 = vmatmul.bf16.gmra.mxu0 %v5853
      %v5954 = vpop.f32.mrf.mxu0
      %v5955 = vadd.f32 0.0, %v5954
      %v5956 = vpop.f32.mrf.mxu0
      %v5957 = vadd.f32 0.0, %v5956
      %5958 = vmatmul.bf16.gmra.mxu0 %v5855
      %v5959 = vpop.f32.mrf.mxu0
      %v5960 = vadd.f32 0.0, %v5959
      %v5961 = vpop.f32.mrf.mxu0
      %v5962 = vadd.f32 0.0, %v5961
      %5963 = vmatmul.bf16.gmra.mxu0 %v5857
      %v5964 = vpop.f32.mrf.mxu0
      %v5965 = vadd.f32 0.0, %v5964
      %v5966 = vpop.f32.mrf.mxu0
      %v5967 = vadd.f32 0.0, %v5966
      %5968 = vmatmul.bf16.gmra.mxu0 %v5859
      %v5969 = vpop.f32.mrf.mxu0
      %v5970 = vadd.f32 0.0, %v5969
      %v5971 = vpop.f32.mrf.mxu0
      %v5972 = vadd.f32 0.0, %v5971
      %5973 = vmatmul.bf16.gmra.mxu0 %v5861
      %v5974 = vpop.f32.mrf.mxu0
      %v5975 = vadd.f32 0.0, %v5974
      %v5976 = vpop.f32.mrf.mxu0
      %v5977 = vadd.f32 0.0, %v5976
      %5978 = vmatmul.bf16.gmra.mxu0 %v5863
      %v5979 = vpop.f32.mrf.mxu0
      %v5980 = vadd.f32 0.0, %v5979
      %v5981 = vpop.f32.mrf.mxu0
      %v5982 = vadd.f32 0.0, %v5981
      %5983 = vmatmul.bf16.gmra.mxu0 %v5865
      %v5984 = vpop.f32.mrf.mxu0
      %v5985 = vadd.f32 0.0, %v5984
      %v5986 = vpop.f32.mrf.mxu0
      %v5987 = vadd.f32 0.0, %v5986
      %5988 = vmatmul.bf16.gmra.mxu0 %v5867
      %v5989 = vpop.f32.mrf.mxu0
      %v5990 = vadd.f32 0.0, %v5989
      %v5991 = vpop.f32.mrf.mxu0
      %v5992 = vadd.f32 0.0, %v5991
      %5993 = vmatmul.bf16.gmra.mxu0 %v5869
      %v5994 = vpop.f32.mrf.mxu0
      %v5995 = vadd.f32 0.0, %v5994
      %v5996 = vpop.f32.mrf.mxu0
      %v5997 = vadd.f32 0.0, %v5996
      %5998 = vdwg.mxu0
      %v5999 = vadd.f32 %v5800, %v5940
      %v6000 = vadd.f32 %v5801, %v5942
      %v6001 = vadd.f32 %v5802, %v5945
      %v6002 = vadd.f32 %v5803, %v5947
      %v6003 = vadd.f32 %v5804, %v5950
      %v6004 = vadd.f32 %v5805, %v5952
      %v6005 = vadd.f32 %v5806, %v5955
      %v6006 = vadd.f32 %v5807, %v5957
      %v6007 = vadd.f32 %v5808, %v5960
      %v6008 = vadd.f32 %v5809, %v5962
      %v6009 = vadd.f32 %v5810, %v5965
      %v6010 = vadd.f32 %v5811, %v5967
      %v6011 = vadd.f32 %v5812, %v5970
      %v6012 = vadd.f32 %v5813, %v5972
      %v6013 = vadd.f32 %v5814, %v5975
      %v6014 = vadd.f32 %v5815, %v5977
      %v6015 = vadd.f32 %v5816, %v5980
      %v6016 = vadd.f32 %v5817, %v5982
      %v6017 = vadd.f32 %v5818, %v5985
      %v6018 = vadd.f32 %v5819, %v5987
      %v6019 = vadd.f32 %v5820, %v5990
      %v6020 = vadd.f32 %v5821, %v5992
      %v6021 = vadd.f32 %v5822, %v5995
      %v6022 = vadd.f32 %v5823, %v5997
      %v6023 = vld [vmem:[#allocation3 + $0x18] sm:$0xf]
      %v6024 = vld [vmem:[#allocation3 + $0x1c] sm:$0xf]
      %v6025 = vld [vmem:[#allocation3 + $0x20] sm:$0xf]
      %v6026 = vld [vmem:[#allocation3 + $0x24] sm:$0xf]
      %v6027 = vld [vmem:[#allocation3 + $0x28] sm:$0xf]
      %v6028 = vld [vmem:[#allocation3 + $0x2c] sm:$0xf]
      %v6029 = vld [vmem:[#allocation3 + $0x30] sm:$0xf]
      %v6030 = vld [vmem:[#allocation3 + $0x34] sm:$0xf]
      %v6031 = vld [vmem:[#allocation3 + $0x38] sm:$0xf]
      %v6032 = vld [vmem:[#allocation3 + $0x3c] sm:$0xf]
      %v6033 = vld [vmem:[#allocation3 + $0x40] sm:$0xf]
      %v6034 = vld [vmem:[#allocation3 + $0x44] sm:$0xf]
      %v6035 = vld [vmem:[#allocation3 + $0x48] sm:$0xf]
      %v6036 = vld [vmem:[#allocation3 + $0x4c] sm:$0xf]
      %v6037 = vld [vmem:[#allocation3 + $0x50] sm:$0xf]
      %v6038 = vld [vmem:[#allocation3 + $0x54] sm:$0xf]
      %v6039 = vld [vmem:[#allocation3 + $0x58] sm:$0xf]
      %v6040 = vld [vmem:[#allocation3 + $0x5c] sm:$0xf]
      %v6041 = vld [vmem:[#allocation3 + $0x60] sm:$0xf]
      %v6042 = vld [vmem:[#allocation3 + $0x64] sm:$0xf]
      %v6043 = vld [vmem:[#allocation3 + $0x68] sm:$0xf]
      %v6044 = vld [vmem:[#allocation3 + $0x6c] sm:$0xf]
      %v6045 = vld [vmem:[#allocation3 + $0x70] sm:$0xf]
      %v6046 = vld [vmem:[#allocation3 + $0x74] sm:$0xf]
      %s6047 = scalar_lea.vmem %s4, 384
      %v6048 = vld [vmem:[%s6047] sm:$0xf]
      %v6049 = vld [vmem:[%s6047 + $0x4] sm:$0xf]
      %v6050 = vld [vmem:[%s6047 + $0x8] sm:$0xf]
      %v6051 = vld [vmem:[%s6047 + $0xc] sm:$0xf]
      %v6052 = vld [vmem:[%s6047 + $0x10] sm:$0xf]
      %v6053 = vld [vmem:[%s6047 + $0x14] sm:$0xf]
      %v6054 = vld [vmem:[%s6047 + $0x18] sm:$0xf]
      %v6055 = vld [vmem:[%s6047 + $0x1c] sm:$0xf]
      %v6056 = vld [vmem:[%s6047 + $0x20] sm:$0xf]
      %v6057 = vld [vmem:[%s6047 + $0x24] sm:$0xf]
      %v6058 = vld [vmem:[%s6047 + $0x28] sm:$0xf]
      %v6059 = vld [vmem:[%s6047 + $0x2c] sm:$0xf]
      %v6060 = vld [vmem:[%s6047 + $0x30] sm:$0xf]
      %v6061 = vld [vmem:[%s6047 + $0x34] sm:$0xf]
      %v6062 = vld [vmem:[%s6047 + $0x38] sm:$0xf]
      %v6063 = vld [vmem:[%s6047 + $0x3c] sm:$0xf]
      %v6088 = vunpack.c.l.b16 %v6023
      %v6089 = vunpack.c.l.b16 %v6024
      %v6090 = vunpack.c.l.b16 %v6025
      %v6091 = vunpack.c.l.b16 %v6026
      %v6092 = vunpack.c.l.b16 %v6027
      %v6093 = vunpack.c.l.b16 %v6028
      %v6094 = vunpack.c.l.b16 %v6029
      %v6095 = vunpack.c.l.b16 %v6030
      %v6096 = vunpack.c.l.b16 %v6031
      %v6097 = vunpack.c.l.b16 %v6032
      %v6098 = vunpack.c.l.b16 %v6033
      %v6099 = vunpack.c.l.b16 %v6034
      %v6100 = vunpack.c.l.b16 %v6035
      %v6101 = vunpack.c.l.b16 %v6036
      %v6102 = vunpack.c.l.b16 %v6037
      %v6103 = vunpack.c.l.b16 %v6038
      %v6104 = vunpack.c.l.b16 %v6039
      %v6105 = vunpack.c.l.b16 %v6040
      %v6106 = vunpack.c.l.b16 %v6041
      %v6107 = vunpack.c.l.b16 %v6042
      %v6108 = vunpack.c.l.b16 %v6043
      %v6109 = vunpack.c.l.b16 %v6044
      %v6110 = vunpack.c.l.b16 %v6045
      %v6111 = vunpack.c.l.b16 %v6046
      %v6112 = vpack.c.b16 %v6089, %v6088
      %v6113 = vpack.c.b16 %v6091, %v6090
      %v6114 = vpack.c.b16 %v6093, %v6092
      %v6115 = vpack.c.b16 %v6095, %v6094
      %v6116 = vpack.c.b16 %v6097, %v6096
      %v6117 = vpack.c.b16 %v6099, %v6098
      %v6118 = vpack.c.b16 %v6101, %v6100
      %v6119 = vpack.c.b16 %v6103, %v6102
      %v6120 = vpack.c.b16 %v6105, %v6104
      %v6121 = vpack.c.b16 %v6107, %v6106
      %v6122 = vpack.c.b16 %v6109, %v6108
      %v6123 = vpack.c.b16 %v6111, %v6110
      %v6152 = vunpack.c.l.b16 %v6048
      %v6153 = vunpack.c.l.b16 %v6049
      %v6154 = vunpack.c.l.b16 %v6050
      %v6155 = vunpack.c.l.b16 %v6051
      %v6156 = vunpack.c.l.b16 %v6052
      %v6157 = vunpack.c.l.b16 %v6053
      %v6158 = vunpack.c.l.b16 %v6054
      %v6159 = vunpack.c.l.b16 %v6055
      %v6160 = vunpack.c.l.b16 %v6056
      %v6161 = vunpack.c.l.b16 %v6057
      %v6162 = vunpack.c.l.b16 %v6058
      %v6163 = vunpack.c.l.b16 %v6059
      %v6164 = vunpack.c.l.b16 %v6060
      %v6165 = vunpack.c.l.b16 %v6061
      %v6166 = vunpack.c.l.b16 %v6062
      %v6167 = vunpack.c.l.b16 %v6063
      %v6168 = vpack.c.b16 %v6153, %v6152
      %v6169 = vpack.c.b16 %v6155, %v6154
      %v6170 = vpack.c.b16 %v6157, %v6156
      %v6171 = vpack.c.b16 %v6159, %v6158
      %v6172 = vpack.c.b16 %v6161, %v6160
      %v6173 = vpack.c.b16 %v6163, %v6162
      %v6174 = vpack.c.b16 %v6165, %v6164
      %v6175 = vpack.c.b16 %v6167, %v6166
      %6184 = vmatpush.bf16.msra.mxu0 %v6175
      %6185 = vmatpush.bf16.msra.mxu0 %v6174
      %6186 = vmatpush.bf16.msra.mxu0 %v6173
      %6187 = vmatpush.bf16.msra.mxu0 %v6172
      %6188 = vmatpush.bf16.msra.mxu0 %v6171
      %6189 = vmatpush.bf16.msra.mxu0 %v6170
      %6190 = vmatpush.bf16.msra.mxu0 %v6169
      %6191 = vmatpush.bf16.msra.mxu0 %v6168
      %6192 = vmatmul.bf16.gmra.mxu0 %v6112
      %v6193 = vpop.f32.mrf.mxu0
      %v6194 = vadd.f32 0.0, %v6193
      %v6195 = vpop.f32.mrf.mxu0
      %v6196 = vadd.f32 0.0, %v6195
      %6197 = vmatmul.bf16.gmra.mxu0 %v6113
      %v6198 = vpop.f32.mrf.mxu0
      %v6199 = vadd.f32 0.0, %v6198
      %v6200 = vpop.f32.mrf.mxu0
      %v6201 = vadd.f32 0.0, %v6200
      %6202 = vmatmul.bf16.gmra.mxu0 %v6114
      %v6203 = vpop.f32.mrf.mxu0
      %v6204 = vadd.f32 0.0, %v6203
      %v6205 = vpop.f32.mrf.mxu0
      %v6206 = vadd.f32 0.0, %v6205
      %6207 = vmatmul.bf16.gmra.mxu0 %v6115
      %v6208 = vpop.f32.mrf.mxu0
      %v6209 = vadd.f32 0.0, %v6208
      %v6210 = vpop.f32.mrf.mxu0
      %v6211 = vadd.f32 0.0, %v6210
      %6212 = vmatmul.bf16.gmra.mxu0 %v6116
      %v6213 = vpop.f32.mrf.mxu0
      %v6214 = vadd.f32 0.0, %v6213
      %v6215 = vpop.f32.mrf.mxu0
      %v6216 = vadd.f32 0.0, %v6215
      %6217 = vmatmul.bf16.gmra.mxu0 %v6117
      %v6218 = vpop.f32.mrf.mxu0
      %v6219 = vadd.f32 0.0, %v6218
      %v6220 = vpop.f32.mrf.mxu0
      %v6221 = vadd.f32 0.0, %v6220
      %6222 = vmatmul.bf16.gmra.mxu0 %v6118
      %v6223 = vpop.f32.mrf.mxu0
      %v6224 = vadd.f32 0.0, %v6223
      %v6225 = vpop.f32.mrf.mxu0
      %v6226 = vadd.f32 0.0, %v6225
      %6227 = vmatmul.bf16.gmra.mxu0 %v6119
      %v6228 = vpop.f32.mrf.mxu0
      %v6229 = vadd.f32 0.0, %v6228
      %v6230 = vpop.f32.mrf.mxu0
      %v6231 = vadd.f32 0.0, %v6230
      %6232 = vmatmul.bf16.gmra.mxu0 %v6120
      %v6233 = vpop.f32.mrf.mxu0
      %v6234 = vadd.f32 0.0, %v6233
      %v6235 = vpop.f32.mrf.mxu0
      %v6236 = vadd.f32 0.0, %v6235
      %6237 = vmatmul.bf16.gmra.mxu0 %v6121
      %v6238 = vpop.f32.mrf.mxu0
      %v6239 = vadd.f32 0.0, %v6238
      %v6240 = vpop.f32.mrf.mxu0
      %v6241 = vadd.f32 0.0, %v6240
      %6242 = vmatmul.bf16.gmra.mxu0 %v6122
      %v6243 = vpop.f32.mrf.mxu0
      %v6244 = vadd.f32 0.0, %v6243
      %v6245 = vpop.f32.mrf.mxu0
      %v6246 = vadd.f32 0.0, %v6245
      %6247 = vmatmul.bf16.gmra.mxu0 %v6123
      %v6248 = vpop.f32.mrf.mxu0
      %v6249 = vadd.f32 0.0, %v6248
      %v6250 = vpop.f32.mrf.mxu0
      %v6251 = vadd.f32 0.0, %v6250
      %6252 = vdwg.mxu0
      %v6253 = vadd.f32 %v5999, %v6194
      %v6254 = vadd.f32 %v6000, %v6196
      %v6255 = vadd.f32 %v6001, %v6199
      %v6256 = vadd.f32 %v6002, %v6201
      %v6257 = vadd.f32 %v6003, %v6204
      %v6258 = vadd.f32 %v6004, %v6206
      %v6259 = vadd.f32 %v6005, %v6209
      %v6260 = vadd.f32 %v6006, %v6211
      %v6261 = vadd.f32 %v6007, %v6214
      %v6262 = vadd.f32 %v6008, %v6216
      %v6263 = vadd.f32 %v6009, %v6219
      %v6264 = vadd.f32 %v6010, %v6221
      %v6265 = vadd.f32 %v6011, %v6224
      %v6266 = vadd.f32 %v6012, %v6226
      %v6267 = vadd.f32 %v6013, %v6229
      %v6268 = vadd.f32 %v6014, %v6231
      %v6269 = vadd.f32 %v6015, %v6234
      %v6270 = vadd.f32 %v6016, %v6236
      %v6271 = vadd.f32 %v6017, %v6239
      %v6272 = vadd.f32 %v6018, %v6241
      %v6273 = vadd.f32 %v6019, %v6244
      %v6274 = vadd.f32 %v6020, %v6246
      %v6275 = vadd.f32 %v6021, %v6249
      %v6276 = vadd.f32 %v6022, %v6251
      %v6277 = vld [vmem:[#allocation3 + $0x18] sm:$0xf]
      %v6278 = vld [vmem:[#allocation3 + $0x1c] sm:$0xf]
      %v6279 = vld [vmem:[#allocation3 + $0x20] sm:$0xf]
      %v6280 = vld [vmem:[#allocation3 + $0x24] sm:$0xf]
      %v6281 = vld [vmem:[#allocation3 + $0x28] sm:$0xf]
      %v6282 = vld [vmem:[#allocation3 + $0x2c] sm:$0xf]
      %v6283 = vld [vmem:[#allocation3 + $0x30] sm:$0xf]
      %v6284 = vld [vmem:[#allocation3 + $0x34] sm:$0xf]
      %v6285 = vld [vmem:[#allocation3 + $0x38] sm:$0xf]
      %v6286 = vld [vmem:[#allocation3 + $0x3c] sm:$0xf]
      %v6287 = vld [vmem:[#allocation3 + $0x40] sm:$0xf]
      %v6288 = vld [vmem:[#allocation3 + $0x44] sm:$0xf]
      %v6289 = vld [vmem:[#allocation3 + $0x48] sm:$0xf]
      %v6290 = vld [vmem:[#allocation3 + $0x4c] sm:$0xf]
      %v6291 = vld [vmem:[#allocation3 + $0x50] sm:$0xf]
      %v6292 = vld [vmem:[#allocation3 + $0x54] sm:$0xf]
      %v6293 = vld [vmem:[#allocation3 + $0x58] sm:$0xf]
      %v6294 = vld [vmem:[#allocation3 + $0x5c] sm:$0xf]
      %v6295 = vld [vmem:[#allocation3 + $0x60] sm:$0xf]
      %v6296 = vld [vmem:[#allocation3 + $0x64] sm:$0xf]
      %v6297 = vld [vmem:[#allocation3 + $0x68] sm:$0xf]
      %v6298 = vld [vmem:[#allocation3 + $0x6c] sm:$0xf]
      %v6299 = vld [vmem:[#allocation3 + $0x70] sm:$0xf]
      %v6300 = vld [vmem:[#allocation3 + $0x74] sm:$0xf]
      %v6301 = vld [vmem:[#allocation3 + $0x78] sm:$0x1]
      %s6302 = scalar_lea.vmem %s4, 448
      %v6303 = vld [vmem:[%s6302] sm:$0xf]
      %v6304 = vld [vmem:[%s6302 + $0x4] sm:$0xf]
      %v6305 = vld [vmem:[%s6302 + $0x8] sm:$0xf]
      %v6306 = vld [vmem:[%s6302 + $0xc] sm:$0xf]
      %v6307 = vld [vmem:[%s6302 + $0x10] sm:$0xf]
      %v6308 = vld [vmem:[%s6302 + $0x14] sm:$0xf]
      %v6309 = vld [vmem:[%s6302 + $0x18] sm:$0xf]
      %v6310 = vld [vmem:[%s6302 + $0x1c] sm:$0xf]
      %v6311 = vld [vmem:[%s6302 + $0x20] sm:$0xf]
      %v6312 = vld [vmem:[%s6302 + $0x24] sm:$0xf]
      %v6313 = vld [vmem:[%s6302 + $0x28] sm:$0xf]
      %v6314 = vld [vmem:[%s6302 + $0x2c] sm:$0xf]
      %v6315 = vld [vmem:[%s6302 + $0x30] sm:$0xf]
      %v6316 = vld [vmem:[%s6302 + $0x34] sm:$0xf]
      %v6317 = vld [vmem:[%s6302 + $0x38] sm:$0xf]
      %v6318 = vld [vmem:[%s6302 + $0x3c] sm:$0xf]
      %v6344 = vunpack.c.l.b16 %v6277
      %v6345 = vunpack.c.l.b16 %v6278
      %v6346 = vunpack.c.l.b16 %v6279
      %v6347 = vunpack.c.l.b16 %v6280
      %v6348 = vunpack.c.l.b16 %v6281
      %v6349 = vunpack.c.l.b16 %v6282
      %v6350 = vunpack.c.l.b16 %v6283
      %v6351 = vunpack.c.l.b16 %v6284
      %v6352 = vunpack.c.l.b16 %v6285
      %v6353 = vunpack.c.l.b16 %v6286
      %v6354 = vunpack.c.l.b16 %v6287
      %v6355 = vunpack.c.l.b16 %v6288
      %v6356 = vunpack.c.l.b16 %v6289
      %v6357 = vunpack.c.l.b16 %v6290
      %v6358 = vunpack.c.l.b16 %v6291
      %v6359 = vunpack.c.l.b16 %v6292
      %v6360 = vunpack.c.l.b16 %v6293
      %v6361 = vunpack.c.l.b16 %v6294
      %v6362 = vunpack.c.l.b16 %v6295
      %v6363 = vunpack.c.l.b16 %v6296
      %v6364 = vunpack.c.l.b16 %v6297
      %v6365 = vunpack.c.l.b16 %v6298
      %v6366 = vunpack.c.l.b16 %v6299
      %v6367 = vunpack.c.l.b16 %v6300
      %v6368 = vunpack.c.l.b16 %v6301
      %v6369 = vpack.c.b16 %v6345, %v6344
      %v6370 = vpack.c.b16 %v6347, %v6346
      %v6371 = vpack.c.b16 %v6349, %v6348
      %v6372 = vpack.c.b16 %v6351, %v6350
      %v6373 = vpack.c.b16 %v6353, %v6352
      %v6374 = vpack.c.b16 %v6355, %v6354
      %v6375 = vpack.c.b16 %v6357, %v6356
      %v6376 = vpack.c.b16 %v6359, %v6358
      %v6377 = vpack.c.b16 %v6361, %v6360
      %v6378 = vpack.c.b16 %v6363, %v6362
      %v6379 = vpack.c.b16 %v6365, %v6364
      %v6380 = vpack.c.b16 %v6367, %v6366
      %v6381 = vpack.c.b16 %v6368, %v6368
      %v6383 = vshrl.u32 %v6369, 16
      %v6385 = vshll.u32 %v6369, 16
      %v6387 = vrot.slane %v6385, 1
      %v6388 = vor.u32 %v6383, %v6387
      %v6390 = vshll.u32 %v6370, 16
      %v6392 = vrot.slane %v6390, 1
      %v6393 = vsel %vm612, %v6388, %v6392
      %v6394 = vshrl.u32 %v6370, 16
      %v6396 = vor.u32 %v6394, %v6392
      %v6398 = vshll.u32 %v6371, 16
      %v6400 = vrot.slane %v6398, 1
      %v6401 = vsel %vm612, %v6396, %v6400
      %v6402 = vshrl.u32 %v6371, 16
      %v6404 = vor.u32 %v6402, %v6400
      %v6406 = vshll.u32 %v6372, 16
      %v6408 = vrot.slane %v6406, 1
      %v6409 = vsel %vm612, %v6404, %v6408
      %v6410 = vshrl.u32 %v6372, 16
      %v6412 = vor.u32 %v6410, %v6408
      %v6414 = vshll.u32 %v6373, 16
      %v6416 = vrot.slane %v6414, 1
      %v6417 = vsel %vm612, %v6412, %v6416
      %v6418 = vshrl.u32 %v6373, 16
      %v6420 = vor.u32 %v6418, %v6416
      %v6422 = vshll.u32 %v6374, 16
      %v6424 = vrot.slane %v6422, 1
      %v6425 = vsel %vm612, %v6420, %v6424
      %v6426 = vshrl.u32 %v6374, 16
      %v6428 = vor.u32 %v6426, %v6424
      %v6430 = vshll.u32 %v6375, 16
      %v6432 = vrot.slane %v6430, 1
      %v6433 = vsel %vm612, %v6428, %v6432
      %v6434 = vshrl.u32 %v6375, 16
      %v6436 = vor.u32 %v6434, %v6432
      %v6438 = vshll.u32 %v6376, 16
      %v6440 = vrot.slane %v6438, 1
      %v6441 = vsel %vm612, %v6436, %v6440
      %v6442 = vshrl.u32 %v6376, 16
      %v6444 = vor.u32 %v6442, %v6440
      %v6446 = vshll.u32 %v6377, 16
      %v6448 = vrot.slane %v6446, 1
      %v6449 = vsel %vm612, %v6444, %v6448
      %v6450 = vshrl.u32 %v6377, 16
      %v6452 = vor.u32 %v6450, %v6448
      %v6454 = vshll.u32 %v6378, 16
      %v6456 = vrot.slane %v6454, 1
      %v6457 = vsel %vm612, %v6452, %v6456
      %v6458 = vshrl.u32 %v6378, 16
      %v6460 = vor.u32 %v6458, %v6456
      %v6462 = vshll.u32 %v6379, 16
      %v6464 = vrot.slane %v6462, 1
      %v6465 = vsel %vm612, %v6460, %v6464
      %v6466 = vshrl.u32 %v6379, 16
      %v6468 = vor.u32 %v6466, %v6464
      %v6470 = vshll.u32 %v6380, 16
      %v6472 = vrot.slane %v6470, 1
      %v6473 = vsel %vm612, %v6468, %v6472
      %v6474 = vshrl.u32 %v6380, 16
      %v6476 = vor.u32 %v6474, %v6472
      %v6478 = vshll.u32 %v6381, 16
      %v6480 = vrot.slane %v6478, 1
      %v6481 = vsel %vm612, %v6476, %v6480
      %v6510 = vunpack.c.l.b16 %v6303
      %v6511 = vunpack.c.l.b16 %v6304
      %v6512 = vunpack.c.l.b16 %v6305
      %v6513 = vunpack.c.l.b16 %v6306
      %v6514 = vunpack.c.l.b16 %v6307
      %v6515 = vunpack.c.l.b16 %v6308
      %v6516 = vunpack.c.l.b16 %v6309
      %v6517 = vunpack.c.l.b16 %v6310
      %v6518 = vunpack.c.l.b16 %v6311
      %v6519 = vunpack.c.l.b16 %v6312
      %v6520 = vunpack.c.l.b16 %v6313
      %v6521 = vunpack.c.l.b16 %v6314
      %v6522 = vunpack.c.l.b16 %v6315
      %v6523 = vunpack.c.l.b16 %v6316
      %v6524 = vunpack.c.l.b16 %v6317
      %v6525 = vunpack.c.l.b16 %v6318
      %v6526 = vpack.c.b16 %v6511, %v6510
      %v6527 = vpack.c.b16 %v6513, %v6512
      %v6528 = vpack.c.b16 %v6515, %v6514
      %v6529 = vpack.c.b16 %v6517, %v6516
      %v6530 = vpack.c.b16 %v6519, %v6518
      %v6531 = vpack.c.b16 %v6521, %v6520
      %v6532 = vpack.c.b16 %v6523, %v6522
      %v6533 = vpack.c.b16 %v6525, %v6524
      %6542 = vmatpush.bf16.msra.mxu0 %v6533
      %6543 = vmatpush.bf16.msra.mxu0 %v6532
      %6544 = vmatpush.bf16.msra.mxu0 %v6531
      %6545 = vmatpush.bf16.msra.mxu0 %v6530
      %6546 = vmatpush.bf16.msra.mxu0 %v6529
      %6547 = vmatpush.bf16.msra.mxu0 %v6528
      %6548 = vmatpush.bf16.msra.mxu0 %v6527
      %6549 = vmatpush.bf16.msra.mxu0 %v6526
      %6550 = vmatmul.bf16.gmra.mxu0 %v6393
      %v6551 = vpop.f32.mrf.mxu0
      %v6552 = vadd.f32 0.0, %v6551
      %v6553 = vpop.f32.mrf.mxu0
      %v6554 = vadd.f32 0.0, %v6553
      %6555 = vmatmul.bf16.gmra.mxu0 %v6401
      %v6556 = vpop.f32.mrf.mxu0
      %v6557 = vadd.f32 0.0, %v6556
      %v6558 = vpop.f32.mrf.mxu0
      %v6559 = vadd.f32 0.0, %v6558
      %6560 = vmatmul.bf16.gmra.mxu0 %v6409
      %v6561 = vpop.f32.mrf.mxu0
      %v6562 = vadd.f32 0.0, %v6561
      %v6563 = vpop.f32.mrf.mxu0
      %v6564 = vadd.f32 0.0, %v6563
      %6565 = vmatmul.bf16.gmra.mxu0 %v6417
      %v6566 = vpop.f32.mrf.mxu0
      %v6567 = vadd.f32 0.0, %v6566
      %v6568 = vpop.f32.mrf.mxu0
      %v6569 = vadd.f32 0.0, %v6568
      %6570 = vmatmul.bf16.gmra.mxu0 %v6425
      %v6571 = vpop.f32.mrf.mxu0
      %v6572 = vadd.f32 0.0, %v6571
      %v6573 = vpop.f32.mrf.mxu0
      %v6574 = vadd.f32 0.0, %v6573
      %6575 = vmatmul.bf16.gmra.mxu0 %v6433
      %v6576 = vpop.f32.mrf.mxu0
      %v6577 = vadd.f32 0.0, %v6576
      %v6578 = vpop.f32.mrf.mxu0
      %v6579 = vadd.f32 0.0, %v6578
      %6580 = vmatmul.bf16.gmra.mxu0 %v6441
      %v6581 = vpop.f32.mrf.mxu0
      %v6582 = vadd.f32 0.0, %v6581
      %v6583 = vpop.f32.mrf.mxu0
      %v6584 = vadd.f32 0.0, %v6583
      %6585 = vmatmul.bf16.gmra.mxu0 %v6449
      %v6586 = vpop.f32.mrf.mxu0
      %v6587 = vadd.f32 0.0, %v6586
      %v6588 = vpop.f32.mrf.mxu0
      %v6589 = vadd.f32 0.0, %v6588
      %6590 = vmatmul.bf16.gmra.mxu0 %v6457
      %v6591 = vpop.f32.mrf.mxu0
      %v6592 = vadd.f32 0.0, %v6591
      %v6593 = vpop.f32.mrf.mxu0
      %v6594 = vadd.f32 0.0, %v6593
      %6595 = vmatmul.bf16.gmra.mxu0 %v6465
      %v6596 = vpop.f32.mrf.mxu0
      %v6597 = vadd.f32 0.0, %v6596
      %v6598 = vpop.f32.mrf.mxu0
      %v6599 = vadd.f32 0.0, %v6598
      %6600 = vmatmul.bf16.gmra.mxu0 %v6473
      %v6601 = vpop.f32.mrf.mxu0
      %v6602 = vadd.f32 0.0, %v6601
      %v6603 = vpop.f32.mrf.mxu0
      %v6604 = vadd.f32 0.0, %v6603
      %6605 = vmatmul.bf16.gmra.mxu0 %v6481
      %v6606 = vpop.f32.mrf.mxu0
      %v6607 = vadd.f32 0.0, %v6606
      %v6608 = vpop.f32.mrf.mxu0
      %v6609 = vadd.f32 0.0, %v6608
      %6610 = vdwg.mxu0
      %v6611 = vadd.f32 %v6253, %v6552
      %v6612 = vadd.f32 %v6254, %v6554
      %v6613 = vadd.f32 %v6255, %v6557
      %v6614 = vadd.f32 %v6256, %v6559
      %v6615 = vadd.f32 %v6257, %v6562
      %v6616 = vadd.f32 %v6258, %v6564
      %v6617 = vadd.f32 %v6259, %v6567
      %v6618 = vadd.f32 %v6260, %v6569
      %v6619 = vadd.f32 %v6261, %v6572
      %v6620 = vadd.f32 %v6262, %v6574
      %v6621 = vadd.f32 %v6263, %v6577
      %v6622 = vadd.f32 %v6264, %v6579
      %v6623 = vadd.f32 %v6265, %v6582
      %v6624 = vadd.f32 %v6266, %v6584
      %v6625 = vadd.f32 %v6267, %v6587
      %v6626 = vadd.f32 %v6268, %v6589
      %v6627 = vadd.f32 %v6269, %v6592
      %v6628 = vadd.f32 %v6270, %v6594
      %v6629 = vadd.f32 %v6271, %v6597
      %v6630 = vadd.f32 %v6272, %v6599
      %v6631 = vadd.f32 %v6273, %v6602
      %v6632 = vadd.f32 %v6274, %v6604
      %v6633 = vadd.f32 %v6275, %v6607
      %v6634 = vadd.f32 %v6276, %v6609
      %v6635 = vld [vmem:[#allocation3 + $0x18] sm:$0xe]
      %s6636 = scalar_lea.vmem %s4, 512
      %v6637 = vld [vmem:[%s6636] sm:$0xf]
      %v6638 = vld [vmem:[%s6636 + $0x4] sm:$0xf]
      %v6639 = vld [vmem:[%s6636 + $0x8] sm:$0xf]
      %v6640 = vld [vmem:[%s6636 + $0xc] sm:$0xf]
      %v6641 = vld [vmem:[%s6636 + $0x10] sm:$0xf]
      %v6642 = vld [vmem:[%s6636 + $0x14] sm:$0xf]
      %v6643 = vld [vmem:[%s6636 + $0x18] sm:$0xf]
      %v6644 = vld [vmem:[%s6636 + $0x1c] sm:$0xf]
      %v6645 = vld [vmem:[%s6636 + $0x20] sm:$0xf]
      %v6646 = vld [vmem:[%s6636 + $0x24] sm:$0xf]
      %v6647 = vld [vmem:[%s6636 + $0x28] sm:$0xf]
      %v6648 = vld [vmem:[%s6636 + $0x2c] sm:$0xf]
      %v6649 = vld [vmem:[%s6636 + $0x30] sm:$0xf]
      %v6650 = vld [vmem:[%s6636 + $0x34] sm:$0xf]
      %v6651 = vld [vmem:[%s6636 + $0x38] sm:$0xf]
      %v6652 = vld [vmem:[%s6636 + $0x3c] sm:$0xf]
      %v6654 = vunpack.c.l.b16 %v6635
      %v6655 = vpack.c.b16 %v6345, %v6654
      %v6656 = vrot.slane %v6655, 1
      %v6657 = vrot.slane %v6370, 1
      %v6658 = vsel %vm1052, %v6656, %v6657
      %v6659 = vrot.slane %v6371, 1
      %v6660 = vsel %vm1052, %v6657, %v6659
      %v6661 = vrot.slane %v6372, 1
      %v6662 = vsel %vm1052, %v6659, %v6661
      %v6663 = vrot.slane %v6373, 1
      %v6664 = vsel %vm1052, %v6661, %v6663
      %v6665 = vrot.slane %v6374, 1
      %v6666 = vsel %vm1052, %v6663, %v6665
      %v6667 = vrot.slane %v6375, 1
      %v6668 = vsel %vm1052, %v6665, %v6667
      %v6669 = vrot.slane %v6376, 1
      %v6670 = vsel %vm1052, %v6667, %v6669
      %v6671 = vrot.slane %v6377, 1
      %v6672 = vsel %vm1052, %v6669, %v6671
      %v6673 = vrot.slane %v6378, 1
      %v6674 = vsel %vm1052, %v6671, %v6673
      %v6675 = vrot.slane %v6379, 1
      %v6676 = vsel %vm1052, %v6673, %v6675
      %v6677 = vrot.slane %v6380, 1
      %v6678 = vsel %vm1052, %v6675, %v6677
      %v6679 = vrot.slane %v6381, 1
      %v6680 = vsel %vm1052, %v6677, %v6679
      %v6709 = vunpack.c.l.b16 %v6637
      %v6710 = vunpack.c.l.b16 %v6638
      %v6711 = vunpack.c.l.b16 %v6639
      %v6712 = vunpack.c.l.b16 %v6640
      %v6713 = vunpack.c.l.b16 %v6641
      %v6714 = vunpack.c.l.b16 %v6642
      %v6715 = vunpack.c.l.b16 %v6643
      %v6716 = vunpack.c.l.b16 %v6644
      %v6717 = vunpack.c.l.b16 %v6645
      %v6718 = vunpack.c.l.b16 %v6646
      %v6719 = vunpack.c.l.b16 %v6647
      %v6720 = vunpack.c.l.b16 %v6648
      %v6721 = vunpack.c.l.b16 %v6649
      %v6722 = vunpack.c.l.b16 %v6650
      %v6723 = vunpack.c.l.b16 %v6651
      %v6724 = vunpack.c.l.b16 %v6652
      %v6725 = vpack.c.b16 %v6710, %v6709
      %v6726 = vpack.c.b16 %v6712, %v6711
      %v6727 = vpack.c.b16 %v6714, %v6713
      %v6728 = vpack.c.b16 %v6716, %v6715
      %v6729 = vpack.c.b16 %v6718, %v6717
      %v6730 = vpack.c.b16 %v6720, %v6719
      %v6731 = vpack.c.b16 %v6722, %v6721
      %v6732 = vpack.c.b16 %v6724, %v6723
      %6741 = vmatpush.bf16.msra.mxu0 %v6732
      %6742 = vmatpush.bf16.msra.mxu0 %v6731
      %6743 = vmatpush.bf16.msra.mxu0 %v6730
      %6744 = vmatpush.bf16.msra.mxu0 %v6729
      %6745 = vmatpush.bf16.msra.mxu0 %v6728
      %6746 = vmatpush.bf16.msra.mxu0 %v6727
      %6747 = vmatpush.bf16.msra.mxu0 %v6726
      %6748 = vmatpush.bf16.msra.mxu0 %v6725
      %6749 = vmatmul.bf16.gmra.mxu0 %v6658
      %v6750 = vpop.f32.mrf.mxu0
      %v6751 = vadd.f32 0.0, %v6750
      %v6752 = vpop.f32.mrf.mxu0
      %v6753 = vadd.f32 0.0, %v6752
      %6754 = vmatmul.bf16.gmra.mxu0 %v6660
      %v6755 = vpop.f32.mrf.mxu0
      %v6756 = vadd.f32 0.0, %v6755
      %v6757 = vpop.f32.mrf.mxu0
      %v6758 = vadd.f32 0.0, %v6757
      %6759 = vmatmul.bf16.gmra.mxu0 %v6662
      %v6760 = vpop.f32.mrf.mxu0
      %v6761 = vadd.f32 0.0, %v6760
      %v6762 = vpop.f32.mrf.mxu0
      %v6763 = vadd.f32 0.0, %v6762
      %6764 = vmatmul.bf16.gmra.mxu0 %v6664
      %v6765 = vpop.f32.mrf.mxu0
      %v6766 = vadd.f32 0.0, %v6765
      %v6767 = vpop.f32.mrf.mxu0
      %v6768 = vadd.f32 0.0, %v6767
      %6769 = vmatmul.bf16.gmra.mxu0 %v6666
      %v6770 = vpop.f32.mrf.mxu0
      %v6771 = vadd.f32 0.0, %v6770
      %v6772 = vpop.f32.mrf.mxu0
      %v6773 = vadd.f32 0.0, %v6772
      %6774 = vmatmul.bf16.gmra.mxu0 %v6668
      %v6775 = vpop.f32.mrf.mxu0
      %v6776 = vadd.f32 0.0, %v6775
      %v6777 = vpop.f32.mrf.mxu0
      %v6778 = vadd.f32 0.0, %v6777
      %6779 = vmatmul.bf16.gmra.mxu0 %v6670
      %v6780 = vpop.f32.mrf.mxu0
      %v6781 = vadd.f32 0.0, %v6780
      %v6782 = vpop.f32.mrf.mxu0
      %v6783 = vadd.f32 0.0, %v6782
      %6784 = vmatmul.bf16.gmra.mxu0 %v6672
      %v6785 = vpop.f32.mrf.mxu0
      %v6786 = vadd.f32 0.0, %v6785
      %v6787 = vpop.f32.mrf.mxu0
      %v6788 = vadd.f32 0.0, %v6787
      %6789 = vmatmul.bf16.gmra.mxu0 %v6674
      %v6790 = vpop.f32.mrf.mxu0
      %v6791 = vadd.f32 0.0, %v6790
      %v6792 = vpop.f32.mrf.mxu0
      %v6793 = vadd.f32 0.0, %v6792
      %6794 = vmatmul.bf16.gmra.mxu0 %v6676
      %v6795 = vpop.f32.mrf.mxu0
      %v6796 = vadd.f32 0.0, %v6795
      %v6797 = vpop.f32.mrf.mxu0
      %v6798 = vadd.f32 0.0, %v6797
      %6799 = vmatmul.bf16.gmra.mxu0 %v6678
      %v6800 = vpop.f32.mrf.mxu0
      %v6801 = vadd.f32 0.0, %v6800
      %v6802 = vpop.f32.mrf.mxu0
      %v6803 = vadd.f32 0.0, %v6802
      %6804 = vmatmul.bf16.gmra.mxu0 %v6680
      %v6805 = vpop.f32.mrf.mxu0
      %v6806 = vadd.f32 0.0, %v6805
      %v6807 = vpop.f32.mrf.mxu0
      %v6808 = vadd.f32 0.0, %v6807
      %6809 = vdwg.mxu0
      %v6810 = vadd.f32 %v6611, %v6751
      %v6811 = vadd.f32 %v6612, %v6753
      %v6812 = vadd.f32 %v6613, %v6756
      %v6813 = vadd.f32 %v6614, %v6758
      %v6814 = vadd.f32 %v6615, %v6761
      %v6815 = vadd.f32 %v6616, %v6763
      %v6816 = vadd.f32 %v6617, %v6766
      %v6817 = vadd.f32 %v6618, %v6768
      %v6818 = vadd.f32 %v6619, %v6771
      %v6819 = vadd.f32 %v6620, %v6773
      %v6820 = vadd.f32 %v6621, %v6776
      %v6821 = vadd.f32 %v6622, %v6778
      %v6822 = vadd.f32 %v6623, %v6781
      %v6823 = vadd.f32 %v6624, %v6783
      %v6824 = vadd.f32 %v6625, %v6786
      %v6825 = vadd.f32 %v6626, %v6788
      %v6826 = vadd.f32 %v6627, %v6791
      %v6827 = vadd.f32 %v6628, %v6793
      %v6828 = vadd.f32 %v6629, %v6796
      %v6829 = vadd.f32 %v6630, %v6798
      %v6830 = vadd.f32 %v6631, %v6801
      %v6831 = vadd.f32 %v6632, %v6803
      %v6832 = vadd.f32 %v6633, %v6806
      %v6833 = vadd.f32 %v6634, %v6808
      %v6834 = vld [vmem:[%s5] sm:$0x1]
      %v6836 = vperm.slane %v6834, 0
      %v6838 = vadd.f32 %v6810, %v6836
      %v6839 = vadd.f32 %v6811, %v6836
      %v6840 = vadd.f32 %v6812, %v6836
      %v6841 = vadd.f32 %v6813, %v6836
      %v6842 = vadd.f32 %v6814, %v6836
      %v6843 = vadd.f32 %v6815, %v6836
      %v6844 = vadd.f32 %v6816, %v6836
      %v6845 = vadd.f32 %v6817, %v6836
      %v6846 = vadd.f32 %v6818, %v6836
      %v6847 = vadd.f32 %v6819, %v6836
      %v6848 = vadd.f32 %v6820, %v6836
      %v6849 = vadd.f32 %v6821, %v6836
      %v6850 = vadd.f32 %v6822, %v6836
      %v6851 = vadd.f32 %v6823, %v6836
      %v6852 = vadd.f32 %v6824, %v6836
      %v6853 = vadd.f32 %v6825, %v6836
      %v6854 = vadd.f32 %v6826, %v6836
      %v6855 = vadd.f32 %v6827, %v6836
      %v6856 = vadd.f32 %v6828, %v6836
      %v6857 = vadd.f32 %v6829, %v6836
      %v6858 = vadd.f32 %v6830, %v6836
      %v6859 = vadd.f32 %v6831, %v6836
      %v6860 = vadd.f32 %v6832, %v6836
      %v6861 = vadd.f32 %v6833, %v6836
      %v6862 = vmax.f32 %v6838, 0.0
      %v6863 = vmax.f32 %v6839, 0.0
      %v6864 = vmax.f32 %v6840, 0.0
      %v6865 = vmax.f32 %v6841, 0.0
      %v6866 = vmax.f32 %v6842, 0.0
      %v6867 = vmax.f32 %v6843, 0.0
      %v6868 = vmax.f32 %v6844, 0.0
      %v6869 = vmax.f32 %v6845, 0.0
      %v6870 = vmax.f32 %v6846, 0.0
      %v6871 = vmax.f32 %v6847, 0.0
      %v6872 = vmax.f32 %v6848, 0.0
      %v6873 = vmax.f32 %v6849, 0.0
      %v6874 = vmax.f32 %v6850, 0.0
      %v6875 = vmax.f32 %v6851, 0.0
      %v6876 = vmax.f32 %v6852, 0.0
      %v6877 = vmax.f32 %v6853, 0.0
      %v6878 = vmax.f32 %v6854, 0.0
      %v6879 = vmax.f32 %v6855, 0.0
      %v6880 = vmax.f32 %v6856, 0.0
      %v6881 = vmax.f32 %v6857, 0.0
      %v6882 = vmax.f32 %v6858, 0.0
      %v6883 = vmax.f32 %v6859, 0.0
      %v6884 = vmax.f32 %v6860, 0.0
      %v6885 = vmax.f32 %v6861, 0.0
      %v6886 = vpack.c.bf16 %v6863, %v6862
      %v6887 = vpack.c.bf16 %v6865, %v6864
      %v6888 = vpack.c.bf16 %v6867, %v6866
      %v6889 = vpack.c.bf16 %v6869, %v6868
      %v6890 = vpack.c.bf16 %v6871, %v6870
      %v6891 = vpack.c.bf16 %v6873, %v6872
      %v6892 = vpack.c.bf16 %v6875, %v6874
      %v6893 = vpack.c.bf16 %v6877, %v6876
      %v6894 = vpack.c.bf16 %v6879, %v6878
      %v6895 = vpack.c.bf16 %v6881, %v6880
      %v6896 = vpack.c.bf16 %v6883, %v6882
      %v6897 = vpack.c.bf16 %v6885, %v6884
      %v6898 = vld [vmem:[%s6] sm:$0xf]
      %v6899 = vld [vmem:[%s6 + $0x4] sm:$0xf]
      %v6900 = vld [vmem:[%s6 + $0x8] sm:$0xf]
      %v6901 = vld [vmem:[%s6 + $0xc] sm:$0xf]
      %v6902 = vld [vmem:[%s6 + $0x10] sm:$0xf]
      %v6903 = vld [vmem:[%s6 + $0x14] sm:$0xf]
      %v6904 = vld [vmem:[%s6 + $0x18] sm:$0xf]
      %v6905 = vld [vmem:[%s6 + $0x1c] sm:$0xf]
      %v6906 = vld [vmem:[%s6 + $0x20] sm:$0xf]
      %v6907 = vld [vmem:[%s6 + $0x24] sm:$0xf]
      %v6908 = vld [vmem:[%s6 + $0x28] sm:$0xf]
      %v6909 = vld [vmem:[%s6 + $0x2c] sm:$0xf]
      %v6910 = vld [vmem:[%s6 + $0x30] sm:$0xf]
      %v6911 = vld [vmem:[%s6 + $0x34] sm:$0xf]
      %v6912 = vld [vmem:[%s6 + $0x38] sm:$0xf]
      %v6913 = vld [vmem:[%s6 + $0x3c] sm:$0xf]
      %v6930 = vunpack.c.l.b16 %v6898
      %v6931 = vunpack.c.l.b16 %v6899
      %v6932 = vunpack.c.l.b16 %v6900
      %v6933 = vunpack.c.l.b16 %v6901
      %v6934 = vunpack.c.l.b16 %v6902
      %v6935 = vunpack.c.l.b16 %v6903
      %v6936 = vunpack.c.l.b16 %v6904
      %v6937 = vunpack.c.l.b16 %v6905
      %v6938 = vunpack.c.l.b16 %v6906
      %v6939 = vunpack.c.l.b16 %v6907
      %v6940 = vunpack.c.l.b16 %v6908
      %v6941 = vunpack.c.l.b16 %v6909
      %v6942 = vunpack.c.l.b16 %v6910
      %v6943 = vunpack.c.l.b16 %v6911
      %v6944 = vunpack.c.l.b16 %v6912
      %v6945 = vunpack.c.l.b16 %v6913
      %v6946 = vpack.c.b16 %v6931, %v6930
      %v6947 = vpack.c.b16 %v6933, %v6932
      %v6948 = vpack.c.b16 %v6935, %v6934
      %v6949 = vpack.c.b16 %v6937, %v6936
      %v6950 = vpack.c.b16 %v6939, %v6938
      %v6951 = vpack.c.b16 %v6941, %v6940
      %v6952 = vpack.c.b16 %v6943, %v6942
      %v6953 = vpack.c.b16 %v6945, %v6944
      %6962 = vmatpush.bf16.msra.mxu0 %v6953
      %6963 = vmatpush.bf16.msra.mxu0 %v6952
      %6964 = vmatpush.bf16.msra.mxu0 %v6951
      %6965 = vmatpush.bf16.msra.mxu0 %v6950
      %6966 = vmatpush.bf16.msra.mxu0 %v6949
      %6967 = vmatpush.bf16.msra.mxu0 %v6948
      %6968 = vmatpush.bf16.msra.mxu0 %v6947
      %6969 = vmatpush.bf16.msra.mxu0 %v6946
      %6970 = vmatmul.bf16.gmra.mxu0 %v6886
      %v6971 = vpop.f32.mrf.mxu0
      %v6972 = vadd.f32 0.0, %v6971
      %v6973 = vpop.f32.mrf.mxu0
      %v6974 = vadd.f32 0.0, %v6973
      %6975 = vmatmul.bf16.gmra.mxu0 %v6887
      %v6976 = vpop.f32.mrf.mxu0
      %v6977 = vadd.f32 0.0, %v6976
      %v6978 = vpop.f32.mrf.mxu0
      %v6979 = vadd.f32 0.0, %v6978
      %6980 = vmatmul.bf16.gmra.mxu0 %v6888
      %v6981 = vpop.f32.mrf.mxu0
      %v6982 = vadd.f32 0.0, %v6981
      %v6983 = vpop.f32.mrf.mxu0
      %v6984 = vadd.f32 0.0, %v6983
      %6985 = vmatmul.bf16.gmra.mxu0 %v6889
      %v6986 = vpop.f32.mrf.mxu0
      %v6987 = vadd.f32 0.0, %v6986
      %v6988 = vpop.f32.mrf.mxu0
      %v6989 = vadd.f32 0.0, %v6988
      %6990 = vmatmul.bf16.gmra.mxu0 %v6890
      %v6991 = vpop.f32.mrf.mxu0
      %v6992 = vadd.f32 0.0, %v6991
      %v6993 = vpop.f32.mrf.mxu0
      %v6994 = vadd.f32 0.0, %v6993
      %6995 = vmatmul.bf16.gmra.mxu0 %v6891
      %v6996 = vpop.f32.mrf.mxu0
      %v6997 = vadd.f32 0.0, %v6996
      %v6998 = vpop.f32.mrf.mxu0
      %v6999 = vadd.f32 0.0, %v6998
      %7000 = vmatmul.bf16.gmra.mxu0 %v6892
      %v7001 = vpop.f32.mrf.mxu0
      %v7002 = vadd.f32 0.0, %v7001
      %v7003 = vpop.f32.mrf.mxu0
      %v7004 = vadd.f32 0.0, %v7003
      %7005 = vmatmul.bf16.gmra.mxu0 %v6893
      %v7006 = vpop.f32.mrf.mxu0
      %v7007 = vadd.f32 0.0, %v7006
      %v7008 = vpop.f32.mrf.mxu0
      %v7009 = vadd.f32 0.0, %v7008
      %7010 = vmatmul.bf16.gmra.mxu0 %v6894
      %v7011 = vpop.f32.mrf.mxu0
      %v7012 = vadd.f32 0.0, %v7011
      %v7013 = vpop.f32.mrf.mxu0
      %v7014 = vadd.f32 0.0, %v7013
      %7015 = vmatmul.bf16.gmra.mxu0 %v6895
      %v7016 = vpop.f32.mrf.mxu0
      %v7017 = vadd.f32 0.0, %v7016
      %v7018 = vpop.f32.mrf.mxu0
      %v7019 = vadd.f32 0.0, %v7018
      %7020 = vmatmul.bf16.gmra.mxu0 %v6896
      %v7021 = vpop.f32.mrf.mxu0
      %v7022 = vadd.f32 0.0, %v7021
      %v7023 = vpop.f32.mrf.mxu0
      %v7024 = vadd.f32 0.0, %v7023
      %7025 = vmatmul.bf16.gmra.mxu0 %v6897
      %v7026 = vpop.f32.mrf.mxu0
      %v7027 = vadd.f32 0.0, %v7026
      %v7028 = vpop.f32.mrf.mxu0
      %v7029 = vadd.f32 0.0, %v7028
      %7030 = vdwg.mxu0
      %v7031 = vadd.f32 %v6862, %v6972
      %v7032 = vadd.f32 %v6863, %v6974
      %v7033 = vadd.f32 %v6864, %v6977
      %v7034 = vadd.f32 %v6865, %v6979
      %v7035 = vadd.f32 %v6866, %v6982
      %v7036 = vadd.f32 %v6867, %v6984
      %v7037 = vadd.f32 %v6868, %v6987
      %v7038 = vadd.f32 %v6869, %v6989
      %v7039 = vadd.f32 %v6870, %v6992
      %v7040 = vadd.f32 %v6871, %v6994
      %v7041 = vadd.f32 %v6872, %v6997
      %v7042 = vadd.f32 %v6873, %v6999
      %v7043 = vadd.f32 %v6874, %v7002
      %v7044 = vadd.f32 %v6875, %v7004
      %v7045 = vadd.f32 %v6876, %v7007
      %v7046 = vadd.f32 %v6877, %v7009
      %v7047 = vadd.f32 %v6878, %v7012
      %v7048 = vadd.f32 %v6879, %v7014
      %v7049 = vadd.f32 %v6880, %v7017
      %v7050 = vadd.f32 %v6881, %v7019
      %v7051 = vadd.f32 %v6882, %v7022
      %v7052 = vadd.f32 %v6883, %v7024
      %v7053 = vadd.f32 %v6884, %v7027
      %v7054 = vadd.f32 %v6885, %v7029
      %v7055 = vld [vmem:[%s7] sm:$0x1]
      %v7057 = vperm.slane %v7055, 0
      %v7059 = vadd.f32 %v7031, %v7057
      %v7060 = vadd.f32 %v7032, %v7057
      %v7061 = vadd.f32 %v7033, %v7057
      %v7062 = vadd.f32 %v7034, %v7057
      %v7063 = vadd.f32 %v7035, %v7057
      %v7064 = vadd.f32 %v7036, %v7057
      %v7065 = vadd.f32 %v7037, %v7057
      %v7066 = vadd.f32 %v7038, %v7057
      %v7067 = vadd.f32 %v7039, %v7057
      %v7068 = vadd.f32 %v7040, %v7057
      %v7069 = vadd.f32 %v7041, %v7057
      %v7070 = vadd.f32 %v7042, %v7057
      %v7071 = vadd.f32 %v7043, %v7057
      %v7072 = vadd.f32 %v7044, %v7057
      %v7073 = vadd.f32 %v7045, %v7057
      %v7074 = vadd.f32 %v7046, %v7057
      %v7075 = vadd.f32 %v7047, %v7057
      %v7076 = vadd.f32 %v7048, %v7057
      %v7077 = vadd.f32 %v7049, %v7057
      %v7078 = vadd.f32 %v7050, %v7057
      %v7079 = vadd.f32 %v7051, %v7057
      %v7080 = vadd.f32 %v7052, %v7057
      %v7081 = vadd.f32 %v7053, %v7057
      %v7082 = vadd.f32 %v7054, %v7057
      %7083 = vst [vmem:[%s295] sm:$0xff] %v7059
      %7084 = vst [vmem:[%s295 + $0x8] sm:$0xff] %v7060
      %7085 = vst [vmem:[%s295 + $0x10] sm:$0xff] %v7061
      %7086 = vst [vmem:[%s295 + $0x18] sm:$0xff] %v7062
      %7087 = vst [vmem:[%s295 + $0x20] sm:$0xff] %v7063
      %7088 = vst [vmem:[%s295 + $0x28] sm:$0xff] %v7064
      %7089 = vst [vmem:[%s295 + $0x30] sm:$0xff] %v7065
      %7090 = vst [vmem:[%s295 + $0x38] sm:$0xff] %v7066
      %7091 = vst [vmem:[%s295 + $0x40] sm:$0xff] %v7067
      %7092 = vst [vmem:[%s295 + $0x48] sm:$0xff] %v7068
      %7093 = vst [vmem:[%s295 + $0x50] sm:$0xff] %v7069
      %7094 = vst [vmem:[%s295 + $0x58] sm:$0xff] %v7070
      %7095 = vst [vmem:[%s295 + $0x60] sm:$0xff] %v7071
      %7096 = vst [vmem:[%s295 + $0x68] sm:$0xff] %v7072
      %7097 = vst [vmem:[%s295 + $0x70] sm:$0xff] %v7073
      %7098 = vst [vmem:[%s295 + $0x78] sm:$0xff] %v7074
      %7099 = vst [vmem:[%s295 + $0x80] sm:$0xff] %v7075
      %7100 = vst [vmem:[%s295 + $0x88] sm:$0xff] %v7076
      %7101 = vst [vmem:[%s295 + $0x90] sm:$0xff] %v7077
      %7102 = vst [vmem:[%s295 + $0x98] sm:$0xff] %v7078
      %7103 = vst [vmem:[%s295 + $0xa0] sm:$0xff] %v7079
      %7104 = vst [vmem:[%s295 + $0xa8] sm:$0xff] %v7080
      %7105 = vst [vmem:[%s295 + $0xb0] sm:$0xff] %v7081
      %7106 = vst [vmem:[%s295 + $0xb8] sm:$0xff] %v7082
      %p7107 = scmp.lt.s32.totalorder %s23, 1
      %s7108 = scalar_select %p7107, %s23, 1
      %p7109 = scmp.lt.s32.totalorder %s24, 1
      %s7110 = scalar_select %p7109, %s24, 1
      %s7111 = smul.addr %s7110, 24
      %s7112 = smul.addr %s7108, 48
      %s7113 = sadd.s32 %s7111, %s7112
      %s7114 = smul.addr %s7113, 8
      %s7115 = scalar_lea.vmem %s8, %s7114
      // Predicated region
      $region101: #{resnet_block_forward.1} parent=47 // pred_check
        %p7116 = pneg %p203
      $region102: #{resnet_block_forward.1} parent=47 // pred_check_branch
        %7118 = sbr.rel (%p7116) target = $region104
      $region103: #{resnet_block_forward.1} parent=47 // pred_region
        _
      $region104: #{resnet_block_forward.1} parent=47 // pred_fallthru
        _
    $region48: #{resnet_block_forward.1} parent=5 // pred_fallthru
      _
    %p7119 = scmp.le.s32.totalorder 2, %s14
    // Predicated region
    $region105: #{resnet_block_forward.1} parent=5 // pred_check
      %p7120 = pneg %p7119
    $region106: #{resnet_block_forward.1} parent=5 // pred_check_branch
      %7122 = sbr.rel (%p7120) target = $region108
    $region107: #{resnet_block_forward.1} parent=5 // pred_region
      %s7123 = ssub.s32 %s14, 2
      // Predicated region
      $region109: #{resnet_block_forward.1} parent=107 // pred_check
        %p7124 = pneg %p209
      $region110: #{resnet_block_forward.1} parent=107 // pred_check_branch
        %7126 = sbr.rel (%p7124) target = $region112
      $region111: #{resnet_block_forward.1} parent=107 // pred_region
        %p7127 = scmp.lt.s32.totalorder %s25, 1
        %s7128 = scalar_select %p7127, %s25, 1
        %p7129 = scmp.lt.s32.totalorder %s26, 1
        %s7130 = scalar_select %p7129, %s26, 1
        %s7131 = smul.addr %s7130, 24
        %s7132 = smul.addr %s7128, 48
        %s7133 = sadd.s32 %s7131, %s7132
        %s7134 = smul.addr %s7133, 8
        %s7135 = scalar_lea.vmem %s8, %s7134
      $region112: #{resnet_block_forward.1} parent=107 // pred_fallthru
        _
    $region108: #{resnet_block_forward.1} parent=5 // pred_fallthru
      _
  $region6: #{resnet_block_forward.1} parent=0 // loop_footer
    %s18 = sadd.s32 1, %s14
  $region7: #{resnet_block_forward.1} parent=0 // loop_footer_branch
    %13 = sbr.rel target = $region3
  $region8: #{resnet_block_forward.1} parent=0 // loop_exit
    _
  %7136 = vsyncmov [#allocation4]
  %s7137 = vpop.sfrf %7136
  %p7138 = scmp.eq.s32.totalorder %s7137, 0
  %p7139 = pneg %p7138
  %7141 = shalt.err (%p7139)
  %s7142 = scalar_lea.sflag [#allocation4], 1
  %7143 = vsyncmov %s7142
  %s7144 = vpop.sfrf %7143
  %p7145 = scmp.eq.s32.totalorder %s7144, 0
  %p7146 = pneg %p7145
  %7148 = shalt.err (%p7146)

</llo_original>
